<compile_context>
chip_gen: v7x
topology: tpu7x:2x2x1
jax: 0.10.0
libtpu: 0.0.40
codegen_flags: <defaults>
</compile_context>

<pallas_src>
import functools
import math

import jax
import jax.numpy as jnp
from jax.experimental import pallas as pl
from jax.experimental.pallas import tpu as pltpu

EPS = 1e-8
LEAKY_SLOPE = 0.2
FACTORS = [1, 1, 1, 1, 1 / 2, 1 / 4, 1 / 8, 1 / 16, 1 / 32]

# Raised above the 16/32 MiB scoped defaults, kept under v7x's 64 MiB physical.
VMEM_LIMIT = 48 * 1024 * 1024
MAX_TILE_M = 1024  # rows per tile for the 2-D slab kernels


def _compiler_params(n_axes=1):
    return pltpu.CompilerParams(
        dimension_semantics=("parallel",) * n_axes,
        vmem_limit_bytes=VMEM_LIMIT,
    )


def _tile_rows(m):
    # Largest tile <= MAX_TILE_M that divides m (shapes here are powers of two
    # times the batch, so this stays a multiple of 8 whenever it is < m).
    return math.gcd(m, MAX_TILE_M)


def _slab_dims(h, w):
    """Padded-flattened-image slab: R real rows + E slack rows on each end."""
    r = (h + 2) * (w + 2)
    e = w + 3          # max |tap offset| = (W+2) + 1
    return r, e, r + 2 * e


# ----------------------------------------------------------------------------
# Kernels
# ----------------------------------------------------------------------------
def _fused_matmul_kernel(a_ref, w_ref, b_ref, o_ref, *, prenorm, leaky, pixelnorm):
    """out = pn?(leaky?(pn_in?(a) @ w + b)); channel axis last."""
    a = a_ref[...]
    if prenorm:  # PixelNorm over the input channel axis (latent z)
        af = a.astype(jnp.float32)
        af = af * jax.lax.rsqrt(jnp.mean(af * af, axis=-1, keepdims=True) + EPS)
        a = af.astype(a_ref.dtype)
    acc = jnp.dot(a, w_ref[...], preferred_element_type=jnp.float32)
    acc = acc + b_ref[...]
    if leaky:
        acc = jnp.where(acc > 0, acc, LEAKY_SLOPE * acc)
    if pixelnorm:
        acc = acc * jax.lax.rsqrt(jnp.mean(acc * acc, axis=-1, keepdims=True) + EPS)
    o_ref[...] = acc.astype(o_ref.dtype)


def fused_matmul(a, w, b, *, prenorm=False, leaky=False, pixelnorm=False,
                 out_dtype=jnp.float32):
    """a: (M, K), w: (K, C), b: (1, C) -> (M, C), row-tiled and pipelined."""
    M, K = a.shape
    K2, C = w.shape
    assert K == K2 and b.shape == (1, C)
    tm = _tile_rows(M)
    kernel = functools.partial(_fused_matmul_kernel, prenorm=prenorm,
                               leaky=leaky, pixelnorm=pixelnorm)
    return pl.pallas_call(
        kernel,
        out_shape=jax.ShapeDtypeStruct((M, C), out_dtype),
        grid=(M // tm,),
        in_specs=[
            pl.BlockSpec((tm, K), lambda i: (i, 0)),
            pl.BlockSpec((K, C), lambda i: (0, 0)),   # resident weights
            pl.BlockSpec((1, C), lambda i: (0, 0)),
        ],
        out_specs=pl.BlockSpec((tm, C), lambda i: (i, 0)),
        compiler_params=_compiler_params(1),
    )(a, w, b)


def _conv3x3_slab_kernel(x_ref, w_ref, b_ref, m_ref, o_ref, *, W, R, E,
                         leaky, pixelnorm):
    """3x3 stride-1 pad-1 conv on a padded-slab image, fused epilogue.

    x_ref: (1, R+2E, Cin) bf16 slab (rows = flattened (H+2, W+2) padded image,
    plus E slack rows each end).  Tap (kh, kw) is a constant row offset, so the
    conv is 9 shifted (R, Cin) x (Cin, Cout) matmuls accumulated in f32.
    """
    cin = x_ref.shape[-1]
    cout = w_ref.shape[-1]
    acc = jnp.zeros((R, cout), jnp.float32)
    t = 0
    for kh in range(3):
        for kw in range(3):
            off = (kh - 1) * (W + 2) + (kw - 1)
            patch = x_ref[0, E + off:E + off + R, :]        # (R, Cin)
            acc = acc + jnp.dot(patch, w_ref[t],
                                preferred_element_type=jnp.float32)
            t += 1
    acc = acc + b_ref[...]
    if leaky:
        acc = jnp.where(acc > 0, acc, LEAKY_SLOPE * acc)
    if pixelnorm:
        acc = acc * jax.lax.rsqrt(jnp.mean(acc * acc, axis=-1, keepdims=True) + EPS)
    acc = acc * m_ref[...]                                  # re-zero padding ring
    zeros = jnp.zeros((E, cout), o_ref.dtype)
    o_ref[0, :E, :] = zeros
    o_ref[0, E + R:, :] = zeros
    o_ref[0, E:E + R, :] = acc.astype(o_ref.dtype)


def ws_conv3x3_slab(x_slab, w9, b, mask, *, H, W, leaky=True, pixelnorm=True,
                    out_dtype=jnp.bfloat16):
    """WSConv2d(k=3,s=1,p=1) (+LeakyReLU+PixelNorm) on slab-layout activations."""
    N = x_slab.shape[0]
    Cin = x_slab.shape[-1]
    Cout = w9.shape[-1]
    R, E, R_ext = _slab_dims(H, W)
    assert x_slab.shape == (N, R_ext, Cin)
    kernel = functools.partial(_conv3x3_slab_kernel, W=W, R=R, E=E,
                               leaky=leaky, pixelnorm=pixelnorm)
    # TODO(synk): for very large resolutions, tile R with halo DMA (and use a
    # lane-dense (H, W*C) output slab) instead of one image per grid step.
    return pl.pallas_call(
        kernel,
        out_shape=jax.ShapeDtypeStruct((N, R_ext, Cout), out_dtype),
        grid=(N,),
        in_specs=[
            pl.BlockSpec((1, R_ext, Cin), lambda n: (n, 0, 0)),
            pl.BlockSpec((9, Cin, Cout), lambda n: (0, 0, 0)),
            pl.BlockSpec((1, Cout), lambda n: (0, 0)),
            pl.BlockSpec((R, 1), lambda n: (0, 0)),
        ],
        out_specs=pl.BlockSpec((1, R_ext, Cout), lambda n: (n, 0, 0)),
        compiler_params=_compiler_params(1),
    )(x_slab, w9, b, mask)


def _rgb_fade_kernel(alpha_ref, u_ref, g_ref, wu_ref, bu_ref, wg_ref, bg_ref,
                     o_ref):
    """Fused: both to-RGB 1x1 convs + tanh(alpha*g_rgb + (1-alpha)*u_rgb)."""
    alpha = alpha_ref[0]
    u = jnp.dot(u_ref[...], wu_ref[...],
                preferred_element_type=jnp.float32) + bu_ref[...]
    g = jnp.dot(g_ref[...], wg_ref[...],
                preferred_element_type=jnp.float32) + bg_ref[...]
    o_ref[...] = jnp.tanh(alpha * g + (1.0 - alpha) * u)


def rgb_fade(alpha_arr, u2d, g2d, wu, bu, wg, bg):
    M, Cu = u2d.shape
    Mg, Cg = g2d.shape
    assert M == Mg
    Cimg = wu.shape[-1]
    tm = _tile_rows(M)
    return pl.pallas_call(
        _rgb_fade_kernel,
        out_shape=jax.ShapeDtypeStruct((M, Cimg), jnp.float32),
        grid=(M // tm,),
        in_specs=[
            pl.BlockSpec(memory_space=pltpu.MemorySpace.SMEM),  # alpha scalar
            pl.BlockSpec((tm, Cu), lambda i: (i, 0)),
            pl.BlockSpec((tm, Cg), lambda i: (i, 0)),
            pl.BlockSpec((Cu, Cimg), lambda i: (0, 0)),
            pl.BlockSpec((1, Cimg), lambda i: (0, 0)),
            pl.BlockSpec((Cg, Cimg), lambda i: (0, 0)),
            pl.BlockSpec((1, Cimg), lambda i: (0, 0)),
        ],
        out_specs=pl.BlockSpec((tm, Cimg), lambda i: (i, 0)),
        compiler_params=_compiler_params(1),
    )(alpha_arr, u2d, g2d, wu, bu, wg, bg)


# ----------------------------------------------------------------------------
# Plain-JAX layout plumbing
# ----------------------------------------------------------------------------
def to_slab(x):
    """NHWC -> padded-flattened slab (N, R+2E, C)."""
    N, H, W, C = x.shape
    R, E, _ = _slab_dims(H, W)
    xp = jnp.pad(x, ((0, 0), (1, 1), (1, 1), (0, 0)))
    slab = xp.reshape(N, R, C)
    return jnp.pad(slab, ((0, 0), (E, E), (0, 0)))


def from_slab(slab, H, W):
    """Slab -> NHWC (drops slack rows and the zero padding ring)."""
    N, _, C = slab.shape
    R, E, _ = _slab_dims(H, W)
    xp = slab[:, E:E + R, :].reshape(N, H + 2, W + 2, C)
    return xp[:, 1:H + 1, 1:W + 1, :]


def _interior_mask(H, W):
    m = jnp.pad(jnp.ones((H, W), jnp.float32), ((1, 1), (1, 1)))
    return m.reshape((H + 2) * (W + 2), 1)


def upsample2x_nearest(x):
    """NHWC nearest 2x upsample (matches F.interpolate mode='nearest')."""
    # TODO(synk): fuse this into the following conv's input DMA instead of
    # materializing the 4x-larger tensor in HBM.
    return jnp.repeat(jnp.repeat(x, 2, axis=1), 2, axis=2)


# ----------------------------------------------------------------------------
# Deterministic parameter construction (synthetic init, WS scale pre-folded)
# ----------------------------------------------------------------------------
def init_params(key, z_dim, in_channels, img_channels):
    keys = iter(jax.random.split(key, 64))
    p = {}

    # ConvTranspose2d(z_dim, C, 4, 1, 0) on a 1x1 latent == matmul with a
    # (z_dim, 4*4*C) matrix; bias replicated over the 16 spatial positions.
    ct = jax.random.normal(next(keys), (z_dim, 4, 4, in_channels), jnp.float32)
    p["ct_w"] = (ct * (1.0 / (z_dim * 16) ** 0.5)).reshape(z_dim, 16 * in_channels)
    ct_b = jax.random.normal(next(keys), (in_channels,), jnp.float32) * 0.01
    p["ct_b"] = jnp.tile(ct_b, 16).reshape(1, 16 * in_channels)

    def ws3x3(k, cin, cout):
        w = jax.random.normal(k, (3, 3, cin, cout), jnp.float32)
        scale = (2.0 / (cin * 9)) ** 0.5          # WSConv gain=2, kernel 3x3
        return (w * scale).reshape(9, cin, cout).astype(jnp.bfloat16)

    def ws1x1(k, cin, cout):
        w = jax.random.normal(k, (cin, cout), jnp.float32)
        scale = (2.0 / cin) ** 0.5                # WSConv gain=2, kernel 1x1
        return (w * scale).astype(jnp.bfloat16)

    p["init_w"] = ws3x3(next(keys), in_channels, in_channels)
    p["init_b"] = jnp.zeros((1, in_channels), jnp.float32)

    rgb = [(ws1x1(next(keys), in_channels, img_channels),
            jnp.zeros((1, img_channels), jnp.float32))]
    prog = []
    for i in range(len(FACTORS) - 1):
        cin = int(in_channels * FACTORS[i])
        cout = int(in_channels * FACTORS[i + 1])
        prog.append((ws3x3(next(keys), cin, cout), jnp.zeros((1, cout), jnp.float32),
                     ws3x3(next(keys), cout, cout), jnp.zeros((1, cout), jnp.float32)))
        rgb.append((ws1x1(next(keys), cout, img_channels),
                    jnp.zeros((1, img_channels), jnp.float32)))
    p["prog"] = prog
    p["rgb"] = rgb
    return p


# ----------------------------------------------------------------------------
# Generator forward (matches PyTorch Generator.forward)
# ----------------------------------------------------------------------------
def generator_forward(params, x_nchw, alpha, steps):
    N, zd = x_nchw.shape[0], x_nchw.shape[1]
    alpha_arr = jnp.reshape(jnp.asarray(alpha, jnp.float32), (1,))

    # initial: PixelNorm -> ConvTranspose(4x4 on 1x1) -> LeakyReLU (one kernel)
    z = x_nchw.reshape(N, zd)
    C0 = params["ct_w"].shape[1] // 16
    out = fused_matmul(z, params["ct_w"], params["ct_b"],
                       prenorm=True, leaky=True, out_dtype=jnp.bfloat16)
    out = out.reshape(N, 4, 4, C0)                       # NHWC, 4x4

    # initial WSConv3x3 + LeakyReLU + PixelNorm
    H = W = 4
    out_slab = ws_conv3x3_slab(to_slab(out), params["init_w"], params["init_b"],
                               _interior_mask(H, W), H=H, W=W)

    if steps == 0:
        out = from_slab(out_slab, H, W)
        w_rgb, b_rgb = params["rgb"][0]
        y = fused_matmul(out.reshape(N * H * W, C0), w_rgb, b_rgb,
                         out_dtype=jnp.float32)
        y = y.reshape(N, H, W, -1)
        return jnp.transpose(y, (0, 3, 1, 2))            # NCHW

    upscaled = None
    cur_c = C0
    for step in range(steps):
        x_nhwc = from_slab(out_slab, H, W)
        upscaled = upsample2x_nearest(x_nhwc)            # (N, 2H, 2W, C)
        H, W = 2 * H, 2 * W
        mask = _interior_mask(H, W)
        up_slab = to_slab(upscaled)
        w1, b1, w2, b2 = params["prog"][step]
        h_slab = ws_conv3x3_slab(up_slab, w1, b1, mask, H=H, W=W)
        out_slab = ws_conv3x3_slab(h_slab, w2, b2, mask, H=H, W=W)
        cur_c = w2.shape[-1]

    out = from_slab(out_slab, H, W)                      # "generated"
    wu, bu = params["rgb"][steps - 1]
    wg, bg = params["rgb"][steps]
    Cu = upscaled.shape[-1]
    y = rgb_fade(alpha_arr,
                 upscaled.reshape(N * H * W, Cu),
                 out.reshape(N * H * W, cur_c),
                 wu, bu, wg, bg)
    y = y.reshape(N, H, W, -1)
    return jnp.transpose(y, (0, 3, 1, 2))                # NCHW


# ----------------------------------------------------------------------------
if __name__ == "__main__":
    key = jax.random.PRNGKey(0)
    z_dim, in_channels, img_channels = 32, 32, 13
    batch, steps, alpha = 2, 2, 0.6

    pkey, xkey = jax.random.split(key)
    params = init_params(pkey, z_dim, in_channels, img_channels)
    x = jax.random.normal(xkey, (batch, z_dim, 1, 1), jnp.float32)  # NCHW latent

    fwd = jax.jit(generator_forward, static_argnums=(3,))
    out = fwd(params, x, jnp.float32(alpha), steps)
    out = jax.block_until_ready(out)

    expected_hw = 4 * (2 ** steps)
    assert out.shape == (batch, img_channels, expected_hw, expected_hw), out.shape
    assert bool(jnp.all(jnp.isfinite(out)))
    # fade_in ends with tanh -> outputs bounded in [-1, 1]
    assert float(jnp.max(jnp.abs(out))) <= 1.0
    print("KERNEL_OK")
</pallas_src>

<mosaic_0001>
module attributes {stable_mosaic.version = 11 : i64} {
  func.func @_fused_matmul_kernel(%arg0: i32, %arg1: memref<2x32xf32, #tpu.memory_space<vmem>>, %arg2: memref<32x512xf32, #tpu.memory_space<vmem>>, %arg3: memref<1x512xf32, #tpu.memory_space<vmem>>, %arg4: memref<2x512xbf16, #tpu.memory_space<vmem>>) attributes {dimension_semantics = [#tpu.dimension_semantics<parallel>], iteration_bounds = array<i64: 1>, scalar_prefetch = 0 : i64, scratch_operands = 0 : i64, tpu.core_type = #tpu.core_type<tc>, window_params = [{transform_indices = @transform_0, window_bounds = array<i64: 2, 32>}, {pipeline_mode = #tpu.pipeline_mode<synchronous>, transform_indices = @transform_1, window_bounds = array<i64: 32, 512>}, {pipeline_mode = #tpu.pipeline_mode<synchronous>, transform_indices = @transform_2, window_bounds = array<i64: 1, 512>}, {transform_indices = @transform_3, window_bounds = array<i64: 2, 512>}]} {
    %c0 = arith.constant 0 : index
    %c0_0 = arith.constant 0 : index
    %0 = vector.load %arg1[%c0, %c0_0] : memref<2x32xf32, #tpu.memory_space<vmem>>, vector<2x32xf32>
    %1 = arith.mulf %0, %0 : vector<2x32xf32>
    %cst = arith.constant dense<0.000000e+00> : vector<2xf32>
    %2 = vector.multi_reduction <add>, %1, %cst [1] : vector<2x32xf32> to vector<2xf32>
    %3 = vector.shape_cast %2 : vector<2xf32> to vector<2x1xf32>
    %cst_1 = arith.constant 3.200000e+01 : f32
    %4 = vector.broadcast %cst_1 : f32 to vector<2x1xf32>
    %5 = arith.divf %3, %4 : vector<2x1xf32>
    %cst_2 = arith.constant 9.99999993E-9 : f32
    %6 = vector.broadcast %cst_2 : f32 to vector<2x1xf32>
    %7 = arith.addf %5, %6 : vector<2x1xf32>
    %8 = math.rsqrt %7 : vector<2x1xf32>
    %9 = vector.broadcast %8 : vector<2x1xf32> to vector<2x32xf32>
    %10 = arith.mulf %0, %9 : vector<2x32xf32>
    %c0_3 = arith.constant 0 : index
    %c0_4 = arith.constant 0 : index
    %11 = vector.load %arg2[%c0_3, %c0_4] : memref<32x512xf32, #tpu.memory_space<vmem>>, vector<32x512xf32>
    %cst_5 = arith.constant dense<0.000000e+00> : vector<2x512xf32>
    %12 = tpu.matmul %10, %11, %cst_5 {dimension_numbers = #tpu.dot_dimension_numbers<[1], [0], [0], [1], [0, 0, 1, 1], [], []>} : vector<2x32xf32>, vector<32x512xf32>, vector<2x512xf32> -> vector<2x512xf32>
    %c0_6 = arith.constant 0 : index
    %c0_7 = arith.constant 0 : index
    %13 = vector.load %arg3[%c0_6, %c0_7] : memref<1x512xf32, #tpu.memory_space<vmem>>, vector<1x512xf32>
    %14 = vector.broadcast %13 : vector<1x512xf32> to vector<2x512xf32>
    %15 = arith.addf %12, %14 : vector<2x512xf32>
    %cst_8 = arith.constant 0.000000e+00 : f32
    %16 = vector.broadcast %cst_8 : f32 to vector<2x512xf32>
    %17 = arith.cmpf ogt, %15, %16 : vector<2x512xf32>
    %cst_9 = arith.constant 2.000000e-01 : f32
    %18 = vector.broadcast %cst_9 : f32 to vector<2x512xf32>
    %19 = arith.mulf %18, %15 : vector<2x512xf32>
    %20 = arith.select %17, %15, %19 : vector<2x512xi1>, vector<2x512xf32>
    %21 = arith.truncf %20 : vector<2x512xf32> to vector<2x512xbf16>
    %c0_10 = arith.constant 0 : index
    %c0_11 = arith.constant 0 : index
    %22 = vector.load %arg4[%c0_10, %c0_11] : memref<2x512xbf16, #tpu.memory_space<vmem>>, vector<2x512xbf16>
    tpu.vector_store %arg4[%c0_10, %c0_11], %21 {strides = array<i32>} : memref<2x512xbf16, #tpu.memory_space<vmem>>, vector<2x512xbf16>,
    return
  }
  func.func @transform_0(%arg0: i32) -> (i32, i32) {
    %c0_i32 = arith.constant 0 : i32
    %c0_i32_0 = arith.constant 0 : i32
    return %arg0, %c0_i32 : i32, i32
  }
  func.func @transform_1(%arg0: i32) -> (i32, i32) {
    %c0_i32 = arith.constant 0 : i32
    %c0_i32_0 = arith.constant 0 : i32
    %c0_i32_1 = arith.constant 0 : i32
    return %c0_i32, %c0_i32_0 : i32, i32
  }
  func.func @transform_2(%arg0: i32) -> (i32, i32) {
    %c0_i32 = arith.constant 0 : i32
    %c0_i32_0 = arith.constant 0 : i32
    %c0_i32_1 = arith.constant 0 : i32
    return %c0_i32, %c0_i32_0 : i32, i32
  }
  func.func @transform_3(%arg0: i32) -> (i32, i32) {
    %c0_i32 = arith.constant 0 : i32
    %c0_i32_0 = arith.constant 0 : i32
    return %arg0, %c0_i32 : i32, i32
  }
}

module attributes {stable_mosaic.version = 11 : i64} {
  func.func @_conv3x3_slab_kernel(%arg0: i32, %arg1: memref<1x50x32xbf16, #tpu.memory_space<vmem>>, %arg2: memref<9x32x32xbf16, #tpu.memory_space<vmem>>, %arg3: memref<1x32xf32, #tpu.memory_space<vmem>>, %arg4: memref<36x1xf32, #tpu.memory_space<vmem>>, %arg5: memref<1x50x32xbf16, #tpu.memory_space<vmem>>) attributes {dimension_semantics = [#tpu.dimension_semantics<parallel>], iteration_bounds = array<i64: 2>, scalar_prefetch = 0 : i64, scratch_operands = 0 : i64, tpu.core_type = #tpu.core_type<tc>, window_params = [{transform_indices = @transform_0, window_bounds = array<i64: 1, 50, 32>}, {pipeline_mode = #tpu.pipeline_mode<synchronous>, transform_indices = @transform_1, window_bounds = array<i64: 9, 32, 32>}, {pipeline_mode = #tpu.pipeline_mode<synchronous>, transform_indices = @transform_2, window_bounds = array<i64: 1, 32>}, {pipeline_mode = #tpu.pipeline_mode<synchronous>, transform_indices = @transform_3, window_bounds = array<i64: 36, 1>}, {transform_indices = @transform_4, window_bounds = array<i64: 1, 50, 32>}]} {
    %cst = arith.constant 0.000000e+00 : f32
    %0 = vector.broadcast %cst : f32 to vector<36x32xf32>
    %c0 = arith.constant 0 : index
    %c0_0 = arith.constant 0 : index
    %c0_1 = arith.constant 0 : index
    %1 = vector.load %arg1[%c0, %c0_0, %c0_1] : memref<1x50x32xbf16, #tpu.memory_space<vmem>>, vector<1x36x32xbf16>
    %2 = vector.shape_cast %1 : vector<1x36x32xbf16> to vector<36x32xbf16>
    %c0_2 = arith.constant 0 : index
    %c0_3 = arith.constant 0 : index
    %c0_4 = arith.constant 0 : index
    %3 = vector.load %arg2[%c0_2, %c0_3, %c0_4] : memref<9x32x32xbf16, #tpu.memory_space<vmem>>, vector<1x32x32xbf16>
    %4 = vector.shape_cast %3 : vector<1x32x32xbf16> to vector<32x32xbf16>
    %cst_5 = arith.constant dense<0.000000e+00> : vector<36x32xf32>
    %5 = tpu.matmul %2, %4, %cst_5 {dimension_numbers = #tpu.dot_dimension_numbers<[1], [0], [0], [1], [0, 0, 1, 1], [], []>} : vector<36x32xbf16>, vector<32x32xbf16>, vector<36x32xf32> -> vector<36x32xf32>
    %6 = arith.addf %0, %5 : vector<36x32xf32>
    %c0_6 = arith.constant 0 : index
    %c1 = arith.constant 1 : index
    %c0_7 = arith.constant 0 : index
    %7 = vector.load %arg1[%c0_6, %c1, %c0_7] : memref<1x50x32xbf16, #tpu.memory_space<vmem>>, vector<1x36x32xbf16>
    %8 = vector.shape_cast %7 : vector<1x36x32xbf16> to vector<36x32xbf16>
    %c1_8 = arith.constant 1 : index
    %c0_9 = arith.constant 0 : index
    %c0_10 = arith.constant 0 : index
    %9 = vector.load %arg2[%c1_8, %c0_9, %c0_10] : memref<9x32x32xbf16, #tpu.memory_space<vmem>>, vector<1x32x32xbf16>
    %10 = vector.shape_cast %9 : vector<1x32x32xbf16> to vector<32x32xbf16>
    %cst_11 = arith.constant dense<0.000000e+00> : vector<36x32xf32>
    %11 = tpu.matmul %8, %10, %cst_11 {dimension_numbers = #tpu.dot_dimension_numbers<[1], [0], [0], [1], [0, 0, 1, 1], [], []>} : vector<36x32xbf16>, vector<32x32xbf16>, vector<36x32xf32> -> vector<36x32xf32>
    %12 = arith.addf %6, %11 : vector<36x32xf32>
    %c0_12 = arith.constant 0 : index
    %c2 = arith.constant 2 : index
    %c0_13 = arith.constant 0 : index
    %13 = vector.load %arg1[%c0_12, %c2, %c0_13] : memref<1x50x32xbf16, #tpu.memory_space<vmem>>, vector<1x36x32xbf16>
    %14 = vector.shape_cast %13 : vector<1x36x32xbf16> to vector<36x32xbf16>
    %c2_14 = arith.constant 2 : index
    %c0_15 = arith.constant 0 : index
    %c0_16 = arith.constant 0 : index
    %15 = vector.load %arg2[%c2_14, %c0_15, %c0_16] : memref<9x32x32xbf16, #tpu.memory_space<vmem>>, vector<1x32x32xbf16>
    %16 = vector.shape_cast %15 : vector<1x32x32xbf16> to vector<32x32xbf16>
    %cst_17 = arith.constant dense<0.000000e+00> : vector<36x32xf32>
    %17 = tpu.matmul %14, %16, %cst_17 {dimension_numbers = #tpu.dot_dimension_numbers<[1], [0], [0], [1], [0, 0, 1, 1], [], []>} : vector<36x32xbf16>, vector<32x32xbf16>, vector<36x32xf32> -> vector<36x32xf32>
    %18 = arith.addf %12, %17 : vector<36x32xf32>
    %c0_18 = arith.constant 0 : index
    %c6 = arith.constant 6 : index
    %c0_19 = arith.constant 0 : index
    %19 = vector.load %arg1[%c0_18, %c6, %c0_19] : memref<1x50x32xbf16, #tpu.memory_space<vmem>>, vector<1x36x32xbf16>
    %20 = vector.shape_cast %19 : vector<1x36x32xbf16> to vector<36x32xbf16>
    %c3 = arith.constant 3 : index
    %c0_20 = arith.constant 0 : index
    %c0_21 = arith.constant 0 : index
    %21 = vector.load %arg2[%c3, %c0_20, %c0_21] : memref<9x32x32xbf16, #tpu.memory_space<vmem>>, vector<1x32x32xbf16>
    %22 = vector.shape_cast %21 : vector<1x32x32xbf16> to vector<32x32xbf16>
    %cst_22 = arith.constant dense<0.000000e+00> : vector<36x32xf32>
    %23 = tpu.matmul %20, %22, %cst_22 {dimension_numbers = #tpu.dot_dimension_numbers<[1], [0], [0], [1], [0, 0, 1, 1], [], []>} : vector<36x32xbf16>, vector<32x32xbf16>, vector<36x32xf32> -> vector<36x32xf32>
    %24 = arith.addf %18, %23 : vector<36x32xf32>
    %c0_23 = arith.constant 0 : index
    %c7 = arith.constant 7 : index
    %c0_24 = arith.constant 0 : index
    %25 = vector.load %arg1[%c0_23, %c7, %c0_24] : memref<1x50x32xbf16, #tpu.memory_space<vmem>>, vector<1x36x32xbf16>
    %26 = vector.shape_cast %25 : vector<1x36x32xbf16> to vector<36x32xbf16>
    %c4 = arith.constant 4 : index
    %c0_25 = arith.constant 0 : index
    %c0_26 = arith.constant 0 : index
    %27 = vector.load %arg2[%c4, %c0_25, %c0_26] : memref<9x32x32xbf16, #tpu.memory_space<vmem>>, vector<1x32x32xbf16>
    %28 = vector.shape_cast %27 : vector<1x32x32xbf16> to vector<32x32xbf16>
    %cst_27 = arith.constant dense<0.000000e+00> : vector<36x32xf32>
    %29 = tpu.matmul %26, %28, %cst_27 {dimension_numbers = #tpu.dot_dimension_numbers<[1], [0], [0], [1], [0, 0, 1, 1], [], []>} : vector<36x32xbf16>, vector<32x32xbf16>, vector<36x32xf32> -> vector<36x32xf32>
    %30 = arith.addf %24, %29 : vector<36x32xf32>
    %c0_28 = arith.constant 0 : index
    %c8 = arith.constant 8 : index
    %c0_29 = arith.constant 0 : index
    %31 = vector.load %arg1[%c0_28, %c8, %c0_29] : memref<1x50x32xbf16, #tpu.memory_space<vmem>>, vector<1x36x32xbf16>
    %32 = vector.shape_cast %31 : vector<1x36x32xbf16> to vector<36x32xbf16>
    %c5 = arith.constant 5 : index
    %c0_30 = arith.constant 0 : index
    %c0_31 = arith.constant 0 : index
    %33 = vector.load %arg2[%c5, %c0_30, %c0_31] : memref<9x32x32xbf16, #tpu.memory_space<vmem>>, vector<1x32x32xbf16>
    %34 = vector.shape_cast %33 : vector<1x32x32xbf16> to vector<32x32xbf16>
    %cst_32 = arith.constant dense<0.000000e+00> : vector<36x32xf32>
    %35 = tpu.matmul %32, %34, %cst_32 {dimension_numbers = #tpu.dot_dimension_numbers<[1], [0], [0], [1], [0, 0, 1, 1], [], []>} : vector<36x32xbf16>, vector<32x32xbf16>, vector<36x32xf32> -> vector<36x32xf32>
    %36 = arith.addf %30, %35 : vector<36x32xf32>
    %c0_33 = arith.constant 0 : index
    %c12 = arith.constant 12 : index
    %c0_34 = arith.constant 0 : index
    %37 = vector.load %arg1[%c0_33, %c12, %c0_34] : memref<1x50x32xbf16, #tpu.memory_space<vmem>>, vector<1x36x32xbf16>
    %38 = vector.shape_cast %37 : vector<1x36x32xbf16> to vector<36x32xbf16>
    %c6_35 = arith.constant 6 : index
    %c0_36 = arith.constant 0 : index
    %c0_37 = arith.constant 0 : index
    %39 = vector.load %arg2[%c6_35, %c0_36, %c0_37] : memref<9x32x32xbf16, #tpu.memory_space<vmem>>, vector<1x32x32xbf16>
    %40 = vector.shape_cast %39 : vector<1x32x32xbf16> to vector<32x32xbf16>
    %cst_38 = arith.constant dense<0.000000e+00> : vector<36x32xf32>
    %41 = tpu.matmul %38, %40, %cst_38 {dimension_numbers = #tpu.dot_dimension_numbers<[1], [0], [0], [1], [0, 0, 1, 1], [], []>} : vector<36x32xbf16>, vector<32x32xbf16>, vector<36x32xf32> -> vector<36x32xf32>
    %42 = arith.addf %36, %41 : vector<36x32xf32>
    %c0_39 = arith.constant 0 : index
    %c13 = arith.constant 13 : index
    %c0_40 = arith.constant 0 : index
    %43 = vector.load %arg1[%c0_39, %c13, %c0_40] : memref<1x50x32xbf16, #tpu.memory_space<vmem>>, vector<1x36x32xbf16>
    %44 = vector.shape_cast %43 : vector<1x36x32xbf16> to vector<36x32xbf16>
    %c7_41 = arith.constant 7 : index
    %c0_42 = arith.constant 0 : index
    %c0_43 = arith.constant 0 : index
    %45 = vector.load %arg2[%c7_41, %c0_42, %c0_43] : memref<9x32x32xbf16, #tpu.memory_space<vmem>>, vector<1x32x32xbf16>
    %46 = vector.shape_cast %45 : vector<1x32x32xbf16> to vector<32x32xbf16>
    %cst_44 = arith.constant dense<0.000000e+00> : vector<36x32xf32>
    %47 = tpu.matmul %44, %46, %cst_44 {dimension_numbers = #tpu.dot_dimension_numbers<[1], [0], [0], [1], [0, 0, 1, 1], [], []>} : vector<36x32xbf16>, vector<32x32xbf16>, vector<36x32xf32> -> vector<36x32xf32>
    %48 = arith.addf %42, %47 : vector<36x32xf32>
    %c0_45 = arith.constant 0 : index
    %c14 = arith.constant 14 : index
    %c0_46 = arith.constant 0 : index
    %49 = vector.load %arg1[%c0_45, %c14, %c0_46] : memref<1x50x32xbf16, #tpu.memory_space<vmem>>, vector<1x36x32xbf16>
    %50 = vector.shape_cast %49 : vector<1x36x32xbf16> to vector<36x32xbf16>
    %c8_47 = arith.constant 8 : index
    %c0_48 = arith.constant 0 : index
    %c0_49 = arith.constant 0 : index
    %51 = vector.load %arg2[%c8_47, %c0_48, %c0_49] : memref<9x32x32xbf16, #tpu.memory_space<vmem>>, vector<1x32x32xbf16>
    %52 = vector.shape_cast %51 : vector<1x32x32xbf16> to vector<32x32xbf16>
    %cst_50 = arith.constant dense<0.000000e+00> : vector<36x32xf32>
    %53 = tpu.matmul %50, %52, %cst_50 {dimension_numbers = #tpu.dot_dimension_numbers<[1], [0], [0], [1], [0, 0, 1, 1], [], []>} : vector<36x32xbf16>, vector<32x32xbf16>, vector<36x32xf32> -> vector<36x32xf32>
    %54 = arith.addf %48, %53 : vector<36x32xf32>
    %c0_51 = arith.constant 0 : index
    %c0_52 = arith.constant 0 : index
    %55 = vector.load %arg3[%c0_51, %c0_52] : memref<1x32xf32, #tpu.memory_space<vmem>>, vector<1x32xf32>
    %56 = vector.broadcast %55 : vector<1x32xf32> to vector<36x32xf32>
    %57 = arith.addf %54, %56 : vector<36x32xf32>
    %cst_53 = arith.constant 0.000000e+00 : f32
    %58 = vector.broadcast %cst_53 : f32 to vector<36x32xf32>
    %59 = arith.cmpf ogt, %57, %58 : vector<36x32xf32>
    %cst_54 = arith.constant 2.000000e-01 : f32
    %60 = vector.broadcast %cst_54 : f32 to vector<36x32xf32>
    %61 = arith.mulf %60, %57 : vector<36x32xf32>
    %62 = arith.select %59, %57, %61 : vector<36x32xi1>, vector<36x32xf32>
    %63 = arith.mulf %62, %62 : vector<36x32xf32>
    %cst_55 = arith.constant dense<0.000000e+00> : vector<36xf32>
    %64 = vector.multi_reduction <add>, %63, %cst_55 [1] : vector<36x32xf32> to vector<36xf32>
    %65 = vector.shape_cast %64 : vector<36xf32> to vector<36x1xf32>
    %cst_56 = arith.constant 3.200000e+01 : f32
    %66 = vector.broadcast %cst_56 : f32 to vector<36x1xf32>
    %67 = arith.divf %65, %66 : vector<36x1xf32>
    %cst_57 = arith.constant 9.99999993E-9 : f32
    %68 = vector.broadcast %cst_57 : f32 to vector<36x1xf32>
    %69 = arith.addf %67, %68 : vector<36x1xf32>
    %70 = math.rsqrt %69 : vector<36x1xf32>
    %71 = vector.broadcast %70 : vector<36x1xf32> to vector<36x32xf32>
    %72 = arith.mulf %62, %71 : vector<36x32xf32>
    %c0_58 = arith.constant 0 : index
    %c0_59 = arith.constant 0 : index
    %73 = vector.load %arg4[%c0_58, %c0_59] : memref<36x1xf32, #tpu.memory_space<vmem>>, vector<36x1xf32>
    %74 = vector.broadcast %73 : vector<36x1xf32> to vector<36x32xf32>
    %75 = arith.mulf %72, %74 : vector<36x32xf32>
    %cst_60 = arith.constant 0.000000e+00 : bf16
    %76 = vector.broadcast %cst_60 : bf16 to vector<7x32xbf16>
    %c0_61 = arith.constant 0 : index
    %c0_62 = arith.constant 0 : index
    %c0_63 = arith.constant 0 : index
    %77 = vector.load %arg5[%c0_61, %c0_62, %c0_63] : memref<1x50x32xbf16, #tpu.memory_space<vmem>>, vector<1x7x32xbf16>
    %78 = vector.shape_cast %77 : vector<1x7x32xbf16> to vector<7x32xbf16>
    %79 = vector.shape_cast %76 : vector<7x32xbf16> to vector<1x7x32xbf16>
    tpu.vector_store %arg5[%c0_61, %c0_62, %c0_63], %79 {strides = array<i32>} : memref<1x50x32xbf16, #tpu.memory_space<vmem>>, vector<1x7x32xbf16>,
    %c0_64 = arith.constant 0 : index
    %c43 = arith.constant 43 : index
    %c0_65 = arith.constant 0 : index
    %80 = vector.load %arg5[%c0_64, %c43, %c0_65] : memref<1x50x32xbf16, #tpu.memory_space<vmem>>, vector<1x7x32xbf16>
    %81 = vector.shape_cast %80 : vector<1x7x32xbf16> to vector<7x32xbf16>
    %82 = vector.shape_cast %76 : vector<7x32xbf16> to vector<1x7x32xbf16>
    tpu.vector_store %arg5[%c0_64, %c43, %c0_65], %82 {strides = array<i32>} : memref<1x50x32xbf16, #tpu.memory_space<vmem>>, vector<1x7x32xbf16>,
    %83 = arith.truncf %75 : vector<36x32xf32> to vector<36x32xbf16>
    %c0_66 = arith.constant 0 : index
    %c7_67 = arith.constant 7 : index
    %c0_68 = arith.constant 0 : index
    %84 = vector.load %arg5[%c0_66, %c7_67, %c0_68] : memref<1x50x32xbf16, #tpu.memory_space<vmem>>, vector<1x36x32xbf16>
    %85 = vector.shape_cast %84 : vector<1x36x32xbf16> to vector<36x32xbf16>
    %86 = vector.shape_cast %83 : vector<36x32xbf16> to vector<1x36x32xbf16>
    tpu.vector_store %arg5[%c0_66, %c7_67, %c0_68], %86 {strides = array<i32>} : memref<1x50x32xbf16, #tpu.memory_space<vmem>>, vector<1x36x32xbf16>,
    return
  }
  func.func @transform_0(%arg0: i32) -> (i32, i32, i32) {
    %c0_i32 = arith.constant 0 : i32
    %c0_i32_0 = arith.constant 0 : i32
    %c0_i32_1 = arith.constant 0 : i32
    return %arg0, %c0_i32, %c0_i32_0 : i32, i32, i32
  }
  func.func @transform_1(%arg0: i32) -> (i32, i32, i32) {
    %c0_i32 = arith.constant 0 : i32
    %c0_i32_0 = arith.constant 0 : i32
    %c0_i32_1 = arith.constant 0 : i32
    %c0_i32_2 = arith.constant 0 : i32
    return %c0_i32, %c0_i32_0, %c0_i32_1 : i32, i32, i32
  }
  func.func @transform_2(%arg0: i32) -> (i32, i32) {
    %c0_i32 = arith.constant 0 : i32
    %c0_i32_0 = arith.constant 0 : i32
    %c0_i32_1 = arith.constant 0 : i32
    return %c0_i32, %c0_i32_0 : i32, i32
  }
  func.func @transform_3(%arg0: i32) -> (i32, i32) {
    %c0_i32 = arith.constant 0 : i32
    %c0_i32_0 = arith.constant 0 : i32
    %c0_i32_1 = arith.constant 0 : i32
    return %c0_i32, %c0_i32_0 : i32, i32
  }
  func.func @transform_4(%arg0: i32) -> (i32, i32, i32) {
    %c0_i32 = arith.constant 0 : i32
    %c0_i32_0 = arith.constant 0 : i32
    %c0_i32_1 = arith.constant 0 : i32
    return %arg0, %c0_i32, %c0_i32_0 : i32, i32, i32
  }
}

module attributes {stable_mosaic.version = 11 : i64} {
  func.func @_conv3x3_slab_kernel(%arg0: i32, %arg1: memref<1x122x32xbf16, #tpu.memory_space<vmem>>, %arg2: memref<9x32x32xbf16, #tpu.memory_space<vmem>>, %arg3: memref<1x32xf32, #tpu.memory_space<vmem>>, %arg4: memref<100x1xf32, #tpu.memory_space<vmem>>, %arg5: memref<1x122x32xbf16, #tpu.memory_space<vmem>>) attributes {dimension_semantics = [#tpu.dimension_semantics<parallel>], iteration_bounds = array<i64: 2>, scalar_prefetch = 0 : i64, scratch_operands = 0 : i64, tpu.core_type = #tpu.core_type<tc>, window_params = [{transform_indices = @transform_0, window_bounds = array<i64: 1, 122, 32>}, {pipeline_mode = #tpu.pipeline_mode<synchronous>, transform_indices = @transform_1, window_bounds = array<i64: 9, 32, 32>}, {pipeline_mode = #tpu.pipeline_mode<synchronous>, transform_indices = @transform_2, window_bounds = array<i64: 1, 32>}, {pipeline_mode = #tpu.pipeline_mode<synchronous>, transform_indices = @transform_3, window_bounds = array<i64: 100, 1>}, {transform_indices = @transform_4, window_bounds = array<i64: 1, 122, 32>}]} {
    %cst = arith.constant 0.000000e+00 : f32
    %0 = vector.broadcast %cst : f32 to vector<100x32xf32>
    %c0 = arith.constant 0 : index
    %c0_0 = arith.constant 0 : index
    %c0_1 = arith.constant 0 : index
    %1 = vector.load %arg1[%c0, %c0_0, %c0_1] : memref<1x122x32xbf16, #tpu.memory_space<vmem>>, vector<1x100x32xbf16>
    %2 = vector.shape_cast %1 : vector<1x100x32xbf16> to vector<100x32xbf16>
    %c0_2 = arith.constant 0 : index
    %c0_3 = arith.constant 0 : index
    %c0_4 = arith.constant 0 : index
    %3 = vector.load %arg2[%c0_2, %c0_3, %c0_4] : memref<9x32x32xbf16, #tpu.memory_space<vmem>>, vector<1x32x32xbf16>
    %4 = vector.shape_cast %3 : vector<1x32x32xbf16> to vector<32x32xbf16>
    %cst_5 = arith.constant dense<0.000000e+00> : vector<100x32xf32>
    %5 = tpu.matmul %2, %4, %cst_5 {dimension_numbers = #tpu.dot_dimension_numbers<[1], [0], [0], [1], [0, 0, 1, 1], [], []>} : vector<100x32xbf16>, vector<32x32xbf16>, vector<100x32xf32> -> vector<100x32xf32>
    %6 = arith.addf %0, %5 : vector<100x32xf32>
    %c0_6 = arith.constant 0 : index
    %c1 = arith.constant 1 : index
    %c0_7 = arith.constant 0 : index
    %7 = vector.load %arg1[%c0_6, %c1, %c0_7] : memref<1x122x32xbf16, #tpu.memory_space<vmem>>, vector<1x100x32xbf16>
    %8 = vector.shape_cast %7 : vector<1x100x32xbf16> to vector<100x32xbf16>
    %c1_8 = arith.constant 1 : index
    %c0_9 = arith.constant 0 : index
    %c0_10 = arith.constant 0 : index
    %9 = vector.load %arg2[%c1_8, %c0_9, %c0_10] : memref<9x32x32xbf16, #tpu.memory_space<vmem>>, vector<1x32x32xbf16>
    %10 = vector.shape_cast %9 : vector<1x32x32xbf16> to vector<32x32xbf16>
    %cst_11 = arith.constant dense<0.000000e+00> : vector<100x32xf32>
    %11 = tpu.matmul %8, %10, %cst_11 {dimension_numbers = #tpu.dot_dimension_numbers<[1], [0], [0], [1], [0, 0, 1, 1], [], []>} : vector<100x32xbf16>, vector<32x32xbf16>, vector<100x32xf32> -> vector<100x32xf32>
    %12 = arith.addf %6, %11 : vector<100x32xf32>
    %c0_12 = arith.constant 0 : index
    %c2 = arith.constant 2 : index
    %c0_13 = arith.constant 0 : index
    %13 = vector.load %arg1[%c0_12, %c2, %c0_13] : memref<1x122x32xbf16, #tpu.memory_space<vmem>>, vector<1x100x32xbf16>
    %14 = vector.shape_cast %13 : vector<1x100x32xbf16> to vector<100x32xbf16>
    %c2_14 = arith.constant 2 : index
    %c0_15 = arith.constant 0 : index
    %c0_16 = arith.constant 0 : index
    %15 = vector.load %arg2[%c2_14, %c0_15, %c0_16] : memref<9x32x32xbf16, #tpu.memory_space<vmem>>, vector<1x32x32xbf16>
    %16 = vector.shape_cast %15 : vector<1x32x32xbf16> to vector<32x32xbf16>
    %cst_17 = arith.constant dense<0.000000e+00> : vector<100x32xf32>
    %17 = tpu.matmul %14, %16, %cst_17 {dimension_numbers = #tpu.dot_dimension_numbers<[1], [0], [0], [1], [0, 0, 1, 1], [], []>} : vector<100x32xbf16>, vector<32x32xbf16>, vector<100x32xf32> -> vector<100x32xf32>
    %18 = arith.addf %12, %17 : vector<100x32xf32>
    %c0_18 = arith.constant 0 : index
    %c10 = arith.constant 10 : index
    %c0_19 = arith.constant 0 : index
    %19 = vector.load %arg1[%c0_18, %c10, %c0_19] : memref<1x122x32xbf16, #tpu.memory_space<vmem>>, vector<1x100x32xbf16>
    %20 = vector.shape_cast %19 : vector<1x100x32xbf16> to vector<100x32xbf16>
    %c3 = arith.constant 3 : index
    %c0_20 = arith.constant 0 : index
    %c0_21 = arith.constant 0 : index
    %21 = vector.load %arg2[%c3, %c0_20, %c0_21] : memref<9x32x32xbf16, #tpu.memory_space<vmem>>, vector<1x32x32xbf16>
    %22 = vector.shape_cast %21 : vector<1x32x32xbf16> to vector<32x32xbf16>
    %cst_22 = arith.constant dense<0.000000e+00> : vector<100x32xf32>
    %23 = tpu.matmul %20, %22, %cst_22 {dimension_numbers = #tpu.dot_dimension_numbers<[1], [0], [0], [1], [0, 0, 1, 1], [], []>} : vector<100x32xbf16>, vector<32x32xbf16>, vector<100x32xf32> -> vector<100x32xf32>
    %24 = arith.addf %18, %23 : vector<100x32xf32>
    %c0_23 = arith.constant 0 : index
    %c11 = arith.constant 11 : index
    %c0_24 = arith.constant 0 : index
    %25 = vector.load %arg1[%c0_23, %c11, %c0_24] : memref<1x122x32xbf16, #tpu.memory_space<vmem>>, vector<1x100x32xbf16>
    %26 = vector.shape_cast %25 : vector<1x100x32xbf16> to vector<100x32xbf16>
    %c4 = arith.constant 4 : index
    %c0_25 = arith.constant 0 : index
    %c0_26 = arith.constant 0 : index
    %27 = vector.load %arg2[%c4, %c0_25, %c0_26] : memref<9x32x32xbf16, #tpu.memory_space<vmem>>, vector<1x32x32xbf16>
    %28 = vector.shape_cast %27 : vector<1x32x32xbf16> to vector<32x32xbf16>
    %cst_27 = arith.constant dense<0.000000e+00> : vector<100x32xf32>
    %29 = tpu.matmul %26, %28, %cst_27 {dimension_numbers = #tpu.dot_dimension_numbers<[1], [0], [0], [1], [0, 0, 1, 1], [], []>} : vector<100x32xbf16>, vector<32x32xbf16>, vector<100x32xf32> -> vector<100x32xf32>
    %30 = arith.addf %24, %29 : vector<100x32xf32>
    %c0_28 = arith.constant 0 : index
    %c12 = arith.constant 12 : index
    %c0_29 = arith.constant 0 : index
    %31 = vector.load %arg1[%c0_28, %c12, %c0_29] : memref<1x122x32xbf16, #tpu.memory_space<vmem>>, vector<1x100x32xbf16>
    %32 = vector.shape_cast %31 : vector<1x100x32xbf16> to vector<100x32xbf16>
    %c5 = arith.constant 5 : index
    %c0_30 = arith.constant 0 : index
    %c0_31 = arith.constant 0 : index
    %33 = vector.load %arg2[%c5, %c0_30, %c0_31] : memref<9x32x32xbf16, #tpu.memory_space<vmem>>, vector<1x32x32xbf16>
    %34 = vector.shape_cast %33 : vector<1x32x32xbf16> to vector<32x32xbf16>
    %cst_32 = arith.constant dense<0.000000e+00> : vector<100x32xf32>
    %35 = tpu.matmul %32, %34, %cst_32 {dimension_numbers = #tpu.dot_dimension_numbers<[1], [0], [0], [1], [0, 0, 1, 1], [], []>} : vector<100x32xbf16>, vector<32x32xbf16>, vector<100x32xf32> -> vector<100x32xf32>
    %36 = arith.addf %30, %35 : vector<100x32xf32>
    %c0_33 = arith.constant 0 : index
    %c20 = arith.constant 20 : index
    %c0_34 = arith.constant 0 : index
    %37 = vector.load %arg1[%c0_33, %c20, %c0_34] : memref<1x122x32xbf16, #tpu.memory_space<vmem>>, vector<1x100x32xbf16>
    %38 = vector.shape_cast %37 : vector<1x100x32xbf16> to vector<100x32xbf16>
    %c6 = arith.constant 6 : index
    %c0_35 = arith.constant 0 : index
    %c0_36 = arith.constant 0 : index
    %39 = vector.load %arg2[%c6, %c0_35, %c0_36] : memref<9x32x32xbf16, #tpu.memory_space<vmem>>, vector<1x32x32xbf16>
    %40 = vector.shape_cast %39 : vector<1x32x32xbf16> to vector<32x32xbf16>
    %cst_37 = arith.constant dense<0.000000e+00> : vector<100x32xf32>
    %41 = tpu.matmul %38, %40, %cst_37 {dimension_numbers = #tpu.dot_dimension_numbers<[1], [0], [0], [1], [0, 0, 1, 1], [], []>} : vector<100x32xbf16>, vector<32x32xbf16>, vector<100x32xf32> -> vector<100x32xf32>
    %42 = arith.addf %36, %41 : vector<100x32xf32>
    %c0_38 = arith.constant 0 : index
    %c21 = arith.constant 21 : index
    %c0_39 = arith.constant 0 : index
    %43 = vector.load %arg1[%c0_38, %c21, %c0_39] : memref<1x122x32xbf16, #tpu.memory_space<vmem>>, vector<1x100x32xbf16>
    %44 = vector.shape_cast %43 : vector<1x100x32xbf16> to vector<100x32xbf16>
    %c7 = arith.constant 7 : index
    %c0_40 = arith.constant 0 : index
    %c0_41 = arith.constant 0 : index
    %45 = vector.load %arg2[%c7, %c0_40, %c0_41] : memref<9x32x32xbf16, #tpu.memory_space<vmem>>, vector<1x32x32xbf16>
    %46 = vector.shape_cast %45 : vector<1x32x32xbf16> to vector<32x32xbf16>
    %cst_42 = arith.constant dense<0.000000e+00> : vector<100x32xf32>
    %47 = tpu.matmul %44, %46, %cst_42 {dimension_numbers = #tpu.dot_dimension_numbers<[1], [0], [0], [1], [0, 0, 1, 1], [], []>} : vector<100x32xbf16>, vector<32x32xbf16>, vector<100x32xf32> -> vector<100x32xf32>
    %48 = arith.addf %42, %47 : vector<100x32xf32>
    %c0_43 = arith.constant 0 : index
    %c22 = arith.constant 22 : index
    %c0_44 = arith.constant 0 : index
    %49 = vector.load %arg1[%c0_43, %c22, %c0_44] : memref<1x122x32xbf16, #tpu.memory_space<vmem>>, vector<1x100x32xbf16>
    %50 = vector.shape_cast %49 : vector<1x100x32xbf16> to vector<100x32xbf16>
    %c8 = arith.constant 8 : index
    %c0_45 = arith.constant 0 : index
    %c0_46 = arith.constant 0 : index
    %51 = vector.load %arg2[%c8, %c0_45, %c0_46] : memref<9x32x32xbf16, #tpu.memory_space<vmem>>, vector<1x32x32xbf16>
    %52 = vector.shape_cast %51 : vector<1x32x32xbf16> to vector<32x32xbf16>
    %cst_47 = arith.constant dense<0.000000e+00> : vector<100x32xf32>
    %53 = tpu.matmul %50, %52, %cst_47 {dimension_numbers = #tpu.dot_dimension_numbers<[1], [0], [0], [1], [0, 0, 1, 1], [], []>} : vector<100x32xbf16>, vector<32x32xbf16>, vector<100x32xf32> -> vector<100x32xf32>
    %54 = arith.addf %48, %53 : vector<100x32xf32>
    %c0_48 = arith.constant 0 : index
    %c0_49 = arith.constant 0 : index
    %55 = vector.load %arg3[%c0_48, %c0_49] : memref<1x32xf32, #tpu.memory_space<vmem>>, vector<1x32xf32>
    %56 = vector.broadcast %55 : vector<1x32xf32> to vector<100x32xf32>
    %57 = arith.addf %54, %56 : vector<100x32xf32>
    %cst_50 = arith.constant 0.000000e+00 : f32
    %58 = vector.broadcast %cst_50 : f32 to vector<100x32xf32>
    %59 = arith.cmpf ogt, %57, %58 : vector<100x32xf32>
    %cst_51 = arith.constant 2.000000e-01 : f32
    %60 = vector.broadcast %cst_51 : f32 to vector<100x32xf32>
    %61 = arith.mulf %60, %57 : vector<100x32xf32>
    %62 = arith.select %59, %57, %61 : vector<100x32xi1>, vector<100x32xf32>
    %63 = arith.mulf %62, %62 : vector<100x32xf32>
    %cst_52 = arith.constant dense<0.000000e+00> : vector<100xf32>
    %64 = vector.multi_reduction <add>, %63, %cst_52 [1] : vector<100x32xf32> to vector<100xf32>
    %65 = vector.shape_cast %64 : vector<100xf32> to vector<100x1xf32>
    %cst_53 = arith.constant 3.200000e+01 : f32
    %66 = vector.broadcast %cst_53 : f32 to vector<100x1xf32>
    %67 = arith.divf %65, %66 : vector<100x1xf32>
    %cst_54 = arith.constant 9.99999993E-9 : f32
    %68 = vector.broadcast %cst_54 : f32 to vector<100x1xf32>
    %69 = arith.addf %67, %68 : vector<100x1xf32>
    %70 = math.rsqrt %69 : vector<100x1xf32>
    %71 = vector.broadcast %70 : vector<100x1xf32> to vector<100x32xf32>
    %72 = arith.mulf %62, %71 : vector<100x32xf32>
    %c0_55 = arith.constant 0 : index
    %c0_56 = arith.constant 0 : index
    %73 = vector.load %arg4[%c0_55, %c0_56] : memref<100x1xf32, #tpu.memory_space<vmem>>, vector<100x1xf32>
    %74 = vector.broadcast %73 : vector<100x1xf32> to vector<100x32xf32>
    %75 = arith.mulf %72, %74 : vector<100x32xf32>
    %cst_57 = arith.constant 0.000000e+00 : bf16
    %76 = vector.broadcast %cst_57 : bf16 to vector<11x32xbf16>
    %c0_58 = arith.constant 0 : index
    %c0_59 = arith.constant 0 : index
    %c0_60 = arith.constant 0 : index
    %77 = vector.load %arg5[%c0_58, %c0_59, %c0_60] : memref<1x122x32xbf16, #tpu.memory_space<vmem>>, vector<1x11x32xbf16>
    %78 = vector.shape_cast %77 : vector<1x11x32xbf16> to vector<11x32xbf16>
    %79 = vector.shape_cast %76 : vector<11x32xbf16> to vector<1x11x32xbf16>
    tpu.vector_store %arg5[%c0_58, %c0_59, %c0_60], %79 {strides = array<i32>} : memref<1x122x32xbf16, #tpu.memory_space<vmem>>, vector<1x11x32xbf16>,
    %c0_61 = arith.constant 0 : index
    %c111 = arith.constant 111 : index
    %c0_62 = arith.constant 0 : index
    %80 = vector.load %arg5[%c0_61, %c111, %c0_62] : memref<1x122x32xbf16, #tpu.memory_space<vmem>>, vector<1x11x32xbf16>
    %81 = vector.shape_cast %80 : vector<1x11x32xbf16> to vector<11x32xbf16>
    %82 = vector.shape_cast %76 : vector<11x32xbf16> to vector<1x11x32xbf16>
    tpu.vector_store %arg5[%c0_61, %c111, %c0_62], %82 {strides = array<i32>} : memref<1x122x32xbf16, #tpu.memory_space<vmem>>, vector<1x11x32xbf16>,
    %83 = arith.truncf %75 : vector<100x32xf32> to vector<100x32xbf16>
    %c0_63 = arith.constant 0 : index
    %c11_64 = arith.constant 11 : index
    %c0_65 = arith.constant 0 : index
    %84 = vector.load %arg5[%c0_63, %c11_64, %c0_65] : memref<1x122x32xbf16, #tpu.memory_space<vmem>>, vector<1x100x32xbf16>
    %85 = vector.shape_cast %84 : vector<1x100x32xbf16> to vector<100x32xbf16>
    %86 = vector.shape_cast %83 : vector<100x32xbf16> to vector<1x100x32xbf16>
    tpu.vector_store %arg5[%c0_63, %c11_64, %c0_65], %86 {strides = array<i32>} : memref<1x122x32xbf16, #tpu.memory_space<vmem>>, vector<1x100x32xbf16>,
    return
  }
  func.func @transform_0(%arg0: i32) -> (i32, i32, i32) {
    %c0_i32 = arith.constant 0 : i32
    %c0_i32_0 = arith.constant 0 : i32
    %c0_i32_1 = arith.constant 0 : i32
    return %arg0, %c0_i32, %c0_i32_0 : i32, i32, i32
  }
  func.func @transform_1(%arg0: i32) -> (i32, i32, i32) {
    %c0_i32 = arith.constant 0 : i32
    %c0_i32_0 = arith.constant 0 : i32
    %c0_i32_1 = arith.constant 0 : i32
    %c0_i32_2 = arith.constant 0 : i32
    return %c0_i32, %c0_i32_0, %c0_i32_1 : i32, i32, i32
  }
  func.func @transform_2(%arg0: i32) -> (i32, i32) {
    %c0_i32 = arith.constant 0 : i32
    %c0_i32_0 = arith.constant 0 : i32
    %c0_i32_1 = arith.constant 0 : i32
    return %c0_i32, %c0_i32_0 : i32, i32
  }
  func.func @transform_3(%arg0: i32) -> (i32, i32) {
    %c0_i32 = arith.constant 0 : i32
    %c0_i32_0 = arith.constant 0 : i32
    %c0_i32_1 = arith.constant 0 : i32
    return %c0_i32, %c0_i32_0 : i32, i32
  }
  func.func @transform_4(%arg0: i32) -> (i32, i32, i32) {
    %c0_i32 = arith.constant 0 : i32
    %c0_i32_0 = arith.constant 0 : i32
    %c0_i32_1 = arith.constant 0 : i32
    return %arg0, %c0_i32, %c0_i32_0 : i32, i32, i32
  }
}

module attributes {stable_mosaic.version = 11 : i64} {
  func.func @_conv3x3_slab_kernel(%arg0: i32, %arg1: memref<1x362x32xbf16, #tpu.memory_space<vmem>>, %arg2: memref<9x32x32xbf16, #tpu.memory_space<vmem>>, %arg3: memref<1x32xf32, #tpu.memory_space<vmem>>, %arg4: memref<324x1xf32, #tpu.memory_space<vmem>>, %arg5: memref<1x362x32xbf16, #tpu.memory_space<vmem>>) attributes {dimension_semantics = [#tpu.dimension_semantics<parallel>], iteration_bounds = array<i64: 2>, scalar_prefetch = 0 : i64, scratch_operands = 0 : i64, tpu.core_type = #tpu.core_type<tc>, window_params = [{transform_indices = @transform_0, window_bounds = array<i64: 1, 362, 32>}, {pipeline_mode = #tpu.pipeline_mode<synchronous>, transform_indices = @transform_1, window_bounds = array<i64: 9, 32, 32>}, {pipeline_mode = #tpu.pipeline_mode<synchronous>, transform_indices = @transform_2, window_bounds = array<i64: 1, 32>}, {pipeline_mode = #tpu.pipeline_mode<synchronous>, transform_indices = @transform_3, window_bounds = array<i64: 324, 1>}, {transform_indices = @transform_4, window_bounds = array<i64: 1, 362, 32>}]} {
    %cst = arith.constant 0.000000e+00 : f32
    %0 = vector.broadcast %cst : f32 to vector<324x32xf32>
    %c0 = arith.constant 0 : index
    %c0_0 = arith.constant 0 : index
    %c0_1 = arith.constant 0 : index
    %1 = vector.load %arg1[%c0, %c0_0, %c0_1] : memref<1x362x32xbf16, #tpu.memory_space<vmem>>, vector<1x324x32xbf16>
    %2 = vector.shape_cast %1 : vector<1x324x32xbf16> to vector<324x32xbf16>
    %c0_2 = arith.constant 0 : index
    %c0_3 = arith.constant 0 : index
    %c0_4 = arith.constant 0 : index
    %3 = vector.load %arg2[%c0_2, %c0_3, %c0_4] : memref<9x32x32xbf16, #tpu.memory_space<vmem>>, vector<1x32x32xbf16>
    %4 = vector.shape_cast %3 : vector<1x32x32xbf16> to vector<32x32xbf16>
    %cst_5 = arith.constant dense<0.000000e+00> : vector<324x32xf32>
    %5 = tpu.matmul %2, %4, %cst_5 {dimension_numbers = #tpu.dot_dimension_numbers<[1], [0], [0], [1], [0, 0, 1, 1], [], []>} : vector<324x32xbf16>, vector<32x32xbf16>, vector<324x32xf32> -> vector<324x32xf32>
    %6 = arith.addf %0, %5 : vector<324x32xf32>
    %c0_6 = arith.constant 0 : index
    %c1 = arith.constant 1 : index
    %c0_7 = arith.constant 0 : index
    %7 = vector.load %arg1[%c0_6, %c1, %c0_7] : memref<1x362x32xbf16, #tpu.memory_space<vmem>>, vector<1x324x32xbf16>
    %8 = vector.shape_cast %7 : vector<1x324x32xbf16> to vector<324x32xbf16>
    %c1_8 = arith.constant 1 : index
    %c0_9 = arith.constant 0 : index
    %c0_10 = arith.constant 0 : index
    %9 = vector.load %arg2[%c1_8, %c0_9, %c0_10] : memref<9x32x32xbf16, #tpu.memory_space<vmem>>, vector<1x32x32xbf16>
    %10 = vector.shape_cast %9 : vector<1x32x32xbf16> to vector<32x32xbf16>
    %cst_11 = arith.constant dense<0.000000e+00> : vector<324x32xf32>
    %11 = tpu.matmul %8, %10, %cst_11 {dimension_numbers = #tpu.dot_dimension_numbers<[1], [0], [0], [1], [0, 0, 1, 1], [], []>} : vector<324x32xbf16>, vector<32x32xbf16>, vector<324x32xf32> -> vector<324x32xf32>
    %12 = arith.addf %6, %11 : vector<324x32xf32>
    %c0_12 = arith.constant 0 : index
    %c2 = arith.constant 2 : index
    %c0_13 = arith.constant 0 : index
    %13 = vector.load %arg1[%c0_12, %c2, %c0_13] : memref<1x362x32xbf16, #tpu.memory_space<vmem>>, vector<1x324x32xbf16>
    %14 = vector.shape_cast %13 : vector<1x324x32xbf16> to vector<324x32xbf16>
    %c2_14 = arith.constant 2 : index
    %c0_15 = arith.constant 0 : index
    %c0_16 = arith.constant 0 : index
    %15 = vector.load %arg2[%c2_14, %c0_15, %c0_16] : memref<9x32x32xbf16, #tpu.memory_space<vmem>>, vector<1x32x32xbf16>
    %16 = vector.shape_cast %15 : vector<1x32x32xbf16> to vector<32x32xbf16>
    %cst_17 = arith.constant dense<0.000000e+00> : vector<324x32xf32>
    %17 = tpu.matmul %14, %16, %cst_17 {dimension_numbers = #tpu.dot_dimension_numbers<[1], [0], [0], [1], [0, 0, 1, 1], [], []>} : vector<324x32xbf16>, vector<32x32xbf16>, vector<324x32xf32> -> vector<324x32xf32>
    %18 = arith.addf %12, %17 : vector<324x32xf32>
    %c0_18 = arith.constant 0 : index
    %c18 = arith.constant 18 : index
    %c0_19 = arith.constant 0 : index
    %19 = vector.load %arg1[%c0_18, %c18, %c0_19] : memref<1x362x32xbf16, #tpu.memory_space<vmem>>, vector<1x324x32xbf16>
    %20 = vector.shape_cast %19 : vector<1x324x32xbf16> to vector<324x32xbf16>
    %c3 = arith.constant 3 : index
    %c0_20 = arith.constant 0 : index
    %c0_21 = arith.constant 0 : index
    %21 = vector.load %arg2[%c3, %c0_20, %c0_21] : memref<9x32x32xbf16, #tpu.memory_space<vmem>>, vector<1x32x32xbf16>
    %22 = vector.shape_cast %21 : vector<1x32x32xbf16> to vector<32x32xbf16>
    %cst_22 = arith.constant dense<0.000000e+00> : vector<324x32xf32>
    %23 = tpu.matmul %20, %22, %cst_22 {dimension_numbers = #tpu.dot_dimension_numbers<[1], [0], [0], [1], [0, 0, 1, 1], [], []>} : vector<324x32xbf16>, vector<32x32xbf16>, vector<324x32xf32> -> vector<324x32xf32>
    %24 = arith.addf %18, %23 : vector<324x32xf32>
    %c0_23 = arith.constant 0 : index
    %c19 = arith.constant 19 : index
    %c0_24 = arith.constant 0 : index
    %25 = vector.load %arg1[%c0_23, %c19, %c0_24] : memref<1x362x32xbf16, #tpu.memory_space<vmem>>, vector<1x324x32xbf16>
    %26 = vector.shape_cast %25 : vector<1x324x32xbf16> to vector<324x32xbf16>
    %c4 = arith.constant 4 : index
    %c0_25 = arith.constant 0 : index
    %c0_26 = arith.constant 0 : index
    %27 = vector.load %arg2[%c4, %c0_25, %c0_26] : memref<9x32x32xbf16, #tpu.memory_space<vmem>>, vector<1x32x32xbf16>
    %28 = vector.shape_cast %27 : vector<1x32x32xbf16> to vector<32x32xbf16>
    %cst_27 = arith.constant dense<0.000000e+00> : vector<324x32xf32>
    %29 = tpu.matmul %26, %28, %cst_27 {dimension_numbers = #tpu.dot_dimension_numbers<[1], [0], [0], [1], [0, 0, 1, 1], [], []>} : vector<324x32xbf16>, vector<32x32xbf16>, vector<324x32xf32> -> vector<324x32xf32>
    %30 = arith.addf %24, %29 : vector<324x32xf32>
    %c0_28 = arith.constant 0 : index
    %c20 = arith.constant 20 : index
    %c0_29 = arith.constant 0 : index
    %31 = vector.load %arg1[%c0_28, %c20, %c0_29] : memref<1x362x32xbf16, #tpu.memory_space<vmem>>, vector<1x324x32xbf16>
    %32 = vector.shape_cast %31 : vector<1x324x32xbf16> to vector<324x32xbf16>
    %c5 = arith.constant 5 : index
    %c0_30 = arith.constant 0 : index
    %c0_31 = arith.constant 0 : index
    %33 = vector.load %arg2[%c5, %c0_30, %c0_31] : memref<9x32x32xbf16, #tpu.memory_space<vmem>>, vector<1x32x32xbf16>
    %34 = vector.shape_cast %33 : vector<1x32x32xbf16> to vector<32x32xbf16>
    %cst_32 = arith.constant dense<0.000000e+00> : vector<324x32xf32>
    %35 = tpu.matmul %32, %34, %cst_32 {dimension_numbers = #tpu.dot_dimension_numbers<[1], [0], [0], [1], [0, 0, 1, 1], [], []>} : vector<324x32xbf16>, vector<32x32xbf16>, vector<324x32xf32> -> vector<324x32xf32>
    %36 = arith.addf %30, %35 : vector<324x32xf32>
    %c0_33 = arith.constant 0 : index
    %c36 = arith.constant 36 : index
    %c0_34 = arith.constant 0 : index
    %37 = vector.load %arg1[%c0_33, %c36, %c0_34] : memref<1x362x32xbf16, #tpu.memory_space<vmem>>, vector<1x324x32xbf16>
    %38 = vector.shape_cast %37 : vector<1x324x32xbf16> to vector<324x32xbf16>
    %c6 = arith.constant 6 : index
    %c0_35 = arith.constant 0 : index
    %c0_36 = arith.constant 0 : index
    %39 = vector.load %arg2[%c6, %c0_35, %c0_36] : memref<9x32x32xbf16, #tpu.memory_space<vmem>>, vector<1x32x32xbf16>
    %40 = vector.shape_cast %39 : vector<1x32x32xbf16> to vector<32x32xbf16>
    %cst_37 = arith.constant dense<0.000000e+00> : vector<324x32xf32>
    %41 = tpu.matmul %38, %40, %cst_37 {dimension_numbers = #tpu.dot_dimension_numbers<[1], [0], [0], [1], [0, 0, 1, 1], [], []>} : vector<324x32xbf16>, vector<32x32xbf16>, vector<324x32xf32> -> vector<324x32xf32>
    %42 = arith.addf %36, %41 : vector<324x32xf32>
    %c0_38 = arith.constant 0 : index
    %c37 = arith.constant 37 : index
    %c0_39 = arith.constant 0 : index
    %43 = vector.load %arg1[%c0_38, %c37, %c0_39] : memref<1x362x32xbf16, #tpu.memory_space<vmem>>, vector<1x324x32xbf16>
    %44 = vector.shape_cast %43 : vector<1x324x32xbf16> to vector<324x32xbf16>
    %c7 = arith.constant 7 : index
    %c0_40 = arith.constant 0 : index
    %c0_41 = arith.constant 0 : index
    %45 = vector.load %arg2[%c7, %c0_40, %c0_41] : memref<9x32x32xbf16, #tpu.memory_space<vmem>>, vector<1x32x32xbf16>
    %46 = vector.shape_cast %45 : vector<1x32x32xbf16> to vector<32x32xbf16>
    %cst_42 = arith.constant dense<0.000000e+00> : vector<324x32xf32>
    %47 = tpu.matmul %44, %46, %cst_42 {dimension_numbers = #tpu.dot_dimension_numbers<[1], [0], [0], [1], [0, 0, 1, 1], [], []>} : vector<324x32xbf16>, vector<32x32xbf16>, vector<324x32xf32> -> vector<324x32xf32>
    %48 = arith.addf %42, %47 : vector<324x32xf32>
    %c0_43 = arith.constant 0 : index
    %c38 = arith.constant 38 : index
    %c0_44 = arith.constant 0 : index
    %49 = vector.load %arg1[%c0_43, %c38, %c0_44] : memref<1x362x32xbf16, #tpu.memory_space<vmem>>, vector<1x324x32xbf16>
    %50 = vector.shape_cast %49 : vector<1x324x32xbf16> to vector<324x32xbf16>
    %c8 = arith.constant 8 : index
    %c0_45 = arith.constant 0 : index
    %c0_46 = arith.constant 0 : index
    %51 = vector.load %arg2[%c8, %c0_45, %c0_46] : memref<9x32x32xbf16, #tpu.memory_space<vmem>>, vector<1x32x32xbf16>
    %52 = vector.shape_cast %51 : vector<1x32x32xbf16> to vector<32x32xbf16>
    %cst_47 = arith.constant dense<0.000000e+00> : vector<324x32xf32>
    %53 = tpu.matmul %50, %52, %cst_47 {dimension_numbers = #tpu.dot_dimension_numbers<[1], [0], [0], [1], [0, 0, 1, 1], [], []>} : vector<324x32xbf16>, vector<32x32xbf16>, vector<324x32xf32> -> vector<324x32xf32>
    %54 = arith.addf %48, %53 : vector<324x32xf32>
    %c0_48 = arith.constant 0 : index
    %c0_49 = arith.constant 0 : index
    %55 = vector.load %arg3[%c0_48, %c0_49] : memref<1x32xf32, #tpu.memory_space<vmem>>, vector<1x32xf32>
    %56 = vector.broadcast %55 : vector<1x32xf32> to vector<324x32xf32>
    %57 = arith.addf %54, %56 : vector<324x32xf32>
    %cst_50 = arith.constant 0.000000e+00 : f32
    %58 = vector.broadcast %cst_50 : f32 to vector<324x32xf32>
    %59 = arith.cmpf ogt, %57, %58 : vector<324x32xf32>
    %cst_51 = arith.constant 2.000000e-01 : f32
    %60 = vector.broadcast %cst_51 : f32 to vector<324x32xf32>
    %61 = arith.mulf %60, %57 : vector<324x32xf32>
    %62 = arith.select %59, %57, %61 : vector<324x32xi1>, vector<324x32xf32>
    %63 = arith.mulf %62, %62 : vector<324x32xf32>
    %cst_52 = arith.constant dense<0.000000e+00> : vector<324xf32>
    %64 = vector.multi_reduction <add>, %63, %cst_52 [1] : vector<324x32xf32> to vector<324xf32>
    %65 = vector.shape_cast %64 : vector<324xf32> to vector<324x1xf32>
    %cst_53 = arith.constant 3.200000e+01 : f32
    %66 = vector.broadcast %cst_53 : f32 to vector<324x1xf32>
    %67 = arith.divf %65, %66 : vector<324x1xf32>
    %cst_54 = arith.constant 9.99999993E-9 : f32
    %68 = vector.broadcast %cst_54 : f32 to vector<324x1xf32>
    %69 = arith.addf %67, %68 : vector<324x1xf32>
    %70 = math.rsqrt %69 : vector<324x1xf32>
    %71 = vector.broadcast %70 : vector<324x1xf32> to vector<324x32xf32>
    %72 = arith.mulf %62, %71 : vector<324x32xf32>
    %c0_55 = arith.constant 0 : index
    %c0_56 = arith.constant 0 : index
    %73 = vector.load %arg4[%c0_55, %c0_56] : memref<324x1xf32, #tpu.memory_space<vmem>>, vector<324x1xf32>
    %74 = vector.broadcast %73 : vector<324x1xf32> to vector<324x32xf32>
    %75 = arith.mulf %72, %74 : vector<324x32xf32>
    %cst_57 = arith.constant 0.000000e+00 : bf16
    %76 = vector.broadcast %cst_57 : bf16 to vector<19x32xbf16>
    %c0_58 = arith.constant 0 : index
    %c0_59 = arith.constant 0 : index
    %c0_60 = arith.constant 0 : index
    %77 = vector.load %arg5[%c0_58, %c0_59, %c0_60] : memref<1x362x32xbf16, #tpu.memory_space<vmem>>, vector<1x19x32xbf16>
    %78 = vector.shape_cast %77 : vector<1x19x32xbf16> to vector<19x32xbf16>
    %79 = vector.shape_cast %76 : vector<19x32xbf16> to vector<1x19x32xbf16>
    tpu.vector_store %arg5[%c0_58, %c0_59, %c0_60], %79 {strides = array<i32>} : memref<1x362x32xbf16, #tpu.memory_space<vmem>>, vector<1x19x32xbf16>,
    %c0_61 = arith.constant 0 : index
    %c343 = arith.constant 343 : index
    %c0_62 = arith.constant 0 : index
    %80 = vector.load %arg5[%c0_61, %c343, %c0_62] : memref<1x362x32xbf16, #tpu.memory_space<vmem>>, vector<1x19x32xbf16>
    %81 = vector.shape_cast %80 : vector<1x19x32xbf16> to vector<19x32xbf16>
    %82 = vector.shape_cast %76 : vector<19x32xbf16> to vector<1x19x32xbf16>
    tpu.vector_store %arg5[%c0_61, %c343, %c0_62], %82 {strides = array<i32>} : memref<1x362x32xbf16, #tpu.memory_space<vmem>>, vector<1x19x32xbf16>,
    %83 = arith.truncf %75 : vector<324x32xf32> to vector<324x32xbf16>
    %c0_63 = arith.constant 0 : index
    %c19_64 = arith.constant 19 : index
    %c0_65 = arith.constant 0 : index
    %84 = vector.load %arg5[%c0_63, %c19_64, %c0_65] : memref<1x362x32xbf16, #tpu.memory_space<vmem>>, vector<1x324x32xbf16>
    %85 = vector.shape_cast %84 : vector<1x324x32xbf16> to vector<324x32xbf16>
    %86 = vector.shape_cast %83 : vector<324x32xbf16> to vector<1x324x32xbf16>
    tpu.vector_store %arg5[%c0_63, %c19_64, %c0_65], %86 {strides = array<i32>} : memref<1x362x32xbf16, #tpu.memory_space<vmem>>, vector<1x324x32xbf16>,
    return
  }
  func.func @transform_0(%arg0: i32) -> (i32, i32, i32) {
    %c0_i32 = arith.constant 0 : i32
    %c0_i32_0 = arith.constant 0 : i32
    %c0_i32_1 = arith.constant 0 : i32
    return %arg0, %c0_i32, %c0_i32_0 : i32, i32, i32
  }
  func.func @transform_1(%arg0: i32) -> (i32, i32, i32) {
    %c0_i32 = arith.constant 0 : i32
    %c0_i32_0 = arith.constant 0 : i32
    %c0_i32_1 = arith.constant 0 : i32
    %c0_i32_2 = arith.constant 0 : i32
    return %c0_i32, %c0_i32_0, %c0_i32_1 : i32, i32, i32
  }
  func.func @transform_2(%arg0: i32) -> (i32, i32) {
    %c0_i32 = arith.constant 0 : i32
    %c0_i32_0 = arith.constant 0 : i32
    %c0_i32_1 = arith.constant 0 : i32
    return %c0_i32, %c0_i32_0 : i32, i32
  }
  func.func @transform_3(%arg0: i32) -> (i32, i32) {
    %c0_i32 = arith.constant 0 : i32
    %c0_i32_0 = arith.constant 0 : i32
    %c0_i32_1 = arith.constant 0 : i32
    return %c0_i32, %c0_i32_0 : i32, i32
  }
  func.func @transform_4(%arg0: i32) -> (i32, i32, i32) {
    %c0_i32 = arith.constant 0 : i32
    %c0_i32_0 = arith.constant 0 : i32
    %c0_i32_1 = arith.constant 0 : i32
    return %arg0, %c0_i32, %c0_i32_0 : i32, i32, i32
  }
}

module attributes {stable_mosaic.version = 11 : i64} {
  func.func @_rgb_fade_kernel(%arg0: i32, %arg1: memref<1xf32, #tpu.memory_space<smem>>, %arg2: memref<512x32xbf16, #tpu.memory_space<vmem>>, %arg3: memref<512x32xbf16, #tpu.memory_space<vmem>>, %arg4: memref<32x13xbf16, #tpu.memory_space<vmem>>, %arg5: memref<1x13xf32, #tpu.memory_space<vmem>>, %arg6: memref<32x13xbf16, #tpu.memory_space<vmem>>, %arg7: memref<1x13xf32, #tpu.memory_space<vmem>>, %arg8: memref<512x13xf32, #tpu.memory_space<vmem>>) attributes {dimension_semantics = [#tpu.dimension_semantics<parallel>], iteration_bounds = array<i64: 1>, scalar_prefetch = 0 : i64, scratch_operands = 0 : i64, tpu.core_type = #tpu.core_type<tc>, window_params = [{transform_indices = @transform_0, window_bounds = array<i64: 1>}, {transform_indices = @transform_1, window_bounds = array<i64: 512, 32>}, {transform_indices = @transform_2, window_bounds = array<i64: 512, 32>}, {pipeline_mode = #tpu.pipeline_mode<synchronous>, transform_indices = @transform_3, window_bounds = array<i64: 32, 13>}, {pipeline_mode = #tpu.pipeline_mode<synchronous>, transform_indices = @transform_4, window_bounds = array<i64: 1, 13>}, {pipeline_mode = #tpu.pipeline_mode<synchronous>, transform_indices = @transform_5, window_bounds = array<i64: 32, 13>}, {pipeline_mode = #tpu.pipeline_mode<synchronous>, transform_indices = @transform_6, window_bounds = array<i64: 1, 13>}, {transform_indices = @transform_7, window_bounds = array<i64: 512, 13>}]} {
    %c0 = arith.constant 0 : index
    %0 = memref.load %arg1[%c0] : memref<1xf32, #tpu.memory_space<smem>>
    %c0_0 = arith.constant 0 : index
    %c0_1 = arith.constant 0 : index
    %1 = vector.load %arg2[%c0_0, %c0_1] : memref<512x32xbf16, #tpu.memory_space<vmem>>, vector<512x32xbf16>
    %c0_2 = arith.constant 0 : index
    %c0_3 = arith.constant 0 : index
    %2 = vector.load %arg4[%c0_2, %c0_3] : memref<32x13xbf16, #tpu.memory_space<vmem>>, vector<32x13xbf16>
    %cst = arith.constant dense<0.000000e+00> : vector<512x13xf32>
    %3 = tpu.matmul %1, %2, %cst {dimension_numbers = #tpu.dot_dimension_numbers<[1], [0], [0], [1], [0, 0, 1, 1], [], []>} : vector<512x32xbf16>, vector<32x13xbf16>, vector<512x13xf32> -> vector<512x13xf32>
    %c0_4 = arith.constant 0 : index
    %c0_5 = arith.constant 0 : index
    %4 = vector.load %arg5[%c0_4, %c0_5] : memref<1x13xf32, #tpu.memory_space<vmem>>, vector<1x13xf32>
    %5 = vector.broadcast %4 : vector<1x13xf32> to vector<512x13xf32>
    %6 = arith.addf %3, %5 : vector<512x13xf32>
    %c0_6 = arith.constant 0 : index
    %c0_7 = arith.constant 0 : index
    %7 = vector.load %arg3[%c0_6, %c0_7] : memref<512x32xbf16, #tpu.memory_space<vmem>>, vector<512x32xbf16>
    %c0_8 = arith.constant 0 : index
    %c0_9 = arith.constant 0 : index
    %8 = vector.load %arg6[%c0_8, %c0_9] : memref<32x13xbf16, #tpu.memory_space<vmem>>, vector<32x13xbf16>
    %cst_10 = arith.constant dense<0.000000e+00> : vector<512x13xf32>
    %9 = tpu.matmul %7, %8, %cst_10 {dimension_numbers = #tpu.dot_dimension_numbers<[1], [0], [0], [1], [0, 0, 1, 1], [], []>} : vector<512x32xbf16>, vector<32x13xbf16>, vector<512x13xf32> -> vector<512x13xf32>
    %c0_11 = arith.constant 0 : index
    %c0_12 = arith.constant 0 : index
    %10 = vector.load %arg7[%c0_11, %c0_12] : memref<1x13xf32, #tpu.memory_space<vmem>>, vector<1x13xf32>
    %11 = vector.broadcast %10 : vector<1x13xf32> to vector<512x13xf32>
    %12 = arith.addf %9, %11 : vector<512x13xf32>
    %13 = vector.broadcast %0 : f32 to vector<512x13xf32>
    %14 = arith.mulf %13, %12 : vector<512x13xf32>
    %cst_13 = arith.constant 1.000000e+00 : f32
    %15 = arith.subf %cst_13, %0 : f32
    %16 = vector.broadcast %15 : f32 to vector<512x13xf32>
    %17 = arith.mulf %16, %6 : vector<512x13xf32>
    %18 = arith.addf %14, %17 : vector<512x13xf32>
    %19 = math.tanh %18 : vector<512x13xf32>
    %c0_14 = arith.constant 0 : index
    %c0_15 = arith.constant 0 : index
    %20 = vector.load %arg8[%c0_14, %c0_15] : memref<512x13xf32, #tpu.memory_space<vmem>>, vector<512x13xf32>
    tpu.vector_store %arg8[%c0_14, %c0_15], %19 {strides = array<i32>} : memref<512x13xf32, #tpu.memory_space<vmem>>, vector<512x13xf32>,
    return
  }
  func.func @transform_0(%arg0: i32) -> i32 {
    %c0_i32 = arith.constant 0 : i32
    %c0_i32_0 = arith.constant 0 : i32
    return %c0_i32 : i32
  }
  func.func @transform_1(%arg0: i32) -> (i32, i32) {
    %c0_i32 = arith.constant 0 : i32
    %c0_i32_0 = arith.constant 0 : i32
    return %arg0, %c0_i32 : i32, i32
  }
  func.func @transform_2(%arg0: i32) -> (i32, i32) {
    %c0_i32 = arith.constant 0 : i32
    %c0_i32_0 = arith.constant 0 : i32
    return %arg0, %c0_i32 : i32, i32
  }
  func.func @transform_3(%arg0: i32) -> (i32, i32) {
    %c0_i32 = arith.constant 0 : i32
    %c0_i32_0 = arith.constant 0 : i32
    %c0_i32_1 = arith.constant 0 : i32
    return %c0_i32, %c0_i32_0 : i32, i32
  }
  func.func @transform_4(%arg0: i32) -> (i32, i32) {
    %c0_i32 = arith.constant 0 : i32
    %c0_i32_0 = arith.constant 0 : i32
    %c0_i32_1 = arith.constant 0 : i32
    return %c0_i32, %c0_i32_0 : i32, i32
  }
  func.func @transform_5(%arg0: i32) -> (i32, i32) {
    %c0_i32 = arith.constant 0 : i32
    %c0_i32_0 = arith.constant 0 : i32
    %c0_i32_1 = arith.constant 0 : i32
    return %c0_i32, %c0_i32_0 : i32, i32
  }
  func.func @transform_6(%arg0: i32) -> (i32, i32) {
    %c0_i32 = arith.constant 0 : i32
    %c0_i32_0 = arith.constant 0 : i32
    %c0_i32_1 = arith.constant 0 : i32
    return %c0_i32, %c0_i32_0 : i32, i32
  }
  func.func @transform_7(%arg0: i32) -> (i32, i32) {
    %c0_i32 = arith.constant 0 : i32
    %c0_i32_0 = arith.constant 0 : i32
    return %arg0, %c0_i32 : i32, i32
  }
}

</mosaic_0001>

<llo_original>
// kernel: generator_forward.7
$region0: #{generator_forward.7}
  #allocation0 [shape = 'u32[]', space=smem, size = 0x4, offset = 0x4, fixed_abs, tag = 'smem constant byte address 0x4 - core index']
  #allocation1 [shape = 'u32[144,128]{1,0:T(1,128)}', space=vmem, size = 0x12000, scoped, tag = 'internal scratch']
  %s0 = inlined_call_operand.vmem [shape: f32[2,32], index: 0, kind: input, shape index: {}]
  %s1 = inlined_call_operand.vmem [shape: f32[32,512], index: 1, kind: input, shape index: {}]
  %s2 = inlined_call_operand.vmem [shape: f32[1,512], index: 2, kind: input, shape index: {}]
  %s3 = inlined_call_operand.vmem [shape: bf16[2,512], index: 3, kind: output, shape index: {}]
  %s4 = sld [smem:[#allocation0]]
  $region22: #{generator_forward.7} parent=0
    _
  %s6 = ssub.s32 1, %s4
  %s7 = scalar_select 0, %s6, %s4
  // Predicated region
  $region2: #{generator_forward.7} parent=0 // pred_check
    _
  $region3: #{generator_forward.7} parent=0 // pred_check_branch
    %9 = sbr.rel (0) target = $region5
  $region4: #{generator_forward.7} parent=0 // pred_region
    _
  $region5: #{generator_forward.7} parent=0 // pred_fallthru
    _
  // Predicated region
  $region6: #{generator_forward.7} parent=0 // pred_check
    _
  $region7: #{generator_forward.7} parent=0 // pred_check_branch
    %11 = sbr.rel (0) target = $region9
  $region8: #{generator_forward.7} parent=0 // pred_region
    _
  $region9: #{generator_forward.7} parent=0 // pred_fallthru
    _
  // Predicated region
  $region10: #{generator_forward.7} parent=0 // pred_check
    _
  $region11: #{generator_forward.7} parent=0 // pred_check_branch
    %13 = sbr.rel (0) target = $region13
  $region12: #{generator_forward.7} parent=0 // pred_region
    _
  $region13: #{generator_forward.7} parent=0 // pred_fallthru
    _
  %v14 = vld [vmem:[%s0] sm:$0x3]
  %v15 = vmul.f32 %v14, %v14
  %vm16 = vcmask 254976
  %v17 = vsel %vm16, %v15, 0.0
  %18 = vadd.xlane.f32.xlu0 %v17
  %v19 = vpop.xlane.xlu0 %18
  %v20 = vrcp.pop 32.0
  %v21 = vmul.f32 %v19, %v20
  %v22 = vadd.f32 %v21, 1e-08
  %v23 = vrsqrt.pop %v22
  %v24 = vmul.f32 %v14, %v23
  %v25 = vld [vmem:[%s1] sm:$0xff]
  %v26 = vld [vmem:[%s1 + $0x8] sm:$0xff]
  %v27 = vld [vmem:[%s1 + $0x10] sm:$0xff]
  %v28 = vld [vmem:[%s1 + $0x18] sm:$0xff]
  %v29 = vld [vmem:[%s1 + $0x20] sm:$0xff]
  %v30 = vld [vmem:[%s1 + $0x28] sm:$0xff]
  %v31 = vld [vmem:[%s1 + $0x30] sm:$0xff]
  %v32 = vld [vmem:[%s1 + $0x38] sm:$0xff]
  %v33 = vld [vmem:[%s1 + $0x40] sm:$0xff]
  %v34 = vld [vmem:[%s1 + $0x48] sm:$0xff]
  %v35 = vld [vmem:[%s1 + $0x50] sm:$0xff]
  %v36 = vld [vmem:[%s1 + $0x58] sm:$0xff]
  %v37 = vld [vmem:[%s1 + $0x60] sm:$0xff]
  %v38 = vld [vmem:[%s1 + $0x68] sm:$0xff]
  %v39 = vld [vmem:[%s1 + $0x70] sm:$0xff]
  %v40 = vld [vmem:[%s1 + $0x78] sm:$0xff]
  %v41 = vld [vmem:[%s2] sm:$0xf]
  %v43 = vlaneseq
  %v44 = vshrl.u32 %v43, 7
  %v45 = vsub.s32 0, %v44
  %v46 = vrot.slane %v41, %v45
  %v47 = vlaneseq
  %v48 = vshrl.u32 %v47, 7
  %v49 = vsub.s32 1, %v48
  %v50 = vrot.slane %v41, %v49
  %v51 = vlaneseq
  %v52 = vshrl.u32 %v51, 7
  %v53 = vsub.s32 2, %v52
  %v54 = vrot.slane %v41, %v53
  %v55 = vlaneseq
  %v56 = vshrl.u32 %v55, 7
  %v57 = vsub.s32 3, %v56
  %v58 = vrot.slane %v41, %v57
  %vm63 = vcmask 261120
  %v65 = vsel %vm63, %v24, 0
  %67 = vmatprep.subr.mxu0 %v26
  %68 = vmatpush1.msra.mxu0 %v25
  %69 = vmatprep.subr.mxu0 %v30
  %70 = vmatpush1.msra.mxu0 %v29
  %71 = vmatprep.subr.mxu0 %v34
  %72 = vmatpush1.msra.mxu0 %v33
  %73 = vmatprep.subr.mxu0 %v38
  %74 = vmatpush1.msra.mxu0 %v37
  %75 = vmatprep.subr.mxu0 0.0
  %76 = vmatpush1.msra.mxu0 0.0
  %77 = vmatprep.subr.mxu0 0.0
  %78 = vmatpush1.msra.mxu0 0.0
  %79 = vmatprep.subr.mxu0 0.0
  %80 = vmatpush1.msra.mxu0 0.0
  %81 = vmatprep.subr.mxu0 0.0
  %82 = vmatpush1.msra.mxu0 0.0
  %83 = vmatprep.subr.mxu0 0.0
  %84 = vmatpush1.msra.mxu0 0.0
  %85 = vmatprep.subr.mxu0 0.0
  %86 = vmatpush1.msra.mxu0 0.0
  %87 = vmatprep.subr.mxu0 0.0
  %88 = vmatpush1.msra.mxu0 0.0
  %89 = vmatprep.subr.mxu0 0.0
  %90 = vmatpush1.msra.mxu0 0.0
  %91 = vmatprep.subr.mxu0 0.0
  %92 = vmatpush1.msra.mxu0 0.0
  %93 = vmatprep.subr.mxu0 0.0
  %94 = vmatpush1.msra.mxu0 0.0
  %95 = vmatprep.subr.mxu0 0.0
  %96 = vmatpush1.msra.mxu0 0.0
  %97 = vmatprep.subr.mxu0 0.0
  %98 = vmatpush1.msra.mxu0 0.0
  %99 = vmatprep.subr.mxu0 0.0
  %100 = vmatpush1.msra.mxu0 0.0
  %101 = vmatprep.subr.mxu0 0.0
  %102 = vmatpush1.msra.mxu0 0.0
  %103 = vmatprep.subr.mxu0 0.0
  %104 = vmatpush1.msra.mxu0 0.0
  %105 = vmatprep.subr.mxu0 0.0
  %106 = vmatpush1.msra.mxu0 0.0
  %107 = vmatprep.subr.mxu0 0.0
  %108 = vmatpush1.msra.mxu0 0.0
  %109 = vmatprep.subr.mxu0 0.0
  %110 = vmatpush1.msra.mxu0 0.0
  %111 = vmatprep.subr.mxu0 0.0
  %112 = vmatpush1.msra.mxu0 0.0
  %113 = vmatprep.subr.mxu0 0.0
  %114 = vmatpush1.msra.mxu0 0.0
  %115 = vmatprep.subr.mxu0 0.0
  %116 = vmatpush1.msra.mxu0 0.0
  %117 = vmatprep.subr.mxu0 0.0
  %118 = vmatpush1.msra.mxu0 0.0
  %119 = vmatprep.subr.mxu0 0.0
  %120 = vmatpush1.msra.mxu0 0.0
  %121 = vmatprep.subr.mxu0 0.0
  %122 = vmatpush1.msra.mxu0 0.0
  %123 = vmatprep.subr.mxu0 0.0
  %124 = vmatpush1.msra.mxu0 0.0
  %125 = vmatprep.subr.mxu0 0.0
  %126 = vmatpush1.msra.mxu0 0.0
  %127 = vmatprep.subr.mxu0 0.0
  %128 = vmatpush1.msra.mxu0 0.0
  %129 = vmatprep.subr.mxu0 0.0
  %130 = vmatpush1.msra.mxu0 0.0
  %131 = vmatprep.mubr.f32.mxu0 0.0
  %132 = vmatmul.mubr.f32.gmra.mrb[0].mxu0 %v65
  %v133 = vpop.f32.mrb[0].mxu0
  %v134 = vadd.f32 %v46, %v133
  %v135 = vpop.f32.mrb[0].mxu0
  %v136 = vadd.f32 %v50, %v135
  %137 = vdwg.mxu0
  %138 = vmatprep.subr.mxu0 %v28
  %139 = vmatpush1.msra.mxu0 %v27
  %140 = vmatprep.subr.mxu0 %v32
  %141 = vmatpush1.msra.mxu0 %v31
  %142 = vmatprep.subr.mxu0 %v36
  %143 = vmatpush1.msra.mxu0 %v35
  %144 = vmatprep.subr.mxu0 %v40
  %145 = vmatpush1.msra.mxu0 %v39
  %146 = vmatprep.subr.mxu0 0.0
  %147 = vmatpush1.msra.mxu0 0.0
  %148 = vmatprep.subr.mxu0 0.0
  %149 = vmatpush1.msra.mxu0 0.0
  %150 = vmatprep.subr.mxu0 0.0
  %151 = vmatpush1.msra.mxu0 0.0
  %152 = vmatprep.subr.mxu0 0.0
  %153 = vmatpush1.msra.mxu0 0.0
  %154 = vmatprep.subr.mxu0 0.0
  %155 = vmatpush1.msra.mxu0 0.0
  %156 = vmatprep.subr.mxu0 0.0
  %157 = vmatpush1.msra.mxu0 0.0
  %158 = vmatprep.subr.mxu0 0.0
  %159 = vmatpush1.msra.mxu0 0.0
  %160 = vmatprep.subr.mxu0 0.0
  %161 = vmatpush1.msra.mxu0 0.0
  %162 = vmatprep.subr.mxu0 0.0
  %163 = vmatpush1.msra.mxu0 0.0
  %164 = vmatprep.subr.mxu0 0.0
  %165 = vmatpush1.msra.mxu0 0.0
  %166 = vmatprep.subr.mxu0 0.0
  %167 = vmatpush1.msra.mxu0 0.0
  %168 = vmatprep.subr.mxu0 0.0
  %169 = vmatpush1.msra.mxu0 0.0
  %170 = vmatprep.subr.mxu0 0.0
  %171 = vmatpush1.msra.mxu0 0.0
  %172 = vmatprep.subr.mxu0 0.0
  %173 = vmatpush1.msra.mxu0 0.0
  %174 = vmatprep.subr.mxu0 0.0
  %175 = vmatpush1.msra.mxu0 0.0
  %176 = vmatprep.subr.mxu0 0.0
  %177 = vmatpush1.msra.mxu0 0.0
  %178 = vmatprep.subr.mxu0 0.0
  %179 = vmatpush1.msra.mxu0 0.0
  %180 = vmatprep.subr.mxu0 0.0
  %181 = vmatpush1.msra.mxu0 0.0
  %182 = vmatprep.subr.mxu0 0.0
  %183 = vmatpush1.msra.mxu0 0.0
  %184 = vmatprep.subr.mxu0 0.0
  %185 = vmatpush1.msra.mxu0 0.0
  %186 = vmatprep.subr.mxu0 0.0
  %187 = vmatpush1.msra.mxu0 0.0
  %188 = vmatprep.subr.mxu0 0.0
  %189 = vmatpush1.msra.mxu0 0.0
  %190 = vmatprep.subr.mxu0 0.0
  %191 = vmatpush1.msra.mxu0 0.0
  %192 = vmatprep.subr.mxu0 0.0
  %193 = vmatpush1.msra.mxu0 0.0
  %194 = vmatprep.subr.mxu0 0.0
  %195 = vmatpush1.msra.mxu0 0.0
  %196 = vmatprep.subr.mxu0 0.0
  %197 = vmatpush1.msra.mxu0 0.0
  %198 = vmatprep.subr.mxu0 0.0
  %199 = vmatpush1.msra.mxu0 0.0
  %200 = vmatprep.subr.mxu0 0.0
  %201 = vmatpush1.msra.mxu0 0.0
  %202 = vmatprep.mubr.f32.mxu0 0.0
  %203 = vmatmul.mubr.f32.gmra.mrb[0].mxu0 %v65
  %v204 = vpop.f32.mrb[0].mxu0
  %v205 = vadd.f32 %v54, %v204
  %v206 = vpop.f32.mrb[0].mxu0
  %v207 = vadd.f32 %v58, %v206
  %208 = vdwg.mxu0
  %vm209 = vcmp.gt.f32.partialorder %v134, 0.0
  %vm210 = vcmp.gt.f32.partialorder %v136, 0.0
  %vm211 = vcmp.gt.f32.partialorder %v205, 0.0
  %vm212 = vcmp.gt.f32.partialorder %v207, 0.0
  %v213 = vmul.f32 %v134, 0.2
  %v214 = vmul.f32 %v136, 0.2
  %v215 = vmul.f32 %v205, 0.2
  %v216 = vmul.f32 %v207, 0.2
  %v217 = vsel %vm209, %v134, %v213
  %v218 = vsel %vm210, %v136, %v214
  %v219 = vsel %vm211, %v205, %v215
  %v220 = vsel %vm212, %v207, %v216
  %v221 = vpack.c.bf16 %v217, %v217
  %v222 = vpack.c.bf16 %v218, %v218
  %v223 = vpack.c.bf16 %v219, %v219
  %v224 = vpack.c.bf16 %v220, %v220
  %v229 = vcombine.low %v221, %v222
  %v230 = vcombine.low %v223, %v224
  %v232 = vunpack.c.l.s4 1966171168
  %v233 = vunpack.c.0.s8 %v232
  %v234 = vlaneseq
  %v235 = vshrl.u32 %v234, 7
  %v236 = vsub.s32 %v233, %v235
  %v237 = vrot.slane %v229, %v236
  %v239 = vunpack.c.l.s4 1966171168
  %v240 = vunpack.c.0.s8 %v239
  %v241 = vlaneseq
  %v242 = vshrl.u32 %v241, 7
  %v243 = vsub.s32 %v240, %v242
  %v244 = vrot.slane %v230, %v243
  %v245 = vcombine.low %v237, %v244
  %v247 = vunpack.c.l.s4 1966171168
  %v248 = vunpack.c.0.s8 %v247
  %v249 = vlaneseq
  %v250 = vshrl.u32 %v249, 7
  %v251 = vsub.s32 %v248, %v250
  %v252 = vrot.slane %v245, %v251
  %254 = vst [vmem:[%s3] sm:$0xf] %v252
  // Predicated region
  $region14: #{generator_forward.7} parent=0 // pred_check
    _
  $region15: #{generator_forward.7} parent=0 // pred_check_branch
    %256 = sbr.rel (0) target = $region17
  $region16: #{generator_forward.7} parent=0 // pred_region
    _
  $region17: #{generator_forward.7} parent=0 // pred_fallthru
    _
  // Predicated region
  $region18: #{generator_forward.7} parent=0 // pred_check
    _
  $region19: #{generator_forward.7} parent=0 // pred_check_branch
    %258 = sbr.rel (0) target = $region21
  $region20: #{generator_forward.7} parent=0 // pred_region
    _
  $region21: #{generator_forward.7} parent=0 // pred_fallthru
    _

// kernel: generator_forward.8
$region0: #{generator_forward.8}
  #allocation0 [shape = 'u32[]', space=smem, size = 0x4, offset = 0x4, fixed_abs, tag = 'smem constant byte address 0x4 - core index']
  #allocation1 [shape = 'u32[144,128]{1,0:T(1,128)}', space=vmem, size = 0x12000, scoped, tag = 'internal scratch']
  %s0 = inlined_call_operand.vmem [shape: bf16[2,50,32], index: 0, kind: input, shape index: {}]
  %s1 = inlined_call_operand.vmem [shape: bf16[9,32,32], index: 1, kind: input, shape index: {}]
  %s2 = inlined_call_operand.vmem [shape: f32[1,32], index: 2, kind: input, shape index: {}]
  %s3 = inlined_call_operand.vmem [shape: f32[36,1], index: 3, kind: input, shape index: {}]
  %s4 = inlined_call_operand.vmem [shape: bf16[2,50,32], index: 4, kind: output, shape index: {}]
  %s5 = sld [smem:[#allocation0]]
  $region49: #{generator_forward.8} parent=0
    _
  %s7 = ssub.s32 1, %s5
  %s8 = scalar_select 0, %s7, %s5
  loop: start=0, step=1, limit=4
  $region2: #{generator_forward.8} parent=0 // loop_pre_header
    _
  $region3: #{generator_forward.8} parent=0 // loop_header
    %s10 = sphi 0, %s14
    %p11 = scmp.ge.s32.totalorder %s10, 4
    %s20 = sphi 0, %s22
    %s23 = sphi 0, %s20
    %s24 = sphi 0, %s23
    %s40 = sphi 0, %s24
    %s44 = sphi 0, %s44
    %s46 = sphi 0, %s44
    %s47 = sphi 0, %s46
    %s61 = sphi 0, %s47
    %s65 = sphi 0, %s65
    %s67 = sphi 0, %s65
    %s68 = sphi 0, %s67
    %s82 = sphi 0, %s68
    %s86 = sphi 0, %s86
    %s88 = sphi 0, %s86
    %s89 = sphi 0, %s88
    %s103 = sphi 0, %s89
    %s109 = sphi 0, %s111
    %s112 = sphi 0, %s109
    %s113 = sphi 0, %s112
    %s129 = sphi 0, %s113
  $region4: #{generator_forward.8} parent=0 // loop_header_branch
    %13 = sbr.rel (%p11) target = $region8
  $region5: #{generator_forward.8} parent=0 // loop_body
    %s15 = ssub.s32 %s10, 1
    %s16 = ssub.s32 %s10, 2
    %s17 = sadd.s32 %s10, 1
    %s18 = ssub.s32 %s10, %s17
    %p19 = scmp.eq.s32.totalorder %s18, 0
    %s21 = sadd.s32 %s20, 1
    %s22 = scalar_select %p19, %s20, %s21
    %p25 = pneg %p19
    %p26 = scmp.eq.s32.totalorder %s10, 1
    %p27 = por %p25, %p26
    %p28 = scmp.ne.s32.totalorder %s20, %s23
    %p29 = scmp.eq.s32.totalorder %s10, 0
    %p30 = por %p28, %p29
    %p31 = scmp.ne.s32.totalorder %s20, %s23
    %p32 = scmp.eq.s32.totalorder %s15, 1
    %p33 = por %p31, %p32
    %p34 = scmp.ne.s32.totalorder %s23, %s24
    %p35 = scmp.eq.s32.totalorder %s15, 0
    %p36 = por %p34, %p35
    %p37 = scmp.ne.s32.totalorder %s23, %s24
    %p38 = scmp.eq.s32.totalorder %s16, 1
    %p39 = por %p37, %p38
    %p41 = scmp.ne.s32.totalorder %s24, %s40
    %p42 = scmp.eq.s32.totalorder %s16, 0
    %p43 = por %p41, %p42
    %s45 = sadd.s32 %s44, 1
    %p48 = scmp.eq.s32.totalorder %s10, 1
    %p49 = scmp.ne.s32.totalorder %s44, %s46
    %p50 = scmp.eq.s32.totalorder %s10, 0
    %p51 = por %p49, %p50
    %p52 = scmp.ne.s32.totalorder %s44, %s46
    %p53 = scmp.eq.s32.totalorder %s15, 1
    %p54 = por %p52, %p53
    %p55 = scmp.ne.s32.totalorder %s46, %s47
    %p56 = scmp.eq.s32.totalorder %s15, 0
    %p57 = por %p55, %p56
    %p58 = scmp.ne.s32.totalorder %s46, %s47
    %p59 = scmp.eq.s32.totalorder %s16, 1
    %p60 = por %p58, %p59
    %p62 = scmp.ne.s32.totalorder %s47, %s61
    %p63 = scmp.eq.s32.totalorder %s16, 0
    %p64 = por %p62, %p63
    %s66 = sadd.s32 %s65, 1
    %p69 = scmp.eq.s32.totalorder %s10, 1
    %p70 = scmp.ne.s32.totalorder %s65, %s67
    %p71 = scmp.eq.s32.totalorder %s10, 0
    %p72 = por %p70, %p71
    %p73 = scmp.ne.s32.totalorder %s65, %s67
    %p74 = scmp.eq.s32.totalorder %s15, 1
    %p75 = por %p73, %p74
    %p76 = scmp.ne.s32.totalorder %s67, %s68
    %p77 = scmp.eq.s32.totalorder %s15, 0
    %p78 = por %p76, %p77
    %p79 = scmp.ne.s32.totalorder %s67, %s68
    %p80 = scmp.eq.s32.totalorder %s16, 1
    %p81 = por %p79, %p80
    %p83 = scmp.ne.s32.totalorder %s68, %s82
    %p84 = scmp.eq.s32.totalorder %s16, 0
    %p85 = por %p83, %p84
    %s87 = sadd.s32 %s86, 1
    %p90 = scmp.eq.s32.totalorder %s10, 1
    %p91 = scmp.ne.s32.totalorder %s86, %s88
    %p92 = scmp.eq.s32.totalorder %s10, 0
    %p93 = por %p91, %p92
    %p94 = scmp.ne.s32.totalorder %s86, %s88
    %p95 = scmp.eq.s32.totalorder %s15, 1
    %p96 = por %p94, %p95
    %p97 = scmp.ne.s32.totalorder %s88, %s89
    %p98 = scmp.eq.s32.totalorder %s15, 0
    %p99 = por %p97, %p98
    %p100 = scmp.ne.s32.totalorder %s88, %s89
    %p101 = scmp.eq.s32.totalorder %s16, 1
    %p102 = por %p100, %p101
    %p104 = scmp.ne.s32.totalorder %s89, %s103
    %p105 = scmp.eq.s32.totalorder %s16, 0
    %p106 = por %p104, %p105
    %s107 = ssub.s32 %s10, %s17
    %p108 = scmp.eq.s32.totalorder %s107, 0
    %s110 = sadd.s32 %s109, 1
    %s111 = scalar_select %p108, %s109, %s110
    %p114 = pneg %p108
    %p115 = scmp.eq.s32.totalorder %s10, 1
    %p116 = por %p114, %p115
    %p117 = scmp.ne.s32.totalorder %s109, %s112
    %p118 = scmp.eq.s32.totalorder %s10, 0
    %p119 = por %p117, %p118
    %p120 = scmp.ne.s32.totalorder %s109, %s112
    %p121 = scmp.eq.s32.totalorder %s15, 1
    %p122 = por %p120, %p121
    %p123 = scmp.ne.s32.totalorder %s112, %s113
    %p124 = scmp.eq.s32.totalorder %s15, 0
    %p125 = por %p123, %p124
    %p126 = scmp.ne.s32.totalorder %s112, %s113
    %p127 = scmp.eq.s32.totalorder %s16, 1
    %p128 = por %p126, %p127
    %p130 = scmp.ne.s32.totalorder %s113, %s129
    %p131 = scmp.eq.s32.totalorder %s16, 0
    %p132 = por %p130, %p131
    %p133 = scmp.le.s32.totalorder 1, %s10
    %p134 = scmp.lt.s32.totalorder %s10, 3
    %p135 = pnand %p133, %p134
    %p136 = pneg %p135
    // Predicated region
    $region9: #{generator_forward.8} parent=5 // pred_check
      _
    $region10: #{generator_forward.8} parent=5 // pred_check_branch
      %138 = sbr.rel (%p135) target = $region12
    $region11: #{generator_forward.8} parent=5 // pred_region
      %s139 = ssub.s32 %s10, 1
      // Predicated region
      $region13: #{generator_forward.8} parent=11 // pred_check
        %p140 = pneg %p57
      $region14: #{generator_forward.8} parent=11 // pred_check_branch
        %142 = sbr.rel (%p140) target = $region16
      $region15: #{generator_forward.8} parent=11 // pred_region
        _
      $region16: #{generator_forward.8} parent=11 // pred_fallthru
        _
      // Predicated region
      $region17: #{generator_forward.8} parent=11 // pred_check
        %p143 = pneg %p78
      $region18: #{generator_forward.8} parent=11 // pred_check_branch
        %145 = sbr.rel (%p143) target = $region20
      $region19: #{generator_forward.8} parent=11 // pred_region
        _
      $region20: #{generator_forward.8} parent=11 // pred_fallthru
        _
      // Predicated region
      $region21: #{generator_forward.8} parent=11 // pred_check
        %p146 = pneg %p99
      $region22: #{generator_forward.8} parent=11 // pred_check_branch
        %148 = sbr.rel (%p146) target = $region24
      $region23: #{generator_forward.8} parent=11 // pred_region
        _
      $region24: #{generator_forward.8} parent=11 // pred_fallthru
        _
    $region12: #{generator_forward.8} parent=5 // pred_fallthru
      _
    %p149 = scmp.lt.s32.totalorder %s10, 2
    // Predicated region
    $region25: #{generator_forward.8} parent=5 // pred_check
      %p150 = pneg %p149
    $region26: #{generator_forward.8} parent=5 // pred_check_branch
      %152 = sbr.rel (%p150) target = $region28
    $region27: #{generator_forward.8} parent=5 // pred_region
      // Predicated region
      $region29: #{generator_forward.8} parent=27 // pred_check
        %p153 = pneg %p30
      $region30: #{generator_forward.8} parent=27 // pred_check_branch
        %155 = sbr.rel (%p153) target = $region32
      $region31: #{generator_forward.8} parent=27 // pred_region
        %p156 = scmp.lt.s32.totalorder %s10, 1
        %s157 = scalar_select %p156, %s10, 1
        %s158 = smul.addr %s157, 7
        %s159 = smul.addr %s158, 4
        %s160 = scalar_lea.vmem %s0, %s159
      $region32: #{generator_forward.8} parent=27 // pred_fallthru
        _
    $region28: #{generator_forward.8} parent=5 // pred_fallthru
      _
    %p161 = scmp.le.s32.totalorder 1, %s10
    %p162 = scmp.lt.s32.totalorder %s10, 3
    %p163 = pnand %p161, %p162
    %p164 = pneg %p163
    // Predicated region
    $region33: #{generator_forward.8} parent=5 // pred_check
      _
    $region34: #{generator_forward.8} parent=5 // pred_check_branch
      %166 = sbr.rel (%p163) target = $region36
    $region35: #{generator_forward.8} parent=5 // pred_region
      %s167 = ssub.s32 %s10, 1
      %p168 = scmp.lt.s32.totalorder %s15, 1
      %s169 = scalar_select %p168, %s15, 1
      %s170 = smul.addr %s169, 7
      %s171 = smul.addr %s170, 4
      %s172 = scalar_lea.vmem %s0, %s171
      %p173 = pneg %p36
      %p174 = pneg %p33
      %p175 = pneg %p57
      %p176 = pneg %p54
      %p177 = pneg %p78
      %p178 = pneg %p75
      %p179 = pneg %p99
      %p180 = pneg %p96
      %p181 = pneg %p125
      %p182 = pneg %p122
      %p183 = scmp.lt.s32.totalorder %s15, 1
      %s184 = scalar_select %p183, %s15, 1
      %s185 = smul.addr %s184, 7
      %s186 = smul.addr %s185, 4
      %s187 = scalar_lea.vmem %s4, %s186
      %p188 = scmp.lt.s32.totalorder %s15, 1
      %s189 = scalar_select %p188, %s15, 1
      %s190 = smul.addr %s189, 7
      %s191 = smul.addr %s190, 4
      %s192 = scalar_lea.vmem %s0, %s191
      %p193 = scmp.lt.s32.totalorder %s15, 1
      %s194 = scalar_select %p193, %s15, 1
      %s195 = smul.addr %s194, 7
      %s196 = smul.addr %s195, 4
      %s197 = scalar_lea.vmem %s4, %s196
      %v199 = vld [vmem:[%s192] sm:$0xf]
      %v200 = vld [vmem:[%s192 + $0x4] sm:$0xf]
      %v201 = vld [vmem:[%s192 + $0x8] sm:$0xf]
      %v202 = vld [vmem:[%s192 + $0xc] sm:$0xf]
      %v203 = vld [vmem:[%s192 + $0x10] sm:$0x3]
      %v204 = vld [vmem:[%s1] sm:$0xf]
      %v205 = vld [vmem:[%s1 + $0x4] sm:$0xf]
      %v206 = vld [vmem:[%s1 + $0x8] sm:$0xf]
      %v207 = vld [vmem:[%s1 + $0xc] sm:$0xf]
      %v208 = vld [vmem:[%s192 + $0x10] sm:$0x7]
      %s209 = scalar_lea.vmem %s1, 16
      %v210 = vld [vmem:[%s209] sm:$0xf]
      %v211 = vld [vmem:[%s209 + $0x4] sm:$0xf]
      %v212 = vld [vmem:[%s209 + $0x8] sm:$0xf]
      %v213 = vld [vmem:[%s209 + $0xc] sm:$0xf]
      %v219 = vunpack.c.l.b16 %v199
      %v220 = vunpack.c.l.b16 %v200
      %v221 = vunpack.c.l.b16 %v201
      %v222 = vunpack.c.l.b16 %v202
      %v223 = vunpack.c.l.b16 %v208
      %v224 = vpack.c.b16 %v220, %v219
      %v225 = vpack.c.b16 %v222, %v221
      %v226 = vpack.c.b16 %v223, %v223
      %vm227 = vsmask.f32 7424
      %v229 = vshrl.u32 %v224, 16
      %v231 = vshll.u32 %v224, 16
      %v233 = vrot.slane %v231, 1
      %v234 = vor.u32 %v229, %v233
      %v236 = vshll.u32 %v225, 16
      %v238 = vrot.slane %v236, 1
      %v239 = vsel %vm227, %v234, %v238
      %v240 = vshrl.u32 %v225, 16
      %v242 = vor.u32 %v240, %v238
      %v244 = vshll.u32 %v226, 16
      %v246 = vrot.slane %v244, 1
      %v247 = vsel %vm227, %v242, %v246
      %v248 = vshrl.u32 %v226, 16
      %v250 = vor.u32 %v248, %v246
      %v255 = vunpack.c.l.b16 %v210
      %v256 = vunpack.c.l.b16 %v211
      %v257 = vunpack.c.l.b16 %v212
      %v258 = vunpack.c.l.b16 %v213
      %v259 = vpack.c.b16 %v256, %v255
      %v260 = vpack.c.b16 %v258, %v257
      %vm263 = vcmask 261120
      %v265 = vsel %vm263, %v239, 0
      %v268 = vsel %vm263, %v247, 0
      %v271 = vsel %vm263, %v250, 0
      %273 = vmatprep.subr.bf16.mxu0 0
      %274 = vmatpush1.bf16.msra.mxu0 %v259
      %275 = vmatprep.subr.bf16.mxu0 0
      %276 = vmatpush1.bf16.msra.mxu0 %v260
      %277 = vmatprep.subr.bf16.mxu0 0
      %278 = vmatpush1.bf16.msra.mxu0 0
      %279 = vmatprep.subr.bf16.mxu0 0
      %280 = vmatpush1.bf16.msra.mxu0 0
      %281 = vmatprep.subr.bf16.mxu0 0
      %282 = vmatpush1.bf16.msra.mxu0 0
      %283 = vmatprep.subr.bf16.mxu0 0
      %284 = vmatpush1.bf16.msra.mxu0 0
      %285 = vmatprep.subr.bf16.mxu0 0
      %286 = vmatpush1.bf16.msra.mxu0 0
      %287 = vmatprep.subr.bf16.mxu0 0
      %288 = vmatpush1.bf16.msra.mxu0 0
      %289 = vmatprep.subr.bf16.mxu0 0
      %290 = vmatpush1.bf16.msra.mxu0 0
      %291 = vmatprep.subr.bf16.mxu0 0
      %292 = vmatpush1.bf16.msra.mxu0 0
      %293 = vmatprep.subr.bf16.mxu0 0
      %294 = vmatpush1.bf16.msra.mxu0 0
      %295 = vmatprep.subr.bf16.mxu0 0
      %296 = vmatpush1.bf16.msra.mxu0 0
      %297 = vmatprep.subr.bf16.mxu0 0
      %298 = vmatpush1.bf16.msra.mxu0 0
      %299 = vmatprep.subr.bf16.mxu0 0
      %300 = vmatpush1.bf16.msra.mxu0 0
      %301 = vmatprep.subr.bf16.mxu0 0
      %302 = vmatpush1.bf16.msra.mxu0 0
      %303 = vmatprep.subr.bf16.mxu0 0
      %304 = vmatpush1.bf16.msra.mxu0 0
      %305 = vmatprep.mubr.bf16.mxu0 0
      %306 = vmatmul.mubr.bf16.gmra.mrb[0].mxu0 %v265
      %v307 = vpop.f32.mrb[0].mxu0
      %v308 = vadd.f32 0.0, %v307
      %v309 = vpop.f32.mrb[0].mxu0
      %v310 = vpop.f32.mrb[0].mxu0
      %v311 = vadd.f32 0.0, %v310
      %v312 = vpop.f32.mrb[0].mxu0
      %313 = vmatprep.mubr.bf16.mxu0 0
      %314 = vmatmul.mubr.bf16.gmra.mrb[0].mxu0 %v268
      %v315 = vpop.f32.mrb[0].mxu0
      %v316 = vadd.f32 0.0, %v315
      %v317 = vpop.f32.mrb[0].mxu0
      %v318 = vpop.f32.mrb[0].mxu0
      %v319 = vadd.f32 0.0, %v318
      %v320 = vpop.f32.mrb[0].mxu0
      %321 = vmatprep.mubr.bf16.mxu0 0
      %322 = vmatmul.mubr.bf16.gmra.mrb[0].mxu0 %v271
      %v323 = vpop.f32.mrb[0].mxu0
      %v324 = vadd.f32 0.0, %v323
      %v325 = vpop.f32.mrb[0].mxu0
      %v326 = vpop.f32.mrb[0].mxu0
      %v327 = vpop.f32.mrb[0].mxu0
      %328 = vdwg.mxu0
      %v330 = vunpack.c.l.b16 %v203
      %v331 = vpack.c.b16 %v330, %v330
      %v336 = vunpack.c.l.b16 %v204
      %v337 = vunpack.c.l.b16 %v205
      %v338 = vunpack.c.l.b16 %v206
      %v339 = vunpack.c.l.b16 %v207
      %v340 = vpack.c.b16 %v337, %v336
      %v341 = vpack.c.b16 %v339, %v338
      %v344 = vsel %vm263, %v224, 0
      %v346 = vsel %vm263, %v225, 0
      %v349 = vsel %vm263, %v331, 0
      %351 = vmatprep.subr.bf16.mxu0 0
      %352 = vmatpush1.bf16.msra.mxu0 %v340
      %353 = vmatprep.subr.bf16.mxu0 0
      %354 = vmatpush1.bf16.msra.mxu0 %v341
      %355 = vmatprep.subr.bf16.mxu0 0
      %356 = vmatpush1.bf16.msra.mxu0 0
      %357 = vmatprep.subr.bf16.mxu0 0
      %358 = vmatpush1.bf16.msra.mxu0 0
      %359 = vmatprep.subr.bf16.mxu0 0
      %360 = vmatpush1.bf16.msra.mxu0 0
      %361 = vmatprep.subr.bf16.mxu0 0
      %362 = vmatpush1.bf16.msra.mxu0 0
      %363 = vmatprep.subr.bf16.mxu0 0
      %364 = vmatpush1.bf16.msra.mxu0 0
      %365 = vmatprep.subr.bf16.mxu0 0
      %366 = vmatpush1.bf16.msra.mxu0 0
      %367 = vmatprep.subr.bf16.mxu0 0
      %368 = vmatpush1.bf16.msra.mxu0 0
      %369 = vmatprep.subr.bf16.mxu0 0
      %370 = vmatpush1.bf16.msra.mxu0 0
      %371 = vmatprep.subr.bf16.mxu0 0
      %372 = vmatpush1.bf16.msra.mxu0 0
      %373 = vmatprep.subr.bf16.mxu0 0
      %374 = vmatpush1.bf16.msra.mxu0 0
      %375 = vmatprep.subr.bf16.mxu0 0
      %376 = vmatpush1.bf16.msra.mxu0 0
      %377 = vmatprep.subr.bf16.mxu0 0
      %378 = vmatpush1.bf16.msra.mxu0 0
      %379 = vmatprep.subr.bf16.mxu0 0
      %380 = vmatpush1.bf16.msra.mxu0 0
      %381 = vmatprep.subr.bf16.mxu0 0
      %382 = vmatpush1.bf16.msra.mxu0 0
      %383 = vmatprep.mubr.bf16.mxu0 0
      %384 = vmatmul.mubr.bf16.gmra.mrb[0].mxu0 %v344
      %v385 = vpop.f32.mrb[0].mxu0
      %v386 = vadd.f32 %v308, %v385
      %v387 = vpop.f32.mrb[0].mxu0
      %v388 = vpop.f32.mrb[0].mxu0
      %v389 = vadd.f32 %v311, %v388
      %v390 = vpop.f32.mrb[0].mxu0
      %391 = vmatprep.mubr.bf16.mxu0 0
      %392 = vmatmul.mubr.bf16.gmra.mrb[0].mxu0 %v346
      %v393 = vpop.f32.mrb[0].mxu0
      %v394 = vadd.f32 %v316, %v393
      %v395 = vpop.f32.mrb[0].mxu0
      %v396 = vpop.f32.mrb[0].mxu0
      %v397 = vadd.f32 %v319, %v396
      %v398 = vpop.f32.mrb[0].mxu0
      %399 = vmatprep.mubr.bf16.mxu0 0
      %400 = vmatmul.mubr.bf16.gmra.mrb[0].mxu0 %v349
      %v401 = vpop.f32.mrb[0].mxu0
      %v402 = vadd.f32 %v324, %v401
      %v403 = vpop.f32.mrb[0].mxu0
      %v404 = vpop.f32.mrb[0].mxu0
      %v405 = vpop.f32.mrb[0].mxu0
      %406 = vdwg.mxu0
      %v407 = vld [vmem:[%s192] sm:$0xe]
      %s408 = scalar_lea.vmem %s1, 32
      %v409 = vld [vmem:[%s408] sm:$0xf]
      %v410 = vld [vmem:[%s408 + $0x4] sm:$0xf]
      %v411 = vld [vmem:[%s408 + $0x8] sm:$0xf]
      %v412 = vld [vmem:[%s408 + $0xc] sm:$0xf]
      %v414 = vunpack.c.l.b16 %v407
      %v415 = vpack.c.b16 %v220, %v414
      %vm416 = vcmask 1046528
      %v417 = vrot.slane %v415, 1
      %v418 = vrot.slane %v225, 1
      %v419 = vsel %vm416, %v417, %v418
      %v420 = vrot.slane %v226, 1
      %v421 = vsel %vm416, %v418, %v420
      %v426 = vunpack.c.l.b16 %v409
      %v427 = vunpack.c.l.b16 %v410
      %v428 = vunpack.c.l.b16 %v411
      %v429 = vunpack.c.l.b16 %v412
      %v430 = vpack.c.b16 %v427, %v426
      %v431 = vpack.c.b16 %v429, %v428
      %v435 = vsel %vm263, %v419, 0
      %v438 = vsel %vm263, %v421, 0
      %v441 = vsel %vm263, %v420, 0
      %443 = vmatprep.subr.bf16.mxu0 0
      %444 = vmatpush1.bf16.msra.mxu0 %v430
      %445 = vmatprep.subr.bf16.mxu0 0
      %446 = vmatpush1.bf16.msra.mxu0 %v431
      %447 = vmatprep.subr.bf16.mxu0 0
      %448 = vmatpush1.bf16.msra.mxu0 0
      %449 = vmatprep.subr.bf16.mxu0 0
      %450 = vmatpush1.bf16.msra.mxu0 0
      %451 = vmatprep.subr.bf16.mxu0 0
      %452 = vmatpush1.bf16.msra.mxu0 0
      %453 = vmatprep.subr.bf16.mxu0 0
      %454 = vmatpush1.bf16.msra.mxu0 0
      %455 = vmatprep.subr.bf16.mxu0 0
      %456 = vmatpush1.bf16.msra.mxu0 0
      %457 = vmatprep.subr.bf16.mxu0 0
      %458 = vmatpush1.bf16.msra.mxu0 0
      %459 = vmatprep.subr.bf16.mxu0 0
      %460 = vmatpush1.bf16.msra.mxu0 0
      %461 = vmatprep.subr.bf16.mxu0 0
      %462 = vmatpush1.bf16.msra.mxu0 0
      %463 = vmatprep.subr.bf16.mxu0 0
      %464 = vmatpush1.bf16.msra.mxu0 0
      %465 = vmatprep.subr.bf16.mxu0 0
      %466 = vmatpush1.bf16.msra.mxu0 0
      %467 = vmatprep.subr.bf16.mxu0 0
      %468 = vmatpush1.bf16.msra.mxu0 0
      %469 = vmatprep.subr.bf16.mxu0 0
      %470 = vmatpush1.bf16.msra.mxu0 0
      %471 = vmatprep.subr.bf16.mxu0 0
      %472 = vmatpush1.bf16.msra.mxu0 0
      %473 = vmatprep.subr.bf16.mxu0 0
      %474 = vmatpush1.bf16.msra.mxu0 0
      %475 = vmatprep.mubr.bf16.mxu0 0
      %476 = vmatmul.mubr.bf16.gmra.mrb[0].mxu0 %v435
      %v477 = vpop.f32.mrb[0].mxu0
      %v478 = vadd.f32 0.0, %v477
      %v479 = vpop.f32.mrb[0].mxu0
      %v480 = vpop.f32.mrb[0].mxu0
      %v481 = vadd.f32 0.0, %v480
      %v482 = vpop.f32.mrb[0].mxu0
      %483 = vmatprep.mubr.bf16.mxu0 0
      %484 = vmatmul.mubr.bf16.gmra.mrb[0].mxu0 %v438
      %v485 = vpop.f32.mrb[0].mxu0
      %v486 = vadd.f32 0.0, %v485
      %v487 = vpop.f32.mrb[0].mxu0
      %v488 = vpop.f32.mrb[0].mxu0
      %v489 = vadd.f32 0.0, %v488
      %v490 = vpop.f32.mrb[0].mxu0
      %491 = vmatprep.mubr.bf16.mxu0 0
      %492 = vmatmul.mubr.bf16.gmra.mrb[0].mxu0 %v441
      %v493 = vpop.f32.mrb[0].mxu0
      %v494 = vadd.f32 0.0, %v493
      %v495 = vpop.f32.mrb[0].mxu0
      %v496 = vpop.f32.mrb[0].mxu0
      %v497 = vpop.f32.mrb[0].mxu0
      %498 = vdwg.mxu0
      %v499 = vadd.f32 %v386, %v478
      %v500 = vadd.f32 %v389, %v481
      %v501 = vadd.f32 %v394, %v486
      %v502 = vadd.f32 %v397, %v489
      %v503 = vadd.f32 %v402, %v494
      %v504 = vld [vmem:[%s192] sm:$0x8]
      %v505 = vld [vmem:[%s192 + $0x4] sm:$0xf]
      %v506 = vld [vmem:[%s192 + $0x8] sm:$0xf]
      %v507 = vld [vmem:[%s192 + $0xc] sm:$0xf]
      %v508 = vld [vmem:[%s192 + $0x10] sm:$0xf]
      %v509 = vld [vmem:[%s192 + $0x14] sm:$0x1]
      %s510 = scalar_lea.vmem %s1, 48
      %v511 = vld [vmem:[%s510] sm:$0xf]
      %v512 = vld [vmem:[%s510 + $0x4] sm:$0xf]
      %v513 = vld [vmem:[%s510 + $0x8] sm:$0xf]
      %v514 = vld [vmem:[%s510 + $0xc] sm:$0xf]
      %v521 = vunpack.c.l.b16 %v504
      %v522 = vunpack.c.l.b16 %v505
      %v523 = vunpack.c.l.b16 %v506
      %v524 = vunpack.c.l.b16 %v507
      %v525 = vunpack.c.l.b16 %v508
      %v526 = vunpack.c.l.b16 %v509
      %v527 = vpack.c.b16 %v522, %v521
      %v528 = vpack.c.b16 %v524, %v523
      %v529 = vpack.c.b16 %v526, %v525
      %vm530 = vcmask 1044480
      %v531 = vrot.slane %v527, 3
      %v532 = vrot.slane %v528, 3
      %v533 = vsel %vm530, %v531, %v532
      %v534 = vrot.slane %v529, 3
      %v535 = vsel %vm530, %v532, %v534
      %v540 = vunpack.c.l.b16 %v511
      %v541 = vunpack.c.l.b16 %v512
      %v542 = vunpack.c.l.b16 %v513
      %v543 = vunpack.c.l.b16 %v514
      %v544 = vpack.c.b16 %v541, %v540
      %v545 = vpack.c.b16 %v543, %v542
      %v549 = vsel %vm263, %v533, 0
      %v552 = vsel %vm263, %v535, 0
      %v555 = vsel %vm263, %v534, 0
      %557 = vmatprep.subr.bf16.mxu0 0
      %558 = vmatpush1.bf16.msra.mxu0 %v544
      %559 = vmatprep.subr.bf16.mxu0 0
      %560 = vmatpush1.bf16.msra.mxu0 %v545
      %561 = vmatprep.subr.bf16.mxu0 0
      %562 = vmatpush1.bf16.msra.mxu0 0
      %563 = vmatprep.subr.bf16.mxu0 0
      %564 = vmatpush1.bf16.msra.mxu0 0
      %565 = vmatprep.subr.bf16.mxu0 0
      %566 = vmatpush1.bf16.msra.mxu0 0
      %567 = vmatprep.subr.bf16.mxu0 0
      %568 = vmatpush1.bf16.msra.mxu0 0
      %569 = vmatprep.subr.bf16.mxu0 0
      %570 = vmatpush1.bf16.msra.mxu0 0
      %571 = vmatprep.subr.bf16.mxu0 0
      %572 = vmatpush1.bf16.msra.mxu0 0
      %573 = vmatprep.subr.bf16.mxu0 0
      %574 = vmatpush1.bf16.msra.mxu0 0
      %575 = vmatprep.subr.bf16.mxu0 0
      %576 = vmatpush1.bf16.msra.mxu0 0
      %577 = vmatprep.subr.bf16.mxu0 0
      %578 = vmatpush1.bf16.msra.mxu0 0
      %579 = vmatprep.subr.bf16.mxu0 0
      %580 = vmatpush1.bf16.msra.mxu0 0
      %581 = vmatprep.subr.bf16.mxu0 0
      %582 = vmatpush1.bf16.msra.mxu0 0
      %583 = vmatprep.subr.bf16.mxu0 0
      %584 = vmatpush1.bf16.msra.mxu0 0
      %585 = vmatprep.subr.bf16.mxu0 0
      %586 = vmatpush1.bf16.msra.mxu0 0
      %587 = vmatprep.subr.bf16.mxu0 0
      %588 = vmatpush1.bf16.msra.mxu0 0
      %589 = vmatprep.mubr.bf16.mxu0 0
      %590 = vmatmul.mubr.bf16.gmra.mrb[0].mxu0 %v549
      %v591 = vpop.f32.mrb[0].mxu0
      %v592 = vadd.f32 0.0, %v591
      %v593 = vpop.f32.mrb[0].mxu0
      %v594 = vpop.f32.mrb[0].mxu0
      %v595 = vadd.f32 0.0, %v594
      %v596 = vpop.f32.mrb[0].mxu0
      %597 = vmatprep.mubr.bf16.mxu0 0
      %598 = vmatmul.mubr.bf16.gmra.mrb[0].mxu0 %v552
      %v599 = vpop.f32.mrb[0].mxu0
      %v600 = vadd.f32 0.0, %v599
      %v601 = vpop.f32.mrb[0].mxu0
      %v602 = vpop.f32.mrb[0].mxu0
      %v603 = vadd.f32 0.0, %v602
      %v604 = vpop.f32.mrb[0].mxu0
      %605 = vmatprep.mubr.bf16.mxu0 0
      %606 = vmatmul.mubr.bf16.gmra.mrb[0].mxu0 %v555
      %v607 = vpop.f32.mrb[0].mxu0
      %v608 = vadd.f32 0.0, %v607
      %v609 = vpop.f32.mrb[0].mxu0
      %v610 = vpop.f32.mrb[0].mxu0
      %v611 = vpop.f32.mrb[0].mxu0
      %612 = vdwg.mxu0
      %v613 = vadd.f32 %v499, %v592
      %v614 = vadd.f32 %v500, %v595
      %v615 = vadd.f32 %v501, %v600
      %v616 = vadd.f32 %v502, %v603
      %v617 = vadd.f32 %v503, %v608
      %v618 = vld [vmem:[%s192 + $0x14] sm:$0x3]
      %s619 = scalar_lea.vmem %s1, 64
      %v620 = vld [vmem:[%s619] sm:$0xf]
      %v621 = vld [vmem:[%s619 + $0x4] sm:$0xf]
      %v622 = vld [vmem:[%s619 + $0x8] sm:$0xf]
      %v623 = vld [vmem:[%s619 + $0xc] sm:$0xf]
      %v625 = vunpack.c.l.b16 %v618
      %v626 = vpack.c.b16 %v625, %v525
      %vm627 = vsmask.f32 4352
      %v629 = vshrl.u32 %v527, 16
      %v631 = vrot.slane %v629, 3
      %v632 = vshll.u32 %v527, 16
      %v634 = vrot.slane %v632, 4
      %v635 = vor.u32 %v631, %v634
      %v637 = vshrl.u32 %v528, 16
      %v639 = vrot.slane %v637, 3
      %v640 = vshll.u32 %v528, 16
      %v642 = vrot.slane %v640, 4
      %v643 = vor.u32 %v639, %v642
      %v644 = vsel %vm627, %v635, %v643
      %v646 = vshrl.u32 %v626, 16
      %v648 = vrot.slane %v646, 3
      %v649 = vshll.u32 %v626, 16
      %v651 = vrot.slane %v649, 4
      %v652 = vor.u32 %v648, %v651
      %v653 = vsel %vm627, %v643, %v652
      %v658 = vunpack.c.l.b16 %v620
      %v659 = vunpack.c.l.b16 %v621
      %v660 = vunpack.c.l.b16 %v622
      %v661 = vunpack.c.l.b16 %v623
      %v662 = vpack.c.b16 %v659, %v658
      %v663 = vpack.c.b16 %v661, %v660
      %v667 = vsel %vm263, %v644, 0
      %v670 = vsel %vm263, %v653, 0
      %v673 = vsel %vm263, %v652, 0
      %675 = vmatprep.subr.bf16.mxu0 0
      %676 = vmatpush1.bf16.msra.mxu0 %v662
      %677 = vmatprep.subr.bf16.mxu0 0
      %678 = vmatpush1.bf16.msra.mxu0 %v663
      %679 = vmatprep.subr.bf16.mxu0 0
      %680 = vmatpush1.bf16.msra.mxu0 0
      %681 = vmatprep.subr.bf16.mxu0 0
      %682 = vmatpush1.bf16.msra.mxu0 0
      %683 = vmatprep.subr.bf16.mxu0 0
      %684 = vmatpush1.bf16.msra.mxu0 0
      %685 = vmatprep.subr.bf16.mxu0 0
      %686 = vmatpush1.bf16.msra.mxu0 0
      %687 = vmatprep.subr.bf16.mxu0 0
      %688 = vmatpush1.bf16.msra.mxu0 0
      %689 = vmatprep.subr.bf16.mxu0 0
      %690 = vmatpush1.bf16.msra.mxu0 0
      %691 = vmatprep.subr.bf16.mxu0 0
      %692 = vmatpush1.bf16.msra.mxu0 0
      %693 = vmatprep.subr.bf16.mxu0 0
      %694 = vmatpush1.bf16.msra.mxu0 0
      %695 = vmatprep.subr.bf16.mxu0 0
      %696 = vmatpush1.bf16.msra.mxu0 0
      %697 = vmatprep.subr.bf16.mxu0 0
      %698 = vmatpush1.bf16.msra.mxu0 0
      %699 = vmatprep.subr.bf16.mxu0 0
      %700 = vmatpush1.bf16.msra.mxu0 0
      %701 = vmatprep.subr.bf16.mxu0 0
      %702 = vmatpush1.bf16.msra.mxu0 0
      %703 = vmatprep.subr.bf16.mxu0 0
      %704 = vmatpush1.bf16.msra.mxu0 0
      %705 = vmatprep.subr.bf16.mxu0 0
      %706 = vmatpush1.bf16.msra.mxu0 0
      %707 = vmatprep.mubr.bf16.mxu0 0
      %708 = vmatmul.mubr.bf16.gmra.mrb[0].mxu0 %v667
      %v709 = vpop.f32.mrb[0].mxu0
      %v710 = vadd.f32 0.0, %v709
      %v711 = vpop.f32.mrb[0].mxu0
      %v712 = vpop.f32.mrb[0].mxu0
      %v713 = vadd.f32 0.0, %v712
      %v714 = vpop.f32.mrb[0].mxu0
      %715 = vmatprep.mubr.bf16.mxu0 0
      %716 = vmatmul.mubr.bf16.gmra.mrb[0].mxu0 %v670
      %v717 = vpop.f32.mrb[0].mxu0
      %v718 = vadd.f32 0.0, %v717
      %v719 = vpop.f32.mrb[0].mxu0
      %v720 = vpop.f32.mrb[0].mxu0
      %v721 = vadd.f32 0.0, %v720
      %v722 = vpop.f32.mrb[0].mxu0
      %723 = vmatprep.mubr.bf16.mxu0 0
      %724 = vmatmul.mubr.bf16.gmra.mrb[0].mxu0 %v673
      %v725 = vpop.f32.mrb[0].mxu0
      %v726 = vadd.f32 0.0, %v725
      %v727 = vpop.f32.mrb[0].mxu0
      %v728 = vpop.f32.mrb[0].mxu0
      %v729 = vpop.f32.mrb[0].mxu0
      %730 = vdwg.mxu0
      %v731 = vadd.f32 %v613, %v710
      %v732 = vadd.f32 %v614, %v713
      %v733 = vadd.f32 %v615, %v718
      %v734 = vadd.f32 %v616, %v721
      %v735 = vadd.f32 %v617, %v726
      %s736 = scalar_lea.vmem %s1, 80
      %v737 = vld [vmem:[%s736] sm:$0xf]
      %v738 = vld [vmem:[%s736 + $0x4] sm:$0xf]
      %v739 = vld [vmem:[%s736 + $0x8] sm:$0xf]
      %v740 = vld [vmem:[%s736 + $0xc] sm:$0xf]
      %v741 = vpack.c.b16 %v523, %v522
      %v742 = vpack.c.b16 %v525, %v524
      %v743 = vpack.c.b16 %v625, %v625
      %v748 = vunpack.c.l.b16 %v737
      %v749 = vunpack.c.l.b16 %v738
      %v750 = vunpack.c.l.b16 %v739
      %v751 = vunpack.c.l.b16 %v740
      %v752 = vpack.c.b16 %v749, %v748
      %v753 = vpack.c.b16 %v751, %v750
      %v757 = vsel %vm263, %v741, 0
      %v760 = vsel %vm263, %v742, 0
      %v763 = vsel %vm263, %v743, 0
      %765 = vmatprep.subr.bf16.mxu0 0
      %766 = vmatpush1.bf16.msra.mxu0 %v752
      %767 = vmatprep.subr.bf16.mxu0 0
      %768 = vmatpush1.bf16.msra.mxu0 %v753
      %769 = vmatprep.subr.bf16.mxu0 0
      %770 = vmatpush1.bf16.msra.mxu0 0
      %771 = vmatprep.subr.bf16.mxu0 0
      %772 = vmatpush1.bf16.msra.mxu0 0
      %773 = vmatprep.subr.bf16.mxu0 0
      %774 = vmatpush1.bf16.msra.mxu0 0
      %775 = vmatprep.subr.bf16.mxu0 0
      %776 = vmatpush1.bf16.msra.mxu0 0
      %777 = vmatprep.subr.bf16.mxu0 0
      %778 = vmatpush1.bf16.msra.mxu0 0
      %779 = vmatprep.subr.bf16.mxu0 0
      %780 = vmatpush1.bf16.msra.mxu0 0
      %781 = vmatprep.subr.bf16.mxu0 0
      %782 = vmatpush1.bf16.msra.mxu0 0
      %783 = vmatprep.subr.bf16.mxu0 0
      %784 = vmatpush1.bf16.msra.mxu0 0
      %785 = vmatprep.subr.bf16.mxu0 0
      %786 = vmatpush1.bf16.msra.mxu0 0
      %787 = vmatprep.subr.bf16.mxu0 0
      %788 = vmatpush1.bf16.msra.mxu0 0
      %789 = vmatprep.subr.bf16.mxu0 0
      %790 = vmatpush1.bf16.msra.mxu0 0
      %791 = vmatprep.subr.bf16.mxu0 0
      %792 = vmatpush1.bf16.msra.mxu0 0
      %793 = vmatprep.subr.bf16.mxu0 0
      %794 = vmatpush1.bf16.msra.mxu0 0
      %795 = vmatprep.subr.bf16.mxu0 0
      %796 = vmatpush1.bf16.msra.mxu0 0
      %797 = vmatprep.mubr.bf16.mxu0 0
      %798 = vmatmul.mubr.bf16.gmra.mrb[0].mxu0 %v757
      %v799 = vpop.f32.mrb[0].mxu0
      %v800 = vadd.f32 0.0, %v799
      %v801 = vpop.f32.mrb[0].mxu0
      %v802 = vpop.f32.mrb[0].mxu0
      %v803 = vadd.f32 0.0, %v802
      %v804 = vpop.f32.mrb[0].mxu0
      %805 = vmatprep.mubr.bf16.mxu0 0
      %806 = vmatmul.mubr.bf16.gmra.mrb[0].mxu0 %v760
      %v807 = vpop.f32.mrb[0].mxu0
      %v808 = vadd.f32 0.0, %v807
      %v809 = vpop.f32.mrb[0].mxu0
      %v810 = vpop.f32.mrb[0].mxu0
      %v811 = vadd.f32 0.0, %v810
      %v812 = vpop.f32.mrb[0].mxu0
      %813 = vmatprep.mubr.bf16.mxu0 0
      %814 = vmatmul.mubr.bf16.gmra.mrb[0].mxu0 %v763
      %v815 = vpop.f32.mrb[0].mxu0
      %v816 = vadd.f32 0.0, %v815
      %v817 = vpop.f32.mrb[0].mxu0
      %v818 = vpop.f32.mrb[0].mxu0
      %v819 = vpop.f32.mrb[0].mxu0
      %820 = vdwg.mxu0
      %v821 = vadd.f32 %v731, %v800
      %v822 = vadd.f32 %v732, %v803
      %v823 = vadd.f32 %v733, %v808
      %v824 = vadd.f32 %v734, %v811
      %v825 = vadd.f32 %v735, %v816
      %v826 = vld [vmem:[%s192 + $0x4] sm:$0xc]
      %v827 = vld [vmem:[%s192 + $0x14] sm:$0xf]
      %s828 = scalar_lea.vmem %s1, 96
      %v829 = vld [vmem:[%s828] sm:$0xf]
      %v830 = vld [vmem:[%s828 + $0x4] sm:$0xf]
      %v831 = vld [vmem:[%s828 + $0x8] sm:$0xf]
      %v832 = vld [vmem:[%s828 + $0xc] sm:$0xf]
      %v835 = vunpack.c.l.b16 %v826
      %v836 = vunpack.c.l.b16 %v827
      %v837 = vpack.c.b16 %v523, %v835
      %v838 = vpack.c.b16 %v836, %v836
      %vm839 = vcmask 1045504
      %v840 = vrot.slane %v837, 2
      %v841 = vrot.slane %v742, 2
      %v842 = vsel %vm839, %v840, %v841
      %v843 = vrot.slane %v838, 2
      %v844 = vsel %vm839, %v841, %v843
      %v849 = vunpack.c.l.b16 %v829
      %v850 = vunpack.c.l.b16 %v830
      %v851 = vunpack.c.l.b16 %v831
      %v852 = vunpack.c.l.b16 %v832
      %v853 = vpack.c.b16 %v850, %v849
      %v854 = vpack.c.b16 %v852, %v851
      %v858 = vsel %vm263, %v842, 0
      %v861 = vsel %vm263, %v844, 0
      %v864 = vsel %vm263, %v843, 0
      %866 = vmatprep.subr.bf16.mxu0 0
      %867 = vmatpush1.bf16.msra.mxu0 %v853
      %868 = vmatprep.subr.bf16.mxu0 0
      %869 = vmatpush1.bf16.msra.mxu0 %v854
      %870 = vmatprep.subr.bf16.mxu0 0
      %871 = vmatpush1.bf16.msra.mxu0 0
      %872 = vmatprep.subr.bf16.mxu0 0
      %873 = vmatpush1.bf16.msra.mxu0 0
      %874 = vmatprep.subr.bf16.mxu0 0
      %875 = vmatpush1.bf16.msra.mxu0 0
      %876 = vmatprep.subr.bf16.mxu0 0
      %877 = vmatpush1.bf16.msra.mxu0 0
      %878 = vmatprep.subr.bf16.mxu0 0
      %879 = vmatpush1.bf16.msra.mxu0 0
      %880 = vmatprep.subr.bf16.mxu0 0
      %881 = vmatpush1.bf16.msra.mxu0 0
      %882 = vmatprep.subr.bf16.mxu0 0
      %883 = vmatpush1.bf16.msra.mxu0 0
      %884 = vmatprep.subr.bf16.mxu0 0
      %885 = vmatpush1.bf16.msra.mxu0 0
      %886 = vmatprep.subr.bf16.mxu0 0
      %887 = vmatpush1.bf16.msra.mxu0 0
      %888 = vmatprep.subr.bf16.mxu0 0
      %889 = vmatpush1.bf16.msra.mxu0 0
      %890 = vmatprep.subr.bf16.mxu0 0
      %891 = vmatpush1.bf16.msra.mxu0 0
      %892 = vmatprep.subr.bf16.mxu0 0
      %893 = vmatpush1.bf16.msra.mxu0 0
      %894 = vmatprep.subr.bf16.mxu0 0
      %895 = vmatpush1.bf16.msra.mxu0 0
      %896 = vmatprep.subr.bf16.mxu0 0
      %897 = vmatpush1.bf16.msra.mxu0 0
      %898 = vmatprep.mubr.bf16.mxu0 0
      %899 = vmatmul.mubr.bf16.gmra.mrb[0].mxu0 %v858
      %v900 = vpop.f32.mrb[0].mxu0
      %v901 = vadd.f32 0.0, %v900
      %v902 = vpop.f32.mrb[0].mxu0
      %v903 = vpop.f32.mrb[0].mxu0
      %v904 = vadd.f32 0.0, %v903
      %v905 = vpop.f32.mrb[0].mxu0
      %906 = vmatprep.mubr.bf16.mxu0 0
      %907 = vmatmul.mubr.bf16.gmra.mrb[0].mxu0 %v861
      %v908 = vpop.f32.mrb[0].mxu0
      %v909 = vadd.f32 0.0, %v908
      %v910 = vpop.f32.mrb[0].mxu0
      %v911 = vpop.f32.mrb[0].mxu0
      %v912 = vadd.f32 0.0, %v911
      %v913 = vpop.f32.mrb[0].mxu0
      %914 = vmatprep.mubr.bf16.mxu0 0
      %915 = vmatmul.mubr.bf16.gmra.mrb[0].mxu0 %v864
      %v916 = vpop.f32.mrb[0].mxu0
      %v917 = vadd.f32 0.0, %v916
      %v918 = vpop.f32.mrb[0].mxu0
      %v919 = vpop.f32.mrb[0].mxu0
      %v920 = vpop.f32.mrb[0].mxu0
      %921 = vdwg.mxu0
      %v922 = vadd.f32 %v821, %v901
      %v923 = vadd.f32 %v822, %v904
      %v924 = vadd.f32 %v823, %v909
      %v925 = vadd.f32 %v824, %v912
      %v926 = vadd.f32 %v825, %v917
      %v927 = vld [vmem:[%s192 + $0x4] sm:$0xc]
      %v928 = vld [vmem:[%s192 + $0x8] sm:$0xf]
      %v929 = vld [vmem:[%s192 + $0xc] sm:$0xf]
      %v930 = vld [vmem:[%s192 + $0x10] sm:$0xf]
      %v931 = vld [vmem:[%s192 + $0x14] sm:$0xf]
      %v932 = vld [vmem:[%s192 + $0x18] sm:$0x1]
      %s933 = scalar_lea.vmem %s1, 112
      %v934 = vld [vmem:[%s933] sm:$0xf]
      %v935 = vld [vmem:[%s933 + $0x4] sm:$0xf]
      %v936 = vld [vmem:[%s933 + $0x8] sm:$0xf]
      %v937 = vld [vmem:[%s933 + $0xc] sm:$0xf]
      %v944 = vunpack.c.l.b16 %v927
      %v945 = vunpack.c.l.b16 %v928
      %v946 = vunpack.c.l.b16 %v929
      %v947 = vunpack.c.l.b16 %v930
      %v948 = vunpack.c.l.b16 %v931
      %v949 = vunpack.c.l.b16 %v932
      %v950 = vpack.c.b16 %v945, %v944
      %v951 = vpack.c.b16 %v947, %v946
      %v952 = vpack.c.b16 %v949, %v948
      %vm953 = vsmask.f32 5376
      %v955 = vshrl.u32 %v950, 16
      %v957 = vrot.slane %v955, 2
      %v958 = vshll.u32 %v950, 16
      %v960 = vrot.slane %v958, 3
      %v961 = vor.u32 %v957, %v960
      %v963 = vshrl.u32 %v951, 16
      %v965 = vrot.slane %v963, 2
      %v966 = vshll.u32 %v951, 16
      %v968 = vrot.slane %v966, 3
      %v969 = vor.u32 %v965, %v968
      %v970 = vsel %vm953, %v961, %v969
      %v972 = vshrl.u32 %v952, 16
      %v974 = vrot.slane %v972, 2
      %v975 = vshll.u32 %v952, 16
      %v977 = vrot.slane %v975, 3
      %v978 = vor.u32 %v974, %v977
      %v979 = vsel %vm953, %v969, %v978
      %v984 = vunpack.c.l.b16 %v934
      %v985 = vunpack.c.l.b16 %v935
      %v986 = vunpack.c.l.b16 %v936
      %v987 = vunpack.c.l.b16 %v937
      %v988 = vpack.c.b16 %v985, %v984
      %v989 = vpack.c.b16 %v987, %v986
      %v993 = vsel %vm263, %v970, 0
      %v996 = vsel %vm263, %v979, 0
      %v999 = vsel %vm263, %v978, 0
      %1001 = vmatprep.subr.bf16.mxu0 0
      %1002 = vmatpush1.bf16.msra.mxu0 %v988
      %1003 = vmatprep.subr.bf16.mxu0 0
      %1004 = vmatpush1.bf16.msra.mxu0 %v989
      %1005 = vmatprep.subr.bf16.mxu0 0
      %1006 = vmatpush1.bf16.msra.mxu0 0
      %1007 = vmatprep.subr.bf16.mxu0 0
      %1008 = vmatpush1.bf16.msra.mxu0 0
      %1009 = vmatprep.subr.bf16.mxu0 0
      %1010 = vmatpush1.bf16.msra.mxu0 0
      %1011 = vmatprep.subr.bf16.mxu0 0
      %1012 = vmatpush1.bf16.msra.mxu0 0
      %1013 = vmatprep.subr.bf16.mxu0 0
      %1014 = vmatpush1.bf16.msra.mxu0 0
      %1015 = vmatprep.subr.bf16.mxu0 0
      %1016 = vmatpush1.bf16.msra.mxu0 0
      %1017 = vmatprep.subr.bf16.mxu0 0
      %1018 = vmatpush1.bf16.msra.mxu0 0
      %1019 = vmatprep.subr.bf16.mxu0 0
      %1020 = vmatpush1.bf16.msra.mxu0 0
      %1021 = vmatprep.subr.bf16.mxu0 0
      %1022 = vmatpush1.bf16.msra.mxu0 0
      %1023 = vmatprep.subr.bf16.mxu0 0
      %1024 = vmatpush1.bf16.msra.mxu0 0
      %1025 = vmatprep.subr.bf16.mxu0 0
      %1026 = vmatpush1.bf16.msra.mxu0 0
      %1027 = vmatprep.subr.bf16.mxu0 0
      %1028 = vmatpush1.bf16.msra.mxu0 0
      %1029 = vmatprep.subr.bf16.mxu0 0
      %1030 = vmatpush1.bf16.msra.mxu0 0
      %1031 = vmatprep.subr.bf16.mxu0 0
      %1032 = vmatpush1.bf16.msra.mxu0 0
      %1033 = vmatprep.mubr.bf16.mxu0 0
      %1034 = vmatmul.mubr.bf16.gmra.mrb[0].mxu0 %v993
      %v1035 = vpop.f32.mrb[0].mxu0
      %v1036 = vadd.f32 0.0, %v1035
      %v1037 = vpop.f32.mrb[0].mxu0
      %v1038 = vpop.f32.mrb[0].mxu0
      %v1039 = vadd.f32 0.0, %v1038
      %v1040 = vpop.f32.mrb[0].mxu0
      %1041 = vmatprep.mubr.bf16.mxu0 0
      %1042 = vmatmul.mubr.bf16.gmra.mrb[0].mxu0 %v996
      %v1043 = vpop.f32.mrb[0].mxu0
      %v1044 = vadd.f32 0.0, %v1043
      %v1045 = vpop.f32.mrb[0].mxu0
      %v1046 = vpop.f32.mrb[0].mxu0
      %v1047 = vadd.f32 0.0, %v1046
      %v1048 = vpop.f32.mrb[0].mxu0
      %1049 = vmatprep.mubr.bf16.mxu0 0
      %1050 = vmatmul.mubr.bf16.gmra.mrb[0].mxu0 %v999
      %v1051 = vpop.f32.mrb[0].mxu0
      %v1052 = vadd.f32 0.0, %v1051
      %v1053 = vpop.f32.mrb[0].mxu0
      %v1054 = vpop.f32.mrb[0].mxu0
      %v1055 = vpop.f32.mrb[0].mxu0
      %1056 = vdwg.mxu0
      %v1057 = vadd.f32 %v922, %v1036
      %v1058 = vadd.f32 %v923, %v1039
      %v1059 = vadd.f32 %v924, %v1044
      %v1060 = vadd.f32 %v925, %v1047
      %v1061 = vadd.f32 %v926, %v1052
      %v1062 = vld [vmem:[%s192 + $0x4] sm:$0x8]
      %s1063 = scalar_lea.vmem %s1, 128
      %v1064 = vld [vmem:[%s1063] sm:$0xf]
      %v1065 = vld [vmem:[%s1063 + $0x4] sm:$0xf]
      %v1066 = vld [vmem:[%s1063 + $0x8] sm:$0xf]
      %v1067 = vld [vmem:[%s1063 + $0xc] sm:$0xf]
      %v1069 = vunpack.c.l.b16 %v1062
      %v1070 = vpack.c.b16 %v945, %v1069
      %v1071 = vrot.slane %v1070, 3
      %v1072 = vrot.slane %v951, 3
      %v1073 = vsel %vm530, %v1071, %v1072
      %v1074 = vrot.slane %v952, 3
      %v1075 = vsel %vm530, %v1072, %v1074
      %v1080 = vunpack.c.l.b16 %v1064
      %v1081 = vunpack.c.l.b16 %v1065
      %v1082 = vunpack.c.l.b16 %v1066
      %v1083 = vunpack.c.l.b16 %v1067
      %v1084 = vpack.c.b16 %v1081, %v1080
      %v1085 = vpack.c.b16 %v1083, %v1082
      %v1089 = vsel %vm263, %v1073, 0
      %v1092 = vsel %vm263, %v1075, 0
      %v1095 = vsel %vm263, %v1074, 0
      %1097 = vmatprep.subr.bf16.mxu0 0
      %1098 = vmatpush1.bf16.msra.mxu0 %v1084
      %1099 = vmatprep.subr.bf16.mxu0 0
      %1100 = vmatpush1.bf16.msra.mxu0 %v1085
      %1101 = vmatprep.subr.bf16.mxu0 0
      %1102 = vmatpush1.bf16.msra.mxu0 0
      %1103 = vmatprep.subr.bf16.mxu0 0
      %1104 = vmatpush1.bf16.msra.mxu0 0
      %1105 = vmatprep.subr.bf16.mxu0 0
      %1106 = vmatpush1.bf16.msra.mxu0 0
      %1107 = vmatprep.subr.bf16.mxu0 0
      %1108 = vmatpush1.bf16.msra.mxu0 0
      %1109 = vmatprep.subr.bf16.mxu0 0
      %1110 = vmatpush1.bf16.msra.mxu0 0
      %1111 = vmatprep.subr.bf16.mxu0 0
      %1112 = vmatpush1.bf16.msra.mxu0 0
      %1113 = vmatprep.subr.bf16.mxu0 0
      %1114 = vmatpush1.bf16.msra.mxu0 0
      %1115 = vmatprep.subr.bf16.mxu0 0
      %1116 = vmatpush1.bf16.msra.mxu0 0
      %1117 = vmatprep.subr.bf16.mxu0 0
      %1118 = vmatpush1.bf16.msra.mxu0 0
      %1119 = vmatprep.subr.bf16.mxu0 0
      %1120 = vmatpush1.bf16.msra.mxu0 0
      %1121 = vmatprep.subr.bf16.mxu0 0
      %1122 = vmatpush1.bf16.msra.mxu0 0
      %1123 = vmatprep.subr.bf16.mxu0 0
      %1124 = vmatpush1.bf16.msra.mxu0 0
      %1125 = vmatprep.subr.bf16.mxu0 0
      %1126 = vmatpush1.bf16.msra.mxu0 0
      %1127 = vmatprep.subr.bf16.mxu0 0
      %1128 = vmatpush1.bf16.msra.mxu0 0
      %1129 = vmatprep.mubr.bf16.mxu0 0
      %1130 = vmatmul.mubr.bf16.gmra.mrb[0].mxu0 %v1089
      %v1131 = vpop.f32.mrb[0].mxu0
      %v1132 = vadd.f32 0.0, %v1131
      %v1133 = vpop.f32.mrb[0].mxu0
      %v1134 = vpop.f32.mrb[0].mxu0
      %v1135 = vadd.f32 0.0, %v1134
      %v1136 = vpop.f32.mrb[0].mxu0
      %1137 = vmatprep.mubr.bf16.mxu0 0
      %1138 = vmatmul.mubr.bf16.gmra.mrb[0].mxu0 %v1092
      %v1139 = vpop.f32.mrb[0].mxu0
      %v1140 = vadd.f32 0.0, %v1139
      %v1141 = vpop.f32.mrb[0].mxu0
      %v1142 = vpop.f32.mrb[0].mxu0
      %v1143 = vadd.f32 0.0, %v1142
      %v1144 = vpop.f32.mrb[0].mxu0
      %1145 = vmatprep.mubr.bf16.mxu0 0
      %1146 = vmatmul.mubr.bf16.gmra.mrb[0].mxu0 %v1095
      %v1147 = vpop.f32.mrb[0].mxu0
      %v1148 = vadd.f32 0.0, %v1147
      %v1149 = vpop.f32.mrb[0].mxu0
      %v1150 = vpop.f32.mrb[0].mxu0
      %v1151 = vpop.f32.mrb[0].mxu0
      %1152 = vdwg.mxu0
      %v1153 = vadd.f32 %v1057, %v1132
      %v1154 = vadd.f32 %v1058, %v1135
      %v1155 = vadd.f32 %v1059, %v1140
      %v1156 = vadd.f32 %v1060, %v1143
      %v1157 = vadd.f32 %v1061, %v1148
      %v1158 = vld [vmem:[%s2] sm:$0x1]
      %v1160 = vlaneseq
      %v1161 = vshrl.u32 %v1160, 7
      %v1162 = vsub.s32 0, %v1161
      %v1163 = vrot.slane %v1158, %v1162
      %v1165 = vadd.f32 %v1153, %v1163
      %v1166 = vadd.f32 %v1154, %v1163
      %v1167 = vadd.f32 %v1155, %v1163
      %v1168 = vadd.f32 %v1156, %v1163
      %v1169 = vadd.f32 %v1157, %v1163
      %vm1170 = vcmp.gt.f32.partialorder %v1165, 0.0
      %vm1171 = vcmp.gt.f32.partialorder %v1166, 0.0
      %vm1172 = vcmp.gt.f32.partialorder %v1167, 0.0
      %vm1173 = vcmp.gt.f32.partialorder %v1168, 0.0
      %vm1174 = vcmp.gt.f32.partialorder %v1169, 0.0
      %v1175 = vmul.f32 %v1165, 0.2
      %v1176 = vmul.f32 %v1166, 0.2
      %v1177 = vmul.f32 %v1167, 0.2
      %v1178 = vmul.f32 %v1168, 0.2
      %v1179 = vmul.f32 %v1169, 0.2
      %v1180 = vsel %vm1170, %v1165, %v1175
      %v1181 = vsel %vm1171, %v1166, %v1176
      %v1182 = vsel %vm1172, %v1167, %v1177
      %v1183 = vsel %vm1173, %v1168, %v1178
      %v1184 = vsel %vm1174, %v1169, %v1179
      %v1185 = vmul.f32 %v1180, %v1180
      %v1186 = vmul.f32 %v1181, %v1181
      %v1187 = vmul.f32 %v1182, %v1182
      %v1188 = vmul.f32 %v1183, %v1183
      %v1189 = vmul.f32 %v1184, %v1184
      %v1190 = vsel %vm263, %v1185, 0.0
      %1191 = vadd.xlane.f32.xlu0 %v1190
      %v1192 = vpop.xlane.xlu0 %1191
      %v1193 = vsel %vm263, %v1186, 0.0
      %1194 = vadd.xlane.f32.xlu0 %v1193
      %v1195 = vpop.xlane.xlu0 %1194
      %v1196 = vsel %vm263, %v1187, 0.0
      %1197 = vadd.xlane.f32.xlu0 %v1196
      %v1198 = vpop.xlane.xlu0 %1197
      %v1199 = vsel %vm263, %v1188, 0.0
      %1200 = vadd.xlane.f32.xlu0 %v1199
      %v1201 = vpop.xlane.xlu0 %1200
      %vm1202 = vcmask 257024
      %v1203 = vsel %vm1202, %v1189, 0.0
      %1204 = vadd.xlane.f32.xlu0 %v1203
      %v1205 = vpop.xlane.xlu0 %1204
      %v1206 = vrcp.pop 32.0
      %v1207 = vmul.f32 %v1192, %v1206
      %v1208 = vmul.f32 %v1195, %v1206
      %v1209 = vmul.f32 %v1198, %v1206
      %v1210 = vmul.f32 %v1201, %v1206
      %v1211 = vmul.f32 %v1205, %v1206
      %v1212 = vadd.f32 %v1207, 1e-08
      %v1213 = vadd.f32 %v1208, 1e-08
      %v1214 = vadd.f32 %v1209, 1e-08
      %v1215 = vadd.f32 %v1210, 1e-08
      %v1216 = vadd.f32 %v1211, 1e-08
      %v1217 = vrsqrt.pop %v1212
      %v1218 = vrsqrt.pop %v1213
      %v1219 = vrsqrt.pop %v1214
      %v1220 = vrsqrt.pop %v1215
      %v1221 = vrsqrt.pop %v1216
      %v1222 = vmul.f32 %v1180, %v1217
      %v1223 = vmul.f32 %v1181, %v1218
      %v1224 = vmul.f32 %v1182, %v1219
      %v1225 = vmul.f32 %v1183, %v1220
      %v1226 = vmul.f32 %v1184, %v1221
      %v1227 = vld [vmem:[%s3] sm:$0xff]
      %v1228 = vld [vmem:[%s3 + $0x8] sm:$0xff]
      %v1229 = vld [vmem:[%s3 + $0x10] sm:$0xff]
      %v1230 = vld [vmem:[%s3 + $0x18] sm:$0xff]
      %v1231 = vld [vmem:[%s3 + $0x20] sm:$0xf]
      %1233 = vset.pattern.permute.xlu0 0
      %1234 = vperm.xlu0 %1233, %v1227
      %v1235 = vpop.permute.xlu0 %1234
      %1238 = vset.pattern.permute.xlu0 0
      %1239 = vperm.xlu0 %1238, %v1228
      %v1240 = vpop.permute.xlu0 %1239
      %1243 = vset.pattern.permute.xlu0 0
      %1244 = vperm.xlu0 %1243, %v1229
      %v1245 = vpop.permute.xlu0 %1244
      %1248 = vset.pattern.permute.xlu0 0
      %1249 = vperm.xlu0 %1248, %v1230
      %v1250 = vpop.permute.xlu0 %1249
      %1253 = vset.pattern.permute.xlu0 0
      %1254 = vperm.xlu0 %1253, %v1231
      %v1255 = vpop.permute.xlu0 %1254
      %v1257 = vmul.f32 %v1222, %v1235
      %v1258 = vmul.f32 %v1223, %v1240
      %v1259 = vmul.f32 %v1224, %v1245
      %v1260 = vmul.f32 %v1225, %v1250
      %v1261 = vmul.f32 %v1226, %v1255
      %vm1262 = vcmask 257024
      %vm1263 = vsmask.f32 3328
      %vm1264 = vmand %vm1262, %vm1263
      %v1265 = vld [vmem:[%s197] sm:$0xf]
      %v1266 = vsel %vm1264, 0, %v1265
      %1267 = vst [vmem:[%s197] sm:$0xf] %v1266
      %vm1268 = vcmask 257025
      %vm1269 = vsmask.f32 7942
      %vm1270 = vmand %vm1268, %vm1269
      %v1271 = vld [vmem:[%s197 + $0x14] sm:$0xe]
      %v1272 = vsel %vm1270, 0, %v1271
      %1273 = vst [vmem:[%s197 + $0x14] sm:$0xe] %v1272
      %vm1274 = vcmask 253952
      %1275 = vst.msk [vmem:[%s197 + $0x18] sm:$0x1] %vm1274, 0
      %v1276 = vpack.c.bf16 %v1258, %v1257
      %v1277 = vpack.c.bf16 %v1260, %v1259
      %v1278 = vpack.c.bf16 %v1261, %v1261
      %v1282 = vunpack.c.l.b16 %v1276
      %v1283 = vunpack.c.h.b16 %v1276
      %v1284 = vunpack.c.l.b16 %v1277
      %v1285 = vunpack.c.h.b16 %v1277
      %v1286 = vunpack.c.l.b16 %v1278
      %v1287 = vpack.c.b16 %v1282, %v1282
      %v1288 = vpack.c.b16 %v1283, %v1283
      %v1289 = vpack.c.b16 %v1284, %v1284
      %v1290 = vpack.c.b16 %v1285, %v1285
      %v1291 = vpack.c.b16 %v1286, %v1286
      %vm1292 = vsmask.f32 7440
      %vm1293 = vmor %vm1263, %vm1292
      %v1295 = vshll.u32 %v1287, 16
      %v1297 = vrot.slane %v1295, 5
      %v1298 = vshrl.u32 %v1287, 16
      %v1300 = vrot.slane %v1298, 4
      %v1301 = vor.u32 %v1300, %v1297
      %v1302 = vrot.slane %v1301, 4
      %v1304 = vshll.u32 %v1288, 16
      %v1306 = vrot.slane %v1304, 5
      %v1307 = vsel %vm1293, %v1302, %v1306
      %v1308 = vshrl.u32 %v1288, 16
      %v1310 = vrot.slane %v1308, 4
      %v1311 = vor.u32 %v1310, %v1306
      %v1312 = vrot.slane %v1311, 4
      %v1314 = vshll.u32 %v1289, 16
      %v1316 = vrot.slane %v1314, 5
      %v1317 = vsel %vm1293, %v1312, %v1316
      %v1318 = vshrl.u32 %v1289, 16
      %v1320 = vrot.slane %v1318, 4
      %v1321 = vor.u32 %v1320, %v1316
      %v1322 = vrot.slane %v1321, 4
      %v1324 = vshll.u32 %v1290, 16
      %v1326 = vrot.slane %v1324, 5
      %v1327 = vsel %vm1293, %v1322, %v1326
      %v1328 = vshrl.u32 %v1290, 16
      %v1330 = vrot.slane %v1328, 4
      %v1331 = vor.u32 %v1330, %v1326
      %v1332 = vrot.slane %v1331, 4
      %v1334 = vshll.u32 %v1291, 16
      %v1336 = vrot.slane %v1334, 5
      %v1337 = vsel %vm1293, %v1332, %v1336
      %v1338 = vshrl.u32 %v1291, 16
      %v1340 = vrot.slane %v1338, 4
      %v1341 = vor.u32 %v1340, %v1336
      %v1342 = vrot.slane %v1341, 4
      %vm1349 = vcmask 257027
      %vm1350 = vsmask.f32 7950
      %vm1351 = vmand %vm1349, %vm1350
      %v1352 = vld [vmem:[%s197] sm:$0x8]
      %v1353 = vsel %vm1351, %v1297, %v1352
      %1354 = vst [vmem:[%s197] sm:$0x8] %v1353
      %1355 = vst.msk [vmem:[%s197 + $0x4] sm:$0xf] %vm1202, %v1307
      %1356 = vst.msk [vmem:[%s197 + $0x8] sm:$0xf] %vm1202, %v1317
      %1357 = vst.msk [vmem:[%s197 + $0xc] sm:$0xf] %vm1202, %v1327
      %1358 = vst.msk [vmem:[%s197 + $0x10] sm:$0xf] %vm1202, %v1337
      %vm1359 = vcmask 254976
      %vm1360 = vsmask.f32 1280
      %vm1361 = vmand %vm1359, %vm1360
      %v1362 = vld [vmem:[%s197 + $0x14] sm:$0x3]
      %v1363 = vsel %vm1361, %v1342, %v1362
      %1364 = vst [vmem:[%s197 + $0x14] sm:$0x3] %v1363
      %p1365 = scmp.lt.s32.totalorder %s15, 1
      %s1366 = scalar_select %p1365, %s15, 1
      %s1367 = smul.addr %s1366, 7
      %s1368 = smul.addr %s1367, 4
      %s1369 = scalar_lea.vmem %s4, %s1368
      // Predicated region
      $region37: #{generator_forward.8} parent=35 // pred_check
        %p1370 = pneg %p122
      $region38: #{generator_forward.8} parent=35 // pred_check_branch
        %1372 = sbr.rel (%p1370) target = $region40
      $region39: #{generator_forward.8} parent=35 // pred_region
        _
      $region40: #{generator_forward.8} parent=35 // pred_fallthru
        _
    $region36: #{generator_forward.8} parent=5 // pred_fallthru
      _
    %p1373 = scmp.le.s32.totalorder 2, %s10
    // Predicated region
    $region41: #{generator_forward.8} parent=5 // pred_check
      %p1374 = pneg %p1373
    $region42: #{generator_forward.8} parent=5 // pred_check_branch
      %1376 = sbr.rel (%p1374) target = $region44
    $region43: #{generator_forward.8} parent=5 // pred_region
      %s1377 = ssub.s32 %s10, 2
      // Predicated region
      $region45: #{generator_forward.8} parent=43 // pred_check
        %p1378 = pneg %p128
      $region46: #{generator_forward.8} parent=43 // pred_check_branch
        %1380 = sbr.rel (%p1378) target = $region48
      $region47: #{generator_forward.8} parent=43 // pred_region
        %p1381 = scmp.lt.s32.totalorder %s16, 1
        %s1382 = scalar_select %p1381, %s16, 1
        %s1383 = smul.addr %s1382, 7
        %s1384 = smul.addr %s1383, 4
        %s1385 = scalar_lea.vmem %s4, %s1384
      $region48: #{generator_forward.8} parent=43 // pred_fallthru
        _
    $region44: #{generator_forward.8} parent=5 // pred_fallthru
      _
  $region6: #{generator_forward.8} parent=0 // loop_footer
    %s14 = sadd.s32 1, %s10
  $region7: #{generator_forward.8} parent=0 // loop_footer_branch
    %9 = sbr.rel target = $region3
  $region8: #{generator_forward.8} parent=0 // loop_exit
    _

// kernel: generator_forward.9
$region0: #{generator_forward.9}
  #allocation0 [shape = 'u32[]', space=smem, size = 0x4, offset = 0x4, fixed_abs, tag = 'smem constant byte address 0x4 - core index']
  #allocation1 [shape = 'u32[144,128]{1,0:T(1,128)}', space=vmem, size = 0x12000, scoped, tag = 'internal scratch']
  %s0 = inlined_call_operand.vmem [shape: bf16[2,122,32], index: 0, kind: input, shape index: {}]
  %s1 = inlined_call_operand.vmem [shape: bf16[9,32,32], index: 1, kind: input, shape index: {}]
  %s2 = inlined_call_operand.vmem [shape: f32[1,32], index: 2, kind: input, shape index: {}]
  %s3 = inlined_call_operand.vmem [shape: f32[100,1], index: 3, kind: input, shape index: {}]
  %s4 = inlined_call_operand.vmem [shape: bf16[2,122,32], index: 4, kind: output, shape index: {}]
  %s5 = sld [smem:[#allocation0]]
  $region49: #{generator_forward.9} parent=0
    _
  %s7 = ssub.s32 1, %s5
  %s8 = scalar_select 0, %s7, %s5
  loop: start=0, step=1, limit=4
  $region2: #{generator_forward.9} parent=0 // loop_pre_header
    _
  $region3: #{generator_forward.9} parent=0 // loop_header
    %s10 = sphi 0, %s14
    %p11 = scmp.ge.s32.totalorder %s10, 4
    %s20 = sphi 0, %s22
    %s23 = sphi 0, %s20
    %s24 = sphi 0, %s23
    %s40 = sphi 0, %s24
    %s44 = sphi 0, %s44
    %s46 = sphi 0, %s44
    %s47 = sphi 0, %s46
    %s61 = sphi 0, %s47
    %s65 = sphi 0, %s65
    %s67 = sphi 0, %s65
    %s68 = sphi 0, %s67
    %s82 = sphi 0, %s68
    %s86 = sphi 0, %s86
    %s88 = sphi 0, %s86
    %s89 = sphi 0, %s88
    %s103 = sphi 0, %s89
    %s109 = sphi 0, %s111
    %s112 = sphi 0, %s109
    %s113 = sphi 0, %s112
    %s129 = sphi 0, %s113
  $region4: #{generator_forward.9} parent=0 // loop_header_branch
    %13 = sbr.rel (%p11) target = $region8
  $region5: #{generator_forward.9} parent=0 // loop_body
    %s15 = ssub.s32 %s10, 1
    %s16 = ssub.s32 %s10, 2
    %s17 = sadd.s32 %s10, 1
    %s18 = ssub.s32 %s10, %s17
    %p19 = scmp.eq.s32.totalorder %s18, 0
    %s21 = sadd.s32 %s20, 1
    %s22 = scalar_select %p19, %s20, %s21
    %p25 = pneg %p19
    %p26 = scmp.eq.s32.totalorder %s10, 1
    %p27 = por %p25, %p26
    %p28 = scmp.ne.s32.totalorder %s20, %s23
    %p29 = scmp.eq.s32.totalorder %s10, 0
    %p30 = por %p28, %p29
    %p31 = scmp.ne.s32.totalorder %s20, %s23
    %p32 = scmp.eq.s32.totalorder %s15, 1
    %p33 = por %p31, %p32
    %p34 = scmp.ne.s32.totalorder %s23, %s24
    %p35 = scmp.eq.s32.totalorder %s15, 0
    %p36 = por %p34, %p35
    %p37 = scmp.ne.s32.totalorder %s23, %s24
    %p38 = scmp.eq.s32.totalorder %s16, 1
    %p39 = por %p37, %p38
    %p41 = scmp.ne.s32.totalorder %s24, %s40
    %p42 = scmp.eq.s32.totalorder %s16, 0
    %p43 = por %p41, %p42
    %s45 = sadd.s32 %s44, 1
    %p48 = scmp.eq.s32.totalorder %s10, 1
    %p49 = scmp.ne.s32.totalorder %s44, %s46
    %p50 = scmp.eq.s32.totalorder %s10, 0
    %p51 = por %p49, %p50
    %p52 = scmp.ne.s32.totalorder %s44, %s46
    %p53 = scmp.eq.s32.totalorder %s15, 1
    %p54 = por %p52, %p53
    %p55 = scmp.ne.s32.totalorder %s46, %s47
    %p56 = scmp.eq.s32.totalorder %s15, 0
    %p57 = por %p55, %p56
    %p58 = scmp.ne.s32.totalorder %s46, %s47
    %p59 = scmp.eq.s32.totalorder %s16, 1
    %p60 = por %p58, %p59
    %p62 = scmp.ne.s32.totalorder %s47, %s61
    %p63 = scmp.eq.s32.totalorder %s16, 0
    %p64 = por %p62, %p63
    %s66 = sadd.s32 %s65, 1
    %p69 = scmp.eq.s32.totalorder %s10, 1
    %p70 = scmp.ne.s32.totalorder %s65, %s67
    %p71 = scmp.eq.s32.totalorder %s10, 0
    %p72 = por %p70, %p71
    %p73 = scmp.ne.s32.totalorder %s65, %s67
    %p74 = scmp.eq.s32.totalorder %s15, 1
    %p75 = por %p73, %p74
    %p76 = scmp.ne.s32.totalorder %s67, %s68
    %p77 = scmp.eq.s32.totalorder %s15, 0
    %p78 = por %p76, %p77
    %p79 = scmp.ne.s32.totalorder %s67, %s68
    %p80 = scmp.eq.s32.totalorder %s16, 1
    %p81 = por %p79, %p80
    %p83 = scmp.ne.s32.totalorder %s68, %s82
    %p84 = scmp.eq.s32.totalorder %s16, 0
    %p85 = por %p83, %p84
    %s87 = sadd.s32 %s86, 1
    %p90 = scmp.eq.s32.totalorder %s10, 1
    %p91 = scmp.ne.s32.totalorder %s86, %s88
    %p92 = scmp.eq.s32.totalorder %s10, 0
    %p93 = por %p91, %p92
    %p94 = scmp.ne.s32.totalorder %s86, %s88
    %p95 = scmp.eq.s32.totalorder %s15, 1
    %p96 = por %p94, %p95
    %p97 = scmp.ne.s32.totalorder %s88, %s89
    %p98 = scmp.eq.s32.totalorder %s15, 0
    %p99 = por %p97, %p98
    %p100 = scmp.ne.s32.totalorder %s88, %s89
    %p101 = scmp.eq.s32.totalorder %s16, 1
    %p102 = por %p100, %p101
    %p104 = scmp.ne.s32.totalorder %s89, %s103
    %p105 = scmp.eq.s32.totalorder %s16, 0
    %p106 = por %p104, %p105
    %s107 = ssub.s32 %s10, %s17
    %p108 = scmp.eq.s32.totalorder %s107, 0
    %s110 = sadd.s32 %s109, 1
    %s111 = scalar_select %p108, %s109, %s110
    %p114 = pneg %p108
    %p115 = scmp.eq.s32.totalorder %s10, 1
    %p116 = por %p114, %p115
    %p117 = scmp.ne.s32.totalorder %s109, %s112
    %p118 = scmp.eq.s32.totalorder %s10, 0
    %p119 = por %p117, %p118
    %p120 = scmp.ne.s32.totalorder %s109, %s112
    %p121 = scmp.eq.s32.totalorder %s15, 1
    %p122 = por %p120, %p121
    %p123 = scmp.ne.s32.totalorder %s112, %s113
    %p124 = scmp.eq.s32.totalorder %s15, 0
    %p125 = por %p123, %p124
    %p126 = scmp.ne.s32.totalorder %s112, %s113
    %p127 = scmp.eq.s32.totalorder %s16, 1
    %p128 = por %p126, %p127
    %p130 = scmp.ne.s32.totalorder %s113, %s129
    %p131 = scmp.eq.s32.totalorder %s16, 0
    %p132 = por %p130, %p131
    %p133 = scmp.le.s32.totalorder 1, %s10
    %p134 = scmp.lt.s32.totalorder %s10, 3
    %p135 = pnand %p133, %p134
    %p136 = pneg %p135
    // Predicated region
    $region9: #{generator_forward.9} parent=5 // pred_check
      _
    $region10: #{generator_forward.9} parent=5 // pred_check_branch
      %138 = sbr.rel (%p135) target = $region12
    $region11: #{generator_forward.9} parent=5 // pred_region
      %s139 = ssub.s32 %s10, 1
      // Predicated region
      $region13: #{generator_forward.9} parent=11 // pred_check
        %p140 = pneg %p57
      $region14: #{generator_forward.9} parent=11 // pred_check_branch
        %142 = sbr.rel (%p140) target = $region16
      $region15: #{generator_forward.9} parent=11 // pred_region
        _
      $region16: #{generator_forward.9} parent=11 // pred_fallthru
        _
      // Predicated region
      $region17: #{generator_forward.9} parent=11 // pred_check
        %p143 = pneg %p78
      $region18: #{generator_forward.9} parent=11 // pred_check_branch
        %145 = sbr.rel (%p143) target = $region20
      $region19: #{generator_forward.9} parent=11 // pred_region
        _
      $region20: #{generator_forward.9} parent=11 // pred_fallthru
        _
      // Predicated region
      $region21: #{generator_forward.9} parent=11 // pred_check
        %p146 = pneg %p99
      $region22: #{generator_forward.9} parent=11 // pred_check_branch
        %148 = sbr.rel (%p146) target = $region24
      $region23: #{generator_forward.9} parent=11 // pred_region
        _
      $region24: #{generator_forward.9} parent=11 // pred_fallthru
        _
    $region12: #{generator_forward.9} parent=5 // pred_fallthru
      _
    %p149 = scmp.lt.s32.totalorder %s10, 2
    // Predicated region
    $region25: #{generator_forward.9} parent=5 // pred_check
      %p150 = pneg %p149
    $region26: #{generator_forward.9} parent=5 // pred_check_branch
      %152 = sbr.rel (%p150) target = $region28
    $region27: #{generator_forward.9} parent=5 // pred_region
      // Predicated region
      $region29: #{generator_forward.9} parent=27 // pred_check
        %p153 = pneg %p30
      $region30: #{generator_forward.9} parent=27 // pred_check_branch
        %155 = sbr.rel (%p153) target = $region32
      $region31: #{generator_forward.9} parent=27 // pred_region
        %p156 = scmp.lt.s32.totalorder %s10, 1
        %s157 = scalar_select %p156, %s10, 1
        %s158 = smul.addr %s157, 16
        %s159 = smul.addr %s158, 4
        %s160 = scalar_lea.vmem %s0, %s159
      $region32: #{generator_forward.9} parent=27 // pred_fallthru
        _
    $region28: #{generator_forward.9} parent=5 // pred_fallthru
      _
    %p161 = scmp.le.s32.totalorder 1, %s10
    %p162 = scmp.lt.s32.totalorder %s10, 3
    %p163 = pnand %p161, %p162
    %p164 = pneg %p163
    // Predicated region
    $region33: #{generator_forward.9} parent=5 // pred_check
      _
    $region34: #{generator_forward.9} parent=5 // pred_check_branch
      %166 = sbr.rel (%p163) target = $region36
    $region35: #{generator_forward.9} parent=5 // pred_region
      %s167 = ssub.s32 %s10, 1
      %p168 = scmp.lt.s32.totalorder %s15, 1
      %s169 = scalar_select %p168, %s15, 1
      %s170 = smul.addr %s169, 16
      %s171 = smul.addr %s170, 4
      %s172 = scalar_lea.vmem %s0, %s171
      %p173 = pneg %p36
      %p174 = pneg %p33
      %p175 = pneg %p57
      %p176 = pneg %p54
      %p177 = pneg %p78
      %p178 = pneg %p75
      %p179 = pneg %p99
      %p180 = pneg %p96
      %p181 = pneg %p125
      %p182 = pneg %p122
      %p183 = scmp.lt.s32.totalorder %s15, 1
      %s184 = scalar_select %p183, %s15, 1
      %s185 = smul.addr %s184, 16
      %s186 = smul.addr %s185, 4
      %s187 = scalar_lea.vmem %s4, %s186
      %p188 = scmp.lt.s32.totalorder %s15, 1
      %s189 = scalar_select %p188, %s15, 1
      %s190 = smul.addr %s189, 16
      %s191 = smul.addr %s190, 4
      %s192 = scalar_lea.vmem %s0, %s191
      %p193 = scmp.lt.s32.totalorder %s15, 1
      %s194 = scalar_select %p193, %s15, 1
      %s195 = smul.addr %s194, 16
      %s196 = smul.addr %s195, 4
      %s197 = scalar_lea.vmem %s4, %s196
      %v199 = vld [vmem:[%s192] sm:$0xf]
      %v200 = vld [vmem:[%s192 + $0x4] sm:$0xf]
      %v201 = vld [vmem:[%s192 + $0x8] sm:$0xf]
      %v202 = vld [vmem:[%s192 + $0xc] sm:$0xf]
      %v203 = vld [vmem:[%s192 + $0x10] sm:$0xf]
      %v204 = vld [vmem:[%s192 + $0x14] sm:$0xf]
      %v205 = vld [vmem:[%s192 + $0x18] sm:$0xf]
      %v206 = vld [vmem:[%s192 + $0x1c] sm:$0xf]
      %v207 = vld [vmem:[%s192 + $0x20] sm:$0xf]
      %v208 = vld [vmem:[%s192 + $0x24] sm:$0xf]
      %v209 = vld [vmem:[%s192 + $0x28] sm:$0xf]
      %v210 = vld [vmem:[%s192 + $0x2c] sm:$0xf]
      %v211 = vld [vmem:[%s192 + $0x30] sm:$0x3]
      %v212 = vld [vmem:[%s1] sm:$0xf]
      %v213 = vld [vmem:[%s1 + $0x4] sm:$0xf]
      %v214 = vld [vmem:[%s1 + $0x8] sm:$0xf]
      %v215 = vld [vmem:[%s1 + $0xc] sm:$0xf]
      %v216 = vld [vmem:[%s192 + $0x30] sm:$0x7]
      %s217 = scalar_lea.vmem %s1, 16
      %v218 = vld [vmem:[%s217] sm:$0xf]
      %v219 = vld [vmem:[%s217 + $0x4] sm:$0xf]
      %v220 = vld [vmem:[%s217 + $0x8] sm:$0xf]
      %v221 = vld [vmem:[%s217 + $0xc] sm:$0xf]
      %v235 = vunpack.c.l.b16 %v199
      %v236 = vunpack.c.l.b16 %v200
      %v237 = vunpack.c.l.b16 %v201
      %v238 = vunpack.c.l.b16 %v202
      %v239 = vunpack.c.l.b16 %v203
      %v240 = vunpack.c.l.b16 %v204
      %v241 = vunpack.c.l.b16 %v205
      %v242 = vunpack.c.l.b16 %v206
      %v243 = vunpack.c.l.b16 %v207
      %v244 = vunpack.c.l.b16 %v208
      %v245 = vunpack.c.l.b16 %v209
      %v246 = vunpack.c.l.b16 %v210
      %v247 = vunpack.c.l.b16 %v216
      %v248 = vpack.c.b16 %v236, %v235
      %v249 = vpack.c.b16 %v238, %v237
      %v250 = vpack.c.b16 %v240, %v239
      %v251 = vpack.c.b16 %v242, %v241
      %v252 = vpack.c.b16 %v244, %v243
      %v253 = vpack.c.b16 %v246, %v245
      %v254 = vpack.c.b16 %v247, %v247
      %vm255 = vsmask.f32 7424
      %v257 = vshrl.u32 %v248, 16
      %v259 = vshll.u32 %v248, 16
      %v261 = vrot.slane %v259, 1
      %v262 = vor.u32 %v257, %v261
      %v264 = vshll.u32 %v249, 16
      %v266 = vrot.slane %v264, 1
      %v267 = vsel %vm255, %v262, %v266
      %v268 = vshrl.u32 %v249, 16
      %v270 = vor.u32 %v268, %v266
      %v272 = vshll.u32 %v250, 16
      %v274 = vrot.slane %v272, 1
      %v275 = vsel %vm255, %v270, %v274
      %v276 = vshrl.u32 %v250, 16
      %v278 = vor.u32 %v276, %v274
      %v280 = vshll.u32 %v251, 16
      %v282 = vrot.slane %v280, 1
      %v283 = vsel %vm255, %v278, %v282
      %v284 = vshrl.u32 %v251, 16
      %v286 = vor.u32 %v284, %v282
      %v288 = vshll.u32 %v252, 16
      %v290 = vrot.slane %v288, 1
      %v291 = vsel %vm255, %v286, %v290
      %v292 = vshrl.u32 %v252, 16
      %v294 = vor.u32 %v292, %v290
      %v296 = vshll.u32 %v253, 16
      %v298 = vrot.slane %v296, 1
      %v299 = vsel %vm255, %v294, %v298
      %v300 = vshrl.u32 %v253, 16
      %v302 = vor.u32 %v300, %v298
      %v304 = vshll.u32 %v254, 16
      %v306 = vrot.slane %v304, 1
      %v307 = vsel %vm255, %v302, %v306
      %v308 = vshrl.u32 %v254, 16
      %v310 = vor.u32 %v308, %v306
      %v315 = vunpack.c.l.b16 %v218
      %v316 = vunpack.c.l.b16 %v219
      %v317 = vunpack.c.l.b16 %v220
      %v318 = vunpack.c.l.b16 %v221
      %v319 = vpack.c.b16 %v316, %v315
      %v320 = vpack.c.b16 %v318, %v317
      %vm323 = vcmask 261120
      %v325 = vsel %vm323, %v267, 0
      %v328 = vsel %vm323, %v275, 0
      %v331 = vsel %vm323, %v283, 0
      %v334 = vsel %vm323, %v291, 0
      %v337 = vsel %vm323, %v299, 0
      %v340 = vsel %vm323, %v307, 0
      %v343 = vsel %vm323, %v310, 0
      %345 = vmatprep.subr.bf16.mxu0 0
      %346 = vmatpush1.bf16.msra.mxu0 %v319
      %347 = vmatprep.subr.bf16.mxu0 0
      %348 = vmatpush1.bf16.msra.mxu0 %v320
      %349 = vmatprep.subr.bf16.mxu0 0
      %350 = vmatpush1.bf16.msra.mxu0 0
      %351 = vmatprep.subr.bf16.mxu0 0
      %352 = vmatpush1.bf16.msra.mxu0 0
      %353 = vmatprep.subr.bf16.mxu0 0
      %354 = vmatpush1.bf16.msra.mxu0 0
      %355 = vmatprep.subr.bf16.mxu0 0
      %356 = vmatpush1.bf16.msra.mxu0 0
      %357 = vmatprep.subr.bf16.mxu0 0
      %358 = vmatpush1.bf16.msra.mxu0 0
      %359 = vmatprep.subr.bf16.mxu0 0
      %360 = vmatpush1.bf16.msra.mxu0 0
      %361 = vmatprep.subr.bf16.mxu0 0
      %362 = vmatpush1.bf16.msra.mxu0 0
      %363 = vmatprep.subr.bf16.mxu0 0
      %364 = vmatpush1.bf16.msra.mxu0 0
      %365 = vmatprep.subr.bf16.mxu0 0
      %366 = vmatpush1.bf16.msra.mxu0 0
      %367 = vmatprep.subr.bf16.mxu0 0
      %368 = vmatpush1.bf16.msra.mxu0 0
      %369 = vmatprep.subr.bf16.mxu0 0
      %370 = vmatpush1.bf16.msra.mxu0 0
      %371 = vmatprep.subr.bf16.mxu0 0
      %372 = vmatpush1.bf16.msra.mxu0 0
      %373 = vmatprep.subr.bf16.mxu0 0
      %374 = vmatpush1.bf16.msra.mxu0 0
      %375 = vmatprep.subr.bf16.mxu0 0
      %376 = vmatpush1.bf16.msra.mxu0 0
      %377 = vmatprep.mubr.bf16.mxu0 0
      %378 = vmatmul.mubr.bf16.gmra.mrb[0].mxu0 %v325
      %v379 = vpop.f32.mrb[0].mxu0
      %v380 = vadd.f32 0.0, %v379
      %v381 = vpop.f32.mrb[0].mxu0
      %v382 = vpop.f32.mrb[0].mxu0
      %v383 = vadd.f32 0.0, %v382
      %v384 = vpop.f32.mrb[0].mxu0
      %385 = vmatprep.mubr.bf16.mxu0 0
      %386 = vmatmul.mubr.bf16.gmra.mrb[0].mxu0 %v328
      %v387 = vpop.f32.mrb[0].mxu0
      %v388 = vadd.f32 0.0, %v387
      %v389 = vpop.f32.mrb[0].mxu0
      %v390 = vpop.f32.mrb[0].mxu0
      %v391 = vadd.f32 0.0, %v390
      %v392 = vpop.f32.mrb[0].mxu0
      %393 = vmatprep.mubr.bf16.mxu0 0
      %394 = vmatmul.mubr.bf16.gmra.mrb[0].mxu0 %v331
      %v395 = vpop.f32.mrb[0].mxu0
      %v396 = vadd.f32 0.0, %v395
      %v397 = vpop.f32.mrb[0].mxu0
      %v398 = vpop.f32.mrb[0].mxu0
      %v399 = vadd.f32 0.0, %v398
      %v400 = vpop.f32.mrb[0].mxu0
      %401 = vmatprep.mubr.bf16.mxu0 0
      %402 = vmatmul.mubr.bf16.gmra.mrb[0].mxu0 %v334
      %v403 = vpop.f32.mrb[0].mxu0
      %v404 = vadd.f32 0.0, %v403
      %v405 = vpop.f32.mrb[0].mxu0
      %v406 = vpop.f32.mrb[0].mxu0
      %v407 = vadd.f32 0.0, %v406
      %v408 = vpop.f32.mrb[0].mxu0
      %409 = vmatprep.mubr.bf16.mxu0 0
      %410 = vmatmul.mubr.bf16.gmra.mrb[0].mxu0 %v337
      %v411 = vpop.f32.mrb[0].mxu0
      %v412 = vadd.f32 0.0, %v411
      %v413 = vpop.f32.mrb[0].mxu0
      %v414 = vpop.f32.mrb[0].mxu0
      %v415 = vadd.f32 0.0, %v414
      %v416 = vpop.f32.mrb[0].mxu0
      %417 = vmatprep.mubr.bf16.mxu0 0
      %418 = vmatmul.mubr.bf16.gmra.mrb[0].mxu0 %v340
      %v419 = vpop.f32.mrb[0].mxu0
      %v420 = vadd.f32 0.0, %v419
      %v421 = vpop.f32.mrb[0].mxu0
      %v422 = vpop.f32.mrb[0].mxu0
      %v423 = vadd.f32 0.0, %v422
      %v424 = vpop.f32.mrb[0].mxu0
      %425 = vmatprep.mubr.bf16.mxu0 0
      %426 = vmatmul.mubr.bf16.gmra.mrb[0].mxu0 %v343
      %v427 = vpop.f32.mrb[0].mxu0
      %v428 = vadd.f32 0.0, %v427
      %v429 = vpop.f32.mrb[0].mxu0
      %v430 = vpop.f32.mrb[0].mxu0
      %v431 = vpop.f32.mrb[0].mxu0
      %432 = vdwg.mxu0
      %v434 = vunpack.c.l.b16 %v211
      %v435 = vpack.c.b16 %v434, %v434
      %v440 = vunpack.c.l.b16 %v212
      %v441 = vunpack.c.l.b16 %v213
      %v442 = vunpack.c.l.b16 %v214
      %v443 = vunpack.c.l.b16 %v215
      %v444 = vpack.c.b16 %v441, %v440
      %v445 = vpack.c.b16 %v443, %v442
      %v448 = vsel %vm323, %v248, 0
      %v450 = vsel %vm323, %v249, 0
      %v452 = vsel %vm323, %v250, 0
      %v454 = vsel %vm323, %v251, 0
      %v456 = vsel %vm323, %v252, 0
      %v458 = vsel %vm323, %v253, 0
      %v461 = vsel %vm323, %v435, 0
      %463 = vmatprep.subr.bf16.mxu0 0
      %464 = vmatpush1.bf16.msra.mxu0 %v444
      %465 = vmatprep.subr.bf16.mxu0 0
      %466 = vmatpush1.bf16.msra.mxu0 %v445
      %467 = vmatprep.subr.bf16.mxu0 0
      %468 = vmatpush1.bf16.msra.mxu0 0
      %469 = vmatprep.subr.bf16.mxu0 0
      %470 = vmatpush1.bf16.msra.mxu0 0
      %471 = vmatprep.subr.bf16.mxu0 0
      %472 = vmatpush1.bf16.msra.mxu0 0
      %473 = vmatprep.subr.bf16.mxu0 0
      %474 = vmatpush1.bf16.msra.mxu0 0
      %475 = vmatprep.subr.bf16.mxu0 0
      %476 = vmatpush1.bf16.msra.mxu0 0
      %477 = vmatprep.subr.bf16.mxu0 0
      %478 = vmatpush1.bf16.msra.mxu0 0
      %479 = vmatprep.subr.bf16.mxu0 0
      %480 = vmatpush1.bf16.msra.mxu0 0
      %481 = vmatprep.subr.bf16.mxu0 0
      %482 = vmatpush1.bf16.msra.mxu0 0
      %483 = vmatprep.subr.bf16.mxu0 0
      %484 = vmatpush1.bf16.msra.mxu0 0
      %485 = vmatprep.subr.bf16.mxu0 0
      %486 = vmatpush1.bf16.msra.mxu0 0
      %487 = vmatprep.subr.bf16.mxu0 0
      %488 = vmatpush1.bf16.msra.mxu0 0
      %489 = vmatprep.subr.bf16.mxu0 0
      %490 = vmatpush1.bf16.msra.mxu0 0
      %491 = vmatprep.subr.bf16.mxu0 0
      %492 = vmatpush1.bf16.msra.mxu0 0
      %493 = vmatprep.subr.bf16.mxu0 0
      %494 = vmatpush1.bf16.msra.mxu0 0
      %495 = vmatprep.mubr.bf16.mxu0 0
      %496 = vmatmul.mubr.bf16.gmra.mrb[0].mxu0 %v448
      %v497 = vpop.f32.mrb[0].mxu0
      %v498 = vadd.f32 %v380, %v497
      %v499 = vpop.f32.mrb[0].mxu0
      %v500 = vpop.f32.mrb[0].mxu0
      %v501 = vadd.f32 %v383, %v500
      %v502 = vpop.f32.mrb[0].mxu0
      %503 = vmatprep.mubr.bf16.mxu0 0
      %504 = vmatmul.mubr.bf16.gmra.mrb[0].mxu0 %v450
      %v505 = vpop.f32.mrb[0].mxu0
      %v506 = vadd.f32 %v388, %v505
      %v507 = vpop.f32.mrb[0].mxu0
      %v508 = vpop.f32.mrb[0].mxu0
      %v509 = vadd.f32 %v391, %v508
      %v510 = vpop.f32.mrb[0].mxu0
      %511 = vmatprep.mubr.bf16.mxu0 0
      %512 = vmatmul.mubr.bf16.gmra.mrb[0].mxu0 %v452
      %v513 = vpop.f32.mrb[0].mxu0
      %v514 = vadd.f32 %v396, %v513
      %v515 = vpop.f32.mrb[0].mxu0
      %v516 = vpop.f32.mrb[0].mxu0
      %v517 = vadd.f32 %v399, %v516
      %v518 = vpop.f32.mrb[0].mxu0
      %519 = vmatprep.mubr.bf16.mxu0 0
      %520 = vmatmul.mubr.bf16.gmra.mrb[0].mxu0 %v454
      %v521 = vpop.f32.mrb[0].mxu0
      %v522 = vadd.f32 %v404, %v521
      %v523 = vpop.f32.mrb[0].mxu0
      %v524 = vpop.f32.mrb[0].mxu0
      %v525 = vadd.f32 %v407, %v524
      %v526 = vpop.f32.mrb[0].mxu0
      %527 = vmatprep.mubr.bf16.mxu0 0
      %528 = vmatmul.mubr.bf16.gmra.mrb[0].mxu0 %v456
      %v529 = vpop.f32.mrb[0].mxu0
      %v530 = vadd.f32 %v412, %v529
      %v531 = vpop.f32.mrb[0].mxu0
      %v532 = vpop.f32.mrb[0].mxu0
      %v533 = vadd.f32 %v415, %v532
      %v534 = vpop.f32.mrb[0].mxu0
      %535 = vmatprep.mubr.bf16.mxu0 0
      %536 = vmatmul.mubr.bf16.gmra.mrb[0].mxu0 %v458
      %v537 = vpop.f32.mrb[0].mxu0
      %v538 = vadd.f32 %v420, %v537
      %v539 = vpop.f32.mrb[0].mxu0
      %v540 = vpop.f32.mrb[0].mxu0
      %v541 = vadd.f32 %v423, %v540
      %v542 = vpop.f32.mrb[0].mxu0
      %543 = vmatprep.mubr.bf16.mxu0 0
      %544 = vmatmul.mubr.bf16.gmra.mrb[0].mxu0 %v461
      %v545 = vpop.f32.mrb[0].mxu0
      %v546 = vadd.f32 %v428, %v545
      %v547 = vpop.f32.mrb[0].mxu0
      %v548 = vpop.f32.mrb[0].mxu0
      %v549 = vpop.f32.mrb[0].mxu0
      %550 = vdwg.mxu0
      %v551 = vld [vmem:[%s192] sm:$0xe]
      %s552 = scalar_lea.vmem %s1, 32
      %v553 = vld [vmem:[%s552] sm:$0xf]
      %v554 = vld [vmem:[%s552 + $0x4] sm:$0xf]
      %v555 = vld [vmem:[%s552 + $0x8] sm:$0xf]
      %v556 = vld [vmem:[%s552 + $0xc] sm:$0xf]
      %v558 = vunpack.c.l.b16 %v551
      %v559 = vpack.c.b16 %v236, %v558
      %vm560 = vcmask 1046528
      %v561 = vrot.slane %v559, 1
      %v562 = vrot.slane %v249, 1
      %v563 = vsel %vm560, %v561, %v562
      %v564 = vrot.slane %v250, 1
      %v565 = vsel %vm560, %v562, %v564
      %v566 = vrot.slane %v251, 1
      %v567 = vsel %vm560, %v564, %v566
      %v568 = vrot.slane %v252, 1
      %v569 = vsel %vm560, %v566, %v568
      %v570 = vrot.slane %v253, 1
      %v571 = vsel %vm560, %v568, %v570
      %v572 = vrot.slane %v254, 1
      %v573 = vsel %vm560, %v570, %v572
      %v578 = vunpack.c.l.b16 %v553
      %v579 = vunpack.c.l.b16 %v554
      %v580 = vunpack.c.l.b16 %v555
      %v581 = vunpack.c.l.b16 %v556
      %v582 = vpack.c.b16 %v579, %v578
      %v583 = vpack.c.b16 %v581, %v580
      %v587 = vsel %vm323, %v563, 0
      %v590 = vsel %vm323, %v565, 0
      %v593 = vsel %vm323, %v567, 0
      %v596 = vsel %vm323, %v569, 0
      %v599 = vsel %vm323, %v571, 0
      %v602 = vsel %vm323, %v573, 0
      %v605 = vsel %vm323, %v572, 0
      %607 = vmatprep.subr.bf16.mxu0 0
      %608 = vmatpush1.bf16.msra.mxu0 %v582
      %609 = vmatprep.subr.bf16.mxu0 0
      %610 = vmatpush1.bf16.msra.mxu0 %v583
      %611 = vmatprep.subr.bf16.mxu0 0
      %612 = vmatpush1.bf16.msra.mxu0 0
      %613 = vmatprep.subr.bf16.mxu0 0
      %614 = vmatpush1.bf16.msra.mxu0 0
      %615 = vmatprep.subr.bf16.mxu0 0
      %616 = vmatpush1.bf16.msra.mxu0 0
      %617 = vmatprep.subr.bf16.mxu0 0
      %618 = vmatpush1.bf16.msra.mxu0 0
      %619 = vmatprep.subr.bf16.mxu0 0
      %620 = vmatpush1.bf16.msra.mxu0 0
      %621 = vmatprep.subr.bf16.mxu0 0
      %622 = vmatpush1.bf16.msra.mxu0 0
      %623 = vmatprep.subr.bf16.mxu0 0
      %624 = vmatpush1.bf16.msra.mxu0 0
      %625 = vmatprep.subr.bf16.mxu0 0
      %626 = vmatpush1.bf16.msra.mxu0 0
      %627 = vmatprep.subr.bf16.mxu0 0
      %628 = vmatpush1.bf16.msra.mxu0 0
      %629 = vmatprep.subr.bf16.mxu0 0
      %630 = vmatpush1.bf16.msra.mxu0 0
      %631 = vmatprep.subr.bf16.mxu0 0
      %632 = vmatpush1.bf16.msra.mxu0 0
      %633 = vmatprep.subr.bf16.mxu0 0
      %634 = vmatpush1.bf16.msra.mxu0 0
      %635 = vmatprep.subr.bf16.mxu0 0
      %636 = vmatpush1.bf16.msra.mxu0 0
      %637 = vmatprep.subr.bf16.mxu0 0
      %638 = vmatpush1.bf16.msra.mxu0 0
      %639 = vmatprep.mubr.bf16.mxu0 0
      %640 = vmatmul.mubr.bf16.gmra.mrb[0].mxu0 %v587
      %v641 = vpop.f32.mrb[0].mxu0
      %v642 = vadd.f32 0.0, %v641
      %v643 = vpop.f32.mrb[0].mxu0
      %v644 = vpop.f32.mrb[0].mxu0
      %v645 = vadd.f32 0.0, %v644
      %v646 = vpop.f32.mrb[0].mxu0
      %647 = vmatprep.mubr.bf16.mxu0 0
      %648 = vmatmul.mubr.bf16.gmra.mrb[0].mxu0 %v590
      %v649 = vpop.f32.mrb[0].mxu0
      %v650 = vadd.f32 0.0, %v649
      %v651 = vpop.f32.mrb[0].mxu0
      %v652 = vpop.f32.mrb[0].mxu0
      %v653 = vadd.f32 0.0, %v652
      %v654 = vpop.f32.mrb[0].mxu0
      %655 = vmatprep.mubr.bf16.mxu0 0
      %656 = vmatmul.mubr.bf16.gmra.mrb[0].mxu0 %v593
      %v657 = vpop.f32.mrb[0].mxu0
      %v658 = vadd.f32 0.0, %v657
      %v659 = vpop.f32.mrb[0].mxu0
      %v660 = vpop.f32.mrb[0].mxu0
      %v661 = vadd.f32 0.0, %v660
      %v662 = vpop.f32.mrb[0].mxu0
      %663 = vmatprep.mubr.bf16.mxu0 0
      %664 = vmatmul.mubr.bf16.gmra.mrb[0].mxu0 %v596
      %v665 = vpop.f32.mrb[0].mxu0
      %v666 = vadd.f32 0.0, %v665
      %v667 = vpop.f32.mrb[0].mxu0
      %v668 = vpop.f32.mrb[0].mxu0
      %v669 = vadd.f32 0.0, %v668
      %v670 = vpop.f32.mrb[0].mxu0
      %671 = vmatprep.mubr.bf16.mxu0 0
      %672 = vmatmul.mubr.bf16.gmra.mrb[0].mxu0 %v599
      %v673 = vpop.f32.mrb[0].mxu0
      %v674 = vadd.f32 0.0, %v673
      %v675 = vpop.f32.mrb[0].mxu0
      %v676 = vpop.f32.mrb[0].mxu0
      %v677 = vadd.f32 0.0, %v676
      %v678 = vpop.f32.mrb[0].mxu0
      %679 = vmatprep.mubr.bf16.mxu0 0
      %680 = vmatmul.mubr.bf16.gmra.mrb[0].mxu0 %v602
      %v681 = vpop.f32.mrb[0].mxu0
      %v682 = vadd.f32 0.0, %v681
      %v683 = vpop.f32.mrb[0].mxu0
      %v684 = vpop.f32.mrb[0].mxu0
      %v685 = vadd.f32 0.0, %v684
      %v686 = vpop.f32.mrb[0].mxu0
      %687 = vmatprep.mubr.bf16.mxu0 0
      %688 = vmatmul.mubr.bf16.gmra.mrb[0].mxu0 %v605
      %v689 = vpop.f32.mrb[0].mxu0
      %v690 = vadd.f32 0.0, %v689
      %v691 = vpop.f32.mrb[0].mxu0
      %v692 = vpop.f32.mrb[0].mxu0
      %v693 = vpop.f32.mrb[0].mxu0
      %694 = vdwg.mxu0
      %v695 = vadd.f32 %v498, %v642
      %v696 = vadd.f32 %v501, %v645
      %v697 = vadd.f32 %v506, %v650
      %v698 = vadd.f32 %v509, %v653
      %v699 = vadd.f32 %v514, %v658
      %v700 = vadd.f32 %v517, %v661
      %v701 = vadd.f32 %v522, %v666
      %v702 = vadd.f32 %v525, %v669
      %v703 = vadd.f32 %v530, %v674
      %v704 = vadd.f32 %v533, %v677
      %v705 = vadd.f32 %v538, %v682
      %v706 = vadd.f32 %v541, %v685
      %v707 = vadd.f32 %v546, %v690
      %v708 = vld [vmem:[%s192 + $0x4] sm:$0xe]
      %v709 = vld [vmem:[%s192 + $0x8] sm:$0xf]
      %v710 = vld [vmem:[%s192 + $0xc] sm:$0xf]
      %v711 = vld [vmem:[%s192 + $0x10] sm:$0xf]
      %v712 = vld [vmem:[%s192 + $0x14] sm:$0xf]
      %v713 = vld [vmem:[%s192 + $0x18] sm:$0xf]
      %v714 = vld [vmem:[%s192 + $0x1c] sm:$0xf]
      %v715 = vld [vmem:[%s192 + $0x20] sm:$0xf]
      %v716 = vld [vmem:[%s192 + $0x24] sm:$0xf]
      %v717 = vld [vmem:[%s192 + $0x28] sm:$0xf]
      %v718 = vld [vmem:[%s192 + $0x2c] sm:$0xf]
      %v719 = vld [vmem:[%s192 + $0x30] sm:$0xf]
      %v720 = vld [vmem:[%s192 + $0x34] sm:$0x7]
      %s721 = scalar_lea.vmem %s1, 48
      %v722 = vld [vmem:[%s721] sm:$0xf]
      %v723 = vld [vmem:[%s721 + $0x4] sm:$0xf]
      %v724 = vld [vmem:[%s721 + $0x8] sm:$0xf]
      %v725 = vld [vmem:[%s721 + $0xc] sm:$0xf]
      %v739 = vunpack.c.l.b16 %v708
      %v740 = vunpack.c.l.b16 %v709
      %v741 = vunpack.c.l.b16 %v710
      %v742 = vunpack.c.l.b16 %v711
      %v743 = vunpack.c.l.b16 %v712
      %v744 = vunpack.c.l.b16 %v713
      %v745 = vunpack.c.l.b16 %v714
      %v746 = vunpack.c.l.b16 %v715
      %v747 = vunpack.c.l.b16 %v716
      %v748 = vunpack.c.l.b16 %v717
      %v749 = vunpack.c.l.b16 %v718
      %v750 = vunpack.c.l.b16 %v719
      %v751 = vunpack.c.l.b16 %v720
      %v752 = vpack.c.b16 %v740, %v739
      %v753 = vpack.c.b16 %v742, %v741
      %v754 = vpack.c.b16 %v744, %v743
      %v755 = vpack.c.b16 %v746, %v745
      %v756 = vpack.c.b16 %v748, %v747
      %v757 = vpack.c.b16 %v750, %v749
      %v758 = vpack.c.b16 %v751, %v751
      %v759 = vrot.slane %v752, 1
      %v760 = vrot.slane %v753, 1
      %v761 = vsel %vm560, %v759, %v760
      %v762 = vrot.slane %v754, 1
      %v763 = vsel %vm560, %v760, %v762
      %v764 = vrot.slane %v755, 1
      %v765 = vsel %vm560, %v762, %v764
      %v766 = vrot.slane %v756, 1
      %v767 = vsel %vm560, %v764, %v766
      %v768 = vrot.slane %v757, 1
      %v769 = vsel %vm560, %v766, %v768
      %v770 = vrot.slane %v758, 1
      %v771 = vsel %vm560, %v768, %v770
      %v776 = vunpack.c.l.b16 %v722
      %v777 = vunpack.c.l.b16 %v723
      %v778 = vunpack.c.l.b16 %v724
      %v779 = vunpack.c.l.b16 %v725
      %v780 = vpack.c.b16 %v777, %v776
      %v781 = vpack.c.b16 %v779, %v778
      %v785 = vsel %vm323, %v761, 0
      %v788 = vsel %vm323, %v763, 0
      %v791 = vsel %vm323, %v765, 0
      %v794 = vsel %vm323, %v767, 0
      %v797 = vsel %vm323, %v769, 0
      %v800 = vsel %vm323, %v771, 0
      %v803 = vsel %vm323, %v770, 0
      %805 = vmatprep.subr.bf16.mxu0 0
      %806 = vmatpush1.bf16.msra.mxu0 %v780
      %807 = vmatprep.subr.bf16.mxu0 0
      %808 = vmatpush1.bf16.msra.mxu0 %v781
      %809 = vmatprep.subr.bf16.mxu0 0
      %810 = vmatpush1.bf16.msra.mxu0 0
      %811 = vmatprep.subr.bf16.mxu0 0
      %812 = vmatpush1.bf16.msra.mxu0 0
      %813 = vmatprep.subr.bf16.mxu0 0
      %814 = vmatpush1.bf16.msra.mxu0 0
      %815 = vmatprep.subr.bf16.mxu0 0
      %816 = vmatpush1.bf16.msra.mxu0 0
      %817 = vmatprep.subr.bf16.mxu0 0
      %818 = vmatpush1.bf16.msra.mxu0 0
      %819 = vmatprep.subr.bf16.mxu0 0
      %820 = vmatpush1.bf16.msra.mxu0 0
      %821 = vmatprep.subr.bf16.mxu0 0
      %822 = vmatpush1.bf16.msra.mxu0 0
      %823 = vmatprep.subr.bf16.mxu0 0
      %824 = vmatpush1.bf16.msra.mxu0 0
      %825 = vmatprep.subr.bf16.mxu0 0
      %826 = vmatpush1.bf16.msra.mxu0 0
      %827 = vmatprep.subr.bf16.mxu0 0
      %828 = vmatpush1.bf16.msra.mxu0 0
      %829 = vmatprep.subr.bf16.mxu0 0
      %830 = vmatpush1.bf16.msra.mxu0 0
      %831 = vmatprep.subr.bf16.mxu0 0
      %832 = vmatpush1.bf16.msra.mxu0 0
      %833 = vmatprep.subr.bf16.mxu0 0
      %834 = vmatpush1.bf16.msra.mxu0 0
      %835 = vmatprep.subr.bf16.mxu0 0
      %836 = vmatpush1.bf16.msra.mxu0 0
      %837 = vmatprep.mubr.bf16.mxu0 0
      %838 = vmatmul.mubr.bf16.gmra.mrb[0].mxu0 %v785
      %v839 = vpop.f32.mrb[0].mxu0
      %v840 = vadd.f32 0.0, %v839
      %v841 = vpop.f32.mrb[0].mxu0
      %v842 = vpop.f32.mrb[0].mxu0
      %v843 = vadd.f32 0.0, %v842
      %v844 = vpop.f32.mrb[0].mxu0
      %845 = vmatprep.mubr.bf16.mxu0 0
      %846 = vmatmul.mubr.bf16.gmra.mrb[0].mxu0 %v788
      %v847 = vpop.f32.mrb[0].mxu0
      %v848 = vadd.f32 0.0, %v847
      %v849 = vpop.f32.mrb[0].mxu0
      %v850 = vpop.f32.mrb[0].mxu0
      %v851 = vadd.f32 0.0, %v850
      %v852 = vpop.f32.mrb[0].mxu0
      %853 = vmatprep.mubr.bf16.mxu0 0
      %854 = vmatmul.mubr.bf16.gmra.mrb[0].mxu0 %v791
      %v855 = vpop.f32.mrb[0].mxu0
      %v856 = vadd.f32 0.0, %v855
      %v857 = vpop.f32.mrb[0].mxu0
      %v858 = vpop.f32.mrb[0].mxu0
      %v859 = vadd.f32 0.0, %v858
      %v860 = vpop.f32.mrb[0].mxu0
      %861 = vmatprep.mubr.bf16.mxu0 0
      %862 = vmatmul.mubr.bf16.gmra.mrb[0].mxu0 %v794
      %v863 = vpop.f32.mrb[0].mxu0
      %v864 = vadd.f32 0.0, %v863
      %v865 = vpop.f32.mrb[0].mxu0
      %v866 = vpop.f32.mrb[0].mxu0
      %v867 = vadd.f32 0.0, %v866
      %v868 = vpop.f32.mrb[0].mxu0
      %869 = vmatprep.mubr.bf16.mxu0 0
      %870 = vmatmul.mubr.bf16.gmra.mrb[0].mxu0 %v797
      %v871 = vpop.f32.mrb[0].mxu0
      %v872 = vadd.f32 0.0, %v871
      %v873 = vpop.f32.mrb[0].mxu0
      %v874 = vpop.f32.mrb[0].mxu0
      %v875 = vadd.f32 0.0, %v874
      %v876 = vpop.f32.mrb[0].mxu0
      %877 = vmatprep.mubr.bf16.mxu0 0
      %878 = vmatmul.mubr.bf16.gmra.mrb[0].mxu0 %v800
      %v879 = vpop.f32.mrb[0].mxu0
      %v880 = vadd.f32 0.0, %v879
      %v881 = vpop.f32.mrb[0].mxu0
      %v882 = vpop.f32.mrb[0].mxu0
      %v883 = vadd.f32 0.0, %v882
      %v884 = vpop.f32.mrb[0].mxu0
      %885 = vmatprep.mubr.bf16.mxu0 0
      %886 = vmatmul.mubr.bf16.gmra.mrb[0].mxu0 %v803
      %v887 = vpop.f32.mrb[0].mxu0
      %v888 = vadd.f32 0.0, %v887
      %v889 = vpop.f32.mrb[0].mxu0
      %v890 = vpop.f32.mrb[0].mxu0
      %v891 = vpop.f32.mrb[0].mxu0
      %892 = vdwg.mxu0
      %v893 = vadd.f32 %v695, %v840
      %v894 = vadd.f32 %v696, %v843
      %v895 = vadd.f32 %v697, %v848
      %v896 = vadd.f32 %v698, %v851
      %v897 = vadd.f32 %v699, %v856
      %v898 = vadd.f32 %v700, %v859
      %v899 = vadd.f32 %v701, %v864
      %v900 = vadd.f32 %v702, %v867
      %v901 = vadd.f32 %v703, %v872
      %v902 = vadd.f32 %v704, %v875
      %v903 = vadd.f32 %v705, %v880
      %v904 = vadd.f32 %v706, %v883
      %v905 = vadd.f32 %v707, %v888
      %v906 = vld [vmem:[%s192 + $0x34] sm:$0xf]
      %s907 = scalar_lea.vmem %s1, 64
      %v908 = vld [vmem:[%s907] sm:$0xf]
      %v909 = vld [vmem:[%s907 + $0x4] sm:$0xf]
      %v910 = vld [vmem:[%s907 + $0x8] sm:$0xf]
      %v911 = vld [vmem:[%s907 + $0xc] sm:$0xf]
      %v913 = vunpack.c.l.b16 %v906
      %v914 = vpack.c.b16 %v913, %v913
      %vm915 = vsmask.f32 6400
      %v917 = vshrl.u32 %v752, 16
      %v919 = vrot.slane %v917, 1
      %v920 = vshll.u32 %v752, 16
      %v922 = vrot.slane %v920, 2
      %v923 = vor.u32 %v919, %v922
      %v925 = vshrl.u32 %v753, 16
      %v927 = vrot.slane %v925, 1
      %v928 = vshll.u32 %v753, 16
      %v930 = vrot.slane %v928, 2
      %v931 = vor.u32 %v927, %v930
      %v932 = vsel %vm915, %v923, %v931
      %v934 = vshrl.u32 %v754, 16
      %v936 = vrot.slane %v934, 1
      %v937 = vshll.u32 %v754, 16
      %v939 = vrot.slane %v937, 2
      %v940 = vor.u32 %v936, %v939
      %v941 = vsel %vm915, %v931, %v940
      %v943 = vshrl.u32 %v755, 16
      %v945 = vrot.slane %v943, 1
      %v946 = vshll.u32 %v755, 16
      %v948 = vrot.slane %v946, 2
      %v949 = vor.u32 %v945, %v948
      %v950 = vsel %vm915, %v940, %v949
      %v952 = vshrl.u32 %v756, 16
      %v954 = vrot.slane %v952, 1
      %v955 = vshll.u32 %v756, 16
      %v957 = vrot.slane %v955, 2
      %v958 = vor.u32 %v954, %v957
      %v959 = vsel %vm915, %v949, %v958
      %v961 = vshrl.u32 %v757, 16
      %v963 = vrot.slane %v961, 1
      %v964 = vshll.u32 %v757, 16
      %v966 = vrot.slane %v964, 2
      %v967 = vor.u32 %v963, %v966
      %v968 = vsel %vm915, %v958, %v967
      %v970 = vshrl.u32 %v914, 16
      %v972 = vrot.slane %v970, 1
      %v973 = vshll.u32 %v914, 16
      %v975 = vrot.slane %v973, 2
      %v976 = vor.u32 %v972, %v975
      %v977 = vsel %vm915, %v967, %v976
      %v982 = vunpack.c.l.b16 %v908
      %v983 = vunpack.c.l.b16 %v909
      %v984 = vunpack.c.l.b16 %v910
      %v985 = vunpack.c.l.b16 %v911
      %v986 = vpack.c.b16 %v983, %v982
      %v987 = vpack.c.b16 %v985, %v984
      %v991 = vsel %vm323, %v932, 0
      %v994 = vsel %vm323, %v941, 0
      %v997 = vsel %vm323, %v950, 0
      %v1000 = vsel %vm323, %v959, 0
      %v1003 = vsel %vm323, %v968, 0
      %v1006 = vsel %vm323, %v977, 0
      %v1009 = vsel %vm323, %v976, 0
      %1011 = vmatprep.subr.bf16.mxu0 0
      %1012 = vmatpush1.bf16.msra.mxu0 %v986
      %1013 = vmatprep.subr.bf16.mxu0 0
      %1014 = vmatpush1.bf16.msra.mxu0 %v987
      %1015 = vmatprep.subr.bf16.mxu0 0
      %1016 = vmatpush1.bf16.msra.mxu0 0
      %1017 = vmatprep.subr.bf16.mxu0 0
      %1018 = vmatpush1.bf16.msra.mxu0 0
      %1019 = vmatprep.subr.bf16.mxu0 0
      %1020 = vmatpush1.bf16.msra.mxu0 0
      %1021 = vmatprep.subr.bf16.mxu0 0
      %1022 = vmatpush1.bf16.msra.mxu0 0
      %1023 = vmatprep.subr.bf16.mxu0 0
      %1024 = vmatpush1.bf16.msra.mxu0 0
      %1025 = vmatprep.subr.bf16.mxu0 0
      %1026 = vmatpush1.bf16.msra.mxu0 0
      %1027 = vmatprep.subr.bf16.mxu0 0
      %1028 = vmatpush1.bf16.msra.mxu0 0
      %1029 = vmatprep.subr.bf16.mxu0 0
      %1030 = vmatpush1.bf16.msra.mxu0 0
      %1031 = vmatprep.subr.bf16.mxu0 0
      %1032 = vmatpush1.bf16.msra.mxu0 0
      %1033 = vmatprep.subr.bf16.mxu0 0
      %1034 = vmatpush1.bf16.msra.mxu0 0
      %1035 = vmatprep.subr.bf16.mxu0 0
      %1036 = vmatpush1.bf16.msra.mxu0 0
      %1037 = vmatprep.subr.bf16.mxu0 0
      %1038 = vmatpush1.bf16.msra.mxu0 0
      %1039 = vmatprep.subr.bf16.mxu0 0
      %1040 = vmatpush1.bf16.msra.mxu0 0
      %1041 = vmatprep.subr.bf16.mxu0 0
      %1042 = vmatpush1.bf16.msra.mxu0 0
      %1043 = vmatprep.mubr.bf16.mxu0 0
      %1044 = vmatmul.mubr.bf16.gmra.mrb[0].mxu0 %v991
      %v1045 = vpop.f32.mrb[0].mxu0
      %v1046 = vadd.f32 0.0, %v1045
      %v1047 = vpop.f32.mrb[0].mxu0
      %v1048 = vpop.f32.mrb[0].mxu0
      %v1049 = vadd.f32 0.0, %v1048
      %v1050 = vpop.f32.mrb[0].mxu0
      %1051 = vmatprep.mubr.bf16.mxu0 0
      %1052 = vmatmul.mubr.bf16.gmra.mrb[0].mxu0 %v994
      %v1053 = vpop.f32.mrb[0].mxu0
      %v1054 = vadd.f32 0.0, %v1053
      %v1055 = vpop.f32.mrb[0].mxu0
      %v1056 = vpop.f32.mrb[0].mxu0
      %v1057 = vadd.f32 0.0, %v1056
      %v1058 = vpop.f32.mrb[0].mxu0
      %1059 = vmatprep.mubr.bf16.mxu0 0
      %1060 = vmatmul.mubr.bf16.gmra.mrb[0].mxu0 %v997
      %v1061 = vpop.f32.mrb[0].mxu0
      %v1062 = vadd.f32 0.0, %v1061
      %v1063 = vpop.f32.mrb[0].mxu0
      %v1064 = vpop.f32.mrb[0].mxu0
      %v1065 = vadd.f32 0.0, %v1064
      %v1066 = vpop.f32.mrb[0].mxu0
      %1067 = vmatprep.mubr.bf16.mxu0 0
      %1068 = vmatmul.mubr.bf16.gmra.mrb[0].mxu0 %v1000
      %v1069 = vpop.f32.mrb[0].mxu0
      %v1070 = vadd.f32 0.0, %v1069
      %v1071 = vpop.f32.mrb[0].mxu0
      %v1072 = vpop.f32.mrb[0].mxu0
      %v1073 = vadd.f32 0.0, %v1072
      %v1074 = vpop.f32.mrb[0].mxu0
      %1075 = vmatprep.mubr.bf16.mxu0 0
      %1076 = vmatmul.mubr.bf16.gmra.mrb[0].mxu0 %v1003
      %v1077 = vpop.f32.mrb[0].mxu0
      %v1078 = vadd.f32 0.0, %v1077
      %v1079 = vpop.f32.mrb[0].mxu0
      %v1080 = vpop.f32.mrb[0].mxu0
      %v1081 = vadd.f32 0.0, %v1080
      %v1082 = vpop.f32.mrb[0].mxu0
      %1083 = vmatprep.mubr.bf16.mxu0 0
      %1084 = vmatmul.mubr.bf16.gmra.mrb[0].mxu0 %v1006
      %v1085 = vpop.f32.mrb[0].mxu0
      %v1086 = vadd.f32 0.0, %v1085
      %v1087 = vpop.f32.mrb[0].mxu0
      %v1088 = vpop.f32.mrb[0].mxu0
      %v1089 = vadd.f32 0.0, %v1088
      %v1090 = vpop.f32.mrb[0].mxu0
      %1091 = vmatprep.mubr.bf16.mxu0 0
      %1092 = vmatmul.mubr.bf16.gmra.mrb[0].mxu0 %v1009
      %v1093 = vpop.f32.mrb[0].mxu0
      %v1094 = vadd.f32 0.0, %v1093
      %v1095 = vpop.f32.mrb[0].mxu0
      %v1096 = vpop.f32.mrb[0].mxu0
      %v1097 = vpop.f32.mrb[0].mxu0
      %1098 = vdwg.mxu0
      %v1099 = vadd.f32 %v893, %v1046
      %v1100 = vadd.f32 %v894, %v1049
      %v1101 = vadd.f32 %v895, %v1054
      %v1102 = vadd.f32 %v896, %v1057
      %v1103 = vadd.f32 %v897, %v1062
      %v1104 = vadd.f32 %v898, %v1065
      %v1105 = vadd.f32 %v899, %v1070
      %v1106 = vadd.f32 %v900, %v1073
      %v1107 = vadd.f32 %v901, %v1078
      %v1108 = vadd.f32 %v902, %v1081
      %v1109 = vadd.f32 %v903, %v1086
      %v1110 = vadd.f32 %v904, %v1089
      %v1111 = vadd.f32 %v905, %v1094
      %v1112 = vld [vmem:[%s192 + $0x4] sm:$0xc]
      %s1113 = scalar_lea.vmem %s1, 80
      %v1114 = vld [vmem:[%s1113] sm:$0xf]
      %v1115 = vld [vmem:[%s1113 + $0x4] sm:$0xf]
      %v1116 = vld [vmem:[%s1113 + $0x8] sm:$0xf]
      %v1117 = vld [vmem:[%s1113 + $0xc] sm:$0xf]
      %v1119 = vunpack.c.l.b16 %v1112
      %v1120 = vpack.c.b16 %v740, %v1119
      %vm1121 = vcmask 1045504
      %v1122 = vrot.slane %v1120, 2
      %v1123 = vrot.slane %v753, 2
      %v1124 = vsel %vm1121, %v1122, %v1123
      %v1125 = vrot.slane %v754, 2
      %v1126 = vsel %vm1121, %v1123, %v1125
      %v1127 = vrot.slane %v755, 2
      %v1128 = vsel %vm1121, %v1125, %v1127
      %v1129 = vrot.slane %v756, 2
      %v1130 = vsel %vm1121, %v1127, %v1129
      %v1131 = vrot.slane %v757, 2
      %v1132 = vsel %vm1121, %v1129, %v1131
      %v1133 = vrot.slane %v914, 2
      %v1134 = vsel %vm1121, %v1131, %v1133
      %v1139 = vunpack.c.l.b16 %v1114
      %v1140 = vunpack.c.l.b16 %v1115
      %v1141 = vunpack.c.l.b16 %v1116
      %v1142 = vunpack.c.l.b16 %v1117
      %v1143 = vpack.c.b16 %v1140, %v1139
      %v1144 = vpack.c.b16 %v1142, %v1141
      %v1148 = vsel %vm323, %v1124, 0
      %v1151 = vsel %vm323, %v1126, 0
      %v1154 = vsel %vm323, %v1128, 0
      %v1157 = vsel %vm323, %v1130, 0
      %v1160 = vsel %vm323, %v1132, 0
      %v1163 = vsel %vm323, %v1134, 0
      %v1166 = vsel %vm323, %v1133, 0
      %1168 = vmatprep.subr.bf16.mxu0 0
      %1169 = vmatpush1.bf16.msra.mxu0 %v1143
      %1170 = vmatprep.subr.bf16.mxu0 0
      %1171 = vmatpush1.bf16.msra.mxu0 %v1144
      %1172 = vmatprep.subr.bf16.mxu0 0
      %1173 = vmatpush1.bf16.msra.mxu0 0
      %1174 = vmatprep.subr.bf16.mxu0 0
      %1175 = vmatpush1.bf16.msra.mxu0 0
      %1176 = vmatprep.subr.bf16.mxu0 0
      %1177 = vmatpush1.bf16.msra.mxu0 0
      %1178 = vmatprep.subr.bf16.mxu0 0
      %1179 = vmatpush1.bf16.msra.mxu0 0
      %1180 = vmatprep.subr.bf16.mxu0 0
      %1181 = vmatpush1.bf16.msra.mxu0 0
      %1182 = vmatprep.subr.bf16.mxu0 0
      %1183 = vmatpush1.bf16.msra.mxu0 0
      %1184 = vmatprep.subr.bf16.mxu0 0
      %1185 = vmatpush1.bf16.msra.mxu0 0
      %1186 = vmatprep.subr.bf16.mxu0 0
      %1187 = vmatpush1.bf16.msra.mxu0 0
      %1188 = vmatprep.subr.bf16.mxu0 0
      %1189 = vmatpush1.bf16.msra.mxu0 0
      %1190 = vmatprep.subr.bf16.mxu0 0
      %1191 = vmatpush1.bf16.msra.mxu0 0
      %1192 = vmatprep.subr.bf16.mxu0 0
      %1193 = vmatpush1.bf16.msra.mxu0 0
      %1194 = vmatprep.subr.bf16.mxu0 0
      %1195 = vmatpush1.bf16.msra.mxu0 0
      %1196 = vmatprep.subr.bf16.mxu0 0
      %1197 = vmatpush1.bf16.msra.mxu0 0
      %1198 = vmatprep.subr.bf16.mxu0 0
      %1199 = vmatpush1.bf16.msra.mxu0 0
      %1200 = vmatprep.mubr.bf16.mxu0 0
      %1201 = vmatmul.mubr.bf16.gmra.mrb[0].mxu0 %v1148
      %v1202 = vpop.f32.mrb[0].mxu0
      %v1203 = vadd.f32 0.0, %v1202
      %v1204 = vpop.f32.mrb[0].mxu0
      %v1205 = vpop.f32.mrb[0].mxu0
      %v1206 = vadd.f32 0.0, %v1205
      %v1207 = vpop.f32.mrb[0].mxu0
      %1208 = vmatprep.mubr.bf16.mxu0 0
      %1209 = vmatmul.mubr.bf16.gmra.mrb[0].mxu0 %v1151
      %v1210 = vpop.f32.mrb[0].mxu0
      %v1211 = vadd.f32 0.0, %v1210
      %v1212 = vpop.f32.mrb[0].mxu0
      %v1213 = vpop.f32.mrb[0].mxu0
      %v1214 = vadd.f32 0.0, %v1213
      %v1215 = vpop.f32.mrb[0].mxu0
      %1216 = vmatprep.mubr.bf16.mxu0 0
      %1217 = vmatmul.mubr.bf16.gmra.mrb[0].mxu0 %v1154
      %v1218 = vpop.f32.mrb[0].mxu0
      %v1219 = vadd.f32 0.0, %v1218
      %v1220 = vpop.f32.mrb[0].mxu0
      %v1221 = vpop.f32.mrb[0].mxu0
      %v1222 = vadd.f32 0.0, %v1221
      %v1223 = vpop.f32.mrb[0].mxu0
      %1224 = vmatprep.mubr.bf16.mxu0 0
      %1225 = vmatmul.mubr.bf16.gmra.mrb[0].mxu0 %v1157
      %v1226 = vpop.f32.mrb[0].mxu0
      %v1227 = vadd.f32 0.0, %v1226
      %v1228 = vpop.f32.mrb[0].mxu0
      %v1229 = vpop.f32.mrb[0].mxu0
      %v1230 = vadd.f32 0.0, %v1229
      %v1231 = vpop.f32.mrb[0].mxu0
      %1232 = vmatprep.mubr.bf16.mxu0 0
      %1233 = vmatmul.mubr.bf16.gmra.mrb[0].mxu0 %v1160
      %v1234 = vpop.f32.mrb[0].mxu0
      %v1235 = vadd.f32 0.0, %v1234
      %v1236 = vpop.f32.mrb[0].mxu0
      %v1237 = vpop.f32.mrb[0].mxu0
      %v1238 = vadd.f32 0.0, %v1237
      %v1239 = vpop.f32.mrb[0].mxu0
      %1240 = vmatprep.mubr.bf16.mxu0 0
      %1241 = vmatmul.mubr.bf16.gmra.mrb[0].mxu0 %v1163
      %v1242 = vpop.f32.mrb[0].mxu0
      %v1243 = vadd.f32 0.0, %v1242
      %v1244 = vpop.f32.mrb[0].mxu0
      %v1245 = vpop.f32.mrb[0].mxu0
      %v1246 = vadd.f32 0.0, %v1245
      %v1247 = vpop.f32.mrb[0].mxu0
      %1248 = vmatprep.mubr.bf16.mxu0 0
      %1249 = vmatmul.mubr.bf16.gmra.mrb[0].mxu0 %v1166
      %v1250 = vpop.f32.mrb[0].mxu0
      %v1251 = vadd.f32 0.0, %v1250
      %v1252 = vpop.f32.mrb[0].mxu0
      %v1253 = vpop.f32.mrb[0].mxu0
      %v1254 = vpop.f32.mrb[0].mxu0
      %1255 = vdwg.mxu0
      %v1256 = vadd.f32 %v1099, %v1203
      %v1257 = vadd.f32 %v1100, %v1206
      %v1258 = vadd.f32 %v1101, %v1211
      %v1259 = vadd.f32 %v1102, %v1214
      %v1260 = vadd.f32 %v1103, %v1219
      %v1261 = vadd.f32 %v1104, %v1222
      %v1262 = vadd.f32 %v1105, %v1227
      %v1263 = vadd.f32 %v1106, %v1230
      %v1264 = vadd.f32 %v1107, %v1235
      %v1265 = vadd.f32 %v1108, %v1238
      %v1266 = vadd.f32 %v1109, %v1243
      %v1267 = vadd.f32 %v1110, %v1246
      %v1268 = vadd.f32 %v1111, %v1251
      %v1269 = vld [vmem:[%s192 + $0x8] sm:$0xc]
      %v1270 = vld [vmem:[%s192 + $0xc] sm:$0xf]
      %v1271 = vld [vmem:[%s192 + $0x10] sm:$0xf]
      %v1272 = vld [vmem:[%s192 + $0x14] sm:$0xf]
      %v1273 = vld [vmem:[%s192 + $0x18] sm:$0xf]
      %v1274 = vld [vmem:[%s192 + $0x1c] sm:$0xf]
      %v1275 = vld [vmem:[%s192 + $0x20] sm:$0xf]
      %v1276 = vld [vmem:[%s192 + $0x24] sm:$0xf]
      %v1277 = vld [vmem:[%s192 + $0x28] sm:$0xf]
      %v1278 = vld [vmem:[%s192 + $0x2c] sm:$0xf]
      %v1279 = vld [vmem:[%s192 + $0x30] sm:$0xf]
      %v1280 = vld [vmem:[%s192 + $0x34] sm:$0xf]
      %v1281 = vld [vmem:[%s192 + $0x38] sm:$0xf]
      %s1282 = scalar_lea.vmem %s1, 96
      %v1283 = vld [vmem:[%s1282] sm:$0xf]
      %v1284 = vld [vmem:[%s1282 + $0x4] sm:$0xf]
      %v1285 = vld [vmem:[%s1282 + $0x8] sm:$0xf]
      %v1286 = vld [vmem:[%s1282 + $0xc] sm:$0xf]
      %v1300 = vunpack.c.l.b16 %v1269
      %v1301 = vunpack.c.l.b16 %v1270
      %v1302 = vunpack.c.l.b16 %v1271
      %v1303 = vunpack.c.l.b16 %v1272
      %v1304 = vunpack.c.l.b16 %v1273
      %v1305 = vunpack.c.l.b16 %v1274
      %v1306 = vunpack.c.l.b16 %v1275
      %v1307 = vunpack.c.l.b16 %v1276
      %v1308 = vunpack.c.l.b16 %v1277
      %v1309 = vunpack.c.l.b16 %v1278
      %v1310 = vunpack.c.l.b16 %v1279
      %v1311 = vunpack.c.l.b16 %v1280
      %v1312 = vunpack.c.l.b16 %v1281
      %v1313 = vpack.c.b16 %v1301, %v1300
      %v1314 = vpack.c.b16 %v1303, %v1302
      %v1315 = vpack.c.b16 %v1305, %v1304
      %v1316 = vpack.c.b16 %v1307, %v1306
      %v1317 = vpack.c.b16 %v1309, %v1308
      %v1318 = vpack.c.b16 %v1311, %v1310
      %v1319 = vpack.c.b16 %v1312, %v1312
      %v1320 = vrot.slane %v1313, 2
      %v1321 = vrot.slane %v1314, 2
      %v1322 = vsel %vm1121, %v1320, %v1321
      %v1323 = vrot.slane %v1315, 2
      %v1324 = vsel %vm1121, %v1321, %v1323
      %v1325 = vrot.slane %v1316, 2
      %v1326 = vsel %vm1121, %v1323, %v1325
      %v1327 = vrot.slane %v1317, 2
      %v1328 = vsel %vm1121, %v1325, %v1327
      %v1329 = vrot.slane %v1318, 2
      %v1330 = vsel %vm1121, %v1327, %v1329
      %v1331 = vrot.slane %v1319, 2
      %v1332 = vsel %vm1121, %v1329, %v1331
      %v1337 = vunpack.c.l.b16 %v1283
      %v1338 = vunpack.c.l.b16 %v1284
      %v1339 = vunpack.c.l.b16 %v1285
      %v1340 = vunpack.c.l.b16 %v1286
      %v1341 = vpack.c.b16 %v1338, %v1337
      %v1342 = vpack.c.b16 %v1340, %v1339
      %v1346 = vsel %vm323, %v1322, 0
      %v1349 = vsel %vm323, %v1324, 0
      %v1352 = vsel %vm323, %v1326, 0
      %v1355 = vsel %vm323, %v1328, 0
      %v1358 = vsel %vm323, %v1330, 0
      %v1361 = vsel %vm323, %v1332, 0
      %v1364 = vsel %vm323, %v1331, 0
      %1366 = vmatprep.subr.bf16.mxu0 0
      %1367 = vmatpush1.bf16.msra.mxu0 %v1341
      %1368 = vmatprep.subr.bf16.mxu0 0
      %1369 = vmatpush1.bf16.msra.mxu0 %v1342
      %1370 = vmatprep.subr.bf16.mxu0 0
      %1371 = vmatpush1.bf16.msra.mxu0 0
      %1372 = vmatprep.subr.bf16.mxu0 0
      %1373 = vmatpush1.bf16.msra.mxu0 0
      %1374 = vmatprep.subr.bf16.mxu0 0
      %1375 = vmatpush1.bf16.msra.mxu0 0
      %1376 = vmatprep.subr.bf16.mxu0 0
      %1377 = vmatpush1.bf16.msra.mxu0 0
      %1378 = vmatprep.subr.bf16.mxu0 0
      %1379 = vmatpush1.bf16.msra.mxu0 0
      %1380 = vmatprep.subr.bf16.mxu0 0
      %1381 = vmatpush1.bf16.msra.mxu0 0
      %1382 = vmatprep.subr.bf16.mxu0 0
      %1383 = vmatpush1.bf16.msra.mxu0 0
      %1384 = vmatprep.subr.bf16.mxu0 0
      %1385 = vmatpush1.bf16.msra.mxu0 0
      %1386 = vmatprep.subr.bf16.mxu0 0
      %1387 = vmatpush1.bf16.msra.mxu0 0
      %1388 = vmatprep.subr.bf16.mxu0 0
      %1389 = vmatpush1.bf16.msra.mxu0 0
      %1390 = vmatprep.subr.bf16.mxu0 0
      %1391 = vmatpush1.bf16.msra.mxu0 0
      %1392 = vmatprep.subr.bf16.mxu0 0
      %1393 = vmatpush1.bf16.msra.mxu0 0
      %1394 = vmatprep.subr.bf16.mxu0 0
      %1395 = vmatpush1.bf16.msra.mxu0 0
      %1396 = vmatprep.subr.bf16.mxu0 0
      %1397 = vmatpush1.bf16.msra.mxu0 0
      %1398 = vmatprep.mubr.bf16.mxu0 0
      %1399 = vmatmul.mubr.bf16.gmra.mrb[0].mxu0 %v1346
      %v1400 = vpop.f32.mrb[0].mxu0
      %v1401 = vadd.f32 0.0, %v1400
      %v1402 = vpop.f32.mrb[0].mxu0
      %v1403 = vpop.f32.mrb[0].mxu0
      %v1404 = vadd.f32 0.0, %v1403
      %v1405 = vpop.f32.mrb[0].mxu0
      %1406 = vmatprep.mubr.bf16.mxu0 0
      %1407 = vmatmul.mubr.bf16.gmra.mrb[0].mxu0 %v1349
      %v1408 = vpop.f32.mrb[0].mxu0
      %v1409 = vadd.f32 0.0, %v1408
      %v1410 = vpop.f32.mrb[0].mxu0
      %v1411 = vpop.f32.mrb[0].mxu0
      %v1412 = vadd.f32 0.0, %v1411
      %v1413 = vpop.f32.mrb[0].mxu0
      %1414 = vmatprep.mubr.bf16.mxu0 0
      %1415 = vmatmul.mubr.bf16.gmra.mrb[0].mxu0 %v1352
      %v1416 = vpop.f32.mrb[0].mxu0
      %v1417 = vadd.f32 0.0, %v1416
      %v1418 = vpop.f32.mrb[0].mxu0
      %v1419 = vpop.f32.mrb[0].mxu0
      %v1420 = vadd.f32 0.0, %v1419
      %v1421 = vpop.f32.mrb[0].mxu0
      %1422 = vmatprep.mubr.bf16.mxu0 0
      %1423 = vmatmul.mubr.bf16.gmra.mrb[0].mxu0 %v1355
      %v1424 = vpop.f32.mrb[0].mxu0
      %v1425 = vadd.f32 0.0, %v1424
      %v1426 = vpop.f32.mrb[0].mxu0
      %v1427 = vpop.f32.mrb[0].mxu0
      %v1428 = vadd.f32 0.0, %v1427
      %v1429 = vpop.f32.mrb[0].mxu0
      %1430 = vmatprep.mubr.bf16.mxu0 0
      %1431 = vmatmul.mubr.bf16.gmra.mrb[0].mxu0 %v1358
      %v1432 = vpop.f32.mrb[0].mxu0
      %v1433 = vadd.f32 0.0, %v1432
      %v1434 = vpop.f32.mrb[0].mxu0
      %v1435 = vpop.f32.mrb[0].mxu0
      %v1436 = vadd.f32 0.0, %v1435
      %v1437 = vpop.f32.mrb[0].mxu0
      %1438 = vmatprep.mubr.bf16.mxu0 0
      %1439 = vmatmul.mubr.bf16.gmra.mrb[0].mxu0 %v1361
      %v1440 = vpop.f32.mrb[0].mxu0
      %v1441 = vadd.f32 0.0, %v1440
      %v1442 = vpop.f32.mrb[0].mxu0
      %v1443 = vpop.f32.mrb[0].mxu0
      %v1444 = vadd.f32 0.0, %v1443
      %v1445 = vpop.f32.mrb[0].mxu0
      %1446 = vmatprep.mubr.bf16.mxu0 0
      %1447 = vmatmul.mubr.bf16.gmra.mrb[0].mxu0 %v1364
      %v1448 = vpop.f32.mrb[0].mxu0
      %v1449 = vadd.f32 0.0, %v1448
      %v1450 = vpop.f32.mrb[0].mxu0
      %v1451 = vpop.f32.mrb[0].mxu0
      %v1452 = vpop.f32.mrb[0].mxu0
      %1453 = vdwg.mxu0
      %v1454 = vadd.f32 %v1256, %v1401
      %v1455 = vadd.f32 %v1257, %v1404
      %v1456 = vadd.f32 %v1258, %v1409
      %v1457 = vadd.f32 %v1259, %v1412
      %v1458 = vadd.f32 %v1260, %v1417
      %v1459 = vadd.f32 %v1261, %v1420
      %v1460 = vadd.f32 %v1262, %v1425
      %v1461 = vadd.f32 %v1263, %v1428
      %v1462 = vadd.f32 %v1264, %v1433
      %v1463 = vadd.f32 %v1265, %v1436
      %v1464 = vadd.f32 %v1266, %v1441
      %v1465 = vadd.f32 %v1267, %v1444
      %v1466 = vadd.f32 %v1268, %v1449
      %v1467 = vld [vmem:[%s192 + $0x8] sm:$0xc]
      %v1468 = vld [vmem:[%s192 + $0xc] sm:$0xf]
      %v1469 = vld [vmem:[%s192 + $0x10] sm:$0xf]
      %v1470 = vld [vmem:[%s192 + $0x14] sm:$0xf]
      %v1471 = vld [vmem:[%s192 + $0x18] sm:$0xf]
      %v1472 = vld [vmem:[%s192 + $0x1c] sm:$0xf]
      %v1473 = vld [vmem:[%s192 + $0x20] sm:$0xf]
      %v1474 = vld [vmem:[%s192 + $0x24] sm:$0xf]
      %v1475 = vld [vmem:[%s192 + $0x28] sm:$0xf]
      %v1476 = vld [vmem:[%s192 + $0x2c] sm:$0xf]
      %v1477 = vld [vmem:[%s192 + $0x30] sm:$0xf]
      %v1478 = vld [vmem:[%s192 + $0x34] sm:$0xf]
      %v1479 = vld [vmem:[%s192 + $0x38] sm:$0xf]
      %v1480 = vld [vmem:[%s192 + $0x3c] sm:$0x1]
      %s1481 = scalar_lea.vmem %s1, 112
      %v1482 = vld [vmem:[%s1481] sm:$0xf]
      %v1483 = vld [vmem:[%s1481 + $0x4] sm:$0xf]
      %v1484 = vld [vmem:[%s1481 + $0x8] sm:$0xf]
      %v1485 = vld [vmem:[%s1481 + $0xc] sm:$0xf]
      %v1500 = vunpack.c.l.b16 %v1467
      %v1501 = vunpack.c.l.b16 %v1468
      %v1502 = vunpack.c.l.b16 %v1469
      %v1503 = vunpack.c.l.b16 %v1470
      %v1504 = vunpack.c.l.b16 %v1471
      %v1505 = vunpack.c.l.b16 %v1472
      %v1506 = vunpack.c.l.b16 %v1473
      %v1507 = vunpack.c.l.b16 %v1474
      %v1508 = vunpack.c.l.b16 %v1475
      %v1509 = vunpack.c.l.b16 %v1476
      %v1510 = vunpack.c.l.b16 %v1477
      %v1511 = vunpack.c.l.b16 %v1478
      %v1512 = vunpack.c.l.b16 %v1479
      %v1513 = vunpack.c.l.b16 %v1480
      %v1514 = vpack.c.b16 %v1501, %v1500
      %v1515 = vpack.c.b16 %v1503, %v1502
      %v1516 = vpack.c.b16 %v1505, %v1504
      %v1517 = vpack.c.b16 %v1507, %v1506
      %v1518 = vpack.c.b16 %v1509, %v1508
      %v1519 = vpack.c.b16 %v1511, %v1510
      %v1520 = vpack.c.b16 %v1513, %v1512
      %vm1521 = vsmask.f32 5376
      %v1523 = vshrl.u32 %v1514, 16
      %v1525 = vrot.slane %v1523, 2
      %v1526 = vshll.u32 %v1514, 16
      %v1528 = vrot.slane %v1526, 3
      %v1529 = vor.u32 %v1525, %v1528
      %v1531 = vshrl.u32 %v1515, 16
      %v1533 = vrot.slane %v1531, 2
      %v1534 = vshll.u32 %v1515, 16
      %v1536 = vrot.slane %v1534, 3
      %v1537 = vor.u32 %v1533, %v1536
      %v1538 = vsel %vm1521, %v1529, %v1537
      %v1540 = vshrl.u32 %v1516, 16
      %v1542 = vrot.slane %v1540, 2
      %v1543 = vshll.u32 %v1516, 16
      %v1545 = vrot.slane %v1543, 3
      %v1546 = vor.u32 %v1542, %v1545
      %v1547 = vsel %vm1521, %v1537, %v1546
      %v1549 = vshrl.u32 %v1517, 16
      %v1551 = vrot.slane %v1549, 2
      %v1552 = vshll.u32 %v1517, 16
      %v1554 = vrot.slane %v1552, 3
      %v1555 = vor.u32 %v1551, %v1554
      %v1556 = vsel %vm1521, %v1546, %v1555
      %v1558 = vshrl.u32 %v1518, 16
      %v1560 = vrot.slane %v1558, 2
      %v1561 = vshll.u32 %v1518, 16
      %v1563 = vrot.slane %v1561, 3
      %v1564 = vor.u32 %v1560, %v1563
      %v1565 = vsel %vm1521, %v1555, %v1564
      %v1567 = vshrl.u32 %v1519, 16
      %v1569 = vrot.slane %v1567, 2
      %v1570 = vshll.u32 %v1519, 16
      %v1572 = vrot.slane %v1570, 3
      %v1573 = vor.u32 %v1569, %v1572
      %v1574 = vsel %vm1521, %v1564, %v1573
      %v1576 = vshrl.u32 %v1520, 16
      %v1578 = vrot.slane %v1576, 2
      %v1579 = vshll.u32 %v1520, 16
      %v1581 = vrot.slane %v1579, 3
      %v1582 = vor.u32 %v1578, %v1581
      %v1583 = vsel %vm1521, %v1573, %v1582
      %v1588 = vunpack.c.l.b16 %v1482
      %v1589 = vunpack.c.l.b16 %v1483
      %v1590 = vunpack.c.l.b16 %v1484
      %v1591 = vunpack.c.l.b16 %v1485
      %v1592 = vpack.c.b16 %v1589, %v1588
      %v1593 = vpack.c.b16 %v1591, %v1590
      %v1597 = vsel %vm323, %v1538, 0
      %v1600 = vsel %vm323, %v1547, 0
      %v1603 = vsel %vm323, %v1556, 0
      %v1606 = vsel %vm323, %v1565, 0
      %v1609 = vsel %vm323, %v1574, 0
      %v1612 = vsel %vm323, %v1583, 0
      %v1615 = vsel %vm323, %v1582, 0
      %1617 = vmatprep.subr.bf16.mxu0 0
      %1618 = vmatpush1.bf16.msra.mxu0 %v1592
      %1619 = vmatprep.subr.bf16.mxu0 0
      %1620 = vmatpush1.bf16.msra.mxu0 %v1593
      %1621 = vmatprep.subr.bf16.mxu0 0
      %1622 = vmatpush1.bf16.msra.mxu0 0
      %1623 = vmatprep.subr.bf16.mxu0 0
      %1624 = vmatpush1.bf16.msra.mxu0 0
      %1625 = vmatprep.subr.bf16.mxu0 0
      %1626 = vmatpush1.bf16.msra.mxu0 0
      %1627 = vmatprep.subr.bf16.mxu0 0
      %1628 = vmatpush1.bf16.msra.mxu0 0
      %1629 = vmatprep.subr.bf16.mxu0 0
      %1630 = vmatpush1.bf16.msra.mxu0 0
      %1631 = vmatprep.subr.bf16.mxu0 0
      %1632 = vmatpush1.bf16.msra.mxu0 0
      %1633 = vmatprep.subr.bf16.mxu0 0
      %1634 = vmatpush1.bf16.msra.mxu0 0
      %1635 = vmatprep.subr.bf16.mxu0 0
      %1636 = vmatpush1.bf16.msra.mxu0 0
      %1637 = vmatprep.subr.bf16.mxu0 0
      %1638 = vmatpush1.bf16.msra.mxu0 0
      %1639 = vmatprep.subr.bf16.mxu0 0
      %1640 = vmatpush1.bf16.msra.mxu0 0
      %1641 = vmatprep.subr.bf16.mxu0 0
      %1642 = vmatpush1.bf16.msra.mxu0 0
      %1643 = vmatprep.subr.bf16.mxu0 0
      %1644 = vmatpush1.bf16.msra.mxu0 0
      %1645 = vmatprep.subr.bf16.mxu0 0
      %1646 = vmatpush1.bf16.msra.mxu0 0
      %1647 = vmatprep.subr.bf16.mxu0 0
      %1648 = vmatpush1.bf16.msra.mxu0 0
      %1649 = vmatprep.mubr.bf16.mxu0 0
      %1650 = vmatmul.mubr.bf16.gmra.mrb[0].mxu0 %v1597
      %v1651 = vpop.f32.mrb[0].mxu0
      %v1652 = vadd.f32 0.0, %v1651
      %v1653 = vpop.f32.mrb[0].mxu0
      %v1654 = vpop.f32.mrb[0].mxu0
      %v1655 = vadd.f32 0.0, %v1654
      %v1656 = vpop.f32.mrb[0].mxu0
      %1657 = vmatprep.mubr.bf16.mxu0 0
      %1658 = vmatmul.mubr.bf16.gmra.mrb[0].mxu0 %v1600
      %v1659 = vpop.f32.mrb[0].mxu0
      %v1660 = vadd.f32 0.0, %v1659
      %v1661 = vpop.f32.mrb[0].mxu0
      %v1662 = vpop.f32.mrb[0].mxu0
      %v1663 = vadd.f32 0.0, %v1662
      %v1664 = vpop.f32.mrb[0].mxu0
      %1665 = vmatprep.mubr.bf16.mxu0 0
      %1666 = vmatmul.mubr.bf16.gmra.mrb[0].mxu0 %v1603
      %v1667 = vpop.f32.mrb[0].mxu0
      %v1668 = vadd.f32 0.0, %v1667
      %v1669 = vpop.f32.mrb[0].mxu0
      %v1670 = vpop.f32.mrb[0].mxu0
      %v1671 = vadd.f32 0.0, %v1670
      %v1672 = vpop.f32.mrb[0].mxu0
      %1673 = vmatprep.mubr.bf16.mxu0 0
      %1674 = vmatmul.mubr.bf16.gmra.mrb[0].mxu0 %v1606
      %v1675 = vpop.f32.mrb[0].mxu0
      %v1676 = vadd.f32 0.0, %v1675
      %v1677 = vpop.f32.mrb[0].mxu0
      %v1678 = vpop.f32.mrb[0].mxu0
      %v1679 = vadd.f32 0.0, %v1678
      %v1680 = vpop.f32.mrb[0].mxu0
      %1681 = vmatprep.mubr.bf16.mxu0 0
      %1682 = vmatmul.mubr.bf16.gmra.mrb[0].mxu0 %v1609
      %v1683 = vpop.f32.mrb[0].mxu0
      %v1684 = vadd.f32 0.0, %v1683
      %v1685 = vpop.f32.mrb[0].mxu0
      %v1686 = vpop.f32.mrb[0].mxu0
      %v1687 = vadd.f32 0.0, %v1686
      %v1688 = vpop.f32.mrb[0].mxu0
      %1689 = vmatprep.mubr.bf16.mxu0 0
      %1690 = vmatmul.mubr.bf16.gmra.mrb[0].mxu0 %v1612
      %v1691 = vpop.f32.mrb[0].mxu0
      %v1692 = vadd.f32 0.0, %v1691
      %v1693 = vpop.f32.mrb[0].mxu0
      %v1694 = vpop.f32.mrb[0].mxu0
      %v1695 = vadd.f32 0.0, %v1694
      %v1696 = vpop.f32.mrb[0].mxu0
      %1697 = vmatprep.mubr.bf16.mxu0 0
      %1698 = vmatmul.mubr.bf16.gmra.mrb[0].mxu0 %v1615
      %v1699 = vpop.f32.mrb[0].mxu0
      %v1700 = vadd.f32 0.0, %v1699
      %v1701 = vpop.f32.mrb[0].mxu0
      %v1702 = vpop.f32.mrb[0].mxu0
      %v1703 = vpop.f32.mrb[0].mxu0
      %1704 = vdwg.mxu0
      %v1705 = vadd.f32 %v1454, %v1652
      %v1706 = vadd.f32 %v1455, %v1655
      %v1707 = vadd.f32 %v1456, %v1660
      %v1708 = vadd.f32 %v1457, %v1663
      %v1709 = vadd.f32 %v1458, %v1668
      %v1710 = vadd.f32 %v1459, %v1671
      %v1711 = vadd.f32 %v1460, %v1676
      %v1712 = vadd.f32 %v1461, %v1679
      %v1713 = vadd.f32 %v1462, %v1684
      %v1714 = vadd.f32 %v1463, %v1687
      %v1715 = vadd.f32 %v1464, %v1692
      %v1716 = vadd.f32 %v1465, %v1695
      %v1717 = vadd.f32 %v1466, %v1700
      %v1718 = vld [vmem:[%s192 + $0x8] sm:$0x8]
      %s1719 = scalar_lea.vmem %s1, 128
      %v1720 = vld [vmem:[%s1719] sm:$0xf]
      %v1721 = vld [vmem:[%s1719 + $0x4] sm:$0xf]
      %v1722 = vld [vmem:[%s1719 + $0x8] sm:$0xf]
      %v1723 = vld [vmem:[%s1719 + $0xc] sm:$0xf]
      %v1725 = vunpack.c.l.b16 %v1718
      %v1726 = vpack.c.b16 %v1501, %v1725
      %vm1727 = vcmask 1044480
      %v1728 = vrot.slane %v1726, 3
      %v1729 = vrot.slane %v1515, 3
      %v1730 = vsel %vm1727, %v1728, %v1729
      %v1731 = vrot.slane %v1516, 3
      %v1732 = vsel %vm1727, %v1729, %v1731
      %v1733 = vrot.slane %v1517, 3
      %v1734 = vsel %vm1727, %v1731, %v1733
      %v1735 = vrot.slane %v1518, 3
      %v1736 = vsel %vm1727, %v1733, %v1735
      %v1737 = vrot.slane %v1519, 3
      %v1738 = vsel %vm1727, %v1735, %v1737
      %v1739 = vrot.slane %v1520, 3
      %v1740 = vsel %vm1727, %v1737, %v1739
      %v1745 = vunpack.c.l.b16 %v1720
      %v1746 = vunpack.c.l.b16 %v1721
      %v1747 = vunpack.c.l.b16 %v1722
      %v1748 = vunpack.c.l.b16 %v1723
      %v1749 = vpack.c.b16 %v1746, %v1745
      %v1750 = vpack.c.b16 %v1748, %v1747
      %v1754 = vsel %vm323, %v1730, 0
      %v1757 = vsel %vm323, %v1732, 0
      %v1760 = vsel %vm323, %v1734, 0
      %v1763 = vsel %vm323, %v1736, 0
      %v1766 = vsel %vm323, %v1738, 0
      %v1769 = vsel %vm323, %v1740, 0
      %v1772 = vsel %vm323, %v1739, 0
      %1774 = vmatprep.subr.bf16.mxu0 0
      %1775 = vmatpush1.bf16.msra.mxu0 %v1749
      %1776 = vmatprep.subr.bf16.mxu0 0
      %1777 = vmatpush1.bf16.msra.mxu0 %v1750
      %1778 = vmatprep.subr.bf16.mxu0 0
      %1779 = vmatpush1.bf16.msra.mxu0 0
      %1780 = vmatprep.subr.bf16.mxu0 0
      %1781 = vmatpush1.bf16.msra.mxu0 0
      %1782 = vmatprep.subr.bf16.mxu0 0
      %1783 = vmatpush1.bf16.msra.mxu0 0
      %1784 = vmatprep.subr.bf16.mxu0 0
      %1785 = vmatpush1.bf16.msra.mxu0 0
      %1786 = vmatprep.subr.bf16.mxu0 0
      %1787 = vmatpush1.bf16.msra.mxu0 0
      %1788 = vmatprep.subr.bf16.mxu0 0
      %1789 = vmatpush1.bf16.msra.mxu0 0
      %1790 = vmatprep.subr.bf16.mxu0 0
      %1791 = vmatpush1.bf16.msra.mxu0 0
      %1792 = vmatprep.subr.bf16.mxu0 0
      %1793 = vmatpush1.bf16.msra.mxu0 0
      %1794 = vmatprep.subr.bf16.mxu0 0
      %1795 = vmatpush1.bf16.msra.mxu0 0
      %1796 = vmatprep.subr.bf16.mxu0 0
      %1797 = vmatpush1.bf16.msra.mxu0 0
      %1798 = vmatprep.subr.bf16.mxu0 0
      %1799 = vmatpush1.bf16.msra.mxu0 0
      %1800 = vmatprep.subr.bf16.mxu0 0
      %1801 = vmatpush1.bf16.msra.mxu0 0
      %1802 = vmatprep.subr.bf16.mxu0 0
      %1803 = vmatpush1.bf16.msra.mxu0 0
      %1804 = vmatprep.subr.bf16.mxu0 0
      %1805 = vmatpush1.bf16.msra.mxu0 0
      %1806 = vmatprep.mubr.bf16.mxu0 0
      %1807 = vmatmul.mubr.bf16.gmra.mrb[0].mxu0 %v1754
      %v1808 = vpop.f32.mrb[0].mxu0
      %v1809 = vadd.f32 0.0, %v1808
      %v1810 = vpop.f32.mrb[0].mxu0
      %v1811 = vpop.f32.mrb[0].mxu0
      %v1812 = vadd.f32 0.0, %v1811
      %v1813 = vpop.f32.mrb[0].mxu0
      %1814 = vmatprep.mubr.bf16.mxu0 0
      %1815 = vmatmul.mubr.bf16.gmra.mrb[0].mxu0 %v1757
      %v1816 = vpop.f32.mrb[0].mxu0
      %v1817 = vadd.f32 0.0, %v1816
      %v1818 = vpop.f32.mrb[0].mxu0
      %v1819 = vpop.f32.mrb[0].mxu0
      %v1820 = vadd.f32 0.0, %v1819
      %v1821 = vpop.f32.mrb[0].mxu0
      %1822 = vmatprep.mubr.bf16.mxu0 0
      %1823 = vmatmul.mubr.bf16.gmra.mrb[0].mxu0 %v1760
      %v1824 = vpop.f32.mrb[0].mxu0
      %v1825 = vadd.f32 0.0, %v1824
      %v1826 = vpop.f32.mrb[0].mxu0
      %v1827 = vpop.f32.mrb[0].mxu0
      %v1828 = vadd.f32 0.0, %v1827
      %v1829 = vpop.f32.mrb[0].mxu0
      %1830 = vmatprep.mubr.bf16.mxu0 0
      %1831 = vmatmul.mubr.bf16.gmra.mrb[0].mxu0 %v1763
      %v1832 = vpop.f32.mrb[0].mxu0
      %v1833 = vadd.f32 0.0, %v1832
      %v1834 = vpop.f32.mrb[0].mxu0
      %v1835 = vpop.f32.mrb[0].mxu0
      %v1836 = vadd.f32 0.0, %v1835
      %v1837 = vpop.f32.mrb[0].mxu0
      %1838 = vmatprep.mubr.bf16.mxu0 0
      %1839 = vmatmul.mubr.bf16.gmra.mrb[0].mxu0 %v1766
      %v1840 = vpop.f32.mrb[0].mxu0
      %v1841 = vadd.f32 0.0, %v1840
      %v1842 = vpop.f32.mrb[0].mxu0
      %v1843 = vpop.f32.mrb[0].mxu0
      %v1844 = vadd.f32 0.0, %v1843
      %v1845 = vpop.f32.mrb[0].mxu0
      %1846 = vmatprep.mubr.bf16.mxu0 0
      %1847 = vmatmul.mubr.bf16.gmra.mrb[0].mxu0 %v1769
      %v1848 = vpop.f32.mrb[0].mxu0
      %v1849 = vadd.f32 0.0, %v1848
      %v1850 = vpop.f32.mrb[0].mxu0
      %v1851 = vpop.f32.mrb[0].mxu0
      %v1852 = vadd.f32 0.0, %v1851
      %v1853 = vpop.f32.mrb[0].mxu0
      %1854 = vmatprep.mubr.bf16.mxu0 0
      %1855 = vmatmul.mubr.bf16.gmra.mrb[0].mxu0 %v1772
      %v1856 = vpop.f32.mrb[0].mxu0
      %v1857 = vadd.f32 0.0, %v1856
      %v1858 = vpop.f32.mrb[0].mxu0
      %v1859 = vpop.f32.mrb[0].mxu0
      %v1860 = vpop.f32.mrb[0].mxu0
      %1861 = vdwg.mxu0
      %v1862 = vadd.f32 %v1705, %v1809
      %v1863 = vadd.f32 %v1706, %v1812
      %v1864 = vadd.f32 %v1707, %v1817
      %v1865 = vadd.f32 %v1708, %v1820
      %v1866 = vadd.f32 %v1709, %v1825
      %v1867 = vadd.f32 %v1710, %v1828
      %v1868 = vadd.f32 %v1711, %v1833
      %v1869 = vadd.f32 %v1712, %v1836
      %v1870 = vadd.f32 %v1713, %v1841
      %v1871 = vadd.f32 %v1714, %v1844
      %v1872 = vadd.f32 %v1715, %v1849
      %v1873 = vadd.f32 %v1716, %v1852
      %v1874 = vadd.f32 %v1717, %v1857
      %v1875 = vld [vmem:[%s2] sm:$0x1]
      %v1877 = vlaneseq
      %v1878 = vshrl.u32 %v1877, 7
      %v1879 = vsub.s32 0, %v1878
      %v1880 = vrot.slane %v1875, %v1879
      %v1882 = vadd.f32 %v1862, %v1880
      %v1883 = vadd.f32 %v1863, %v1880
      %v1884 = vadd.f32 %v1864, %v1880
      %v1885 = vadd.f32 %v1865, %v1880
      %v1886 = vadd.f32 %v1866, %v1880
      %v1887 = vadd.f32 %v1867, %v1880
      %v1888 = vadd.f32 %v1868, %v1880
      %v1889 = vadd.f32 %v1869, %v1880
      %v1890 = vadd.f32 %v1870, %v1880
      %v1891 = vadd.f32 %v1871, %v1880
      %v1892 = vadd.f32 %v1872, %v1880
      %v1893 = vadd.f32 %v1873, %v1880
      %v1894 = vadd.f32 %v1874, %v1880
      %vm1895 = vcmp.gt.f32.partialorder %v1882, 0.0
      %vm1896 = vcmp.gt.f32.partialorder %v1883, 0.0
      %vm1897 = vcmp.gt.f32.partialorder %v1884, 0.0
      %vm1898 = vcmp.gt.f32.partialorder %v1885, 0.0
      %vm1899 = vcmp.gt.f32.partialorder %v1886, 0.0
      %vm1900 = vcmp.gt.f32.partialorder %v1887, 0.0
      %vm1901 = vcmp.gt.f32.partialorder %v1888, 0.0
      %vm1902 = vcmp.gt.f32.partialorder %v1889, 0.0
      %vm1903 = vcmp.gt.f32.partialorder %v1890, 0.0
      %vm1904 = vcmp.gt.f32.partialorder %v1891, 0.0
      %vm1905 = vcmp.gt.f32.partialorder %v1892, 0.0
      %vm1906 = vcmp.gt.f32.partialorder %v1893, 0.0
      %vm1907 = vcmp.gt.f32.partialorder %v1894, 0.0
      %v1908 = vmul.f32 %v1882, 0.2
      %v1909 = vmul.f32 %v1883, 0.2
      %v1910 = vmul.f32 %v1884, 0.2
      %v1911 = vmul.f32 %v1885, 0.2
      %v1912 = vmul.f32 %v1886, 0.2
      %v1913 = vmul.f32 %v1887, 0.2
      %v1914 = vmul.f32 %v1888, 0.2
      %v1915 = vmul.f32 %v1889, 0.2
      %v1916 = vmul.f32 %v1890, 0.2
      %v1917 = vmul.f32 %v1891, 0.2
      %v1918 = vmul.f32 %v1892, 0.2
      %v1919 = vmul.f32 %v1893, 0.2
      %v1920 = vmul.f32 %v1894, 0.2
      %v1921 = vsel %vm1895, %v1882, %v1908
      %v1922 = vsel %vm1896, %v1883, %v1909
      %v1923 = vsel %vm1897, %v1884, %v1910
      %v1924 = vsel %vm1898, %v1885, %v1911
      %v1925 = vsel %vm1899, %v1886, %v1912
      %v1926 = vsel %vm1900, %v1887, %v1913
      %v1927 = vsel %vm1901, %v1888, %v1914
      %v1928 = vsel %vm1902, %v1889, %v1915
      %v1929 = vsel %vm1903, %v1890, %v1916
      %v1930 = vsel %vm1904, %v1891, %v1917
      %v1931 = vsel %vm1905, %v1892, %v1918
      %v1932 = vsel %vm1906, %v1893, %v1919
      %v1933 = vsel %vm1907, %v1894, %v1920
      %v1934 = vmul.f32 %v1921, %v1921
      %v1935 = vmul.f32 %v1922, %v1922
      %v1936 = vmul.f32 %v1923, %v1923
      %v1937 = vmul.f32 %v1924, %v1924
      %v1938 = vmul.f32 %v1925, %v1925
      %v1939 = vmul.f32 %v1926, %v1926
      %v1940 = vmul.f32 %v1927, %v1927
      %v1941 = vmul.f32 %v1928, %v1928
      %v1942 = vmul.f32 %v1929, %v1929
      %v1943 = vmul.f32 %v1930, %v1930
      %v1944 = vmul.f32 %v1931, %v1931
      %v1945 = vmul.f32 %v1932, %v1932
      %v1946 = vmul.f32 %v1933, %v1933
      %v1947 = vsel %vm323, %v1934, 0.0
      %1948 = vadd.xlane.f32.xlu0 %v1947
      %v1949 = vpop.xlane.xlu0 %1948
      %v1950 = vsel %vm323, %v1935, 0.0
      %1951 = vadd.xlane.f32.xlu0 %v1950
      %v1952 = vpop.xlane.xlu0 %1951
      %v1953 = vsel %vm323, %v1936, 0.0
      %1954 = vadd.xlane.f32.xlu0 %v1953
      %v1955 = vpop.xlane.xlu0 %1954
      %v1956 = vsel %vm323, %v1937, 0.0
      %1957 = vadd.xlane.f32.xlu0 %v1956
      %v1958 = vpop.xlane.xlu0 %1957
      %v1959 = vsel %vm323, %v1938, 0.0
      %1960 = vadd.xlane.f32.xlu0 %v1959
      %v1961 = vpop.xlane.xlu0 %1960
      %v1962 = vsel %vm323, %v1939, 0.0
      %1963 = vadd.xlane.f32.xlu0 %v1962
      %v1964 = vpop.xlane.xlu0 %1963
      %v1965 = vsel %vm323, %v1940, 0.0
      %1966 = vadd.xlane.f32.xlu0 %v1965
      %v1967 = vpop.xlane.xlu0 %1966
      %v1968 = vsel %vm323, %v1941, 0.0
      %1969 = vadd.xlane.f32.xlu0 %v1968
      %v1970 = vpop.xlane.xlu0 %1969
      %v1971 = vsel %vm323, %v1942, 0.0
      %1972 = vadd.xlane.f32.xlu0 %v1971
      %v1973 = vpop.xlane.xlu0 %1972
      %v1974 = vsel %vm323, %v1943, 0.0
      %1975 = vadd.xlane.f32.xlu0 %v1974
      %v1976 = vpop.xlane.xlu0 %1975
      %v1977 = vsel %vm323, %v1944, 0.0
      %1978 = vadd.xlane.f32.xlu0 %v1977
      %v1979 = vpop.xlane.xlu0 %1978
      %v1980 = vsel %vm323, %v1945, 0.0
      %1981 = vadd.xlane.f32.xlu0 %v1980
      %v1982 = vpop.xlane.xlu0 %1981
      %vm1983 = vcmask 257024
      %v1984 = vsel %vm1983, %v1946, 0.0
      %1985 = vadd.xlane.f32.xlu0 %v1984
      %v1986 = vpop.xlane.xlu0 %1985
      %v1987 = vrcp.pop 32.0
      %v1988 = vmul.f32 %v1949, %v1987
      %v1989 = vmul.f32 %v1952, %v1987
      %v1990 = vmul.f32 %v1955, %v1987
      %v1991 = vmul.f32 %v1958, %v1987
      %v1992 = vmul.f32 %v1961, %v1987
      %v1993 = vmul.f32 %v1964, %v1987
      %v1994 = vmul.f32 %v1967, %v1987
      %v1995 = vmul.f32 %v1970, %v1987
      %v1996 = vmul.f32 %v1973, %v1987
      %v1997 = vmul.f32 %v1976, %v1987
      %v1998 = vmul.f32 %v1979, %v1987
      %v1999 = vmul.f32 %v1982, %v1987
      %v2000 = vmul.f32 %v1986, %v1987
      %v2001 = vadd.f32 %v1988, 1e-08
      %v2002 = vadd.f32 %v1989, 1e-08
      %v2003 = vadd.f32 %v1990, 1e-08
      %v2004 = vadd.f32 %v1991, 1e-08
      %v2005 = vadd.f32 %v1992, 1e-08
      %v2006 = vadd.f32 %v1993, 1e-08
      %v2007 = vadd.f32 %v1994, 1e-08
      %v2008 = vadd.f32 %v1995, 1e-08
      %v2009 = vadd.f32 %v1996, 1e-08
      %v2010 = vadd.f32 %v1997, 1e-08
      %v2011 = vadd.f32 %v1998, 1e-08
      %v2012 = vadd.f32 %v1999, 1e-08
      %v2013 = vadd.f32 %v2000, 1e-08
      %v2014 = vrsqrt.pop %v2001
      %v2015 = vrsqrt.pop %v2002
      %v2016 = vrsqrt.pop %v2003
      %v2017 = vrsqrt.pop %v2004
      %v2018 = vrsqrt.pop %v2005
      %v2019 = vrsqrt.pop %v2006
      %v2020 = vrsqrt.pop %v2007
      %v2021 = vrsqrt.pop %v2008
      %v2022 = vrsqrt.pop %v2009
      %v2023 = vrsqrt.pop %v2010
      %v2024 = vrsqrt.pop %v2011
      %v2025 = vrsqrt.pop %v2012
      %v2026 = vrsqrt.pop %v2013
      %v2027 = vmul.f32 %v1921, %v2014
      %v2028 = vmul.f32 %v1922, %v2015
      %v2029 = vmul.f32 %v1923, %v2016
      %v2030 = vmul.f32 %v1924, %v2017
      %v2031 = vmul.f32 %v1925, %v2018
      %v2032 = vmul.f32 %v1926, %v2019
      %v2033 = vmul.f32 %v1927, %v2020
      %v2034 = vmul.f32 %v1928, %v2021
      %v2035 = vmul.f32 %v1929, %v2022
      %v2036 = vmul.f32 %v1930, %v2023
      %v2037 = vmul.f32 %v1931, %v2024
      %v2038 = vmul.f32 %v1932, %v2025
      %v2039 = vmul.f32 %v1933, %v2026
      %v2040 = vld [vmem:[%s3] sm:$0xff]
      %v2041 = vld [vmem:[%s3 + $0x8] sm:$0xff]
      %v2042 = vld [vmem:[%s3 + $0x10] sm:$0xff]
      %v2043 = vld [vmem:[%s3 + $0x18] sm:$0xff]
      %v2044 = vld [vmem:[%s3 + $0x20] sm:$0xff]
      %v2045 = vld [vmem:[%s3 + $0x28] sm:$0xff]
      %v2046 = vld [vmem:[%s3 + $0x30] sm:$0xff]
      %v2047 = vld [vmem:[%s3 + $0x38] sm:$0xff]
      %v2048 = vld [vmem:[%s3 + $0x40] sm:$0xff]
      %v2049 = vld [vmem:[%s3 + $0x48] sm:$0xff]
      %v2050 = vld [vmem:[%s3 + $0x50] sm:$0xff]
      %v2051 = vld [vmem:[%s3 + $0x58] sm:$0xff]
      %v2052 = vld [vmem:[%s3 + $0x60] sm:$0xf]
      %2054 = vset.pattern.permute.xlu0 0
      %2055 = vperm.xlu0 %2054, %v2040
      %v2056 = vpop.permute.xlu0 %2055
      %2059 = vset.pattern.permute.xlu0 0
      %2060 = vperm.xlu0 %2059, %v2041
      %v2061 = vpop.permute.xlu0 %2060
      %2064 = vset.pattern.permute.xlu0 0
      %2065 = vperm.xlu0 %2064, %v2042
      %v2066 = vpop.permute.xlu0 %2065
      %2069 = vset.pattern.permute.xlu0 0
      %2070 = vperm.xlu0 %2069, %v2043
      %v2071 = vpop.permute.xlu0 %2070
      %2074 = vset.pattern.permute.xlu0 0
      %2075 = vperm.xlu0 %2074, %v2044
      %v2076 = vpop.permute.xlu0 %2075
      %2079 = vset.pattern.permute.xlu0 0
      %2080 = vperm.xlu0 %2079, %v2045
      %v2081 = vpop.permute.xlu0 %2080
      %2084 = vset.pattern.permute.xlu0 0
      %2085 = vperm.xlu0 %2084, %v2046
      %v2086 = vpop.permute.xlu0 %2085
      %2089 = vset.pattern.permute.xlu0 0
      %2090 = vperm.xlu0 %2089, %v2047
      %v2091 = vpop.permute.xlu0 %2090
      %2094 = vset.pattern.permute.xlu0 0
      %2095 = vperm.xlu0 %2094, %v2048
      %v2096 = vpop.permute.xlu0 %2095
      %2099 = vset.pattern.permute.xlu0 0
      %2100 = vperm.xlu0 %2099, %v2049
      %v2101 = vpop.permute.xlu0 %2100
      %2104 = vset.pattern.permute.xlu0 0
      %2105 = vperm.xlu0 %2104, %v2050
      %v2106 = vpop.permute.xlu0 %2105
      %2109 = vset.pattern.permute.xlu0 0
      %2110 = vperm.xlu0 %2109, %v2051
      %v2111 = vpop.permute.xlu0 %2110
      %2114 = vset.pattern.permute.xlu0 0
      %2115 = vperm.xlu0 %2114, %v2052
      %v2116 = vpop.permute.xlu0 %2115
      %v2118 = vmul.f32 %v2027, %v2056
      %v2119 = vmul.f32 %v2028, %v2061
      %v2120 = vmul.f32 %v2029, %v2066
      %v2121 = vmul.f32 %v2030, %v2071
      %v2122 = vmul.f32 %v2031, %v2076
      %v2123 = vmul.f32 %v2032, %v2081
      %v2124 = vmul.f32 %v2033, %v2086
      %v2125 = vmul.f32 %v2034, %v2091
      %v2126 = vmul.f32 %v2035, %v2096
      %v2127 = vmul.f32 %v2036, %v2101
      %v2128 = vmul.f32 %v2037, %v2106
      %v2129 = vmul.f32 %v2038, %v2111
      %v2130 = vmul.f32 %v2039, %v2116
      %2131 = vst.msk [vmem:[%s197] sm:$0xf] %vm1983, 0
      %vm2132 = vcmask 254976
      %vm2133 = vsmask.f32 1280
      %vm2134 = vmand %vm2132, %vm2133
      %v2135 = vld [vmem:[%s197 + $0x4] sm:$0x3]
      %v2136 = vsel %vm2134, 0, %v2135
      %2137 = vst [vmem:[%s197 + $0x4] sm:$0x3] %v2136
      %vm2138 = vcmask 257027
      %vm2139 = vsmask.f32 7950
      %vm2140 = vmand %vm2138, %vm2139
      %v2141 = vld [vmem:[%s197 + $0x34] sm:$0x8]
      %v2142 = vsel %vm2140, 0, %v2141
      %2143 = vst [vmem:[%s197 + $0x34] sm:$0x8] %v2142
      %2144 = vst.msk [vmem:[%s197 + $0x38] sm:$0xf] %vm1983, 0
      %vm2145 = vcmask 253952
      %2146 = vst.msk [vmem:[%s197 + $0x3c] sm:$0x1] %vm2145, 0
      %v2147 = vpack.c.bf16 %v2119, %v2118
      %v2148 = vpack.c.bf16 %v2121, %v2120
      %v2149 = vpack.c.bf16 %v2123, %v2122
      %v2150 = vpack.c.bf16 %v2125, %v2124
      %v2151 = vpack.c.bf16 %v2127, %v2126
      %v2152 = vpack.c.bf16 %v2129, %v2128
      %v2153 = vpack.c.bf16 %v2130, %v2130
      %v2161 = vunpack.c.l.b16 %v2147
      %v2162 = vunpack.c.h.b16 %v2147
      %v2163 = vunpack.c.l.b16 %v2148
      %v2164 = vunpack.c.h.b16 %v2148
      %v2165 = vunpack.c.l.b16 %v2149
      %v2166 = vunpack.c.h.b16 %v2149
      %v2167 = vunpack.c.l.b16 %v2150
      %v2168 = vunpack.c.h.b16 %v2150
      %v2169 = vunpack.c.l.b16 %v2151
      %v2170 = vunpack.c.h.b16 %v2151
      %v2171 = vunpack.c.l.b16 %v2152
      %v2172 = vunpack.c.h.b16 %v2152
      %v2173 = vunpack.c.l.b16 %v2153
      %v2174 = vpack.c.b16 %v2161, %v2161
      %v2175 = vpack.c.b16 %v2162, %v2162
      %v2176 = vpack.c.b16 %v2163, %v2163
      %v2177 = vpack.c.b16 %v2164, %v2164
      %v2178 = vpack.c.b16 %v2165, %v2165
      %v2179 = vpack.c.b16 %v2166, %v2166
      %v2180 = vpack.c.b16 %v2167, %v2167
      %v2181 = vpack.c.b16 %v2168, %v2168
      %v2182 = vpack.c.b16 %v2169, %v2169
      %v2183 = vpack.c.b16 %v2170, %v2170
      %v2184 = vpack.c.b16 %v2171, %v2171
      %v2185 = vpack.c.b16 %v2172, %v2172
      %v2186 = vpack.c.b16 %v2173, %v2173
      %vm2187 = vsmask.f32 5392
      %vm2188 = vmor %vm2133, %vm2187
      %v2190 = vshrl.u32 %v2174, 16
      %v2192 = vrot.slane %v2190, 6
      %v2193 = vshll.u32 %v2174, 16
      %v2195 = vrot.slane %v2193, 7
      %v2196 = vor.u32 %v2192, %v2195
      %v2197 = vrot.slane %v2196, 4
      %v2199 = vshrl.u32 %v2175, 16
      %v2201 = vrot.slane %v2199, 6
      %v2202 = vshll.u32 %v2175, 16
      %v2204 = vrot.slane %v2202, 7
      %v2205 = vor.u32 %v2201, %v2204
      %v2206 = vsel %vm2188, %v2197, %v2205
      %v2207 = vrot.slane %v2205, 4
      %v2209 = vshrl.u32 %v2176, 16
      %v2211 = vrot.slane %v2209, 6
      %v2212 = vshll.u32 %v2176, 16
      %v2214 = vrot.slane %v2212, 7
      %v2215 = vor.u32 %v2211, %v2214
      %v2216 = vsel %vm2188, %v2207, %v2215
      %v2217 = vrot.slane %v2215, 4
      %v2219 = vshrl.u32 %v2177, 16
      %v2221 = vrot.slane %v2219, 6
      %v2222 = vshll.u32 %v2177, 16
      %v2224 = vrot.slane %v2222, 7
      %v2225 = vor.u32 %v2221, %v2224
      %v2226 = vsel %vm2188, %v2217, %v2225
      %v2227 = vrot.slane %v2225, 4
      %v2229 = vshrl.u32 %v2178, 16
      %v2231 = vrot.slane %v2229, 6
      %v2232 = vshll.u32 %v2178, 16
      %v2234 = vrot.slane %v2232, 7
      %v2235 = vor.u32 %v2231, %v2234
      %v2236 = vsel %vm2188, %v2227, %v2235
      %v2237 = vrot.slane %v2235, 4
      %v2239 = vshrl.u32 %v2179, 16
      %v2241 = vrot.slane %v2239, 6
      %v2242 = vshll.u32 %v2179, 16
      %v2244 = vrot.slane %v2242, 7
      %v2245 = vor.u32 %v2241, %v2244
      %v2246 = vsel %vm2188, %v2237, %v2245
      %v2247 = vrot.slane %v2245, 4
      %v2249 = vshrl.u32 %v2180, 16
      %v2251 = vrot.slane %v2249, 6
      %v2252 = vshll.u32 %v2180, 16
      %v2254 = vrot.slane %v2252, 7
      %v2255 = vor.u32 %v2251, %v2254
      %v2256 = vsel %vm2188, %v2247, %v2255
      %v2257 = vrot.slane %v2255, 4
      %v2259 = vshrl.u32 %v2181, 16
      %v2261 = vrot.slane %v2259, 6
      %v2262 = vshll.u32 %v2181, 16
      %v2264 = vrot.slane %v2262, 7
      %v2265 = vor.u32 %v2261, %v2264
      %v2266 = vsel %vm2188, %v2257, %v2265
      %v2267 = vrot.slane %v2265, 4
      %v2269 = vshrl.u32 %v2182, 16
      %v2271 = vrot.slane %v2269, 6
      %v2272 = vshll.u32 %v2182, 16
      %v2274 = vrot.slane %v2272, 7
      %v2275 = vor.u32 %v2271, %v2274
      %v2276 = vsel %vm2188, %v2267, %v2275
      %v2277 = vrot.slane %v2275, 4
      %v2279 = vshrl.u32 %v2183, 16
      %v2281 = vrot.slane %v2279, 6
      %v2282 = vshll.u32 %v2183, 16
      %v2284 = vrot.slane %v2282, 7
      %v2285 = vor.u32 %v2281, %v2284
      %v2286 = vsel %vm2188, %v2277, %v2285
      %v2287 = vrot.slane %v2285, 4
      %v2289 = vshrl.u32 %v2184, 16
      %v2291 = vrot.slane %v2289, 6
      %v2292 = vshll.u32 %v2184, 16
      %v2294 = vrot.slane %v2292, 7
      %v2295 = vor.u32 %v2291, %v2294
      %v2296 = vsel %vm2188, %v2287, %v2295
      %v2297 = vrot.slane %v2295, 4
      %v2299 = vshrl.u32 %v2185, 16
      %v2301 = vrot.slane %v2299, 6
      %v2302 = vshll.u32 %v2185, 16
      %v2304 = vrot.slane %v2302, 7
      %v2305 = vor.u32 %v2301, %v2304
      %v2306 = vsel %vm2188, %v2297, %v2305
      %v2307 = vrot.slane %v2305, 4
      %v2309 = vshrl.u32 %v2186, 16
      %v2311 = vrot.slane %v2309, 6
      %v2312 = vshll.u32 %v2186, 16
      %v2314 = vrot.slane %v2312, 7
      %v2315 = vor.u32 %v2311, %v2314
      %v2316 = vsel %vm2188, %v2307, %v2315
      %vm2330 = vcmask 257025
      %vm2331 = vsmask.f32 7942
      %vm2332 = vmand %vm2330, %vm2331
      %v2333 = vld [vmem:[%s197 + $0x4] sm:$0xe]
      %v2334 = vsel %vm2332, %v2196, %v2333
      %2335 = vst [vmem:[%s197 + $0x4] sm:$0xe] %v2334
      %2336 = vst.msk [vmem:[%s197 + $0x8] sm:$0xf] %vm1983, %v2206
      %2337 = vst.msk [vmem:[%s197 + $0xc] sm:$0xf] %vm1983, %v2216
      %2338 = vst.msk [vmem:[%s197 + $0x10] sm:$0xf] %vm1983, %v2226
      %2339 = vst.msk [vmem:[%s197 + $0x14] sm:$0xf] %vm1983, %v2236
      %2340 = vst.msk [vmem:[%s197 + $0x18] sm:$0xf] %vm1983, %v2246
      %2341 = vst.msk [vmem:[%s197 + $0x1c] sm:$0xf] %vm1983, %v2256
      %2342 = vst.msk [vmem:[%s197 + $0x20] sm:$0xf] %vm1983, %v2266
      %2343 = vst.msk [vmem:[%s197 + $0x24] sm:$0xf] %vm1983, %v2276
      %2344 = vst.msk [vmem:[%s197 + $0x28] sm:$0xf] %vm1983, %v2286
      %2345 = vst.msk [vmem:[%s197 + $0x2c] sm:$0xf] %vm1983, %v2296
      %2346 = vst.msk [vmem:[%s197 + $0x30] sm:$0xf] %vm1983, %v2306
      %vm2347 = vcmask 257024
      %vm2348 = vsmask.f32 3328
      %vm2349 = vmand %vm2347, %vm2348
      %v2350 = vld [vmem:[%s197 + $0x34] sm:$0xf]
      %v2351 = vsel %vm2349, %v2316, %v2350
      %2352 = vst [vmem:[%s197 + $0x34] sm:$0xf] %v2351
      %p2353 = scmp.lt.s32.totalorder %s15, 1
      %s2354 = scalar_select %p2353, %s15, 1
      %s2355 = smul.addr %s2354, 16
      %s2356 = smul.addr %s2355, 4
      %s2357 = scalar_lea.vmem %s4, %s2356
      // Predicated region
      $region37: #{generator_forward.9} parent=35 // pred_check
        %p2358 = pneg %p122
      $region38: #{generator_forward.9} parent=35 // pred_check_branch
        %2360 = sbr.rel (%p2358) target = $region40
      $region39: #{generator_forward.9} parent=35 // pred_region
        _
      $region40: #{generator_forward.9} parent=35 // pred_fallthru
        _
    $region36: #{generator_forward.9} parent=5 // pred_fallthru
      _
    %p2361 = scmp.le.s32.totalorder 2, %s10
    // Predicated region
    $region41: #{generator_forward.9} parent=5 // pred_check
      %p2362 = pneg %p2361
    $region42: #{generator_forward.9} parent=5 // pred_check_branch
      %2364 = sbr.rel (%p2362) target = $region44
    $region43: #{generator_forward.9} parent=5 // pred_region
      %s2365 = ssub.s32 %s10, 2
      // Predicated region
      $region45: #{generator_forward.9} parent=43 // pred_check
        %p2366 = pneg %p128
      $region46: #{generator_forward.9} parent=43 // pred_check_branch
        %2368 = sbr.rel (%p2366) target = $region48
      $region47: #{generator_forward.9} parent=43 // pred_region
        %p2369 = scmp.lt.s32.totalorder %s16, 1
        %s2370 = scalar_select %p2369, %s16, 1
        %s2371 = smul.addr %s2370, 16
        %s2372 = smul.addr %s2371, 4
        %s2373 = scalar_lea.vmem %s4, %s2372
      $region48: #{generator_forward.9} parent=43 // pred_fallthru
        _
    $region44: #{generator_forward.9} parent=5 // pred_fallthru
      _
  $region6: #{generator_forward.9} parent=0 // loop_footer
    %s14 = sadd.s32 1, %s10
  $region7: #{generator_forward.9} parent=0 // loop_footer_branch
    %9 = sbr.rel target = $region3
  $region8: #{generator_forward.9} parent=0 // loop_exit
    _

// kernel: generator_forward.13
$region0: #{generator_forward.13}
  #allocation0 [shape = 'u32[]', space=smem, size = 0x4, offset = 0x4, fixed_abs, tag = 'smem constant byte address 0x4 - core index']
  #allocation1 [shape = 'u32[144,128]{1,0:T(1,128)}', space=vmem, size = 0x12000, scoped, tag = 'internal scratch']
  #allocation2 [shape = 'f32[1]{0:T(128)S(6)}', space=smem, size = 0x200, scoped, tag = 'scoped memory for generator_forward.13']
  %s0 = inlined_call_operand.<no memory space> [shape: f32[1], index: 0, kind: input, shape index: {}]
  %s1 = inlined_call_operand.vmem [shape: bf16[512,32], index: 1, kind: input, shape index: {}]
  %s2 = inlined_call_operand.vmem [shape: bf16[512,32], index: 2, kind: input, shape index: {}]
  %s3 = inlined_call_operand.vmem [shape: bf16[32,13], index: 3, kind: input, shape index: {}]
  %s4 = inlined_call_operand.vmem [shape: f32[1,13], index: 4, kind: input, shape index: {}]
  %s5 = inlined_call_operand.vmem [shape: bf16[32,13], index: 5, kind: input, shape index: {}]
  %s6 = inlined_call_operand.vmem [shape: f32[1,13], index: 6, kind: input, shape index: {}]
  %s7 = inlined_call_operand.vmem [shape: f32[512,13], index: 7, kind: output, shape index: {}]
  %s8 = sld [smem:[#allocation0]]
  $region38: #{generator_forward.13} parent=0
    _
  %s10 = ssub.s32 1, %s8
  %s11 = scalar_select 0, %s10, %s8
  %12 = sst [smem:[#allocation2]] %s0
  // Predicated region
  $region2: #{generator_forward.13} parent=0 // pred_check
    _
  $region3: #{generator_forward.13} parent=0 // pred_check_branch
    %14 = sbr.rel (0) target = $region5
  $region4: #{generator_forward.13} parent=0 // pred_region
    _
  $region5: #{generator_forward.13} parent=0 // pred_fallthru
    _
  // Predicated region
  $region6: #{generator_forward.13} parent=0 // pred_check
    _
  $region7: #{generator_forward.13} parent=0 // pred_check_branch
    %16 = sbr.rel (0) target = $region9
  $region8: #{generator_forward.13} parent=0 // pred_region
    _
  $region9: #{generator_forward.13} parent=0 // pred_fallthru
    _
  // Predicated region
  $region10: #{generator_forward.13} parent=0 // pred_check
    _
  $region11: #{generator_forward.13} parent=0 // pred_check_branch
    %18 = sbr.rel (0) target = $region13
  $region12: #{generator_forward.13} parent=0 // pred_region
    _
  $region13: #{generator_forward.13} parent=0 // pred_fallthru
    _
  // Predicated region
  $region14: #{generator_forward.13} parent=0 // pred_check
    _
  $region15: #{generator_forward.13} parent=0 // pred_check_branch
    %20 = sbr.rel (0) target = $region17
  $region16: #{generator_forward.13} parent=0 // pred_region
    _
  $region17: #{generator_forward.13} parent=0 // pred_fallthru
    _
  // Predicated region
  $region18: #{generator_forward.13} parent=0 // pred_check
    _
  $region19: #{generator_forward.13} parent=0 // pred_check_branch
    %22 = sbr.rel (0) target = $region21
  $region20: #{generator_forward.13} parent=0 // pred_region
    _
  $region21: #{generator_forward.13} parent=0 // pred_fallthru
    _
  // Predicated region
  $region22: #{generator_forward.13} parent=0 // pred_check
    _
  $region23: #{generator_forward.13} parent=0 // pred_check_branch
    %24 = sbr.rel (0) target = $region25
  $region24: #{generator_forward.13} parent=0 // pred_region
    _
  $region25: #{generator_forward.13} parent=0 // pred_fallthru
    _
  // Predicated region
  $region26: #{generator_forward.13} parent=0 // pred_check
    _
  $region27: #{generator_forward.13} parent=0 // pred_check_branch
    %26 = sbr.rel (0) target = $region29
  $region28: #{generator_forward.13} parent=0 // pred_region
    _
  $region29: #{generator_forward.13} parent=0 // pred_fallthru
    _
  %s28 = sld [smem:[#allocation2]]
  %v29 = vld [vmem:[%s1] sm:$0xf]
  %v30 = vld [vmem:[%s1 + $0x4] sm:$0xf]
  %v31 = vld [vmem:[%s1 + $0x8] sm:$0xf]
  %v32 = vld [vmem:[%s1 + $0xc] sm:$0xf]
  %v33 = vld [vmem:[%s1 + $0x10] sm:$0xf]
  %v34 = vld [vmem:[%s1 + $0x14] sm:$0xf]
  %v35 = vld [vmem:[%s1 + $0x18] sm:$0xf]
  %v36 = vld [vmem:[%s1 + $0x1c] sm:$0xf]
  %v37 = vld [vmem:[%s1 + $0x20] sm:$0xf]
  %v38 = vld [vmem:[%s1 + $0x24] sm:$0xf]
  %v39 = vld [vmem:[%s1 + $0x28] sm:$0xf]
  %v40 = vld [vmem:[%s1 + $0x2c] sm:$0xf]
  %v41 = vld [vmem:[%s1 + $0x30] sm:$0xf]
  %v42 = vld [vmem:[%s1 + $0x34] sm:$0xf]
  %v43 = vld [vmem:[%s1 + $0x38] sm:$0xf]
  %v44 = vld [vmem:[%s1 + $0x3c] sm:$0xf]
  %v45 = vld [vmem:[%s1 + $0x40] sm:$0xf]
  %v46 = vld [vmem:[%s1 + $0x44] sm:$0xf]
  %v47 = vld [vmem:[%s1 + $0x48] sm:$0xf]
  %v48 = vld [vmem:[%s1 + $0x4c] sm:$0xf]
  %v49 = vld [vmem:[%s1 + $0x50] sm:$0xf]
  %v50 = vld [vmem:[%s1 + $0x54] sm:$0xf]
  %v51 = vld [vmem:[%s1 + $0x58] sm:$0xf]
  %v52 = vld [vmem:[%s1 + $0x5c] sm:$0xf]
  %v53 = vld [vmem:[%s1 + $0x60] sm:$0xf]
  %v54 = vld [vmem:[%s1 + $0x64] sm:$0xf]
  %v55 = vld [vmem:[%s1 + $0x68] sm:$0xf]
  %v56 = vld [vmem:[%s1 + $0x6c] sm:$0xf]
  %v57 = vld [vmem:[%s1 + $0x70] sm:$0xf]
  %v58 = vld [vmem:[%s1 + $0x74] sm:$0xf]
  %v59 = vld [vmem:[%s1 + $0x78] sm:$0xf]
  %v60 = vld [vmem:[%s1 + $0x7c] sm:$0xf]
  %v61 = vld [vmem:[%s1 + $0x80] sm:$0xf]
  %v62 = vld [vmem:[%s1 + $0x84] sm:$0xf]
  %v63 = vld [vmem:[%s1 + $0x88] sm:$0xf]
  %v64 = vld [vmem:[%s1 + $0x8c] sm:$0xf]
  %v65 = vld [vmem:[%s1 + $0x90] sm:$0xf]
  %v66 = vld [vmem:[%s1 + $0x94] sm:$0xf]
  %v67 = vld [vmem:[%s1 + $0x98] sm:$0xf]
  %v68 = vld [vmem:[%s1 + $0x9c] sm:$0xf]
  %v69 = vld [vmem:[%s1 + $0xa0] sm:$0xf]
  %v70 = vld [vmem:[%s1 + $0xa4] sm:$0xf]
  %v71 = vld [vmem:[%s1 + $0xa8] sm:$0xf]
  %v72 = vld [vmem:[%s1 + $0xac] sm:$0xf]
  %v73 = vld [vmem:[%s1 + $0xb0] sm:$0xf]
  %v74 = vld [vmem:[%s1 + $0xb4] sm:$0xf]
  %v75 = vld [vmem:[%s1 + $0xb8] sm:$0xf]
  %v76 = vld [vmem:[%s1 + $0xbc] sm:$0xf]
  %v77 = vld [vmem:[%s1 + $0xc0] sm:$0xf]
  %v78 = vld [vmem:[%s1 + $0xc4] sm:$0xf]
  %v79 = vld [vmem:[%s1 + $0xc8] sm:$0xf]
  %v80 = vld [vmem:[%s1 + $0xcc] sm:$0xf]
  %v81 = vld [vmem:[%s1 + $0xd0] sm:$0xf]
  %v82 = vld [vmem:[%s1 + $0xd4] sm:$0xf]
  %v83 = vld [vmem:[%s1 + $0xd8] sm:$0xf]
  %v84 = vld [vmem:[%s1 + $0xdc] sm:$0xf]
  %v85 = vld [vmem:[%s1 + $0xe0] sm:$0xf]
  %v86 = vld [vmem:[%s1 + $0xe4] sm:$0xf]
  %v87 = vld [vmem:[%s1 + $0xe8] sm:$0xf]
  %v88 = vld [vmem:[%s1 + $0xec] sm:$0xf]
  %v89 = vld [vmem:[%s1 + $0xf0] sm:$0xf]
  %v90 = vld [vmem:[%s1 + $0xf4] sm:$0xf]
  %v91 = vld [vmem:[%s1 + $0xf8] sm:$0xf]
  %v92 = vld [vmem:[%s1 + $0xfc] sm:$0xf]
  %v93 = vld [vmem:[%s3] sm:$0xf]
  %v94 = vld [vmem:[%s3 + $0x4] sm:$0xf]
  %v95 = vld [vmem:[%s3 + $0x8] sm:$0xf]
  %v96 = vld [vmem:[%s3 + $0xc] sm:$0xf]
  %v97 = vld [vmem:[%s4] sm:$0x1]
  %v99 = vlaneseq
  %v100 = vshrl.u32 %v99, 7
  %v101 = vsub.s32 0, %v100
  %v102 = vrot.slane %v97, %v101
  %v168 = vunpack.c.l.b16 %v29
  %v169 = vunpack.c.l.b16 %v30
  %v170 = vunpack.c.l.b16 %v31
  %v171 = vunpack.c.l.b16 %v32
  %v172 = vunpack.c.l.b16 %v33
  %v173 = vunpack.c.l.b16 %v34
  %v174 = vunpack.c.l.b16 %v35
  %v175 = vunpack.c.l.b16 %v36
  %v176 = vunpack.c.l.b16 %v37
  %v177 = vunpack.c.l.b16 %v38
  %v178 = vunpack.c.l.b16 %v39
  %v179 = vunpack.c.l.b16 %v40
  %v180 = vunpack.c.l.b16 %v41
  %v181 = vunpack.c.l.b16 %v42
  %v182 = vunpack.c.l.b16 %v43
  %v183 = vunpack.c.l.b16 %v44
  %v184 = vunpack.c.l.b16 %v45
  %v185 = vunpack.c.l.b16 %v46
  %v186 = vunpack.c.l.b16 %v47
  %v187 = vunpack.c.l.b16 %v48
  %v188 = vunpack.c.l.b16 %v49
  %v189 = vunpack.c.l.b16 %v50
  %v190 = vunpack.c.l.b16 %v51
  %v191 = vunpack.c.l.b16 %v52
  %v192 = vunpack.c.l.b16 %v53
  %v193 = vunpack.c.l.b16 %v54
  %v194 = vunpack.c.l.b16 %v55
  %v195 = vunpack.c.l.b16 %v56
  %v196 = vunpack.c.l.b16 %v57
  %v197 = vunpack.c.l.b16 %v58
  %v198 = vunpack.c.l.b16 %v59
  %v199 = vunpack.c.l.b16 %v60
  %v200 = vunpack.c.l.b16 %v61
  %v201 = vunpack.c.l.b16 %v62
  %v202 = vunpack.c.l.b16 %v63
  %v203 = vunpack.c.l.b16 %v64
  %v204 = vunpack.c.l.b16 %v65
  %v205 = vunpack.c.l.b16 %v66
  %v206 = vunpack.c.l.b16 %v67
  %v207 = vunpack.c.l.b16 %v68
  %v208 = vunpack.c.l.b16 %v69
  %v209 = vunpack.c.l.b16 %v70
  %v210 = vunpack.c.l.b16 %v71
  %v211 = vunpack.c.l.b16 %v72
  %v212 = vunpack.c.l.b16 %v73
  %v213 = vunpack.c.l.b16 %v74
  %v214 = vunpack.c.l.b16 %v75
  %v215 = vunpack.c.l.b16 %v76
  %v216 = vunpack.c.l.b16 %v77
  %v217 = vunpack.c.l.b16 %v78
  %v218 = vunpack.c.l.b16 %v79
  %v219 = vunpack.c.l.b16 %v80
  %v220 = vunpack.c.l.b16 %v81
  %v221 = vunpack.c.l.b16 %v82
  %v222 = vunpack.c.l.b16 %v83
  %v223 = vunpack.c.l.b16 %v84
  %v224 = vunpack.c.l.b16 %v85
  %v225 = vunpack.c.l.b16 %v86
  %v226 = vunpack.c.l.b16 %v87
  %v227 = vunpack.c.l.b16 %v88
  %v228 = vunpack.c.l.b16 %v89
  %v229 = vunpack.c.l.b16 %v90
  %v230 = vunpack.c.l.b16 %v91
  %v231 = vunpack.c.l.b16 %v92
  %v232 = vpack.c.b16 %v169, %v168
  %v233 = vpack.c.b16 %v171, %v170
  %v234 = vpack.c.b16 %v173, %v172
  %v235 = vpack.c.b16 %v175, %v174
  %v236 = vpack.c.b16 %v177, %v176
  %v237 = vpack.c.b16 %v179, %v178
  %v238 = vpack.c.b16 %v181, %v180
  %v239 = vpack.c.b16 %v183, %v182
  %v240 = vpack.c.b16 %v185, %v184
  %v241 = vpack.c.b16 %v187, %v186
  %v242 = vpack.c.b16 %v189, %v188
  %v243 = vpack.c.b16 %v191, %v190
  %v244 = vpack.c.b16 %v193, %v192
  %v245 = vpack.c.b16 %v195, %v194
  %v246 = vpack.c.b16 %v197, %v196
  %v247 = vpack.c.b16 %v199, %v198
  %v248 = vpack.c.b16 %v201, %v200
  %v249 = vpack.c.b16 %v203, %v202
  %v250 = vpack.c.b16 %v205, %v204
  %v251 = vpack.c.b16 %v207, %v206
  %v252 = vpack.c.b16 %v209, %v208
  %v253 = vpack.c.b16 %v211, %v210
  %v254 = vpack.c.b16 %v213, %v212
  %v255 = vpack.c.b16 %v215, %v214
  %v256 = vpack.c.b16 %v217, %v216
  %v257 = vpack.c.b16 %v219, %v218
  %v258 = vpack.c.b16 %v221, %v220
  %v259 = vpack.c.b16 %v223, %v222
  %v260 = vpack.c.b16 %v225, %v224
  %v261 = vpack.c.b16 %v227, %v226
  %v262 = vpack.c.b16 %v229, %v228
  %v263 = vpack.c.b16 %v231, %v230
  %v268 = vunpack.c.l.b16 %v93
  %v269 = vunpack.c.l.b16 %v94
  %v270 = vunpack.c.l.b16 %v95
  %v271 = vunpack.c.l.b16 %v96
  %v272 = vpack.c.b16 %v269, %v268
  %v273 = vpack.c.b16 %v271, %v270
  %vm276 = vcmask 261120
  %v278 = vsel %vm276, %v232, 0
  %v281 = vsel %vm276, %v233, 0
  %v284 = vsel %vm276, %v234, 0
  %v287 = vsel %vm276, %v235, 0
  %v290 = vsel %vm276, %v236, 0
  %v293 = vsel %vm276, %v237, 0
  %v296 = vsel %vm276, %v238, 0
  %v299 = vsel %vm276, %v239, 0
  %v302 = vsel %vm276, %v240, 0
  %v305 = vsel %vm276, %v241, 0
  %v308 = vsel %vm276, %v242, 0
  %v311 = vsel %vm276, %v243, 0
  %v314 = vsel %vm276, %v244, 0
  %v317 = vsel %vm276, %v245, 0
  %v320 = vsel %vm276, %v246, 0
  %v323 = vsel %vm276, %v247, 0
  %v326 = vsel %vm276, %v248, 0
  %v329 = vsel %vm276, %v249, 0
  %v332 = vsel %vm276, %v250, 0
  %v335 = vsel %vm276, %v251, 0
  %v338 = vsel %vm276, %v252, 0
  %v341 = vsel %vm276, %v253, 0
  %v344 = vsel %vm276, %v254, 0
  %v347 = vsel %vm276, %v255, 0
  %v350 = vsel %vm276, %v256, 0
  %v353 = vsel %vm276, %v257, 0
  %v356 = vsel %vm276, %v258, 0
  %v359 = vsel %vm276, %v259, 0
  %v362 = vsel %vm276, %v260, 0
  %v365 = vsel %vm276, %v261, 0
  %v368 = vsel %vm276, %v262, 0
  %v371 = vsel %vm276, %v263, 0
  %373 = vmatprep.subr.bf16.mxu0 0
  %374 = vmatpush1.bf16.msra.mxu0 %v272
  %375 = vmatprep.subr.bf16.mxu0 0
  %376 = vmatpush1.bf16.msra.mxu0 %v273
  %377 = vmatprep.subr.bf16.mxu0 0
  %378 = vmatpush1.bf16.msra.mxu0 0
  %379 = vmatprep.subr.bf16.mxu0 0
  %380 = vmatpush1.bf16.msra.mxu0 0
  %381 = vmatprep.subr.bf16.mxu0 0
  %382 = vmatpush1.bf16.msra.mxu0 0
  %383 = vmatprep.subr.bf16.mxu0 0
  %384 = vmatpush1.bf16.msra.mxu0 0
  %385 = vmatprep.subr.bf16.mxu0 0
  %386 = vmatpush1.bf16.msra.mxu0 0
  %387 = vmatprep.subr.bf16.mxu0 0
  %388 = vmatpush1.bf16.msra.mxu0 0
  %389 = vmatprep.subr.bf16.mxu0 0
  %390 = vmatpush1.bf16.msra.mxu0 0
  %391 = vmatprep.subr.bf16.mxu0 0
  %392 = vmatpush1.bf16.msra.mxu0 0
  %393 = vmatprep.subr.bf16.mxu0 0
  %394 = vmatpush1.bf16.msra.mxu0 0
  %395 = vmatprep.subr.bf16.mxu0 0
  %396 = vmatpush1.bf16.msra.mxu0 0
  %397 = vmatprep.subr.bf16.mxu0 0
  %398 = vmatpush1.bf16.msra.mxu0 0
  %399 = vmatprep.subr.bf16.mxu0 0
  %400 = vmatpush1.bf16.msra.mxu0 0
  %401 = vmatprep.subr.bf16.mxu0 0
  %402 = vmatpush1.bf16.msra.mxu0 0
  %403 = vmatprep.subr.bf16.mxu0 0
  %404 = vmatpush1.bf16.msra.mxu0 0
  %405 = vmatprep.mubr.bf16.mxu0 0
  %406 = vmatmul.mubr.bf16.gmra.mrb[0].mxu0 %v278
  %v407 = vpop.f32.mrb[0].mxu0
  %v408 = vadd.f32 %v102, %v407
  %v409 = vpop.f32.mrb[0].mxu0
  %v410 = vpop.f32.mrb[0].mxu0
  %v411 = vadd.f32 %v102, %v410
  %v412 = vpop.f32.mrb[0].mxu0
  %413 = vmatprep.mubr.bf16.mxu0 0
  %414 = vmatmul.mubr.bf16.gmra.mrb[0].mxu0 %v281
  %v415 = vpop.f32.mrb[0].mxu0
  %v416 = vadd.f32 %v102, %v415
  %v417 = vpop.f32.mrb[0].mxu0
  %v418 = vpop.f32.mrb[0].mxu0
  %v419 = vadd.f32 %v102, %v418
  %v420 = vpop.f32.mrb[0].mxu0
  %421 = vmatprep.mubr.bf16.mxu0 0
  %422 = vmatmul.mubr.bf16.gmra.mrb[0].mxu0 %v284
  %v423 = vpop.f32.mrb[0].mxu0
  %v424 = vadd.f32 %v102, %v423
  %v425 = vpop.f32.mrb[0].mxu0
  %v426 = vpop.f32.mrb[0].mxu0
  %v427 = vadd.f32 %v102, %v426
  %v428 = vpop.f32.mrb[0].mxu0
  %429 = vmatprep.mubr.bf16.mxu0 0
  %430 = vmatmul.mubr.bf16.gmra.mrb[0].mxu0 %v287
  %v431 = vpop.f32.mrb[0].mxu0
  %v432 = vadd.f32 %v102, %v431
  %v433 = vpop.f32.mrb[0].mxu0
  %v434 = vpop.f32.mrb[0].mxu0
  %v435 = vadd.f32 %v102, %v434
  %v436 = vpop.f32.mrb[0].mxu0
  %437 = vmatprep.mubr.bf16.mxu0 0
  %438 = vmatmul.mubr.bf16.gmra.mrb[0].mxu0 %v290
  %v439 = vpop.f32.mrb[0].mxu0
  %v440 = vadd.f32 %v102, %v439
  %v441 = vpop.f32.mrb[0].mxu0
  %v442 = vpop.f32.mrb[0].mxu0
  %v443 = vadd.f32 %v102, %v442
  %v444 = vpop.f32.mrb[0].mxu0
  %445 = vmatprep.mubr.bf16.mxu0 0
  %446 = vmatmul.mubr.bf16.gmra.mrb[0].mxu0 %v293
  %v447 = vpop.f32.mrb[0].mxu0
  %v448 = vadd.f32 %v102, %v447
  %v449 = vpop.f32.mrb[0].mxu0
  %v450 = vpop.f32.mrb[0].mxu0
  %v451 = vadd.f32 %v102, %v450
  %v452 = vpop.f32.mrb[0].mxu0
  %453 = vmatprep.mubr.bf16.mxu0 0
  %454 = vmatmul.mubr.bf16.gmra.mrb[0].mxu0 %v296
  %v455 = vpop.f32.mrb[0].mxu0
  %v456 = vadd.f32 %v102, %v455
  %v457 = vpop.f32.mrb[0].mxu0
  %v458 = vpop.f32.mrb[0].mxu0
  %v459 = vadd.f32 %v102, %v458
  %v460 = vpop.f32.mrb[0].mxu0
  %461 = vmatprep.mubr.bf16.mxu0 0
  %462 = vmatmul.mubr.bf16.gmra.mrb[0].mxu0 %v299
  %v463 = vpop.f32.mrb[0].mxu0
  %v464 = vadd.f32 %v102, %v463
  %v465 = vpop.f32.mrb[0].mxu0
  %v466 = vpop.f32.mrb[0].mxu0
  %v467 = vadd.f32 %v102, %v466
  %v468 = vpop.f32.mrb[0].mxu0
  %469 = vmatprep.mubr.bf16.mxu0 0
  %470 = vmatmul.mubr.bf16.gmra.mrb[0].mxu0 %v302
  %v471 = vpop.f32.mrb[0].mxu0
  %v472 = vadd.f32 %v102, %v471
  %v473 = vpop.f32.mrb[0].mxu0
  %v474 = vpop.f32.mrb[0].mxu0
  %v475 = vadd.f32 %v102, %v474
  %v476 = vpop.f32.mrb[0].mxu0
  %477 = vmatprep.mubr.bf16.mxu0 0
  %478 = vmatmul.mubr.bf16.gmra.mrb[0].mxu0 %v305
  %v479 = vpop.f32.mrb[0].mxu0
  %v480 = vadd.f32 %v102, %v479
  %v481 = vpop.f32.mrb[0].mxu0
  %v482 = vpop.f32.mrb[0].mxu0
  %v483 = vadd.f32 %v102, %v482
  %v484 = vpop.f32.mrb[0].mxu0
  %485 = vmatprep.mubr.bf16.mxu0 0
  %486 = vmatmul.mubr.bf16.gmra.mrb[0].mxu0 %v308
  %v487 = vpop.f32.mrb[0].mxu0
  %v488 = vadd.f32 %v102, %v487
  %v489 = vpop.f32.mrb[0].mxu0
  %v490 = vpop.f32.mrb[0].mxu0
  %v491 = vadd.f32 %v102, %v490
  %v492 = vpop.f32.mrb[0].mxu0
  %493 = vmatprep.mubr.bf16.mxu0 0
  %494 = vmatmul.mubr.bf16.gmra.mrb[0].mxu0 %v311
  %v495 = vpop.f32.mrb[0].mxu0
  %v496 = vadd.f32 %v102, %v495
  %v497 = vpop.f32.mrb[0].mxu0
  %v498 = vpop.f32.mrb[0].mxu0
  %v499 = vadd.f32 %v102, %v498
  %v500 = vpop.f32.mrb[0].mxu0
  %501 = vmatprep.mubr.bf16.mxu0 0
  %502 = vmatmul.mubr.bf16.gmra.mrb[0].mxu0 %v314
  %v503 = vpop.f32.mrb[0].mxu0
  %v504 = vadd.f32 %v102, %v503
  %v505 = vpop.f32.mrb[0].mxu0
  %v506 = vpop.f32.mrb[0].mxu0
  %v507 = vadd.f32 %v102, %v506
  %v508 = vpop.f32.mrb[0].mxu0
  %509 = vmatprep.mubr.bf16.mxu0 0
  %510 = vmatmul.mubr.bf16.gmra.mrb[0].mxu0 %v317
  %v511 = vpop.f32.mrb[0].mxu0
  %v512 = vadd.f32 %v102, %v511
  %v513 = vpop.f32.mrb[0].mxu0
  %v514 = vpop.f32.mrb[0].mxu0
  %v515 = vadd.f32 %v102, %v514
  %v516 = vpop.f32.mrb[0].mxu0
  %517 = vmatprep.mubr.bf16.mxu0 0
  %518 = vmatmul.mubr.bf16.gmra.mrb[0].mxu0 %v320
  %v519 = vpop.f32.mrb[0].mxu0
  %v520 = vadd.f32 %v102, %v519
  %v521 = vpop.f32.mrb[0].mxu0
  %v522 = vpop.f32.mrb[0].mxu0
  %v523 = vadd.f32 %v102, %v522
  %v524 = vpop.f32.mrb[0].mxu0
  %525 = vmatprep.mubr.bf16.mxu0 0
  %526 = vmatmul.mubr.bf16.gmra.mrb[0].mxu0 %v323
  %v527 = vpop.f32.mrb[0].mxu0
  %v528 = vadd.f32 %v102, %v527
  %v529 = vpop.f32.mrb[0].mxu0
  %v530 = vpop.f32.mrb[0].mxu0
  %v531 = vadd.f32 %v102, %v530
  %v532 = vpop.f32.mrb[0].mxu0
  %533 = vmatprep.mubr.bf16.mxu0 0
  %534 = vmatmul.mubr.bf16.gmra.mrb[0].mxu0 %v326
  %v535 = vpop.f32.mrb[0].mxu0
  %v536 = vadd.f32 %v102, %v535
  %v537 = vpop.f32.mrb[0].mxu0
  %v538 = vpop.f32.mrb[0].mxu0
  %v539 = vadd.f32 %v102, %v538
  %v540 = vpop.f32.mrb[0].mxu0
  %541 = vmatprep.mubr.bf16.mxu0 0
  %542 = vmatmul.mubr.bf16.gmra.mrb[0].mxu0 %v329
  %v543 = vpop.f32.mrb[0].mxu0
  %v544 = vadd.f32 %v102, %v543
  %v545 = vpop.f32.mrb[0].mxu0
  %v546 = vpop.f32.mrb[0].mxu0
  %v547 = vadd.f32 %v102, %v546
  %v548 = vpop.f32.mrb[0].mxu0
  %549 = vmatprep.mubr.bf16.mxu0 0
  %550 = vmatmul.mubr.bf16.gmra.mrb[0].mxu0 %v332
  %v551 = vpop.f32.mrb[0].mxu0
  %v552 = vadd.f32 %v102, %v551
  %v553 = vpop.f32.mrb[0].mxu0
  %v554 = vpop.f32.mrb[0].mxu0
  %v555 = vadd.f32 %v102, %v554
  %v556 = vpop.f32.mrb[0].mxu0
  %557 = vmatprep.mubr.bf16.mxu0 0
  %558 = vmatmul.mubr.bf16.gmra.mrb[0].mxu0 %v335
  %v559 = vpop.f32.mrb[0].mxu0
  %v560 = vadd.f32 %v102, %v559
  %v561 = vpop.f32.mrb[0].mxu0
  %v562 = vpop.f32.mrb[0].mxu0
  %v563 = vadd.f32 %v102, %v562
  %v564 = vpop.f32.mrb[0].mxu0
  %565 = vmatprep.mubr.bf16.mxu0 0
  %566 = vmatmul.mubr.bf16.gmra.mrb[0].mxu0 %v338
  %v567 = vpop.f32.mrb[0].mxu0
  %v568 = vadd.f32 %v102, %v567
  %v569 = vpop.f32.mrb[0].mxu0
  %v570 = vpop.f32.mrb[0].mxu0
  %v571 = vadd.f32 %v102, %v570
  %v572 = vpop.f32.mrb[0].mxu0
  %573 = vmatprep.mubr.bf16.mxu0 0
  %574 = vmatmul.mubr.bf16.gmra.mrb[0].mxu0 %v341
  %v575 = vpop.f32.mrb[0].mxu0
  %v576 = vadd.f32 %v102, %v575
  %v577 = vpop.f32.mrb[0].mxu0
  %v578 = vpop.f32.mrb[0].mxu0
  %v579 = vadd.f32 %v102, %v578
  %v580 = vpop.f32.mrb[0].mxu0
  %581 = vmatprep.mubr.bf16.mxu0 0
  %582 = vmatmul.mubr.bf16.gmra.mrb[0].mxu0 %v344
  %v583 = vpop.f32.mrb[0].mxu0
  %v584 = vadd.f32 %v102, %v583
  %v585 = vpop.f32.mrb[0].mxu0
  %v586 = vpop.f32.mrb[0].mxu0
  %v587 = vadd.f32 %v102, %v586
  %v588 = vpop.f32.mrb[0].mxu0
  %589 = vmatprep.mubr.bf16.mxu0 0
  %590 = vmatmul.mubr.bf16.gmra.mrb[0].mxu0 %v347
  %v591 = vpop.f32.mrb[0].mxu0
  %v592 = vadd.f32 %v102, %v591
  %v593 = vpop.f32.mrb[0].mxu0
  %v594 = vpop.f32.mrb[0].mxu0
  %v595 = vadd.f32 %v102, %v594
  %v596 = vpop.f32.mrb[0].mxu0
  %597 = vmatprep.mubr.bf16.mxu0 0
  %598 = vmatmul.mubr.bf16.gmra.mrb[0].mxu0 %v350
  %v599 = vpop.f32.mrb[0].mxu0
  %v600 = vadd.f32 %v102, %v599
  %v601 = vpop.f32.mrb[0].mxu0
  %v602 = vpop.f32.mrb[0].mxu0
  %v603 = vadd.f32 %v102, %v602
  %v604 = vpop.f32.mrb[0].mxu0
  %605 = vmatprep.mubr.bf16.mxu0 0
  %606 = vmatmul.mubr.bf16.gmra.mrb[0].mxu0 %v353
  %v607 = vpop.f32.mrb[0].mxu0
  %v608 = vadd.f32 %v102, %v607
  %v609 = vpop.f32.mrb[0].mxu0
  %v610 = vpop.f32.mrb[0].mxu0
  %v611 = vadd.f32 %v102, %v610
  %v612 = vpop.f32.mrb[0].mxu0
  %613 = vmatprep.mubr.bf16.mxu0 0
  %614 = vmatmul.mubr.bf16.gmra.mrb[0].mxu0 %v356
  %v615 = vpop.f32.mrb[0].mxu0
  %v616 = vadd.f32 %v102, %v615
  %v617 = vpop.f32.mrb[0].mxu0
  %v618 = vpop.f32.mrb[0].mxu0
  %v619 = vadd.f32 %v102, %v618
  %v620 = vpop.f32.mrb[0].mxu0
  %621 = vmatprep.mubr.bf16.mxu0 0
  %622 = vmatmul.mubr.bf16.gmra.mrb[0].mxu0 %v359
  %v623 = vpop.f32.mrb[0].mxu0
  %v624 = vadd.f32 %v102, %v623
  %v625 = vpop.f32.mrb[0].mxu0
  %v626 = vpop.f32.mrb[0].mxu0
  %v627 = vadd.f32 %v102, %v626
  %v628 = vpop.f32.mrb[0].mxu0
  %629 = vmatprep.mubr.bf16.mxu0 0
  %630 = vmatmul.mubr.bf16.gmra.mrb[0].mxu0 %v362
  %v631 = vpop.f32.mrb[0].mxu0
  %v632 = vadd.f32 %v102, %v631
  %v633 = vpop.f32.mrb[0].mxu0
  %v634 = vpop.f32.mrb[0].mxu0
  %v635 = vadd.f32 %v102, %v634
  %v636 = vpop.f32.mrb[0].mxu0
  %637 = vmatprep.mubr.bf16.mxu0 0
  %638 = vmatmul.mubr.bf16.gmra.mrb[0].mxu0 %v365
  %v639 = vpop.f32.mrb[0].mxu0
  %v640 = vadd.f32 %v102, %v639
  %v641 = vpop.f32.mrb[0].mxu0
  %v642 = vpop.f32.mrb[0].mxu0
  %v643 = vadd.f32 %v102, %v642
  %v644 = vpop.f32.mrb[0].mxu0
  %645 = vmatprep.mubr.bf16.mxu0 0
  %646 = vmatmul.mubr.bf16.gmra.mrb[0].mxu0 %v368
  %v647 = vpop.f32.mrb[0].mxu0
  %v648 = vadd.f32 %v102, %v647
  %v649 = vpop.f32.mrb[0].mxu0
  %v650 = vpop.f32.mrb[0].mxu0
  %v651 = vadd.f32 %v102, %v650
  %v652 = vpop.f32.mrb[0].mxu0
  %653 = vmatprep.mubr.bf16.mxu0 0
  %654 = vmatmul.mubr.bf16.gmra.mrb[0].mxu0 %v371
  %v655 = vpop.f32.mrb[0].mxu0
  %v656 = vadd.f32 %v102, %v655
  %v657 = vpop.f32.mrb[0].mxu0
  %v658 = vpop.f32.mrb[0].mxu0
  %v659 = vadd.f32 %v102, %v658
  %v660 = vpop.f32.mrb[0].mxu0
  %661 = vdwg.mxu0
  %v662 = vld [vmem:[%s2] sm:$0xf]
  %v663 = vld [vmem:[%s2 + $0x4] sm:$0xf]
  %v664 = vld [vmem:[%s2 + $0x8] sm:$0xf]
  %v665 = vld [vmem:[%s2 + $0xc] sm:$0xf]
  %v666 = vld [vmem:[%s2 + $0x10] sm:$0xf]
  %v667 = vld [vmem:[%s2 + $0x14] sm:$0xf]
  %v668 = vld [vmem:[%s2 + $0x18] sm:$0xf]
  %v669 = vld [vmem:[%s2 + $0x1c] sm:$0xf]
  %v670 = vld [vmem:[%s2 + $0x20] sm:$0xf]
  %v671 = vld [vmem:[%s2 + $0x24] sm:$0xf]
  %v672 = vld [vmem:[%s2 + $0x28] sm:$0xf]
  %v673 = vld [vmem:[%s2 + $0x2c] sm:$0xf]
  %v674 = vld [vmem:[%s2 + $0x30] sm:$0xf]
  %v675 = vld [vmem:[%s2 + $0x34] sm:$0xf]
  %v676 = vld [vmem:[%s2 + $0x38] sm:$0xf]
  %v677 = vld [vmem:[%s2 + $0x3c] sm:$0xf]
  %v678 = vld [vmem:[%s2 + $0x40] sm:$0xf]
  %v679 = vld [vmem:[%s2 + $0x44] sm:$0xf]
  %v680 = vld [vmem:[%s2 + $0x48] sm:$0xf]
  %v681 = vld [vmem:[%s2 + $0x4c] sm:$0xf]
  %v682 = vld [vmem:[%s2 + $0x50] sm:$0xf]
  %v683 = vld [vmem:[%s2 + $0x54] sm:$0xf]
  %v684 = vld [vmem:[%s2 + $0x58] sm:$0xf]
  %v685 = vld [vmem:[%s2 + $0x5c] sm:$0xf]
  %v686 = vld [vmem:[%s2 + $0x60] sm:$0xf]
  %v687 = vld [vmem:[%s2 + $0x64] sm:$0xf]
  %v688 = vld [vmem:[%s2 + $0x68] sm:$0xf]
  %v689 = vld [vmem:[%s2 + $0x6c] sm:$0xf]
  %v690 = vld [vmem:[%s2 + $0x70] sm:$0xf]
  %v691 = vld [vmem:[%s2 + $0x74] sm:$0xf]
  %v692 = vld [vmem:[%s2 + $0x78] sm:$0xf]
  %v693 = vld [vmem:[%s2 + $0x7c] sm:$0xf]
  %v694 = vld [vmem:[%s2 + $0x80] sm:$0xf]
  %v695 = vld [vmem:[%s2 + $0x84] sm:$0xf]
  %v696 = vld [vmem:[%s2 + $0x88] sm:$0xf]
  %v697 = vld [vmem:[%s2 + $0x8c] sm:$0xf]
  %v698 = vld [vmem:[%s2 + $0x90] sm:$0xf]
  %v699 = vld [vmem:[%s2 + $0x94] sm:$0xf]
  %v700 = vld [vmem:[%s2 + $0x98] sm:$0xf]
  %v701 = vld [vmem:[%s2 + $0x9c] sm:$0xf]
  %v702 = vld [vmem:[%s2 + $0xa0] sm:$0xf]
  %v703 = vld [vmem:[%s2 + $0xa4] sm:$0xf]
  %v704 = vld [vmem:[%s2 + $0xa8] sm:$0xf]
  %v705 = vld [vmem:[%s2 + $0xac] sm:$0xf]
  %v706 = vld [vmem:[%s2 + $0xb0] sm:$0xf]
  %v707 = vld [vmem:[%s2 + $0xb4] sm:$0xf]
  %v708 = vld [vmem:[%s2 + $0xb8] sm:$0xf]
  %v709 = vld [vmem:[%s2 + $0xbc] sm:$0xf]
  %v710 = vld [vmem:[%s2 + $0xc0] sm:$0xf]
  %v711 = vld [vmem:[%s2 + $0xc4] sm:$0xf]
  %v712 = vld [vmem:[%s2 + $0xc8] sm:$0xf]
  %v713 = vld [vmem:[%s2 + $0xcc] sm:$0xf]
  %v714 = vld [vmem:[%s2 + $0xd0] sm:$0xf]
  %v715 = vld [vmem:[%s2 + $0xd4] sm:$0xf]
  %v716 = vld [vmem:[%s2 + $0xd8] sm:$0xf]
  %v717 = vld [vmem:[%s2 + $0xdc] sm:$0xf]
  %v718 = vld [vmem:[%s2 + $0xe0] sm:$0xf]
  %v719 = vld [vmem:[%s2 + $0xe4] sm:$0xf]
  %v720 = vld [vmem:[%s2 + $0xe8] sm:$0xf]
  %v721 = vld [vmem:[%s2 + $0xec] sm:$0xf]
  %v722 = vld [vmem:[%s2 + $0xf0] sm:$0xf]
  %v723 = vld [vmem:[%s2 + $0xf4] sm:$0xf]
  %v724 = vld [vmem:[%s2 + $0xf8] sm:$0xf]
  %v725 = vld [vmem:[%s2 + $0xfc] sm:$0xf]
  %v726 = vld [vmem:[%s5] sm:$0xf]
  %v727 = vld [vmem:[%s5 + $0x4] sm:$0xf]
  %v728 = vld [vmem:[%s5 + $0x8] sm:$0xf]
  %v729 = vld [vmem:[%s5 + $0xc] sm:$0xf]
  %v730 = vld [vmem:[%s6] sm:$0x1]
  %v732 = vlaneseq
  %v733 = vshrl.u32 %v732, 7
  %v734 = vsub.s32 0, %v733
  %v735 = vrot.slane %v730, %v734
  %v801 = vunpack.c.l.b16 %v662
  %v802 = vunpack.c.l.b16 %v663
  %v803 = vunpack.c.l.b16 %v664
  %v804 = vunpack.c.l.b16 %v665
  %v805 = vunpack.c.l.b16 %v666
  %v806 = vunpack.c.l.b16 %v667
  %v807 = vunpack.c.l.b16 %v668
  %v808 = vunpack.c.l.b16 %v669
  %v809 = vunpack.c.l.b16 %v670
  %v810 = vunpack.c.l.b16 %v671
  %v811 = vunpack.c.l.b16 %v672
  %v812 = vunpack.c.l.b16 %v673
  %v813 = vunpack.c.l.b16 %v674
  %v814 = vunpack.c.l.b16 %v675
  %v815 = vunpack.c.l.b16 %v676
  %v816 = vunpack.c.l.b16 %v677
  %v817 = vunpack.c.l.b16 %v678
  %v818 = vunpack.c.l.b16 %v679
  %v819 = vunpack.c.l.b16 %v680
  %v820 = vunpack.c.l.b16 %v681
  %v821 = vunpack.c.l.b16 %v682
  %v822 = vunpack.c.l.b16 %v683
  %v823 = vunpack.c.l.b16 %v684
  %v824 = vunpack.c.l.b16 %v685
  %v825 = vunpack.c.l.b16 %v686
  %v826 = vunpack.c.l.b16 %v687
  %v827 = vunpack.c.l.b16 %v688
  %v828 = vunpack.c.l.b16 %v689
  %v829 = vunpack.c.l.b16 %v690
  %v830 = vunpack.c.l.b16 %v691
  %v831 = vunpack.c.l.b16 %v692
  %v832 = vunpack.c.l.b16 %v693
  %v833 = vunpack.c.l.b16 %v694
  %v834 = vunpack.c.l.b16 %v695
  %v835 = vunpack.c.l.b16 %v696
  %v836 = vunpack.c.l.b16 %v697
  %v837 = vunpack.c.l.b16 %v698
  %v838 = vunpack.c.l.b16 %v699
  %v839 = vunpack.c.l.b16 %v700
  %v840 = vunpack.c.l.b16 %v701
  %v841 = vunpack.c.l.b16 %v702
  %v842 = vunpack.c.l.b16 %v703
  %v843 = vunpack.c.l.b16 %v704
  %v844 = vunpack.c.l.b16 %v705
  %v845 = vunpack.c.l.b16 %v706
  %v846 = vunpack.c.l.b16 %v707
  %v847 = vunpack.c.l.b16 %v708
  %v848 = vunpack.c.l.b16 %v709
  %v849 = vunpack.c.l.b16 %v710
  %v850 = vunpack.c.l.b16 %v711
  %v851 = vunpack.c.l.b16 %v712
  %v852 = vunpack.c.l.b16 %v713
  %v853 = vunpack.c.l.b16 %v714
  %v854 = vunpack.c.l.b16 %v715
  %v855 = vunpack.c.l.b16 %v716
  %v856 = vunpack.c.l.b16 %v717
  %v857 = vunpack.c.l.b16 %v718
  %v858 = vunpack.c.l.b16 %v719
  %v859 = vunpack.c.l.b16 %v720
  %v860 = vunpack.c.l.b16 %v721
  %v861 = vunpack.c.l.b16 %v722
  %v862 = vunpack.c.l.b16 %v723
  %v863 = vunpack.c.l.b16 %v724
  %v864 = vunpack.c.l.b16 %v725
  %v865 = vpack.c.b16 %v802, %v801
  %v866 = vpack.c.b16 %v804, %v803
  %v867 = vpack.c.b16 %v806, %v805
  %v868 = vpack.c.b16 %v808, %v807
  %v869 = vpack.c.b16 %v810, %v809
  %v870 = vpack.c.b16 %v812, %v811
  %v871 = vpack.c.b16 %v814, %v813
  %v872 = vpack.c.b16 %v816, %v815
  %v873 = vpack.c.b16 %v818, %v817
  %v874 = vpack.c.b16 %v820, %v819
  %v875 = vpack.c.b16 %v822, %v821
  %v876 = vpack.c.b16 %v824, %v823
  %v877 = vpack.c.b16 %v826, %v825
  %v878 = vpack.c.b16 %v828, %v827
  %v879 = vpack.c.b16 %v830, %v829
  %v880 = vpack.c.b16 %v832, %v831
  %v881 = vpack.c.b16 %v834, %v833
  %v882 = vpack.c.b16 %v836, %v835
  %v883 = vpack.c.b16 %v838, %v837
  %v884 = vpack.c.b16 %v840, %v839
  %v885 = vpack.c.b16 %v842, %v841
  %v886 = vpack.c.b16 %v844, %v843
  %v887 = vpack.c.b16 %v846, %v845
  %v888 = vpack.c.b16 %v848, %v847
  %v889 = vpack.c.b16 %v850, %v849
  %v890 = vpack.c.b16 %v852, %v851
  %v891 = vpack.c.b16 %v854, %v853
  %v892 = vpack.c.b16 %v856, %v855
  %v893 = vpack.c.b16 %v858, %v857
  %v894 = vpack.c.b16 %v860, %v859
  %v895 = vpack.c.b16 %v862, %v861
  %v896 = vpack.c.b16 %v864, %v863
  %v901 = vunpack.c.l.b16 %v726
  %v902 = vunpack.c.l.b16 %v727
  %v903 = vunpack.c.l.b16 %v728
  %v904 = vunpack.c.l.b16 %v729
  %v905 = vpack.c.b16 %v902, %v901
  %v906 = vpack.c.b16 %v904, %v903
  %v910 = vsel %vm276, %v865, 0
  %v913 = vsel %vm276, %v866, 0
  %v916 = vsel %vm276, %v867, 0
  %v919 = vsel %vm276, %v868, 0
  %v922 = vsel %vm276, %v869, 0
  %v925 = vsel %vm276, %v870, 0
  %v928 = vsel %vm276, %v871, 0
  %v931 = vsel %vm276, %v872, 0
  %v934 = vsel %vm276, %v873, 0
  %v937 = vsel %vm276, %v874, 0
  %v940 = vsel %vm276, %v875, 0
  %v943 = vsel %vm276, %v876, 0
  %v946 = vsel %vm276, %v877, 0
  %v949 = vsel %vm276, %v878, 0
  %v952 = vsel %vm276, %v879, 0
  %v955 = vsel %vm276, %v880, 0
  %v958 = vsel %vm276, %v881, 0
  %v961 = vsel %vm276, %v882, 0
  %v964 = vsel %vm276, %v883, 0
  %v967 = vsel %vm276, %v884, 0
  %v970 = vsel %vm276, %v885, 0
  %v973 = vsel %vm276, %v886, 0
  %v976 = vsel %vm276, %v887, 0
  %v979 = vsel %vm276, %v888, 0
  %v982 = vsel %vm276, %v889, 0
  %v985 = vsel %vm276, %v890, 0
  %v988 = vsel %vm276, %v891, 0
  %v991 = vsel %vm276, %v892, 0
  %v994 = vsel %vm276, %v893, 0
  %v997 = vsel %vm276, %v894, 0
  %v1000 = vsel %vm276, %v895, 0
  %v1003 = vsel %vm276, %v896, 0
  %1005 = vmatprep.subr.bf16.mxu0 0
  %1006 = vmatpush1.bf16.msra.mxu0 %v905
  %1007 = vmatprep.subr.bf16.mxu0 0
  %1008 = vmatpush1.bf16.msra.mxu0 %v906
  %1009 = vmatprep.subr.bf16.mxu0 0
  %1010 = vmatpush1.bf16.msra.mxu0 0
  %1011 = vmatprep.subr.bf16.mxu0 0
  %1012 = vmatpush1.bf16.msra.mxu0 0
  %1013 = vmatprep.subr.bf16.mxu0 0
  %1014 = vmatpush1.bf16.msra.mxu0 0
  %1015 = vmatprep.subr.bf16.mxu0 0
  %1016 = vmatpush1.bf16.msra.mxu0 0
  %1017 = vmatprep.subr.bf16.mxu0 0
  %1018 = vmatpush1.bf16.msra.mxu0 0
  %1019 = vmatprep.subr.bf16.mxu0 0
  %1020 = vmatpush1.bf16.msra.mxu0 0
  %1021 = vmatprep.subr.bf16.mxu0 0
  %1022 = vmatpush1.bf16.msra.mxu0 0
  %1023 = vmatprep.subr.bf16.mxu0 0
  %1024 = vmatpush1.bf16.msra.mxu0 0
  %1025 = vmatprep.subr.bf16.mxu0 0
  %1026 = vmatpush1.bf16.msra.mxu0 0
  %1027 = vmatprep.subr.bf16.mxu0 0
  %1028 = vmatpush1.bf16.msra.mxu0 0
  %1029 = vmatprep.subr.bf16.mxu0 0
  %1030 = vmatpush1.bf16.msra.mxu0 0
  %1031 = vmatprep.subr.bf16.mxu0 0
  %1032 = vmatpush1.bf16.msra.mxu0 0
  %1033 = vmatprep.subr.bf16.mxu0 0
  %1034 = vmatpush1.bf16.msra.mxu0 0
  %1035 = vmatprep.subr.bf16.mxu0 0
  %1036 = vmatpush1.bf16.msra.mxu0 0
  %1037 = vmatprep.mubr.bf16.mxu0 0
  %1038 = vmatmul.mubr.bf16.gmra.mrb[0].mxu0 %v910
  %v1039 = vpop.f32.mrb[0].mxu0
  %v1040 = vadd.f32 %v735, %v1039
  %v1041 = vpop.f32.mrb[0].mxu0
  %v1042 = vpop.f32.mrb[0].mxu0
  %v1043 = vadd.f32 %v735, %v1042
  %v1044 = vpop.f32.mrb[0].mxu0
  %1045 = vmatprep.mubr.bf16.mxu0 0
  %1046 = vmatmul.mubr.bf16.gmra.mrb[0].mxu0 %v913
  %v1047 = vpop.f32.mrb[0].mxu0
  %v1048 = vadd.f32 %v735, %v1047
  %v1049 = vpop.f32.mrb[0].mxu0
  %v1050 = vpop.f32.mrb[0].mxu0
  %v1051 = vadd.f32 %v735, %v1050
  %v1052 = vpop.f32.mrb[0].mxu0
  %1053 = vmatprep.mubr.bf16.mxu0 0
  %1054 = vmatmul.mubr.bf16.gmra.mrb[0].mxu0 %v916
  %v1055 = vpop.f32.mrb[0].mxu0
  %v1056 = vadd.f32 %v735, %v1055
  %v1057 = vpop.f32.mrb[0].mxu0
  %v1058 = vpop.f32.mrb[0].mxu0
  %v1059 = vadd.f32 %v735, %v1058
  %v1060 = vpop.f32.mrb[0].mxu0
  %1061 = vmatprep.mubr.bf16.mxu0 0
  %1062 = vmatmul.mubr.bf16.gmra.mrb[0].mxu0 %v919
  %v1063 = vpop.f32.mrb[0].mxu0
  %v1064 = vadd.f32 %v735, %v1063
  %v1065 = vpop.f32.mrb[0].mxu0
  %v1066 = vpop.f32.mrb[0].mxu0
  %v1067 = vadd.f32 %v735, %v1066
  %v1068 = vpop.f32.mrb[0].mxu0
  %1069 = vmatprep.mubr.bf16.mxu0 0
  %1070 = vmatmul.mubr.bf16.gmra.mrb[0].mxu0 %v922
  %v1071 = vpop.f32.mrb[0].mxu0
  %v1072 = vadd.f32 %v735, %v1071
  %v1073 = vpop.f32.mrb[0].mxu0
  %v1074 = vpop.f32.mrb[0].mxu0
  %v1075 = vadd.f32 %v735, %v1074
  %v1076 = vpop.f32.mrb[0].mxu0
  %1077 = vmatprep.mubr.bf16.mxu0 0
  %1078 = vmatmul.mubr.bf16.gmra.mrb[0].mxu0 %v925
  %v1079 = vpop.f32.mrb[0].mxu0
  %v1080 = vadd.f32 %v735, %v1079
  %v1081 = vpop.f32.mrb[0].mxu0
  %v1082 = vpop.f32.mrb[0].mxu0
  %v1083 = vadd.f32 %v735, %v1082
  %v1084 = vpop.f32.mrb[0].mxu0
  %1085 = vmatprep.mubr.bf16.mxu0 0
  %1086 = vmatmul.mubr.bf16.gmra.mrb[0].mxu0 %v928
  %v1087 = vpop.f32.mrb[0].mxu0
  %v1088 = vadd.f32 %v735, %v1087
  %v1089 = vpop.f32.mrb[0].mxu0
  %v1090 = vpop.f32.mrb[0].mxu0
  %v1091 = vadd.f32 %v735, %v1090
  %v1092 = vpop.f32.mrb[0].mxu0
  %1093 = vmatprep.mubr.bf16.mxu0 0
  %1094 = vmatmul.mubr.bf16.gmra.mrb[0].mxu0 %v931
  %v1095 = vpop.f32.mrb[0].mxu0
  %v1096 = vadd.f32 %v735, %v1095
  %v1097 = vpop.f32.mrb[0].mxu0
  %v1098 = vpop.f32.mrb[0].mxu0
  %v1099 = vadd.f32 %v735, %v1098
  %v1100 = vpop.f32.mrb[0].mxu0
  %1101 = vmatprep.mubr.bf16.mxu0 0
  %1102 = vmatmul.mubr.bf16.gmra.mrb[0].mxu0 %v934
  %v1103 = vpop.f32.mrb[0].mxu0
  %v1104 = vadd.f32 %v735, %v1103
  %v1105 = vpop.f32.mrb[0].mxu0
  %v1106 = vpop.f32.mrb[0].mxu0
  %v1107 = vadd.f32 %v735, %v1106
  %v1108 = vpop.f32.mrb[0].mxu0
  %1109 = vmatprep.mubr.bf16.mxu0 0
  %1110 = vmatmul.mubr.bf16.gmra.mrb[0].mxu0 %v937
  %v1111 = vpop.f32.mrb[0].mxu0
  %v1112 = vadd.f32 %v735, %v1111
  %v1113 = vpop.f32.mrb[0].mxu0
  %v1114 = vpop.f32.mrb[0].mxu0
  %v1115 = vadd.f32 %v735, %v1114
  %v1116 = vpop.f32.mrb[0].mxu0
  %1117 = vmatprep.mubr.bf16.mxu0 0
  %1118 = vmatmul.mubr.bf16.gmra.mrb[0].mxu0 %v940
  %v1119 = vpop.f32.mrb[0].mxu0
  %v1120 = vadd.f32 %v735, %v1119
  %v1121 = vpop.f32.mrb[0].mxu0
  %v1122 = vpop.f32.mrb[0].mxu0
  %v1123 = vadd.f32 %v735, %v1122
  %v1124 = vpop.f32.mrb[0].mxu0
  %1125 = vmatprep.mubr.bf16.mxu0 0
  %1126 = vmatmul.mubr.bf16.gmra.mrb[0].mxu0 %v943
  %v1127 = vpop.f32.mrb[0].mxu0
  %v1128 = vadd.f32 %v735, %v1127
  %v1129 = vpop.f32.mrb[0].mxu0
  %v1130 = vpop.f32.mrb[0].mxu0
  %v1131 = vadd.f32 %v735, %v1130
  %v1132 = vpop.f32.mrb[0].mxu0
  %1133 = vmatprep.mubr.bf16.mxu0 0
  %1134 = vmatmul.mubr.bf16.gmra.mrb[0].mxu0 %v946
  %v1135 = vpop.f32.mrb[0].mxu0
  %v1136 = vadd.f32 %v735, %v1135
  %v1137 = vpop.f32.mrb[0].mxu0
  %v1138 = vpop.f32.mrb[0].mxu0
  %v1139 = vadd.f32 %v735, %v1138
  %v1140 = vpop.f32.mrb[0].mxu0
  %1141 = vmatprep.mubr.bf16.mxu0 0
  %1142 = vmatmul.mubr.bf16.gmra.mrb[0].mxu0 %v949
  %v1143 = vpop.f32.mrb[0].mxu0
  %v1144 = vadd.f32 %v735, %v1143
  %v1145 = vpop.f32.mrb[0].mxu0
  %v1146 = vpop.f32.mrb[0].mxu0
  %v1147 = vadd.f32 %v735, %v1146
  %v1148 = vpop.f32.mrb[0].mxu0
  %1149 = vmatprep.mubr.bf16.mxu0 0
  %1150 = vmatmul.mubr.bf16.gmra.mrb[0].mxu0 %v952
  %v1151 = vpop.f32.mrb[0].mxu0
  %v1152 = vadd.f32 %v735, %v1151
  %v1153 = vpop.f32.mrb[0].mxu0
  %v1154 = vpop.f32.mrb[0].mxu0
  %v1155 = vadd.f32 %v735, %v1154
  %v1156 = vpop.f32.mrb[0].mxu0
  %1157 = vmatprep.mubr.bf16.mxu0 0
  %1158 = vmatmul.mubr.bf16.gmra.mrb[0].mxu0 %v955
  %v1159 = vpop.f32.mrb[0].mxu0
  %v1160 = vadd.f32 %v735, %v1159
  %v1161 = vpop.f32.mrb[0].mxu0
  %v1162 = vpop.f32.mrb[0].mxu0
  %v1163 = vadd.f32 %v735, %v1162
  %v1164 = vpop.f32.mrb[0].mxu0
  %1165 = vmatprep.mubr.bf16.mxu0 0
  %1166 = vmatmul.mubr.bf16.gmra.mrb[0].mxu0 %v958
  %v1167 = vpop.f32.mrb[0].mxu0
  %v1168 = vadd.f32 %v735, %v1167
  %v1169 = vpop.f32.mrb[0].mxu0
  %v1170 = vpop.f32.mrb[0].mxu0
  %v1171 = vadd.f32 %v735, %v1170
  %v1172 = vpop.f32.mrb[0].mxu0
  %1173 = vmatprep.mubr.bf16.mxu0 0
  %1174 = vmatmul.mubr.bf16.gmra.mrb[0].mxu0 %v961
  %v1175 = vpop.f32.mrb[0].mxu0
  %v1176 = vadd.f32 %v735, %v1175
  %v1177 = vpop.f32.mrb[0].mxu0
  %v1178 = vpop.f32.mrb[0].mxu0
  %v1179 = vadd.f32 %v735, %v1178
  %v1180 = vpop.f32.mrb[0].mxu0
  %1181 = vmatprep.mubr.bf16.mxu0 0
  %1182 = vmatmul.mubr.bf16.gmra.mrb[0].mxu0 %v964
  %v1183 = vpop.f32.mrb[0].mxu0
  %v1184 = vadd.f32 %v735, %v1183
  %v1185 = vpop.f32.mrb[0].mxu0
  %v1186 = vpop.f32.mrb[0].mxu0
  %v1187 = vadd.f32 %v735, %v1186
  %v1188 = vpop.f32.mrb[0].mxu0
  %1189 = vmatprep.mubr.bf16.mxu0 0
  %1190 = vmatmul.mubr.bf16.gmra.mrb[0].mxu0 %v967
  %v1191 = vpop.f32.mrb[0].mxu0
  %v1192 = vadd.f32 %v735, %v1191
  %v1193 = vpop.f32.mrb[0].mxu0
  %v1194 = vpop.f32.mrb[0].mxu0
  %v1195 = vadd.f32 %v735, %v1194
  %v1196 = vpop.f32.mrb[0].mxu0
  %1197 = vmatprep.mubr.bf16.mxu0 0
  %1198 = vmatmul.mubr.bf16.gmra.mrb[0].mxu0 %v970
  %v1199 = vpop.f32.mrb[0].mxu0
  %v1200 = vadd.f32 %v735, %v1199
  %v1201 = vpop.f32.mrb[0].mxu0
  %v1202 = vpop.f32.mrb[0].mxu0
  %v1203 = vadd.f32 %v735, %v1202
  %v1204 = vpop.f32.mrb[0].mxu0
  %1205 = vmatprep.mubr.bf16.mxu0 0
  %1206 = vmatmul.mubr.bf16.gmra.mrb[0].mxu0 %v973
  %v1207 = vpop.f32.mrb[0].mxu0
  %v1208 = vadd.f32 %v735, %v1207
  %v1209 = vpop.f32.mrb[0].mxu0
  %v1210 = vpop.f32.mrb[0].mxu0
  %v1211 = vadd.f32 %v735, %v1210
  %v1212 = vpop.f32.mrb[0].mxu0
  %1213 = vmatprep.mubr.bf16.mxu0 0
  %1214 = vmatmul.mubr.bf16.gmra.mrb[0].mxu0 %v976
  %v1215 = vpop.f32.mrb[0].mxu0
  %v1216 = vadd.f32 %v735, %v1215
  %v1217 = vpop.f32.mrb[0].mxu0
  %v1218 = vpop.f32.mrb[0].mxu0
  %v1219 = vadd.f32 %v735, %v1218
  %v1220 = vpop.f32.mrb[0].mxu0
  %1221 = vmatprep.mubr.bf16.mxu0 0
  %1222 = vmatmul.mubr.bf16.gmra.mrb[0].mxu0 %v979
  %v1223 = vpop.f32.mrb[0].mxu0
  %v1224 = vadd.f32 %v735, %v1223
  %v1225 = vpop.f32.mrb[0].mxu0
  %v1226 = vpop.f32.mrb[0].mxu0
  %v1227 = vadd.f32 %v735, %v1226
  %v1228 = vpop.f32.mrb[0].mxu0
  %1229 = vmatprep.mubr.bf16.mxu0 0
  %1230 = vmatmul.mubr.bf16.gmra.mrb[0].mxu0 %v982
  %v1231 = vpop.f32.mrb[0].mxu0
  %v1232 = vadd.f32 %v735, %v1231
  %v1233 = vpop.f32.mrb[0].mxu0
  %v1234 = vpop.f32.mrb[0].mxu0
  %v1235 = vadd.f32 %v735, %v1234
  %v1236 = vpop.f32.mrb[0].mxu0
  %1237 = vmatprep.mubr.bf16.mxu0 0
  %1238 = vmatmul.mubr.bf16.gmra.mrb[0].mxu0 %v985
  %v1239 = vpop.f32.mrb[0].mxu0
  %v1240 = vadd.f32 %v735, %v1239
  %v1241 = vpop.f32.mrb[0].mxu0
  %v1242 = vpop.f32.mrb[0].mxu0
  %v1243 = vadd.f32 %v735, %v1242
  %v1244 = vpop.f32.mrb[0].mxu0
  %1245 = vmatprep.mubr.bf16.mxu0 0
  %1246 = vmatmul.mubr.bf16.gmra.mrb[0].mxu0 %v988
  %v1247 = vpop.f32.mrb[0].mxu0
  %v1248 = vadd.f32 %v735, %v1247
  %v1249 = vpop.f32.mrb[0].mxu0
  %v1250 = vpop.f32.mrb[0].mxu0
  %v1251 = vadd.f32 %v735, %v1250
  %v1252 = vpop.f32.mrb[0].mxu0
  %1253 = vmatprep.mubr.bf16.mxu0 0
  %1254 = vmatmul.mubr.bf16.gmra.mrb[0].mxu0 %v991
  %v1255 = vpop.f32.mrb[0].mxu0
  %v1256 = vadd.f32 %v735, %v1255
  %v1257 = vpop.f32.mrb[0].mxu0
  %v1258 = vpop.f32.mrb[0].mxu0
  %v1259 = vadd.f32 %v735, %v1258
  %v1260 = vpop.f32.mrb[0].mxu0
  %1261 = vmatprep.mubr.bf16.mxu0 0
  %1262 = vmatmul.mubr.bf16.gmra.mrb[0].mxu0 %v994
  %v1263 = vpop.f32.mrb[0].mxu0
  %v1264 = vadd.f32 %v735, %v1263
  %v1265 = vpop.f32.mrb[0].mxu0
  %v1266 = vpop.f32.mrb[0].mxu0
  %v1267 = vadd.f32 %v735, %v1266
  %v1268 = vpop.f32.mrb[0].mxu0
  %1269 = vmatprep.mubr.bf16.mxu0 0
  %1270 = vmatmul.mubr.bf16.gmra.mrb[0].mxu0 %v997
  %v1271 = vpop.f32.mrb[0].mxu0
  %v1272 = vadd.f32 %v735, %v1271
  %v1273 = vpop.f32.mrb[0].mxu0
  %v1274 = vpop.f32.mrb[0].mxu0
  %v1275 = vadd.f32 %v735, %v1274
  %v1276 = vpop.f32.mrb[0].mxu0
  %1277 = vmatprep.mubr.bf16.mxu0 0
  %1278 = vmatmul.mubr.bf16.gmra.mrb[0].mxu0 %v1000
  %v1279 = vpop.f32.mrb[0].mxu0
  %v1280 = vadd.f32 %v735, %v1279
  %v1281 = vpop.f32.mrb[0].mxu0
  %v1282 = vpop.f32.mrb[0].mxu0
  %v1283 = vadd.f32 %v735, %v1282
  %v1284 = vpop.f32.mrb[0].mxu0
  %1285 = vmatprep.mubr.bf16.mxu0 0
  %1286 = vmatmul.mubr.bf16.gmra.mrb[0].mxu0 %v1003
  %v1287 = vpop.f32.mrb[0].mxu0
  %v1288 = vadd.f32 %v735, %v1287
  %v1289 = vpop.f32.mrb[0].mxu0
  %v1290 = vpop.f32.mrb[0].mxu0
  %v1291 = vadd.f32 %v735, %v1290
  %v1292 = vpop.f32.mrb[0].mxu0
  %1293 = vdwg.mxu0
  %v1294 = vstv %s28
  %v1295 = vmul.f32 %v1294, %v1040
  %v1296 = vmul.f32 %v1294, %v1043
  %v1297 = vmul.f32 %v1294, %v1048
  %v1298 = vmul.f32 %v1294, %v1051
  %v1299 = vmul.f32 %v1294, %v1056
  %v1300 = vmul.f32 %v1294, %v1059
  %v1301 = vmul.f32 %v1294, %v1064
  %v1302 = vmul.f32 %v1294, %v1067
  %v1303 = vmul.f32 %v1294, %v1072
  %v1304 = vmul.f32 %v1294, %v1075
  %v1305 = vmul.f32 %v1294, %v1080
  %v1306 = vmul.f32 %v1294, %v1083
  %v1307 = vmul.f32 %v1294, %v1088
  %v1308 = vmul.f32 %v1294, %v1091
  %v1309 = vmul.f32 %v1294, %v1096
  %v1310 = vmul.f32 %v1294, %v1099
  %v1311 = vmul.f32 %v1294, %v1104
  %v1312 = vmul.f32 %v1294, %v1107
  %v1313 = vmul.f32 %v1294, %v1112
  %v1314 = vmul.f32 %v1294, %v1115
  %v1315 = vmul.f32 %v1294, %v1120
  %v1316 = vmul.f32 %v1294, %v1123
  %v1317 = vmul.f32 %v1294, %v1128
  %v1318 = vmul.f32 %v1294, %v1131
  %v1319 = vmul.f32 %v1294, %v1136
  %v1320 = vmul.f32 %v1294, %v1139
  %v1321 = vmul.f32 %v1294, %v1144
  %v1322 = vmul.f32 %v1294, %v1147
  %v1323 = vmul.f32 %v1294, %v1152
  %v1324 = vmul.f32 %v1294, %v1155
  %v1325 = vmul.f32 %v1294, %v1160
  %v1326 = vmul.f32 %v1294, %v1163
  %v1327 = vmul.f32 %v1294, %v1168
  %v1328 = vmul.f32 %v1294, %v1171
  %v1329 = vmul.f32 %v1294, %v1176
  %v1330 = vmul.f32 %v1294, %v1179
  %v1331 = vmul.f32 %v1294, %v1184
  %v1332 = vmul.f32 %v1294, %v1187
  %v1333 = vmul.f32 %v1294, %v1192
  %v1334 = vmul.f32 %v1294, %v1195
  %v1335 = vmul.f32 %v1294, %v1200
  %v1336 = vmul.f32 %v1294, %v1203
  %v1337 = vmul.f32 %v1294, %v1208
  %v1338 = vmul.f32 %v1294, %v1211
  %v1339 = vmul.f32 %v1294, %v1216
  %v1340 = vmul.f32 %v1294, %v1219
  %v1341 = vmul.f32 %v1294, %v1224
  %v1342 = vmul.f32 %v1294, %v1227
  %v1343 = vmul.f32 %v1294, %v1232
  %v1344 = vmul.f32 %v1294, %v1235
  %v1345 = vmul.f32 %v1294, %v1240
  %v1346 = vmul.f32 %v1294, %v1243
  %v1347 = vmul.f32 %v1294, %v1248
  %v1348 = vmul.f32 %v1294, %v1251
  %v1349 = vmul.f32 %v1294, %v1256
  %v1350 = vmul.f32 %v1294, %v1259
  %v1351 = vmul.f32 %v1294, %v1264
  %v1352 = vmul.f32 %v1294, %v1267
  %v1353 = vmul.f32 %v1294, %v1272
  %v1354 = vmul.f32 %v1294, %v1275
  %v1355 = vmul.f32 %v1294, %v1280
  %v1356 = vmul.f32 %v1294, %v1283
  %v1357 = vmul.f32 %v1294, %v1288
  %v1358 = vmul.f32 %v1294, %v1291
  %s1359 = ssub.f32 1.0, %s28
  %v1360 = vstv %s1359
  %v1361 = vmul.f32 %v1360, %v408
  %v1362 = vmul.f32 %v1360, %v411
  %v1363 = vmul.f32 %v1360, %v416
  %v1364 = vmul.f32 %v1360, %v419
  %v1365 = vmul.f32 %v1360, %v424
  %v1366 = vmul.f32 %v1360, %v427
  %v1367 = vmul.f32 %v1360, %v432
  %v1368 = vmul.f32 %v1360, %v435
  %v1369 = vmul.f32 %v1360, %v440
  %v1370 = vmul.f32 %v1360, %v443
  %v1371 = vmul.f32 %v1360, %v448
  %v1372 = vmul.f32 %v1360, %v451
  %v1373 = vmul.f32 %v1360, %v456
  %v1374 = vmul.f32 %v1360, %v459
  %v1375 = vmul.f32 %v1360, %v464
  %v1376 = vmul.f32 %v1360, %v467
  %v1377 = vmul.f32 %v1360, %v472
  %v1378 = vmul.f32 %v1360, %v475
  %v1379 = vmul.f32 %v1360, %v480
  %v1380 = vmul.f32 %v1360, %v483
  %v1381 = vmul.f32 %v1360, %v488
  %v1382 = vmul.f32 %v1360, %v491
  %v1383 = vmul.f32 %v1360, %v496
  %v1384 = vmul.f32 %v1360, %v499
  %v1385 = vmul.f32 %v1360, %v504
  %v1386 = vmul.f32 %v1360, %v507
  %v1387 = vmul.f32 %v1360, %v512
  %v1388 = vmul.f32 %v1360, %v515
  %v1389 = vmul.f32 %v1360, %v520
  %v1390 = vmul.f32 %v1360, %v523
  %v1391 = vmul.f32 %v1360, %v528
  %v1392 = vmul.f32 %v1360, %v531
  %v1393 = vmul.f32 %v1360, %v536
  %v1394 = vmul.f32 %v1360, %v539
  %v1395 = vmul.f32 %v1360, %v544
  %v1396 = vmul.f32 %v1360, %v547
  %v1397 = vmul.f32 %v1360, %v552
  %v1398 = vmul.f32 %v1360, %v555
  %v1399 = vmul.f32 %v1360, %v560
  %v1400 = vmul.f32 %v1360, %v563
  %v1401 = vmul.f32 %v1360, %v568
  %v1402 = vmul.f32 %v1360, %v571
  %v1403 = vmul.f32 %v1360, %v576
  %v1404 = vmul.f32 %v1360, %v579
  %v1405 = vmul.f32 %v1360, %v584
  %v1406 = vmul.f32 %v1360, %v587
  %v1407 = vmul.f32 %v1360, %v592
  %v1408 = vmul.f32 %v1360, %v595
  %v1409 = vmul.f32 %v1360, %v600
  %v1410 = vmul.f32 %v1360, %v603
  %v1411 = vmul.f32 %v1360, %v608
  %v1412 = vmul.f32 %v1360, %v611
  %v1413 = vmul.f32 %v1360, %v616
  %v1414 = vmul.f32 %v1360, %v619
  %v1415 = vmul.f32 %v1360, %v624
  %v1416 = vmul.f32 %v1360, %v627
  %v1417 = vmul.f32 %v1360, %v632
  %v1418 = vmul.f32 %v1360, %v635
  %v1419 = vmul.f32 %v1360, %v640
  %v1420 = vmul.f32 %v1360, %v643
  %v1421 = vmul.f32 %v1360, %v648
  %v1422 = vmul.f32 %v1360, %v651
  %v1423 = vmul.f32 %v1360, %v656
  %v1424 = vmul.f32 %v1360, %v659
  %v1425 = vadd.f32 %v1295, %v1361
  %v1426 = vadd.f32 %v1296, %v1362
  %v1427 = vadd.f32 %v1297, %v1363
  %v1428 = vadd.f32 %v1298, %v1364
  %v1429 = vadd.f32 %v1299, %v1365
  %v1430 = vadd.f32 %v1300, %v1366
  %v1431 = vadd.f32 %v1301, %v1367
  %v1432 = vadd.f32 %v1302, %v1368
  %v1433 = vadd.f32 %v1303, %v1369
  %v1434 = vadd.f32 %v1304, %v1370
  %v1435 = vadd.f32 %v1305, %v1371
  %v1436 = vadd.f32 %v1306, %v1372
  %v1437 = vadd.f32 %v1307, %v1373
  %v1438 = vadd.f32 %v1308, %v1374
  %v1439 = vadd.f32 %v1309, %v1375
  %v1440 = vadd.f32 %v1310, %v1376
  %v1441 = vadd.f32 %v1311, %v1377
  %v1442 = vadd.f32 %v1312, %v1378
  %v1443 = vadd.f32 %v1313, %v1379
  %v1444 = vadd.f32 %v1314, %v1380
  %v1445 = vadd.f32 %v1315, %v1381
  %v1446 = vadd.f32 %v1316, %v1382
  %v1447 = vadd.f32 %v1317, %v1383
  %v1448 = vadd.f32 %v1318, %v1384
  %v1449 = vadd.f32 %v1319, %v1385
  %v1450 = vadd.f32 %v1320, %v1386
  %v1451 = vadd.f32 %v1321, %v1387
  %v1452 = vadd.f32 %v1322, %v1388
  %v1453 = vadd.f32 %v1323, %v1389
  %v1454 = vadd.f32 %v1324, %v1390
  %v1455 = vadd.f32 %v1325, %v1391
  %v1456 = vadd.f32 %v1326, %v1392
  %v1457 = vadd.f32 %v1327, %v1393
  %v1458 = vadd.f32 %v1328, %v1394
  %v1459 = vadd.f32 %v1329, %v1395
  %v1460 = vadd.f32 %v1330, %v1396
  %v1461 = vadd.f32 %v1331, %v1397
  %v1462 = vadd.f32 %v1332, %v1398
  %v1463 = vadd.f32 %v1333, %v1399
  %v1464 = vadd.f32 %v1334, %v1400
  %v1465 = vadd.f32 %v1335, %v1401
  %v1466 = vadd.f32 %v1336, %v1402
  %v1467 = vadd.f32 %v1337, %v1403
  %v1468 = vadd.f32 %v1338, %v1404
  %v1469 = vadd.f32 %v1339, %v1405
  %v1470 = vadd.f32 %v1340, %v1406
  %v1471 = vadd.f32 %v1341, %v1407
  %v1472 = vadd.f32 %v1342, %v1408
  %v1473 = vadd.f32 %v1343, %v1409
  %v1474 = vadd.f32 %v1344, %v1410
  %v1475 = vadd.f32 %v1345, %v1411
  %v1476 = vadd.f32 %v1346, %v1412
  %v1477 = vadd.f32 %v1347, %v1413
  %v1478 = vadd.f32 %v1348, %v1414
  %v1479 = vadd.f32 %v1349, %v1415
  %v1480 = vadd.f32 %v1350, %v1416
  %v1481 = vadd.f32 %v1351, %v1417
  %v1482 = vadd.f32 %v1352, %v1418
  %v1483 = vadd.f32 %v1353, %v1419
  %v1484 = vadd.f32 %v1354, %v1420
  %v1485 = vadd.f32 %v1355, %v1421
  %v1486 = vadd.f32 %v1356, %v1422
  %v1487 = vadd.f32 %v1357, %v1423
  %v1488 = vadd.f32 %v1358, %v1424
  %v1489 = vtanh.pop %v1425
  %v1490 = vtanh.pop %v1426
  %v1491 = vtanh.pop %v1427
  %v1492 = vtanh.pop %v1428
  %v1493 = vtanh.pop %v1429
  %v1494 = vtanh.pop %v1430
  %v1495 = vtanh.pop %v1431
  %v1496 = vtanh.pop %v1432
  %v1497 = vtanh.pop %v1433
  %v1498 = vtanh.pop %v1434
  %v1499 = vtanh.pop %v1435
  %v1500 = vtanh.pop %v1436
  %v1501 = vtanh.pop %v1437
  %v1502 = vtanh.pop %v1438
  %v1503 = vtanh.pop %v1439
  %v1504 = vtanh.pop %v1440
  %v1505 = vtanh.pop %v1441
  %v1506 = vtanh.pop %v1442
  %v1507 = vtanh.pop %v1443
  %v1508 = vtanh.pop %v1444
  %v1509 = vtanh.pop %v1445
  %v1510 = vtanh.pop %v1446
  %v1511 = vtanh.pop %v1447
  %v1512 = vtanh.pop %v1448
  %v1513 = vtanh.pop %v1449
  %v1514 = vtanh.pop %v1450
  %v1515 = vtanh.pop %v1451
  %v1516 = vtanh.pop %v1452
  %v1517 = vtanh.pop %v1453
  %v1518 = vtanh.pop %v1454
  %v1519 = vtanh.pop %v1455
  %v1520 = vtanh.pop %v1456
  %v1521 = vtanh.pop %v1457
  %v1522 = vtanh.pop %v1458
  %v1523 = vtanh.pop %v1459
  %v1524 = vtanh.pop %v1460
  %v1525 = vtanh.pop %v1461
  %v1526 = vtanh.pop %v1462
  %v1527 = vtanh.pop %v1463
  %v1528 = vtanh.pop %v1464
  %v1529 = vtanh.pop %v1465
  %v1530 = vtanh.pop %v1466
  %v1531 = vtanh.pop %v1467
  %v1532 = vtanh.pop %v1468
  %v1533 = vtanh.pop %v1469
  %v1534 = vtanh.pop %v1470
  %v1535 = vtanh.pop %v1471
  %v1536 = vtanh.pop %v1472
  %v1537 = vtanh.pop %v1473
  %v1538 = vtanh.pop %v1474
  %v1539 = vtanh.pop %v1475
  %v1540 = vtanh.pop %v1476
  %v1541 = vtanh.pop %v1477
  %v1542 = vtanh.pop %v1478
  %v1543 = vtanh.pop %v1479
  %v1544 = vtanh.pop %v1480
  %v1545 = vtanh.pop %v1481
  %v1546 = vtanh.pop %v1482
  %v1547 = vtanh.pop %v1483
  %v1548 = vtanh.pop %v1484
  %v1549 = vtanh.pop %v1485
  %v1550 = vtanh.pop %v1486
  %v1551 = vtanh.pop %v1487
  %v1552 = vtanh.pop %v1488
  %vm1553 = vcmask 105472
  %1554 = vst.msk [vmem:[%s7] sm:$0xff] %vm1553, %v1489
  %1555 = vst.msk [vmem:[%s7 + $0x8] sm:$0xff] %vm1553, %v1490
  %1556 = vst.msk [vmem:[%s7 + $0x10] sm:$0xff] %vm1553, %v1491
  %1557 = vst.msk [vmem:[%s7 + $0x18] sm:$0xff] %vm1553, %v1492
  %1558 = vst.msk [vmem:[%s7 + $0x20] sm:$0xff] %vm1553, %v1493
  %1559 = vst.msk [vmem:[%s7 + $0x28] sm:$0xff] %vm1553, %v1494
  %1560 = vst.msk [vmem:[%s7 + $0x30] sm:$0xff] %vm1553, %v1495
  %1561 = vst.msk [vmem:[%s7 + $0x38] sm:$0xff] %vm1553, %v1496
  %1562 = vst.msk [vmem:[%s7 + $0x40] sm:$0xff] %vm1553, %v1497
  %1563 = vst.msk [vmem:[%s7 + $0x48] sm:$0xff] %vm1553, %v1498
  %1564 = vst.msk [vmem:[%s7 + $0x50] sm:$0xff] %vm1553, %v1499
  %1565 = vst.msk [vmem:[%s7 + $0x58] sm:$0xff] %vm1553, %v1500
  %1566 = vst.msk [vmem:[%s7 + $0x60] sm:$0xff] %vm1553, %v1501
  %1567 = vst.msk [vmem:[%s7 + $0x68] sm:$0xff] %vm1553, %v1502
  %1568 = vst.msk [vmem:[%s7 + $0x70] sm:$0xff] %vm1553, %v1503
  %1569 = vst.msk [vmem:[%s7 + $0x78] sm:$0xff] %vm1553, %v1504
  %1570 = vst.msk [vmem:[%s7 + $0x80] sm:$0xff] %vm1553, %v1505
  %1571 = vst.msk [vmem:[%s7 + $0x88] sm:$0xff] %vm1553, %v1506
  %1572 = vst.msk [vmem:[%s7 + $0x90] sm:$0xff] %vm1553, %v1507
  %1573 = vst.msk [vmem:[%s7 + $0x98] sm:$0xff] %vm1553, %v1508
  %1574 = vst.msk [vmem:[%s7 + $0xa0] sm:$0xff] %vm1553, %v1509
  %1575 = vst.msk [vmem:[%s7 + $0xa8] sm:$0xff] %vm1553, %v1510
  %1576 = vst.msk [vmem:[%s7 + $0xb0] sm:$0xff] %vm1553, %v1511
  %1577 = vst.msk [vmem:[%s7 + $0xb8] sm:$0xff] %vm1553, %v1512
  %1578 = vst.msk [vmem:[%s7 + $0xc0] sm:$0xff] %vm1553, %v1513
  %1579 = vst.msk [vmem:[%s7 + $0xc8] sm:$0xff] %vm1553, %v1514
  %1580 = vst.msk [vmem:[%s7 + $0xd0] sm:$0xff] %vm1553, %v1515
  %1581 = vst.msk [vmem:[%s7 + $0xd8] sm:$0xff] %vm1553, %v1516
  %1582 = vst.msk [vmem:[%s7 + $0xe0] sm:$0xff] %vm1553, %v1517
  %1583 = vst.msk [vmem:[%s7 + $0xe8] sm:$0xff] %vm1553, %v1518
  %1584 = vst.msk [vmem:[%s7 + $0xf0] sm:$0xff] %vm1553, %v1519
  %1585 = vst.msk [vmem:[%s7 + $0xf8] sm:$0xff] %vm1553, %v1520
  %1586 = vst.msk [vmem:[%s7 + $0x100] sm:$0xff] %vm1553, %v1521
  %1587 = vst.msk [vmem:[%s7 + $0x108] sm:$0xff] %vm1553, %v1522
  %1588 = vst.msk [vmem:[%s7 + $0x110] sm:$0xff] %vm1553, %v1523
  %1589 = vst.msk [vmem:[%s7 + $0x118] sm:$0xff] %vm1553, %v1524
  %1590 = vst.msk [vmem:[%s7 + $0x120] sm:$0xff] %vm1553, %v1525
  %1591 = vst.msk [vmem:[%s7 + $0x128] sm:$0xff] %vm1553, %v1526
  %1592 = vst.msk [vmem:[%s7 + $0x130] sm:$0xff] %vm1553, %v1527
  %1593 = vst.msk [vmem:[%s7 + $0x138] sm:$0xff] %vm1553, %v1528
  %1594 = vst.msk [vmem:[%s7 + $0x140] sm:$0xff] %vm1553, %v1529
  %1595 = vst.msk [vmem:[%s7 + $0x148] sm:$0xff] %vm1553, %v1530
  %1596 = vst.msk [vmem:[%s7 + $0x150] sm:$0xff] %vm1553, %v1531
  %1597 = vst.msk [vmem:[%s7 + $0x158] sm:$0xff] %vm1553, %v1532
  %1598 = vst.msk [vmem:[%s7 + $0x160] sm:$0xff] %vm1553, %v1533
  %1599 = vst.msk [vmem:[%s7 + $0x168] sm:$0xff] %vm1553, %v1534
  %1600 = vst.msk [vmem:[%s7 + $0x170] sm:$0xff] %vm1553, %v1535
  %1601 = vst.msk [vmem:[%s7 + $0x178] sm:$0xff] %vm1553, %v1536
  %1602 = vst.msk [vmem:[%s7 + $0x180] sm:$0xff] %vm1553, %v1537
  %1603 = vst.msk [vmem:[%s7 + $0x188] sm:$0xff] %vm1553, %v1538
  %1604 = vst.msk [vmem:[%s7 + $0x190] sm:$0xff] %vm1553, %v1539
  %1605 = vst.msk [vmem:[%s7 + $0x198] sm:$0xff] %vm1553, %v1540
  %1606 = vst.msk [vmem:[%s7 + $0x1a0] sm:$0xff] %vm1553, %v1541
  %1607 = vst.msk [vmem:[%s7 + $0x1a8] sm:$0xff] %vm1553, %v1542
  %1608 = vst.msk [vmem:[%s7 + $0x1b0] sm:$0xff] %vm1553, %v1543
  %1609 = vst.msk [vmem:[%s7 + $0x1b8] sm:$0xff] %vm1553, %v1544
  %1610 = vst.msk [vmem:[%s7 + $0x1c0] sm:$0xff] %vm1553, %v1545
  %1611 = vst.msk [vmem:[%s7 + $0x1c8] sm:$0xff] %vm1553, %v1546
  %1612 = vst.msk [vmem:[%s7 + $0x1d0] sm:$0xff] %vm1553, %v1547
  %1613 = vst.msk [vmem:[%s7 + $0x1d8] sm:$0xff] %vm1553, %v1548
  %1614 = vst.msk [vmem:[%s7 + $0x1e0] sm:$0xff] %vm1553, %v1549
  %1615 = vst.msk [vmem:[%s7 + $0x1e8] sm:$0xff] %vm1553, %v1550
  %1616 = vst.msk [vmem:[%s7 + $0x1f0] sm:$0xff] %vm1553, %v1551
  %1617 = vst.msk [vmem:[%s7 + $0x1f8] sm:$0xff] %vm1553, %v1552
  // Predicated region
  $region30: #{generator_forward.13} parent=0 // pred_check
    _
  $region31: #{generator_forward.13} parent=0 // pred_check_branch
    %1619 = sbr.rel (0) target = $region33
  $region32: #{generator_forward.13} parent=0 // pred_region
    _
  $region33: #{generator_forward.13} parent=0 // pred_fallthru
    _
  // Predicated region
  $region34: #{generator_forward.13} parent=0 // pred_check
    _
  $region35: #{generator_forward.13} parent=0 // pred_check_branch
    %1621 = sbr.rel (0) target = $region37
  $region36: #{generator_forward.13} parent=0 // pred_region
    _
  $region37: #{generator_forward.13} parent=0 // pred_fallthru
    _

// kernel: generator_forward.11
$region0: #{generator_forward.11}
  #allocation0 [shape = 'u32[]', space=smem, size = 0x4, offset = 0x4, fixed_abs, tag = 'smem constant byte address 0x4 - core index']
  #allocation1 [shape = 'u32[144,128]{1,0:T(1,128)}', space=vmem, size = 0x12000, scoped, tag = 'internal scratch']
  %s0 = inlined_call_operand.vmem [shape: bf16[2,362,32], index: 0, kind: input, shape index: {}]
  %s1 = inlined_call_operand.vmem [shape: bf16[9,32,32], index: 1, kind: input, shape index: {}]
  %s2 = inlined_call_operand.vmem [shape: f32[1,32], index: 2, kind: input, shape index: {}]
  %s3 = inlined_call_operand.vmem [shape: f32[324,1], index: 3, kind: input, shape index: {}]
  %s4 = inlined_call_operand.vmem [shape: bf16[2,362,32], index: 4, kind: output, shape index: {}]
  %s5 = sld [smem:[#allocation0]]
  $region49: #{generator_forward.11} parent=0
    _
  %s7 = ssub.s32 1, %s5
  %s8 = scalar_select 0, %s7, %s5
  loop: start=0, step=1, limit=4
  $region2: #{generator_forward.11} parent=0 // loop_pre_header
    _
  $region3: #{generator_forward.11} parent=0 // loop_header
    %s10 = sphi 0, %s14
    %p11 = scmp.ge.s32.totalorder %s10, 4
    %s20 = sphi 0, %s22
    %s23 = sphi 0, %s20
    %s24 = sphi 0, %s23
    %s40 = sphi 0, %s24
    %s44 = sphi 0, %s44
    %s46 = sphi 0, %s44
    %s47 = sphi 0, %s46
    %s61 = sphi 0, %s47
    %s65 = sphi 0, %s65
    %s67 = sphi 0, %s65
    %s68 = sphi 0, %s67
    %s82 = sphi 0, %s68
    %s86 = sphi 0, %s86
    %s88 = sphi 0, %s86
    %s89 = sphi 0, %s88
    %s103 = sphi 0, %s89
    %s109 = sphi 0, %s111
    %s112 = sphi 0, %s109
    %s113 = sphi 0, %s112
    %s129 = sphi 0, %s113
  $region4: #{generator_forward.11} parent=0 // loop_header_branch
    %13 = sbr.rel (%p11) target = $region8
  $region5: #{generator_forward.11} parent=0 // loop_body
    %s15 = ssub.s32 %s10, 1
    %s16 = ssub.s32 %s10, 2
    %s17 = sadd.s32 %s10, 1
    %s18 = ssub.s32 %s10, %s17
    %p19 = scmp.eq.s32.totalorder %s18, 0
    %s21 = sadd.s32 %s20, 1
    %s22 = scalar_select %p19, %s20, %s21
    %p25 = pneg %p19
    %p26 = scmp.eq.s32.totalorder %s10, 1
    %p27 = por %p25, %p26
    %p28 = scmp.ne.s32.totalorder %s20, %s23
    %p29 = scmp.eq.s32.totalorder %s10, 0
    %p30 = por %p28, %p29
    %p31 = scmp.ne.s32.totalorder %s20, %s23
    %p32 = scmp.eq.s32.totalorder %s15, 1
    %p33 = por %p31, %p32
    %p34 = scmp.ne.s32.totalorder %s23, %s24
    %p35 = scmp.eq.s32.totalorder %s15, 0
    %p36 = por %p34, %p35
    %p37 = scmp.ne.s32.totalorder %s23, %s24
    %p38 = scmp.eq.s32.totalorder %s16, 1
    %p39 = por %p37, %p38
    %p41 = scmp.ne.s32.totalorder %s24, %s40
    %p42 = scmp.eq.s32.totalorder %s16, 0
    %p43 = por %p41, %p42
    %s45 = sadd.s32 %s44, 1
    %p48 = scmp.eq.s32.totalorder %s10, 1
    %p49 = scmp.ne.s32.totalorder %s44, %s46
    %p50 = scmp.eq.s32.totalorder %s10, 0
    %p51 = por %p49, %p50
    %p52 = scmp.ne.s32.totalorder %s44, %s46
    %p53 = scmp.eq.s32.totalorder %s15, 1
    %p54 = por %p52, %p53
    %p55 = scmp.ne.s32.totalorder %s46, %s47
    %p56 = scmp.eq.s32.totalorder %s15, 0
    %p57 = por %p55, %p56
    %p58 = scmp.ne.s32.totalorder %s46, %s47
    %p59 = scmp.eq.s32.totalorder %s16, 1
    %p60 = por %p58, %p59
    %p62 = scmp.ne.s32.totalorder %s47, %s61
    %p63 = scmp.eq.s32.totalorder %s16, 0
    %p64 = por %p62, %p63
    %s66 = sadd.s32 %s65, 1
    %p69 = scmp.eq.s32.totalorder %s10, 1
    %p70 = scmp.ne.s32.totalorder %s65, %s67
    %p71 = scmp.eq.s32.totalorder %s10, 0
    %p72 = por %p70, %p71
    %p73 = scmp.ne.s32.totalorder %s65, %s67
    %p74 = scmp.eq.s32.totalorder %s15, 1
    %p75 = por %p73, %p74
    %p76 = scmp.ne.s32.totalorder %s67, %s68
    %p77 = scmp.eq.s32.totalorder %s15, 0
    %p78 = por %p76, %p77
    %p79 = scmp.ne.s32.totalorder %s67, %s68
    %p80 = scmp.eq.s32.totalorder %s16, 1
    %p81 = por %p79, %p80
    %p83 = scmp.ne.s32.totalorder %s68, %s82
    %p84 = scmp.eq.s32.totalorder %s16, 0
    %p85 = por %p83, %p84
    %s87 = sadd.s32 %s86, 1
    %p90 = scmp.eq.s32.totalorder %s10, 1
    %p91 = scmp.ne.s32.totalorder %s86, %s88
    %p92 = scmp.eq.s32.totalorder %s10, 0
    %p93 = por %p91, %p92
    %p94 = scmp.ne.s32.totalorder %s86, %s88
    %p95 = scmp.eq.s32.totalorder %s15, 1
    %p96 = por %p94, %p95
    %p97 = scmp.ne.s32.totalorder %s88, %s89
    %p98 = scmp.eq.s32.totalorder %s15, 0
    %p99 = por %p97, %p98
    %p100 = scmp.ne.s32.totalorder %s88, %s89
    %p101 = scmp.eq.s32.totalorder %s16, 1
    %p102 = por %p100, %p101
    %p104 = scmp.ne.s32.totalorder %s89, %s103
    %p105 = scmp.eq.s32.totalorder %s16, 0
    %p106 = por %p104, %p105
    %s107 = ssub.s32 %s10, %s17
    %p108 = scmp.eq.s32.totalorder %s107, 0
    %s110 = sadd.s32 %s109, 1
    %s111 = scalar_select %p108, %s109, %s110
    %p114 = pneg %p108
    %p115 = scmp.eq.s32.totalorder %s10, 1
    %p116 = por %p114, %p115
    %p117 = scmp.ne.s32.totalorder %s109, %s112
    %p118 = scmp.eq.s32.totalorder %s10, 0
    %p119 = por %p117, %p118
    %p120 = scmp.ne.s32.totalorder %s109, %s112
    %p121 = scmp.eq.s32.totalorder %s15, 1
    %p122 = por %p120, %p121
    %p123 = scmp.ne.s32.totalorder %s112, %s113
    %p124 = scmp.eq.s32.totalorder %s15, 0
    %p125 = por %p123, %p124
    %p126 = scmp.ne.s32.totalorder %s112, %s113
    %p127 = scmp.eq.s32.totalorder %s16, 1
    %p128 = por %p126, %p127
    %p130 = scmp.ne.s32.totalorder %s113, %s129
    %p131 = scmp.eq.s32.totalorder %s16, 0
    %p132 = por %p130, %p131
    %p133 = scmp.le.s32.totalorder 1, %s10
    %p134 = scmp.lt.s32.totalorder %s10, 3
    %p135 = pnand %p133, %p134
    %p136 = pneg %p135
    // Predicated region
    $region9: #{generator_forward.11} parent=5 // pred_check
      _
    $region10: #{generator_forward.11} parent=5 // pred_check_branch
      %138 = sbr.rel (%p135) target = $region12
    $region11: #{generator_forward.11} parent=5 // pred_region
      %s139 = ssub.s32 %s10, 1
      // Predicated region
      $region13: #{generator_forward.11} parent=11 // pred_check
        %p140 = pneg %p57
      $region14: #{generator_forward.11} parent=11 // pred_check_branch
        %142 = sbr.rel (%p140) target = $region16
      $region15: #{generator_forward.11} parent=11 // pred_region
        _
      $region16: #{generator_forward.11} parent=11 // pred_fallthru
        _
      // Predicated region
      $region17: #{generator_forward.11} parent=11 // pred_check
        %p143 = pneg %p78
      $region18: #{generator_forward.11} parent=11 // pred_check_branch
        %145 = sbr.rel (%p143) target = $region20
      $region19: #{generator_forward.11} parent=11 // pred_region
        _
      $region20: #{generator_forward.11} parent=11 // pred_fallthru
        _
      // Predicated region
      $region21: #{generator_forward.11} parent=11 // pred_check
        %p146 = pneg %p99
      $region22: #{generator_forward.11} parent=11 // pred_check_branch
        %148 = sbr.rel (%p146) target = $region24
      $region23: #{generator_forward.11} parent=11 // pred_region
        _
      $region24: #{generator_forward.11} parent=11 // pred_fallthru
        _
    $region12: #{generator_forward.11} parent=5 // pred_fallthru
      _
    %p149 = scmp.lt.s32.totalorder %s10, 2
    // Predicated region
    $region25: #{generator_forward.11} parent=5 // pred_check
      %p150 = pneg %p149
    $region26: #{generator_forward.11} parent=5 // pred_check_branch
      %152 = sbr.rel (%p150) target = $region28
    $region27: #{generator_forward.11} parent=5 // pred_region
      // Predicated region
      $region29: #{generator_forward.11} parent=27 // pred_check
        %p153 = pneg %p30
      $region30: #{generator_forward.11} parent=27 // pred_check_branch
        %155 = sbr.rel (%p153) target = $region32
      $region31: #{generator_forward.11} parent=27 // pred_region
        %p156 = scmp.lt.s32.totalorder %s10, 1
        %s157 = scalar_select %p156, %s10, 1
        %s158 = smul.addr %s157, 46
        %s159 = smul.addr %s158, 4
        %s160 = scalar_lea.vmem %s0, %s159
      $region32: #{generator_forward.11} parent=27 // pred_fallthru
        _
    $region28: #{generator_forward.11} parent=5 // pred_fallthru
      _
    %p161 = scmp.le.s32.totalorder 1, %s10
    %p162 = scmp.lt.s32.totalorder %s10, 3
    %p163 = pnand %p161, %p162
    %p164 = pneg %p163
    // Predicated region
    $region33: #{generator_forward.11} parent=5 // pred_check
      _
    $region34: #{generator_forward.11} parent=5 // pred_check_branch
      %166 = sbr.rel (%p163) target = $region36
    $region35: #{generator_forward.11} parent=5 // pred_region
      %s167 = ssub.s32 %s10, 1
      %p168 = scmp.lt.s32.totalorder %s15, 1
      %s169 = scalar_select %p168, %s15, 1
      %s170 = smul.addr %s169, 46
      %s171 = smul.addr %s170, 4
      %s172 = scalar_lea.vmem %s0, %s171
      %p173 = pneg %p36
      %p174 = pneg %p33
      %p175 = pneg %p57
      %p176 = pneg %p54
      %p177 = pneg %p78
      %p178 = pneg %p75
      %p179 = pneg %p99
      %p180 = pneg %p96
      %p181 = pneg %p125
      %p182 = pneg %p122
      %p183 = scmp.lt.s32.totalorder %s15, 1
      %s184 = scalar_select %p183, %s15, 1
      %s185 = smul.addr %s184, 46
      %s186 = smul.addr %s185, 4
      %s187 = scalar_lea.vmem %s4, %s186
      %p188 = scmp.lt.s32.totalorder %s15, 1
      %s189 = scalar_select %p188, %s15, 1
      %s190 = smul.addr %s189, 46
      %s191 = smul.addr %s190, 4
      %s192 = scalar_lea.vmem %s0, %s191
      %p193 = scmp.lt.s32.totalorder %s15, 1
      %s194 = scalar_select %p193, %s15, 1
      %s195 = smul.addr %s194, 46
      %s196 = smul.addr %s195, 4
      %s197 = scalar_lea.vmem %s4, %s196
      %v199 = vld [vmem:[%s192] sm:$0xf]
      %v200 = vld [vmem:[%s192 + $0x4] sm:$0xf]
      %v201 = vld [vmem:[%s192 + $0x8] sm:$0xf]
      %v202 = vld [vmem:[%s192 + $0xc] sm:$0xf]
      %v203 = vld [vmem:[%s192 + $0x10] sm:$0xf]
      %v204 = vld [vmem:[%s192 + $0x14] sm:$0xf]
      %v205 = vld [vmem:[%s192 + $0x18] sm:$0xf]
      %v206 = vld [vmem:[%s192 + $0x1c] sm:$0xf]
      %v207 = vld [vmem:[%s192 + $0x20] sm:$0xf]
      %v208 = vld [vmem:[%s192 + $0x24] sm:$0xf]
      %v209 = vld [vmem:[%s192 + $0x28] sm:$0xf]
      %v210 = vld [vmem:[%s192 + $0x2c] sm:$0xf]
      %v211 = vld [vmem:[%s192 + $0x30] sm:$0xf]
      %v212 = vld [vmem:[%s192 + $0x34] sm:$0xf]
      %v213 = vld [vmem:[%s192 + $0x38] sm:$0xf]
      %v214 = vld [vmem:[%s192 + $0x3c] sm:$0xf]
      %v215 = vld [vmem:[%s192 + $0x40] sm:$0xf]
      %v216 = vld [vmem:[%s192 + $0x44] sm:$0xf]
      %v217 = vld [vmem:[%s192 + $0x48] sm:$0xf]
      %v218 = vld [vmem:[%s192 + $0x4c] sm:$0xf]
      %v219 = vld [vmem:[%s192 + $0x50] sm:$0xf]
      %v220 = vld [vmem:[%s192 + $0x54] sm:$0xf]
      %v221 = vld [vmem:[%s192 + $0x58] sm:$0xf]
      %v222 = vld [vmem:[%s192 + $0x5c] sm:$0xf]
      %v223 = vld [vmem:[%s192 + $0x60] sm:$0xf]
      %v224 = vld [vmem:[%s192 + $0x64] sm:$0xf]
      %v225 = vld [vmem:[%s192 + $0x68] sm:$0xf]
      %v226 = vld [vmem:[%s192 + $0x6c] sm:$0xf]
      %v227 = vld [vmem:[%s192 + $0x70] sm:$0xf]
      %v228 = vld [vmem:[%s192 + $0x74] sm:$0xf]
      %v229 = vld [vmem:[%s192 + $0x78] sm:$0xf]
      %v230 = vld [vmem:[%s192 + $0x7c] sm:$0xf]
      %v231 = vld [vmem:[%s192 + $0x80] sm:$0xf]
      %v232 = vld [vmem:[%s192 + $0x84] sm:$0xf]
      %v233 = vld [vmem:[%s192 + $0x88] sm:$0xf]
      %v234 = vld [vmem:[%s192 + $0x8c] sm:$0xf]
      %v235 = vld [vmem:[%s192 + $0x90] sm:$0xf]
      %v236 = vld [vmem:[%s192 + $0x94] sm:$0xf]
      %v237 = vld [vmem:[%s192 + $0x98] sm:$0xf]
      %v238 = vld [vmem:[%s192 + $0x9c] sm:$0xf]
      %v239 = vld [vmem:[%s192 + $0xa0] sm:$0x3]
      %v240 = vld [vmem:[%s1] sm:$0xf]
      %v241 = vld [vmem:[%s1 + $0x4] sm:$0xf]
      %v242 = vld [vmem:[%s1 + $0x8] sm:$0xf]
      %v243 = vld [vmem:[%s1 + $0xc] sm:$0xf]
      %v244 = vld [vmem:[%s192 + $0xa0] sm:$0x7]
      %s245 = scalar_lea.vmem %s1, 16
      %v246 = vld [vmem:[%s245] sm:$0xf]
      %v247 = vld [vmem:[%s245 + $0x4] sm:$0xf]
      %v248 = vld [vmem:[%s245 + $0x8] sm:$0xf]
      %v249 = vld [vmem:[%s245 + $0xc] sm:$0xf]
      %v291 = vunpack.c.l.b16 %v199
      %v292 = vunpack.c.l.b16 %v200
      %v293 = vunpack.c.l.b16 %v201
      %v294 = vunpack.c.l.b16 %v202
      %v295 = vunpack.c.l.b16 %v203
      %v296 = vunpack.c.l.b16 %v204
      %v297 = vunpack.c.l.b16 %v205
      %v298 = vunpack.c.l.b16 %v206
      %v299 = vunpack.c.l.b16 %v207
      %v300 = vunpack.c.l.b16 %v208
      %v301 = vunpack.c.l.b16 %v209
      %v302 = vunpack.c.l.b16 %v210
      %v303 = vunpack.c.l.b16 %v211
      %v304 = vunpack.c.l.b16 %v212
      %v305 = vunpack.c.l.b16 %v213
      %v306 = vunpack.c.l.b16 %v214
      %v307 = vunpack.c.l.b16 %v215
      %v308 = vunpack.c.l.b16 %v216
      %v309 = vunpack.c.l.b16 %v217
      %v310 = vunpack.c.l.b16 %v218
      %v311 = vunpack.c.l.b16 %v219
      %v312 = vunpack.c.l.b16 %v220
      %v313 = vunpack.c.l.b16 %v221
      %v314 = vunpack.c.l.b16 %v222
      %v315 = vunpack.c.l.b16 %v223
      %v316 = vunpack.c.l.b16 %v224
      %v317 = vunpack.c.l.b16 %v225
      %v318 = vunpack.c.l.b16 %v226
      %v319 = vunpack.c.l.b16 %v227
      %v320 = vunpack.c.l.b16 %v228
      %v321 = vunpack.c.l.b16 %v229
      %v322 = vunpack.c.l.b16 %v230
      %v323 = vunpack.c.l.b16 %v231
      %v324 = vunpack.c.l.b16 %v232
      %v325 = vunpack.c.l.b16 %v233
      %v326 = vunpack.c.l.b16 %v234
      %v327 = vunpack.c.l.b16 %v235
      %v328 = vunpack.c.l.b16 %v236
      %v329 = vunpack.c.l.b16 %v237
      %v330 = vunpack.c.l.b16 %v238
      %v331 = vunpack.c.l.b16 %v244
      %v332 = vpack.c.b16 %v292, %v291
      %v333 = vpack.c.b16 %v294, %v293
      %v334 = vpack.c.b16 %v296, %v295
      %v335 = vpack.c.b16 %v298, %v297
      %v336 = vpack.c.b16 %v300, %v299
      %v337 = vpack.c.b16 %v302, %v301
      %v338 = vpack.c.b16 %v304, %v303
      %v339 = vpack.c.b16 %v306, %v305
      %v340 = vpack.c.b16 %v308, %v307
      %v341 = vpack.c.b16 %v310, %v309
      %v342 = vpack.c.b16 %v312, %v311
      %v343 = vpack.c.b16 %v314, %v313
      %v344 = vpack.c.b16 %v316, %v315
      %v345 = vpack.c.b16 %v318, %v317
      %v346 = vpack.c.b16 %v320, %v319
      %v347 = vpack.c.b16 %v322, %v321
      %v348 = vpack.c.b16 %v324, %v323
      %v349 = vpack.c.b16 %v326, %v325
      %v350 = vpack.c.b16 %v328, %v327
      %v351 = vpack.c.b16 %v330, %v329
      %v352 = vpack.c.b16 %v331, %v331
      %vm353 = vsmask.f32 7424
      %v355 = vshrl.u32 %v332, 16
      %v357 = vshll.u32 %v332, 16
      %v359 = vrot.slane %v357, 1
      %v360 = vor.u32 %v355, %v359
      %v362 = vshll.u32 %v333, 16
      %v364 = vrot.slane %v362, 1
      %v365 = vsel %vm353, %v360, %v364
      %v366 = vshrl.u32 %v333, 16
      %v368 = vor.u32 %v366, %v364
      %v370 = vshll.u32 %v334, 16
      %v372 = vrot.slane %v370, 1
      %v373 = vsel %vm353, %v368, %v372
      %v374 = vshrl.u32 %v334, 16
      %v376 = vor.u32 %v374, %v372
      %v378 = vshll.u32 %v335, 16
      %v380 = vrot.slane %v378, 1
      %v381 = vsel %vm353, %v376, %v380
      %v382 = vshrl.u32 %v335, 16
      %v384 = vor.u32 %v382, %v380
      %v386 = vshll.u32 %v336, 16
      %v388 = vrot.slane %v386, 1
      %v389 = vsel %vm353, %v384, %v388
      %v390 = vshrl.u32 %v336, 16
      %v392 = vor.u32 %v390, %v388
      %v394 = vshll.u32 %v337, 16
      %v396 = vrot.slane %v394, 1
      %v397 = vsel %vm353, %v392, %v396
      %v398 = vshrl.u32 %v337, 16
      %v400 = vor.u32 %v398, %v396
      %v402 = vshll.u32 %v338, 16
      %v404 = vrot.slane %v402, 1
      %v405 = vsel %vm353, %v400, %v404
      %v406 = vshrl.u32 %v338, 16
      %v408 = vor.u32 %v406, %v404
      %v410 = vshll.u32 %v339, 16
      %v412 = vrot.slane %v410, 1
      %v413 = vsel %vm353, %v408, %v412
      %v414 = vshrl.u32 %v339, 16
      %v416 = vor.u32 %v414, %v412
      %v418 = vshll.u32 %v340, 16
      %v420 = vrot.slane %v418, 1
      %v421 = vsel %vm353, %v416, %v420
      %v422 = vshrl.u32 %v340, 16
      %v424 = vor.u32 %v422, %v420
      %v426 = vshll.u32 %v341, 16
      %v428 = vrot.slane %v426, 1
      %v429 = vsel %vm353, %v424, %v428
      %v430 = vshrl.u32 %v341, 16
      %v432 = vor.u32 %v430, %v428
      %v434 = vshll.u32 %v342, 16
      %v436 = vrot.slane %v434, 1
      %v437 = vsel %vm353, %v432, %v436
      %v438 = vshrl.u32 %v342, 16
      %v440 = vor.u32 %v438, %v436
      %v442 = vshll.u32 %v343, 16
      %v444 = vrot.slane %v442, 1
      %v445 = vsel %vm353, %v440, %v444
      %v446 = vshrl.u32 %v343, 16
      %v448 = vor.u32 %v446, %v444
      %v450 = vshll.u32 %v344, 16
      %v452 = vrot.slane %v450, 1
      %v453 = vsel %vm353, %v448, %v452
      %v454 = vshrl.u32 %v344, 16
      %v456 = vor.u32 %v454, %v452
      %v458 = vshll.u32 %v345, 16
      %v460 = vrot.slane %v458, 1
      %v461 = vsel %vm353, %v456, %v460
      %v462 = vshrl.u32 %v345, 16
      %v464 = vor.u32 %v462, %v460
      %v466 = vshll.u32 %v346, 16
      %v468 = vrot.slane %v466, 1
      %v469 = vsel %vm353, %v464, %v468
      %v470 = vshrl.u32 %v346, 16
      %v472 = vor.u32 %v470, %v468
      %v474 = vshll.u32 %v347, 16
      %v476 = vrot.slane %v474, 1
      %v477 = vsel %vm353, %v472, %v476
      %v478 = vshrl.u32 %v347, 16
      %v480 = vor.u32 %v478, %v476
      %v482 = vshll.u32 %v348, 16
      %v484 = vrot.slane %v482, 1
      %v485 = vsel %vm353, %v480, %v484
      %v486 = vshrl.u32 %v348, 16
      %v488 = vor.u32 %v486, %v484
      %v490 = vshll.u32 %v349, 16
      %v492 = vrot.slane %v490, 1
      %v493 = vsel %vm353, %v488, %v492
      %v494 = vshrl.u32 %v349, 16
      %v496 = vor.u32 %v494, %v492
      %v498 = vshll.u32 %v350, 16
      %v500 = vrot.slane %v498, 1
      %v501 = vsel %vm353, %v496, %v500
      %v502 = vshrl.u32 %v350, 16
      %v504 = vor.u32 %v502, %v500
      %v506 = vshll.u32 %v351, 16
      %v508 = vrot.slane %v506, 1
      %v509 = vsel %vm353, %v504, %v508
      %v510 = vshrl.u32 %v351, 16
      %v512 = vor.u32 %v510, %v508
      %v514 = vshll.u32 %v352, 16
      %v516 = vrot.slane %v514, 1
      %v517 = vsel %vm353, %v512, %v516
      %v518 = vshrl.u32 %v352, 16
      %v520 = vor.u32 %v518, %v516
      %v525 = vunpack.c.l.b16 %v246
      %v526 = vunpack.c.l.b16 %v247
      %v527 = vunpack.c.l.b16 %v248
      %v528 = vunpack.c.l.b16 %v249
      %v529 = vpack.c.b16 %v526, %v525
      %v530 = vpack.c.b16 %v528, %v527
      %vm533 = vcmask 261120
      %v535 = vsel %vm533, %v365, 0
      %v538 = vsel %vm533, %v373, 0
      %v541 = vsel %vm533, %v381, 0
      %v544 = vsel %vm533, %v389, 0
      %v547 = vsel %vm533, %v397, 0
      %v550 = vsel %vm533, %v405, 0
      %v553 = vsel %vm533, %v413, 0
      %v556 = vsel %vm533, %v421, 0
      %v559 = vsel %vm533, %v429, 0
      %v562 = vsel %vm533, %v437, 0
      %v565 = vsel %vm533, %v445, 0
      %v568 = vsel %vm533, %v453, 0
      %v571 = vsel %vm533, %v461, 0
      %v574 = vsel %vm533, %v469, 0
      %v577 = vsel %vm533, %v477, 0
      %v580 = vsel %vm533, %v485, 0
      %v583 = vsel %vm533, %v493, 0
      %v586 = vsel %vm533, %v501, 0
      %v589 = vsel %vm533, %v509, 0
      %v592 = vsel %vm533, %v517, 0
      %v595 = vsel %vm533, %v520, 0
      %597 = vmatprep.subr.bf16.mxu0 0
      %598 = vmatpush1.bf16.msra.mxu0 %v529
      %599 = vmatprep.subr.bf16.mxu0 0
      %600 = vmatpush1.bf16.msra.mxu0 %v530
      %601 = vmatprep.subr.bf16.mxu0 0
      %602 = vmatpush1.bf16.msra.mxu0 0
      %603 = vmatprep.subr.bf16.mxu0 0
      %604 = vmatpush1.bf16.msra.mxu0 0
      %605 = vmatprep.subr.bf16.mxu0 0
      %606 = vmatpush1.bf16.msra.mxu0 0
      %607 = vmatprep.subr.bf16.mxu0 0
      %608 = vmatpush1.bf16.msra.mxu0 0
      %609 = vmatprep.subr.bf16.mxu0 0
      %610 = vmatpush1.bf16.msra.mxu0 0
      %611 = vmatprep.subr.bf16.mxu0 0
      %612 = vmatpush1.bf16.msra.mxu0 0
      %613 = vmatprep.subr.bf16.mxu0 0
      %614 = vmatpush1.bf16.msra.mxu0 0
      %615 = vmatprep.subr.bf16.mxu0 0
      %616 = vmatpush1.bf16.msra.mxu0 0
      %617 = vmatprep.subr.bf16.mxu0 0
      %618 = vmatpush1.bf16.msra.mxu0 0
      %619 = vmatprep.subr.bf16.mxu0 0
      %620 = vmatpush1.bf16.msra.mxu0 0
      %621 = vmatprep.subr.bf16.mxu0 0
      %622 = vmatpush1.bf16.msra.mxu0 0
      %623 = vmatprep.subr.bf16.mxu0 0
      %624 = vmatpush1.bf16.msra.mxu0 0
      %625 = vmatprep.subr.bf16.mxu0 0
      %626 = vmatpush1.bf16.msra.mxu0 0
      %627 = vmatprep.subr.bf16.mxu0 0
      %628 = vmatpush1.bf16.msra.mxu0 0
      %629 = vmatprep.mubr.bf16.mxu0 0
      %630 = vmatmul.mubr.bf16.gmra.mrb[0].mxu0 %v535
      %v631 = vpop.f32.mrb[0].mxu0
      %v632 = vadd.f32 0.0, %v631
      %v633 = vpop.f32.mrb[0].mxu0
      %v634 = vpop.f32.mrb[0].mxu0
      %v635 = vadd.f32 0.0, %v634
      %v636 = vpop.f32.mrb[0].mxu0
      %637 = vmatprep.mubr.bf16.mxu0 0
      %638 = vmatmul.mubr.bf16.gmra.mrb[0].mxu0 %v538
      %v639 = vpop.f32.mrb[0].mxu0
      %v640 = vadd.f32 0.0, %v639
      %v641 = vpop.f32.mrb[0].mxu0
      %v642 = vpop.f32.mrb[0].mxu0
      %v643 = vadd.f32 0.0, %v642
      %v644 = vpop.f32.mrb[0].mxu0
      %645 = vmatprep.mubr.bf16.mxu0 0
      %646 = vmatmul.mubr.bf16.gmra.mrb[0].mxu0 %v541
      %v647 = vpop.f32.mrb[0].mxu0
      %v648 = vadd.f32 0.0, %v647
      %v649 = vpop.f32.mrb[0].mxu0
      %v650 = vpop.f32.mrb[0].mxu0
      %v651 = vadd.f32 0.0, %v650
      %v652 = vpop.f32.mrb[0].mxu0
      %653 = vmatprep.mubr.bf16.mxu0 0
      %654 = vmatmul.mubr.bf16.gmra.mrb[0].mxu0 %v544
      %v655 = vpop.f32.mrb[0].mxu0
      %v656 = vadd.f32 0.0, %v655
      %v657 = vpop.f32.mrb[0].mxu0
      %v658 = vpop.f32.mrb[0].mxu0
      %v659 = vadd.f32 0.0, %v658
      %v660 = vpop.f32.mrb[0].mxu0
      %661 = vmatprep.mubr.bf16.mxu0 0
      %662 = vmatmul.mubr.bf16.gmra.mrb[0].mxu0 %v547
      %v663 = vpop.f32.mrb[0].mxu0
      %v664 = vadd.f32 0.0, %v663
      %v665 = vpop.f32.mrb[0].mxu0
      %v666 = vpop.f32.mrb[0].mxu0
      %v667 = vadd.f32 0.0, %v666
      %v668 = vpop.f32.mrb[0].mxu0
      %669 = vmatprep.mubr.bf16.mxu0 0
      %670 = vmatmul.mubr.bf16.gmra.mrb[0].mxu0 %v550
      %v671 = vpop.f32.mrb[0].mxu0
      %v672 = vadd.f32 0.0, %v671
      %v673 = vpop.f32.mrb[0].mxu0
      %v674 = vpop.f32.mrb[0].mxu0
      %v675 = vadd.f32 0.0, %v674
      %v676 = vpop.f32.mrb[0].mxu0
      %677 = vmatprep.mubr.bf16.mxu0 0
      %678 = vmatmul.mubr.bf16.gmra.mrb[0].mxu0 %v553
      %v679 = vpop.f32.mrb[0].mxu0
      %v680 = vadd.f32 0.0, %v679
      %v681 = vpop.f32.mrb[0].mxu0
      %v682 = vpop.f32.mrb[0].mxu0
      %v683 = vadd.f32 0.0, %v682
      %v684 = vpop.f32.mrb[0].mxu0
      %685 = vmatprep.mubr.bf16.mxu0 0
      %686 = vmatmul.mubr.bf16.gmra.mrb[0].mxu0 %v556
      %v687 = vpop.f32.mrb[0].mxu0
      %v688 = vadd.f32 0.0, %v687
      %v689 = vpop.f32.mrb[0].mxu0
      %v690 = vpop.f32.mrb[0].mxu0
      %v691 = vadd.f32 0.0, %v690
      %v692 = vpop.f32.mrb[0].mxu0
      %693 = vmatprep.mubr.bf16.mxu0 0
      %694 = vmatmul.mubr.bf16.gmra.mrb[0].mxu0 %v559
      %v695 = vpop.f32.mrb[0].mxu0
      %v696 = vadd.f32 0.0, %v695
      %v697 = vpop.f32.mrb[0].mxu0
      %v698 = vpop.f32.mrb[0].mxu0
      %v699 = vadd.f32 0.0, %v698
      %v700 = vpop.f32.mrb[0].mxu0
      %701 = vmatprep.mubr.bf16.mxu0 0
      %702 = vmatmul.mubr.bf16.gmra.mrb[0].mxu0 %v562
      %v703 = vpop.f32.mrb[0].mxu0
      %v704 = vadd.f32 0.0, %v703
      %v705 = vpop.f32.mrb[0].mxu0
      %v706 = vpop.f32.mrb[0].mxu0
      %v707 = vadd.f32 0.0, %v706
      %v708 = vpop.f32.mrb[0].mxu0
      %709 = vmatprep.mubr.bf16.mxu0 0
      %710 = vmatmul.mubr.bf16.gmra.mrb[0].mxu0 %v565
      %v711 = vpop.f32.mrb[0].mxu0
      %v712 = vadd.f32 0.0, %v711
      %v713 = vpop.f32.mrb[0].mxu0
      %v714 = vpop.f32.mrb[0].mxu0
      %v715 = vadd.f32 0.0, %v714
      %v716 = vpop.f32.mrb[0].mxu0
      %717 = vmatprep.mubr.bf16.mxu0 0
      %718 = vmatmul.mubr.bf16.gmra.mrb[0].mxu0 %v568
      %v719 = vpop.f32.mrb[0].mxu0
      %v720 = vadd.f32 0.0, %v719
      %v721 = vpop.f32.mrb[0].mxu0
      %v722 = vpop.f32.mrb[0].mxu0
      %v723 = vadd.f32 0.0, %v722
      %v724 = vpop.f32.mrb[0].mxu0
      %725 = vmatprep.mubr.bf16.mxu0 0
      %726 = vmatmul.mubr.bf16.gmra.mrb[0].mxu0 %v571
      %v727 = vpop.f32.mrb[0].mxu0
      %v728 = vadd.f32 0.0, %v727
      %v729 = vpop.f32.mrb[0].mxu0
      %v730 = vpop.f32.mrb[0].mxu0
      %v731 = vadd.f32 0.0, %v730
      %v732 = vpop.f32.mrb[0].mxu0
      %733 = vmatprep.mubr.bf16.mxu0 0
      %734 = vmatmul.mubr.bf16.gmra.mrb[0].mxu0 %v574
      %v735 = vpop.f32.mrb[0].mxu0
      %v736 = vadd.f32 0.0, %v735
      %v737 = vpop.f32.mrb[0].mxu0
      %v738 = vpop.f32.mrb[0].mxu0
      %v739 = vadd.f32 0.0, %v738
      %v740 = vpop.f32.mrb[0].mxu0
      %741 = vmatprep.mubr.bf16.mxu0 0
      %742 = vmatmul.mubr.bf16.gmra.mrb[0].mxu0 %v577
      %v743 = vpop.f32.mrb[0].mxu0
      %v744 = vadd.f32 0.0, %v743
      %v745 = vpop.f32.mrb[0].mxu0
      %v746 = vpop.f32.mrb[0].mxu0
      %v747 = vadd.f32 0.0, %v746
      %v748 = vpop.f32.mrb[0].mxu0
      %749 = vmatprep.mubr.bf16.mxu0 0
      %750 = vmatmul.mubr.bf16.gmra.mrb[0].mxu0 %v580
      %v751 = vpop.f32.mrb[0].mxu0
      %v752 = vadd.f32 0.0, %v751
      %v753 = vpop.f32.mrb[0].mxu0
      %v754 = vpop.f32.mrb[0].mxu0
      %v755 = vadd.f32 0.0, %v754
      %v756 = vpop.f32.mrb[0].mxu0
      %757 = vmatprep.mubr.bf16.mxu0 0
      %758 = vmatmul.mubr.bf16.gmra.mrb[0].mxu0 %v583
      %v759 = vpop.f32.mrb[0].mxu0
      %v760 = vadd.f32 0.0, %v759
      %v761 = vpop.f32.mrb[0].mxu0
      %v762 = vpop.f32.mrb[0].mxu0
      %v763 = vadd.f32 0.0, %v762
      %v764 = vpop.f32.mrb[0].mxu0
      %765 = vmatprep.mubr.bf16.mxu0 0
      %766 = vmatmul.mubr.bf16.gmra.mrb[0].mxu0 %v586
      %v767 = vpop.f32.mrb[0].mxu0
      %v768 = vadd.f32 0.0, %v767
      %v769 = vpop.f32.mrb[0].mxu0
      %v770 = vpop.f32.mrb[0].mxu0
      %v771 = vadd.f32 0.0, %v770
      %v772 = vpop.f32.mrb[0].mxu0
      %773 = vmatprep.mubr.bf16.mxu0 0
      %774 = vmatmul.mubr.bf16.gmra.mrb[0].mxu0 %v589
      %v775 = vpop.f32.mrb[0].mxu0
      %v776 = vadd.f32 0.0, %v775
      %v777 = vpop.f32.mrb[0].mxu0
      %v778 = vpop.f32.mrb[0].mxu0
      %v779 = vadd.f32 0.0, %v778
      %v780 = vpop.f32.mrb[0].mxu0
      %781 = vmatprep.mubr.bf16.mxu0 0
      %782 = vmatmul.mubr.bf16.gmra.mrb[0].mxu0 %v592
      %v783 = vpop.f32.mrb[0].mxu0
      %v784 = vadd.f32 0.0, %v783
      %v785 = vpop.f32.mrb[0].mxu0
      %v786 = vpop.f32.mrb[0].mxu0
      %v787 = vadd.f32 0.0, %v786
      %v788 = vpop.f32.mrb[0].mxu0
      %789 = vmatprep.mubr.bf16.mxu0 0
      %790 = vmatmul.mubr.bf16.gmra.mrb[0].mxu0 %v595
      %v791 = vpop.f32.mrb[0].mxu0
      %v792 = vadd.f32 0.0, %v791
      %v793 = vpop.f32.mrb[0].mxu0
      %v794 = vpop.f32.mrb[0].mxu0
      %v795 = vpop.f32.mrb[0].mxu0
      %796 = vdwg.mxu0
      %v798 = vunpack.c.l.b16 %v239
      %v799 = vpack.c.b16 %v798, %v798
      %v804 = vunpack.c.l.b16 %v240
      %v805 = vunpack.c.l.b16 %v241
      %v806 = vunpack.c.l.b16 %v242
      %v807 = vunpack.c.l.b16 %v243
      %v808 = vpack.c.b16 %v805, %v804
      %v809 = vpack.c.b16 %v807, %v806
      %v812 = vsel %vm533, %v332, 0
      %v814 = vsel %vm533, %v333, 0
      %v816 = vsel %vm533, %v334, 0
      %v818 = vsel %vm533, %v335, 0
      %v820 = vsel %vm533, %v336, 0
      %v822 = vsel %vm533, %v337, 0
      %v824 = vsel %vm533, %v338, 0
      %v826 = vsel %vm533, %v339, 0
      %v828 = vsel %vm533, %v340, 0
      %v830 = vsel %vm533, %v341, 0
      %v832 = vsel %vm533, %v342, 0
      %v834 = vsel %vm533, %v343, 0
      %v836 = vsel %vm533, %v344, 0
      %v838 = vsel %vm533, %v345, 0
      %v840 = vsel %vm533, %v346, 0
      %v842 = vsel %vm533, %v347, 0
      %v844 = vsel %vm533, %v348, 0
      %v846 = vsel %vm533, %v349, 0
      %v848 = vsel %vm533, %v350, 0
      %v850 = vsel %vm533, %v351, 0
      %v853 = vsel %vm533, %v799, 0
      %855 = vmatprep.subr.bf16.mxu0 0
      %856 = vmatpush1.bf16.msra.mxu0 %v808
      %857 = vmatprep.subr.bf16.mxu0 0
      %858 = vmatpush1.bf16.msra.mxu0 %v809
      %859 = vmatprep.subr.bf16.mxu0 0
      %860 = vmatpush1.bf16.msra.mxu0 0
      %861 = vmatprep.subr.bf16.mxu0 0
      %862 = vmatpush1.bf16.msra.mxu0 0
      %863 = vmatprep.subr.bf16.mxu0 0
      %864 = vmatpush1.bf16.msra.mxu0 0
      %865 = vmatprep.subr.bf16.mxu0 0
      %866 = vmatpush1.bf16.msra.mxu0 0
      %867 = vmatprep.subr.bf16.mxu0 0
      %868 = vmatpush1.bf16.msra.mxu0 0
      %869 = vmatprep.subr.bf16.mxu0 0
      %870 = vmatpush1.bf16.msra.mxu0 0
      %871 = vmatprep.subr.bf16.mxu0 0
      %872 = vmatpush1.bf16.msra.mxu0 0
      %873 = vmatprep.subr.bf16.mxu0 0
      %874 = vmatpush1.bf16.msra.mxu0 0
      %875 = vmatprep.subr.bf16.mxu0 0
      %876 = vmatpush1.bf16.msra.mxu0 0
      %877 = vmatprep.subr.bf16.mxu0 0
      %878 = vmatpush1.bf16.msra.mxu0 0
      %879 = vmatprep.subr.bf16.mxu0 0
      %880 = vmatpush1.bf16.msra.mxu0 0
      %881 = vmatprep.subr.bf16.mxu0 0
      %882 = vmatpush1.bf16.msra.mxu0 0
      %883 = vmatprep.subr.bf16.mxu0 0
      %884 = vmatpush1.bf16.msra.mxu0 0
      %885 = vmatprep.subr.bf16.mxu0 0
      %886 = vmatpush1.bf16.msra.mxu0 0
      %887 = vmatprep.mubr.bf16.mxu0 0
      %888 = vmatmul.mubr.bf16.gmra.mrb[0].mxu0 %v812
      %v889 = vpop.f32.mrb[0].mxu0
      %v890 = vadd.f32 %v632, %v889
      %v891 = vpop.f32.mrb[0].mxu0
      %v892 = vpop.f32.mrb[0].mxu0
      %v893 = vadd.f32 %v635, %v892
      %v894 = vpop.f32.mrb[0].mxu0
      %895 = vmatprep.mubr.bf16.mxu0 0
      %896 = vmatmul.mubr.bf16.gmra.mrb[0].mxu0 %v814
      %v897 = vpop.f32.mrb[0].mxu0
      %v898 = vadd.f32 %v640, %v897
      %v899 = vpop.f32.mrb[0].mxu0
      %v900 = vpop.f32.mrb[0].mxu0
      %v901 = vadd.f32 %v643, %v900
      %v902 = vpop.f32.mrb[0].mxu0
      %903 = vmatprep.mubr.bf16.mxu0 0
      %904 = vmatmul.mubr.bf16.gmra.mrb[0].mxu0 %v816
      %v905 = vpop.f32.mrb[0].mxu0
      %v906 = vadd.f32 %v648, %v905
      %v907 = vpop.f32.mrb[0].mxu0
      %v908 = vpop.f32.mrb[0].mxu0
      %v909 = vadd.f32 %v651, %v908
      %v910 = vpop.f32.mrb[0].mxu0
      %911 = vmatprep.mubr.bf16.mxu0 0
      %912 = vmatmul.mubr.bf16.gmra.mrb[0].mxu0 %v818
      %v913 = vpop.f32.mrb[0].mxu0
      %v914 = vadd.f32 %v656, %v913
      %v915 = vpop.f32.mrb[0].mxu0
      %v916 = vpop.f32.mrb[0].mxu0
      %v917 = vadd.f32 %v659, %v916
      %v918 = vpop.f32.mrb[0].mxu0
      %919 = vmatprep.mubr.bf16.mxu0 0
      %920 = vmatmul.mubr.bf16.gmra.mrb[0].mxu0 %v820
      %v921 = vpop.f32.mrb[0].mxu0
      %v922 = vadd.f32 %v664, %v921
      %v923 = vpop.f32.mrb[0].mxu0
      %v924 = vpop.f32.mrb[0].mxu0
      %v925 = vadd.f32 %v667, %v924
      %v926 = vpop.f32.mrb[0].mxu0
      %927 = vmatprep.mubr.bf16.mxu0 0
      %928 = vmatmul.mubr.bf16.gmra.mrb[0].mxu0 %v822
      %v929 = vpop.f32.mrb[0].mxu0
      %v930 = vadd.f32 %v672, %v929
      %v931 = vpop.f32.mrb[0].mxu0
      %v932 = vpop.f32.mrb[0].mxu0
      %v933 = vadd.f32 %v675, %v932
      %v934 = vpop.f32.mrb[0].mxu0
      %935 = vmatprep.mubr.bf16.mxu0 0
      %936 = vmatmul.mubr.bf16.gmra.mrb[0].mxu0 %v824
      %v937 = vpop.f32.mrb[0].mxu0
      %v938 = vadd.f32 %v680, %v937
      %v939 = vpop.f32.mrb[0].mxu0
      %v940 = vpop.f32.mrb[0].mxu0
      %v941 = vadd.f32 %v683, %v940
      %v942 = vpop.f32.mrb[0].mxu0
      %943 = vmatprep.mubr.bf16.mxu0 0
      %944 = vmatmul.mubr.bf16.gmra.mrb[0].mxu0 %v826
      %v945 = vpop.f32.mrb[0].mxu0
      %v946 = vadd.f32 %v688, %v945
      %v947 = vpop.f32.mrb[0].mxu0
      %v948 = vpop.f32.mrb[0].mxu0
      %v949 = vadd.f32 %v691, %v948
      %v950 = vpop.f32.mrb[0].mxu0
      %951 = vmatprep.mubr.bf16.mxu0 0
      %952 = vmatmul.mubr.bf16.gmra.mrb[0].mxu0 %v828
      %v953 = vpop.f32.mrb[0].mxu0
      %v954 = vadd.f32 %v696, %v953
      %v955 = vpop.f32.mrb[0].mxu0
      %v956 = vpop.f32.mrb[0].mxu0
      %v957 = vadd.f32 %v699, %v956
      %v958 = vpop.f32.mrb[0].mxu0
      %959 = vmatprep.mubr.bf16.mxu0 0
      %960 = vmatmul.mubr.bf16.gmra.mrb[0].mxu0 %v830
      %v961 = vpop.f32.mrb[0].mxu0
      %v962 = vadd.f32 %v704, %v961
      %v963 = vpop.f32.mrb[0].mxu0
      %v964 = vpop.f32.mrb[0].mxu0
      %v965 = vadd.f32 %v707, %v964
      %v966 = vpop.f32.mrb[0].mxu0
      %967 = vmatprep.mubr.bf16.mxu0 0
      %968 = vmatmul.mubr.bf16.gmra.mrb[0].mxu0 %v832
      %v969 = vpop.f32.mrb[0].mxu0
      %v970 = vadd.f32 %v712, %v969
      %v971 = vpop.f32.mrb[0].mxu0
      %v972 = vpop.f32.mrb[0].mxu0
      %v973 = vadd.f32 %v715, %v972
      %v974 = vpop.f32.mrb[0].mxu0
      %975 = vmatprep.mubr.bf16.mxu0 0
      %976 = vmatmul.mubr.bf16.gmra.mrb[0].mxu0 %v834
      %v977 = vpop.f32.mrb[0].mxu0
      %v978 = vadd.f32 %v720, %v977
      %v979 = vpop.f32.mrb[0].mxu0
      %v980 = vpop.f32.mrb[0].mxu0
      %v981 = vadd.f32 %v723, %v980
      %v982 = vpop.f32.mrb[0].mxu0
      %983 = vmatprep.mubr.bf16.mxu0 0
      %984 = vmatmul.mubr.bf16.gmra.mrb[0].mxu0 %v836
      %v985 = vpop.f32.mrb[0].mxu0
      %v986 = vadd.f32 %v728, %v985
      %v987 = vpop.f32.mrb[0].mxu0
      %v988 = vpop.f32.mrb[0].mxu0
      %v989 = vadd.f32 %v731, %v988
      %v990 = vpop.f32.mrb[0].mxu0
      %991 = vmatprep.mubr.bf16.mxu0 0
      %992 = vmatmul.mubr.bf16.gmra.mrb[0].mxu0 %v838
      %v993 = vpop.f32.mrb[0].mxu0
      %v994 = vadd.f32 %v736, %v993
      %v995 = vpop.f32.mrb[0].mxu0
      %v996 = vpop.f32.mrb[0].mxu0
      %v997 = vadd.f32 %v739, %v996
      %v998 = vpop.f32.mrb[0].mxu0
      %999 = vmatprep.mubr.bf16.mxu0 0
      %1000 = vmatmul.mubr.bf16.gmra.mrb[0].mxu0 %v840
      %v1001 = vpop.f32.mrb[0].mxu0
      %v1002 = vadd.f32 %v744, %v1001
      %v1003 = vpop.f32.mrb[0].mxu0
      %v1004 = vpop.f32.mrb[0].mxu0
      %v1005 = vadd.f32 %v747, %v1004
      %v1006 = vpop.f32.mrb[0].mxu0
      %1007 = vmatprep.mubr.bf16.mxu0 0
      %1008 = vmatmul.mubr.bf16.gmra.mrb[0].mxu0 %v842
      %v1009 = vpop.f32.mrb[0].mxu0
      %v1010 = vadd.f32 %v752, %v1009
      %v1011 = vpop.f32.mrb[0].mxu0
      %v1012 = vpop.f32.mrb[0].mxu0
      %v1013 = vadd.f32 %v755, %v1012
      %v1014 = vpop.f32.mrb[0].mxu0
      %1015 = vmatprep.mubr.bf16.mxu0 0
      %1016 = vmatmul.mubr.bf16.gmra.mrb[0].mxu0 %v844
      %v1017 = vpop.f32.mrb[0].mxu0
      %v1018 = vadd.f32 %v760, %v1017
      %v1019 = vpop.f32.mrb[0].mxu0
      %v1020 = vpop.f32.mrb[0].mxu0
      %v1021 = vadd.f32 %v763, %v1020
      %v1022 = vpop.f32.mrb[0].mxu0
      %1023 = vmatprep.mubr.bf16.mxu0 0
      %1024 = vmatmul.mubr.bf16.gmra.mrb[0].mxu0 %v846
      %v1025 = vpop.f32.mrb[0].mxu0
      %v1026 = vadd.f32 %v768, %v1025
      %v1027 = vpop.f32.mrb[0].mxu0
      %v1028 = vpop.f32.mrb[0].mxu0
      %v1029 = vadd.f32 %v771, %v1028
      %v1030 = vpop.f32.mrb[0].mxu0
      %1031 = vmatprep.mubr.bf16.mxu0 0
      %1032 = vmatmul.mubr.bf16.gmra.mrb[0].mxu0 %v848
      %v1033 = vpop.f32.mrb[0].mxu0
      %v1034 = vadd.f32 %v776, %v1033
      %v1035 = vpop.f32.mrb[0].mxu0
      %v1036 = vpop.f32.mrb[0].mxu0
      %v1037 = vadd.f32 %v779, %v1036
      %v1038 = vpop.f32.mrb[0].mxu0
      %1039 = vmatprep.mubr.bf16.mxu0 0
      %1040 = vmatmul.mubr.bf16.gmra.mrb[0].mxu0 %v850
      %v1041 = vpop.f32.mrb[0].mxu0
      %v1042 = vadd.f32 %v784, %v1041
      %v1043 = vpop.f32.mrb[0].mxu0
      %v1044 = vpop.f32.mrb[0].mxu0
      %v1045 = vadd.f32 %v787, %v1044
      %v1046 = vpop.f32.mrb[0].mxu0
      %1047 = vmatprep.mubr.bf16.mxu0 0
      %1048 = vmatmul.mubr.bf16.gmra.mrb[0].mxu0 %v853
      %v1049 = vpop.f32.mrb[0].mxu0
      %v1050 = vadd.f32 %v792, %v1049
      %v1051 = vpop.f32.mrb[0].mxu0
      %v1052 = vpop.f32.mrb[0].mxu0
      %v1053 = vpop.f32.mrb[0].mxu0
      %1054 = vdwg.mxu0
      %v1055 = vld [vmem:[%s192] sm:$0xe]
      %s1056 = scalar_lea.vmem %s1, 32
      %v1057 = vld [vmem:[%s1056] sm:$0xf]
      %v1058 = vld [vmem:[%s1056 + $0x4] sm:$0xf]
      %v1059 = vld [vmem:[%s1056 + $0x8] sm:$0xf]
      %v1060 = vld [vmem:[%s1056 + $0xc] sm:$0xf]
      %v1062 = vunpack.c.l.b16 %v1055
      %v1063 = vpack.c.b16 %v292, %v1062
      %vm1064 = vcmask 1046528
      %v1065 = vrot.slane %v1063, 1
      %v1066 = vrot.slane %v333, 1
      %v1067 = vsel %vm1064, %v1065, %v1066
      %v1068 = vrot.slane %v334, 1
      %v1069 = vsel %vm1064, %v1066, %v1068
      %v1070 = vrot.slane %v335, 1
      %v1071 = vsel %vm1064, %v1068, %v1070
      %v1072 = vrot.slane %v336, 1
      %v1073 = vsel %vm1064, %v1070, %v1072
      %v1074 = vrot.slane %v337, 1
      %v1075 = vsel %vm1064, %v1072, %v1074
      %v1076 = vrot.slane %v338, 1
      %v1077 = vsel %vm1064, %v1074, %v1076
      %v1078 = vrot.slane %v339, 1
      %v1079 = vsel %vm1064, %v1076, %v1078
      %v1080 = vrot.slane %v340, 1
      %v1081 = vsel %vm1064, %v1078, %v1080
      %v1082 = vrot.slane %v341, 1
      %v1083 = vsel %vm1064, %v1080, %v1082
      %v1084 = vrot.slane %v342, 1
      %v1085 = vsel %vm1064, %v1082, %v1084
      %v1086 = vrot.slane %v343, 1
      %v1087 = vsel %vm1064, %v1084, %v1086
      %v1088 = vrot.slane %v344, 1
      %v1089 = vsel %vm1064, %v1086, %v1088
      %v1090 = vrot.slane %v345, 1
      %v1091 = vsel %vm1064, %v1088, %v1090
      %v1092 = vrot.slane %v346, 1
      %v1093 = vsel %vm1064, %v1090, %v1092
      %v1094 = vrot.slane %v347, 1
      %v1095 = vsel %vm1064, %v1092, %v1094
      %v1096 = vrot.slane %v348, 1
      %v1097 = vsel %vm1064, %v1094, %v1096
      %v1098 = vrot.slane %v349, 1
      %v1099 = vsel %vm1064, %v1096, %v1098
      %v1100 = vrot.slane %v350, 1
      %v1101 = vsel %vm1064, %v1098, %v1100
      %v1102 = vrot.slane %v351, 1
      %v1103 = vsel %vm1064, %v1100, %v1102
      %v1104 = vrot.slane %v352, 1
      %v1105 = vsel %vm1064, %v1102, %v1104
      %v1110 = vunpack.c.l.b16 %v1057
      %v1111 = vunpack.c.l.b16 %v1058
      %v1112 = vunpack.c.l.b16 %v1059
      %v1113 = vunpack.c.l.b16 %v1060
      %v1114 = vpack.c.b16 %v1111, %v1110
      %v1115 = vpack.c.b16 %v1113, %v1112
      %v1119 = vsel %vm533, %v1067, 0
      %v1122 = vsel %vm533, %v1069, 0
      %v1125 = vsel %vm533, %v1071, 0
      %v1128 = vsel %vm533, %v1073, 0
      %v1131 = vsel %vm533, %v1075, 0
      %v1134 = vsel %vm533, %v1077, 0
      %v1137 = vsel %vm533, %v1079, 0
      %v1140 = vsel %vm533, %v1081, 0
      %v1143 = vsel %vm533, %v1083, 0
      %v1146 = vsel %vm533, %v1085, 0
      %v1149 = vsel %vm533, %v1087, 0
      %v1152 = vsel %vm533, %v1089, 0
      %v1155 = vsel %vm533, %v1091, 0
      %v1158 = vsel %vm533, %v1093, 0
      %v1161 = vsel %vm533, %v1095, 0
      %v1164 = vsel %vm533, %v1097, 0
      %v1167 = vsel %vm533, %v1099, 0
      %v1170 = vsel %vm533, %v1101, 0
      %v1173 = vsel %vm533, %v1103, 0
      %v1176 = vsel %vm533, %v1105, 0
      %v1179 = vsel %vm533, %v1104, 0
      %1181 = vmatprep.subr.bf16.mxu0 0
      %1182 = vmatpush1.bf16.msra.mxu0 %v1114
      %1183 = vmatprep.subr.bf16.mxu0 0
      %1184 = vmatpush1.bf16.msra.mxu0 %v1115
      %1185 = vmatprep.subr.bf16.mxu0 0
      %1186 = vmatpush1.bf16.msra.mxu0 0
      %1187 = vmatprep.subr.bf16.mxu0 0
      %1188 = vmatpush1.bf16.msra.mxu0 0
      %1189 = vmatprep.subr.bf16.mxu0 0
      %1190 = vmatpush1.bf16.msra.mxu0 0
      %1191 = vmatprep.subr.bf16.mxu0 0
      %1192 = vmatpush1.bf16.msra.mxu0 0
      %1193 = vmatprep.subr.bf16.mxu0 0
      %1194 = vmatpush1.bf16.msra.mxu0 0
      %1195 = vmatprep.subr.bf16.mxu0 0
      %1196 = vmatpush1.bf16.msra.mxu0 0
      %1197 = vmatprep.subr.bf16.mxu0 0
      %1198 = vmatpush1.bf16.msra.mxu0 0
      %1199 = vmatprep.subr.bf16.mxu0 0
      %1200 = vmatpush1.bf16.msra.mxu0 0
      %1201 = vmatprep.subr.bf16.mxu0 0
      %1202 = vmatpush1.bf16.msra.mxu0 0
      %1203 = vmatprep.subr.bf16.mxu0 0
      %1204 = vmatpush1.bf16.msra.mxu0 0
      %1205 = vmatprep.subr.bf16.mxu0 0
      %1206 = vmatpush1.bf16.msra.mxu0 0
      %1207 = vmatprep.subr.bf16.mxu0 0
      %1208 = vmatpush1.bf16.msra.mxu0 0
      %1209 = vmatprep.subr.bf16.mxu0 0
      %1210 = vmatpush1.bf16.msra.mxu0 0
      %1211 = vmatprep.subr.bf16.mxu0 0
      %1212 = vmatpush1.bf16.msra.mxu0 0
      %1213 = vmatprep.mubr.bf16.mxu0 0
      %1214 = vmatmul.mubr.bf16.gmra.mrb[0].mxu0 %v1119
      %v1215 = vpop.f32.mrb[0].mxu0
      %v1216 = vadd.f32 0.0, %v1215
      %v1217 = vpop.f32.mrb[0].mxu0
      %v1218 = vpop.f32.mrb[0].mxu0
      %v1219 = vadd.f32 0.0, %v1218
      %v1220 = vpop.f32.mrb[0].mxu0
      %1221 = vmatprep.mubr.bf16.mxu0 0
      %1222 = vmatmul.mubr.bf16.gmra.mrb[0].mxu0 %v1122
      %v1223 = vpop.f32.mrb[0].mxu0
      %v1224 = vadd.f32 0.0, %v1223
      %v1225 = vpop.f32.mrb[0].mxu0
      %v1226 = vpop.f32.mrb[0].mxu0
      %v1227 = vadd.f32 0.0, %v1226
      %v1228 = vpop.f32.mrb[0].mxu0
      %1229 = vmatprep.mubr.bf16.mxu0 0
      %1230 = vmatmul.mubr.bf16.gmra.mrb[0].mxu0 %v1125
      %v1231 = vpop.f32.mrb[0].mxu0
      %v1232 = vadd.f32 0.0, %v1231
      %v1233 = vpop.f32.mrb[0].mxu0
      %v1234 = vpop.f32.mrb[0].mxu0
      %v1235 = vadd.f32 0.0, %v1234
      %v1236 = vpop.f32.mrb[0].mxu0
      %1237 = vmatprep.mubr.bf16.mxu0 0
      %1238 = vmatmul.mubr.bf16.gmra.mrb[0].mxu0 %v1128
      %v1239 = vpop.f32.mrb[0].mxu0
      %v1240 = vadd.f32 0.0, %v1239
      %v1241 = vpop.f32.mrb[0].mxu0
      %v1242 = vpop.f32.mrb[0].mxu0
      %v1243 = vadd.f32 0.0, %v1242
      %v1244 = vpop.f32.mrb[0].mxu0
      %1245 = vmatprep.mubr.bf16.mxu0 0
      %1246 = vmatmul.mubr.bf16.gmra.mrb[0].mxu0 %v1131
      %v1247 = vpop.f32.mrb[0].mxu0
      %v1248 = vadd.f32 0.0, %v1247
      %v1249 = vpop.f32.mrb[0].mxu0
      %v1250 = vpop.f32.mrb[0].mxu0
      %v1251 = vadd.f32 0.0, %v1250
      %v1252 = vpop.f32.mrb[0].mxu0
      %1253 = vmatprep.mubr.bf16.mxu0 0
      %1254 = vmatmul.mubr.bf16.gmra.mrb[0].mxu0 %v1134
      %v1255 = vpop.f32.mrb[0].mxu0
      %v1256 = vadd.f32 0.0, %v1255
      %v1257 = vpop.f32.mrb[0].mxu0
      %v1258 = vpop.f32.mrb[0].mxu0
      %v1259 = vadd.f32 0.0, %v1258
      %v1260 = vpop.f32.mrb[0].mxu0
      %1261 = vmatprep.mubr.bf16.mxu0 0
      %1262 = vmatmul.mubr.bf16.gmra.mrb[0].mxu0 %v1137
      %v1263 = vpop.f32.mrb[0].mxu0
      %v1264 = vadd.f32 0.0, %v1263
      %v1265 = vpop.f32.mrb[0].mxu0
      %v1266 = vpop.f32.mrb[0].mxu0
      %v1267 = vadd.f32 0.0, %v1266
      %v1268 = vpop.f32.mrb[0].mxu0
      %1269 = vmatprep.mubr.bf16.mxu0 0
      %1270 = vmatmul.mubr.bf16.gmra.mrb[0].mxu0 %v1140
      %v1271 = vpop.f32.mrb[0].mxu0
      %v1272 = vadd.f32 0.0, %v1271
      %v1273 = vpop.f32.mrb[0].mxu0
      %v1274 = vpop.f32.mrb[0].mxu0
      %v1275 = vadd.f32 0.0, %v1274
      %v1276 = vpop.f32.mrb[0].mxu0
      %1277 = vmatprep.mubr.bf16.mxu0 0
      %1278 = vmatmul.mubr.bf16.gmra.mrb[0].mxu0 %v1143
      %v1279 = vpop.f32.mrb[0].mxu0
      %v1280 = vadd.f32 0.0, %v1279
      %v1281 = vpop.f32.mrb[0].mxu0
      %v1282 = vpop.f32.mrb[0].mxu0
      %v1283 = vadd.f32 0.0, %v1282
      %v1284 = vpop.f32.mrb[0].mxu0
      %1285 = vmatprep.mubr.bf16.mxu0 0
      %1286 = vmatmul.mubr.bf16.gmra.mrb[0].mxu0 %v1146
      %v1287 = vpop.f32.mrb[0].mxu0
      %v1288 = vadd.f32 0.0, %v1287
      %v1289 = vpop.f32.mrb[0].mxu0
      %v1290 = vpop.f32.mrb[0].mxu0
      %v1291 = vadd.f32 0.0, %v1290
      %v1292 = vpop.f32.mrb[0].mxu0
      %1293 = vmatprep.mubr.bf16.mxu0 0
      %1294 = vmatmul.mubr.bf16.gmra.mrb[0].mxu0 %v1149
      %v1295 = vpop.f32.mrb[0].mxu0
      %v1296 = vadd.f32 0.0, %v1295
      %v1297 = vpop.f32.mrb[0].mxu0
      %v1298 = vpop.f32.mrb[0].mxu0
      %v1299 = vadd.f32 0.0, %v1298
      %v1300 = vpop.f32.mrb[0].mxu0
      %1301 = vmatprep.mubr.bf16.mxu0 0
      %1302 = vmatmul.mubr.bf16.gmra.mrb[0].mxu0 %v1152
      %v1303 = vpop.f32.mrb[0].mxu0
      %v1304 = vadd.f32 0.0, %v1303
      %v1305 = vpop.f32.mrb[0].mxu0
      %v1306 = vpop.f32.mrb[0].mxu0
      %v1307 = vadd.f32 0.0, %v1306
      %v1308 = vpop.f32.mrb[0].mxu0
      %1309 = vmatprep.mubr.bf16.mxu0 0
      %1310 = vmatmul.mubr.bf16.gmra.mrb[0].mxu0 %v1155
      %v1311 = vpop.f32.mrb[0].mxu0
      %v1312 = vadd.f32 0.0, %v1311
      %v1313 = vpop.f32.mrb[0].mxu0
      %v1314 = vpop.f32.mrb[0].mxu0
      %v1315 = vadd.f32 0.0, %v1314
      %v1316 = vpop.f32.mrb[0].mxu0
      %1317 = vmatprep.mubr.bf16.mxu0 0
      %1318 = vmatmul.mubr.bf16.gmra.mrb[0].mxu0 %v1158
      %v1319 = vpop.f32.mrb[0].mxu0
      %v1320 = vadd.f32 0.0, %v1319
      %v1321 = vpop.f32.mrb[0].mxu0
      %v1322 = vpop.f32.mrb[0].mxu0
      %v1323 = vadd.f32 0.0, %v1322
      %v1324 = vpop.f32.mrb[0].mxu0
      %1325 = vmatprep.mubr.bf16.mxu0 0
      %1326 = vmatmul.mubr.bf16.gmra.mrb[0].mxu0 %v1161
      %v1327 = vpop.f32.mrb[0].mxu0
      %v1328 = vadd.f32 0.0, %v1327
      %v1329 = vpop.f32.mrb[0].mxu0
      %v1330 = vpop.f32.mrb[0].mxu0
      %v1331 = vadd.f32 0.0, %v1330
      %v1332 = vpop.f32.mrb[0].mxu0
      %1333 = vmatprep.mubr.bf16.mxu0 0
      %1334 = vmatmul.mubr.bf16.gmra.mrb[0].mxu0 %v1164
      %v1335 = vpop.f32.mrb[0].mxu0
      %v1336 = vadd.f32 0.0, %v1335
      %v1337 = vpop.f32.mrb[0].mxu0
      %v1338 = vpop.f32.mrb[0].mxu0
      %v1339 = vadd.f32 0.0, %v1338
      %v1340 = vpop.f32.mrb[0].mxu0
      %1341 = vmatprep.mubr.bf16.mxu0 0
      %1342 = vmatmul.mubr.bf16.gmra.mrb[0].mxu0 %v1167
      %v1343 = vpop.f32.mrb[0].mxu0
      %v1344 = vadd.f32 0.0, %v1343
      %v1345 = vpop.f32.mrb[0].mxu0
      %v1346 = vpop.f32.mrb[0].mxu0
      %v1347 = vadd.f32 0.0, %v1346
      %v1348 = vpop.f32.mrb[0].mxu0
      %1349 = vmatprep.mubr.bf16.mxu0 0
      %1350 = vmatmul.mubr.bf16.gmra.mrb[0].mxu0 %v1170
      %v1351 = vpop.f32.mrb[0].mxu0
      %v1352 = vadd.f32 0.0, %v1351
      %v1353 = vpop.f32.mrb[0].mxu0
      %v1354 = vpop.f32.mrb[0].mxu0
      %v1355 = vadd.f32 0.0, %v1354
      %v1356 = vpop.f32.mrb[0].mxu0
      %1357 = vmatprep.mubr.bf16.mxu0 0
      %1358 = vmatmul.mubr.bf16.gmra.mrb[0].mxu0 %v1173
      %v1359 = vpop.f32.mrb[0].mxu0
      %v1360 = vadd.f32 0.0, %v1359
      %v1361 = vpop.f32.mrb[0].mxu0
      %v1362 = vpop.f32.mrb[0].mxu0
      %v1363 = vadd.f32 0.0, %v1362
      %v1364 = vpop.f32.mrb[0].mxu0
      %1365 = vmatprep.mubr.bf16.mxu0 0
      %1366 = vmatmul.mubr.bf16.gmra.mrb[0].mxu0 %v1176
      %v1367 = vpop.f32.mrb[0].mxu0
      %v1368 = vadd.f32 0.0, %v1367
      %v1369 = vpop.f32.mrb[0].mxu0
      %v1370 = vpop.f32.mrb[0].mxu0
      %v1371 = vadd.f32 0.0, %v1370
      %v1372 = vpop.f32.mrb[0].mxu0
      %1373 = vmatprep.mubr.bf16.mxu0 0
      %1374 = vmatmul.mubr.bf16.gmra.mrb[0].mxu0 %v1179
      %v1375 = vpop.f32.mrb[0].mxu0
      %v1376 = vadd.f32 0.0, %v1375
      %v1377 = vpop.f32.mrb[0].mxu0
      %v1378 = vpop.f32.mrb[0].mxu0
      %v1379 = vpop.f32.mrb[0].mxu0
      %1380 = vdwg.mxu0
      %v1381 = vadd.f32 %v890, %v1216
      %v1382 = vadd.f32 %v893, %v1219
      %v1383 = vadd.f32 %v898, %v1224
      %v1384 = vadd.f32 %v901, %v1227
      %v1385 = vadd.f32 %v906, %v1232
      %v1386 = vadd.f32 %v909, %v1235
      %v1387 = vadd.f32 %v914, %v1240
      %v1388 = vadd.f32 %v917, %v1243
      %v1389 = vadd.f32 %v922, %v1248
      %v1390 = vadd.f32 %v925, %v1251
      %v1391 = vadd.f32 %v930, %v1256
      %v1392 = vadd.f32 %v933, %v1259
      %v1393 = vadd.f32 %v938, %v1264
      %v1394 = vadd.f32 %v941, %v1267
      %v1395 = vadd.f32 %v946, %v1272
      %v1396 = vadd.f32 %v949, %v1275
      %v1397 = vadd.f32 %v954, %v1280
      %v1398 = vadd.f32 %v957, %v1283
      %v1399 = vadd.f32 %v962, %v1288
      %v1400 = vadd.f32 %v965, %v1291
      %v1401 = vadd.f32 %v970, %v1296
      %v1402 = vadd.f32 %v973, %v1299
      %v1403 = vadd.f32 %v978, %v1304
      %v1404 = vadd.f32 %v981, %v1307
      %v1405 = vadd.f32 %v986, %v1312
      %v1406 = vadd.f32 %v989, %v1315
      %v1407 = vadd.f32 %v994, %v1320
      %v1408 = vadd.f32 %v997, %v1323
      %v1409 = vadd.f32 %v1002, %v1328
      %v1410 = vadd.f32 %v1005, %v1331
      %v1411 = vadd.f32 %v1010, %v1336
      %v1412 = vadd.f32 %v1013, %v1339
      %v1413 = vadd.f32 %v1018, %v1344
      %v1414 = vadd.f32 %v1021, %v1347
      %v1415 = vadd.f32 %v1026, %v1352
      %v1416 = vadd.f32 %v1029, %v1355
      %v1417 = vadd.f32 %v1034, %v1360
      %v1418 = vadd.f32 %v1037, %v1363
      %v1419 = vadd.f32 %v1042, %v1368
      %v1420 = vadd.f32 %v1045, %v1371
      %v1421 = vadd.f32 %v1050, %v1376
      %v1422 = vld [vmem:[%s192 + $0x8] sm:$0xe]
      %v1423 = vld [vmem:[%s192 + $0xc] sm:$0xf]
      %v1424 = vld [vmem:[%s192 + $0x10] sm:$0xf]
      %v1425 = vld [vmem:[%s192 + $0x14] sm:$0xf]
      %v1426 = vld [vmem:[%s192 + $0x18] sm:$0xf]
      %v1427 = vld [vmem:[%s192 + $0x1c] sm:$0xf]
      %v1428 = vld [vmem:[%s192 + $0x20] sm:$0xf]
      %v1429 = vld [vmem:[%s192 + $0x24] sm:$0xf]
      %v1430 = vld [vmem:[%s192 + $0x28] sm:$0xf]
      %v1431 = vld [vmem:[%s192 + $0x2c] sm:$0xf]
      %v1432 = vld [vmem:[%s192 + $0x30] sm:$0xf]
      %v1433 = vld [vmem:[%s192 + $0x34] sm:$0xf]
      %v1434 = vld [vmem:[%s192 + $0x38] sm:$0xf]
      %v1435 = vld [vmem:[%s192 + $0x3c] sm:$0xf]
      %v1436 = vld [vmem:[%s192 + $0x40] sm:$0xf]
      %v1437 = vld [vmem:[%s192 + $0x44] sm:$0xf]
      %v1438 = vld [vmem:[%s192 + $0x48] sm:$0xf]
      %v1439 = vld [vmem:[%s192 + $0x4c] sm:$0xf]
      %v1440 = vld [vmem:[%s192 + $0x50] sm:$0xf]
      %v1441 = vld [vmem:[%s192 + $0x54] sm:$0xf]
      %v1442 = vld [vmem:[%s192 + $0x58] sm:$0xf]
      %v1443 = vld [vmem:[%s192 + $0x5c] sm:$0xf]
      %v1444 = vld [vmem:[%s192 + $0x60] sm:$0xf]
      %v1445 = vld [vmem:[%s192 + $0x64] sm:$0xf]
      %v1446 = vld [vmem:[%s192 + $0x68] sm:$0xf]
      %v1447 = vld [vmem:[%s192 + $0x6c] sm:$0xf]
      %v1448 = vld [vmem:[%s192 + $0x70] sm:$0xf]
      %v1449 = vld [vmem:[%s192 + $0x74] sm:$0xf]
      %v1450 = vld [vmem:[%s192 + $0x78] sm:$0xf]
      %v1451 = vld [vmem:[%s192 + $0x7c] sm:$0xf]
      %v1452 = vld [vmem:[%s192 + $0x80] sm:$0xf]
      %v1453 = vld [vmem:[%s192 + $0x84] sm:$0xf]
      %v1454 = vld [vmem:[%s192 + $0x88] sm:$0xf]
      %v1455 = vld [vmem:[%s192 + $0x8c] sm:$0xf]
      %v1456 = vld [vmem:[%s192 + $0x90] sm:$0xf]
      %v1457 = vld [vmem:[%s192 + $0x94] sm:$0xf]
      %v1458 = vld [vmem:[%s192 + $0x98] sm:$0xf]
      %v1459 = vld [vmem:[%s192 + $0x9c] sm:$0xf]
      %v1460 = vld [vmem:[%s192 + $0xa0] sm:$0xf]
      %v1461 = vld [vmem:[%s192 + $0xa4] sm:$0xf]
      %v1462 = vld [vmem:[%s192 + $0xa8] sm:$0x7]
      %s1463 = scalar_lea.vmem %s1, 48
      %v1464 = vld [vmem:[%s1463] sm:$0xf]
      %v1465 = vld [vmem:[%s1463 + $0x4] sm:$0xf]
      %v1466 = vld [vmem:[%s1463 + $0x8] sm:$0xf]
      %v1467 = vld [vmem:[%s1463 + $0xc] sm:$0xf]
      %v1509 = vunpack.c.l.b16 %v1422
      %v1510 = vunpack.c.l.b16 %v1423
      %v1511 = vunpack.c.l.b16 %v1424
      %v1512 = vunpack.c.l.b16 %v1425
      %v1513 = vunpack.c.l.b16 %v1426
      %v1514 = vunpack.c.l.b16 %v1427
      %v1515 = vunpack.c.l.b16 %v1428
      %v1516 = vunpack.c.l.b16 %v1429
      %v1517 = vunpack.c.l.b16 %v1430
      %v1518 = vunpack.c.l.b16 %v1431
      %v1519 = vunpack.c.l.b16 %v1432
      %v1520 = vunpack.c.l.b16 %v1433
      %v1521 = vunpack.c.l.b16 %v1434
      %v1522 = vunpack.c.l.b16 %v1435
      %v1523 = vunpack.c.l.b16 %v1436
      %v1524 = vunpack.c.l.b16 %v1437
      %v1525 = vunpack.c.l.b16 %v1438
      %v1526 = vunpack.c.l.b16 %v1439
      %v1527 = vunpack.c.l.b16 %v1440
      %v1528 = vunpack.c.l.b16 %v1441
      %v1529 = vunpack.c.l.b16 %v1442
      %v1530 = vunpack.c.l.b16 %v1443
      %v1531 = vunpack.c.l.b16 %v1444
      %v1532 = vunpack.c.l.b16 %v1445
      %v1533 = vunpack.c.l.b16 %v1446
      %v1534 = vunpack.c.l.b16 %v1447
      %v1535 = vunpack.c.l.b16 %v1448
      %v1536 = vunpack.c.l.b16 %v1449
      %v1537 = vunpack.c.l.b16 %v1450
      %v1538 = vunpack.c.l.b16 %v1451
      %v1539 = vunpack.c.l.b16 %v1452
      %v1540 = vunpack.c.l.b16 %v1453
      %v1541 = vunpack.c.l.b16 %v1454
      %v1542 = vunpack.c.l.b16 %v1455
      %v1543 = vunpack.c.l.b16 %v1456
      %v1544 = vunpack.c.l.b16 %v1457
      %v1545 = vunpack.c.l.b16 %v1458
      %v1546 = vunpack.c.l.b16 %v1459
      %v1547 = vunpack.c.l.b16 %v1460
      %v1548 = vunpack.c.l.b16 %v1461
      %v1549 = vunpack.c.l.b16 %v1462
      %v1550 = vpack.c.b16 %v1510, %v1509
      %v1551 = vpack.c.b16 %v1512, %v1511
      %v1552 = vpack.c.b16 %v1514, %v1513
      %v1553 = vpack.c.b16 %v1516, %v1515
      %v1554 = vpack.c.b16 %v1518, %v1517
      %v1555 = vpack.c.b16 %v1520, %v1519
      %v1556 = vpack.c.b16 %v1522, %v1521
      %v1557 = vpack.c.b16 %v1524, %v1523
      %v1558 = vpack.c.b16 %v1526, %v1525
      %v1559 = vpack.c.b16 %v1528, %v1527
      %v1560 = vpack.c.b16 %v1530, %v1529
      %v1561 = vpack.c.b16 %v1532, %v1531
      %v1562 = vpack.c.b16 %v1534, %v1533
      %v1563 = vpack.c.b16 %v1536, %v1535
      %v1564 = vpack.c.b16 %v1538, %v1537
      %v1565 = vpack.c.b16 %v1540, %v1539
      %v1566 = vpack.c.b16 %v1542, %v1541
      %v1567 = vpack.c.b16 %v1544, %v1543
      %v1568 = vpack.c.b16 %v1546, %v1545
      %v1569 = vpack.c.b16 %v1548, %v1547
      %v1570 = vpack.c.b16 %v1549, %v1549
      %v1571 = vrot.slane %v1550, 1
      %v1572 = vrot.slane %v1551, 1
      %v1573 = vsel %vm1064, %v1571, %v1572
      %v1574 = vrot.slane %v1552, 1
      %v1575 = vsel %vm1064, %v1572, %v1574
      %v1576 = vrot.slane %v1553, 1
      %v1577 = vsel %vm1064, %v1574, %v1576
      %v1578 = vrot.slane %v1554, 1
      %v1579 = vsel %vm1064, %v1576, %v1578
      %v1580 = vrot.slane %v1555, 1
      %v1581 = vsel %vm1064, %v1578, %v1580
      %v1582 = vrot.slane %v1556, 1
      %v1583 = vsel %vm1064, %v1580, %v1582
      %v1584 = vrot.slane %v1557, 1
      %v1585 = vsel %vm1064, %v1582, %v1584
      %v1586 = vrot.slane %v1558, 1
      %v1587 = vsel %vm1064, %v1584, %v1586
      %v1588 = vrot.slane %v1559, 1
      %v1589 = vsel %vm1064, %v1586, %v1588
      %v1590 = vrot.slane %v1560, 1
      %v1591 = vsel %vm1064, %v1588, %v1590
      %v1592 = vrot.slane %v1561, 1
      %v1593 = vsel %vm1064, %v1590, %v1592
      %v1594 = vrot.slane %v1562, 1
      %v1595 = vsel %vm1064, %v1592, %v1594
      %v1596 = vrot.slane %v1563, 1
      %v1597 = vsel %vm1064, %v1594, %v1596
      %v1598 = vrot.slane %v1564, 1
      %v1599 = vsel %vm1064, %v1596, %v1598
      %v1600 = vrot.slane %v1565, 1
      %v1601 = vsel %vm1064, %v1598, %v1600
      %v1602 = vrot.slane %v1566, 1
      %v1603 = vsel %vm1064, %v1600, %v1602
      %v1604 = vrot.slane %v1567, 1
      %v1605 = vsel %vm1064, %v1602, %v1604
      %v1606 = vrot.slane %v1568, 1
      %v1607 = vsel %vm1064, %v1604, %v1606
      %v1608 = vrot.slane %v1569, 1
      %v1609 = vsel %vm1064, %v1606, %v1608
      %v1610 = vrot.slane %v1570, 1
      %v1611 = vsel %vm1064, %v1608, %v1610
      %v1616 = vunpack.c.l.b16 %v1464
      %v1617 = vunpack.c.l.b16 %v1465
      %v1618 = vunpack.c.l.b16 %v1466
      %v1619 = vunpack.c.l.b16 %v1467
      %v1620 = vpack.c.b16 %v1617, %v1616
      %v1621 = vpack.c.b16 %v1619, %v1618
      %v1625 = vsel %vm533, %v1573, 0
      %v1628 = vsel %vm533, %v1575, 0
      %v1631 = vsel %vm533, %v1577, 0
      %v1634 = vsel %vm533, %v1579, 0
      %v1637 = vsel %vm533, %v1581, 0
      %v1640 = vsel %vm533, %v1583, 0
      %v1643 = vsel %vm533, %v1585, 0
      %v1646 = vsel %vm533, %v1587, 0
      %v1649 = vsel %vm533, %v1589, 0
      %v1652 = vsel %vm533, %v1591, 0
      %v1655 = vsel %vm533, %v1593, 0
      %v1658 = vsel %vm533, %v1595, 0
      %v1661 = vsel %vm533, %v1597, 0
      %v1664 = vsel %vm533, %v1599, 0
      %v1667 = vsel %vm533, %v1601, 0
      %v1670 = vsel %vm533, %v1603, 0
      %v1673 = vsel %vm533, %v1605, 0
      %v1676 = vsel %vm533, %v1607, 0
      %v1679 = vsel %vm533, %v1609, 0
      %v1682 = vsel %vm533, %v1611, 0
      %v1685 = vsel %vm533, %v1610, 0
      %1687 = vmatprep.subr.bf16.mxu0 0
      %1688 = vmatpush1.bf16.msra.mxu0 %v1620
      %1689 = vmatprep.subr.bf16.mxu0 0
      %1690 = vmatpush1.bf16.msra.mxu0 %v1621
      %1691 = vmatprep.subr.bf16.mxu0 0
      %1692 = vmatpush1.bf16.msra.mxu0 0
      %1693 = vmatprep.subr.bf16.mxu0 0
      %1694 = vmatpush1.bf16.msra.mxu0 0
      %1695 = vmatprep.subr.bf16.mxu0 0
      %1696 = vmatpush1.bf16.msra.mxu0 0
      %1697 = vmatprep.subr.bf16.mxu0 0
      %1698 = vmatpush1.bf16.msra.mxu0 0
      %1699 = vmatprep.subr.bf16.mxu0 0
      %1700 = vmatpush1.bf16.msra.mxu0 0
      %1701 = vmatprep.subr.bf16.mxu0 0
      %1702 = vmatpush1.bf16.msra.mxu0 0
      %1703 = vmatprep.subr.bf16.mxu0 0
      %1704 = vmatpush1.bf16.msra.mxu0 0
      %1705 = vmatprep.subr.bf16.mxu0 0
      %1706 = vmatpush1.bf16.msra.mxu0 0
      %1707 = vmatprep.subr.bf16.mxu0 0
      %1708 = vmatpush1.bf16.msra.mxu0 0
      %1709 = vmatprep.subr.bf16.mxu0 0
      %1710 = vmatpush1.bf16.msra.mxu0 0
      %1711 = vmatprep.subr.bf16.mxu0 0
      %1712 = vmatpush1.bf16.msra.mxu0 0
      %1713 = vmatprep.subr.bf16.mxu0 0
      %1714 = vmatpush1.bf16.msra.mxu0 0
      %1715 = vmatprep.subr.bf16.mxu0 0
      %1716 = vmatpush1.bf16.msra.mxu0 0
      %1717 = vmatprep.subr.bf16.mxu0 0
      %1718 = vmatpush1.bf16.msra.mxu0 0
      %1719 = vmatprep.mubr.bf16.mxu0 0
      %1720 = vmatmul.mubr.bf16.gmra.mrb[0].mxu0 %v1625
      %v1721 = vpop.f32.mrb[0].mxu0
      %v1722 = vadd.f32 0.0, %v1721
      %v1723 = vpop.f32.mrb[0].mxu0
      %v1724 = vpop.f32.mrb[0].mxu0
      %v1725 = vadd.f32 0.0, %v1724
      %v1726 = vpop.f32.mrb[0].mxu0
      %1727 = vmatprep.mubr.bf16.mxu0 0
      %1728 = vmatmul.mubr.bf16.gmra.mrb[0].mxu0 %v1628
      %v1729 = vpop.f32.mrb[0].mxu0
      %v1730 = vadd.f32 0.0, %v1729
      %v1731 = vpop.f32.mrb[0].mxu0
      %v1732 = vpop.f32.mrb[0].mxu0
      %v1733 = vadd.f32 0.0, %v1732
      %v1734 = vpop.f32.mrb[0].mxu0
      %1735 = vmatprep.mubr.bf16.mxu0 0
      %1736 = vmatmul.mubr.bf16.gmra.mrb[0].mxu0 %v1631
      %v1737 = vpop.f32.mrb[0].mxu0
      %v1738 = vadd.f32 0.0, %v1737
      %v1739 = vpop.f32.mrb[0].mxu0
      %v1740 = vpop.f32.mrb[0].mxu0
      %v1741 = vadd.f32 0.0, %v1740
      %v1742 = vpop.f32.mrb[0].mxu0
      %1743 = vmatprep.mubr.bf16.mxu0 0
      %1744 = vmatmul.mubr.bf16.gmra.mrb[0].mxu0 %v1634
      %v1745 = vpop.f32.mrb[0].mxu0
      %v1746 = vadd.f32 0.0, %v1745
      %v1747 = vpop.f32.mrb[0].mxu0
      %v1748 = vpop.f32.mrb[0].mxu0
      %v1749 = vadd.f32 0.0, %v1748
      %v1750 = vpop.f32.mrb[0].mxu0
      %1751 = vmatprep.mubr.bf16.mxu0 0
      %1752 = vmatmul.mubr.bf16.gmra.mrb[0].mxu0 %v1637
      %v1753 = vpop.f32.mrb[0].mxu0
      %v1754 = vadd.f32 0.0, %v1753
      %v1755 = vpop.f32.mrb[0].mxu0
      %v1756 = vpop.f32.mrb[0].mxu0
      %v1757 = vadd.f32 0.0, %v1756
      %v1758 = vpop.f32.mrb[0].mxu0
      %1759 = vmatprep.mubr.bf16.mxu0 0
      %1760 = vmatmul.mubr.bf16.gmra.mrb[0].mxu0 %v1640
      %v1761 = vpop.f32.mrb[0].mxu0
      %v1762 = vadd.f32 0.0, %v1761
      %v1763 = vpop.f32.mrb[0].mxu0
      %v1764 = vpop.f32.mrb[0].mxu0
      %v1765 = vadd.f32 0.0, %v1764
      %v1766 = vpop.f32.mrb[0].mxu0
      %1767 = vmatprep.mubr.bf16.mxu0 0
      %1768 = vmatmul.mubr.bf16.gmra.mrb[0].mxu0 %v1643
      %v1769 = vpop.f32.mrb[0].mxu0
      %v1770 = vadd.f32 0.0, %v1769
      %v1771 = vpop.f32.mrb[0].mxu0
      %v1772 = vpop.f32.mrb[0].mxu0
      %v1773 = vadd.f32 0.0, %v1772
      %v1774 = vpop.f32.mrb[0].mxu0
      %1775 = vmatprep.mubr.bf16.mxu0 0
      %1776 = vmatmul.mubr.bf16.gmra.mrb[0].mxu0 %v1646
      %v1777 = vpop.f32.mrb[0].mxu0
      %v1778 = vadd.f32 0.0, %v1777
      %v1779 = vpop.f32.mrb[0].mxu0
      %v1780 = vpop.f32.mrb[0].mxu0
      %v1781 = vadd.f32 0.0, %v1780
      %v1782 = vpop.f32.mrb[0].mxu0
      %1783 = vmatprep.mubr.bf16.mxu0 0
      %1784 = vmatmul.mubr.bf16.gmra.mrb[0].mxu0 %v1649
      %v1785 = vpop.f32.mrb[0].mxu0
      %v1786 = vadd.f32 0.0, %v1785
      %v1787 = vpop.f32.mrb[0].mxu0
      %v1788 = vpop.f32.mrb[0].mxu0
      %v1789 = vadd.f32 0.0, %v1788
      %v1790 = vpop.f32.mrb[0].mxu0
      %1791 = vmatprep.mubr.bf16.mxu0 0
      %1792 = vmatmul.mubr.bf16.gmra.mrb[0].mxu0 %v1652
      %v1793 = vpop.f32.mrb[0].mxu0
      %v1794 = vadd.f32 0.0, %v1793
      %v1795 = vpop.f32.mrb[0].mxu0
      %v1796 = vpop.f32.mrb[0].mxu0
      %v1797 = vadd.f32 0.0, %v1796
      %v1798 = vpop.f32.mrb[0].mxu0
      %1799 = vmatprep.mubr.bf16.mxu0 0
      %1800 = vmatmul.mubr.bf16.gmra.mrb[0].mxu0 %v1655
      %v1801 = vpop.f32.mrb[0].mxu0
      %v1802 = vadd.f32 0.0, %v1801
      %v1803 = vpop.f32.mrb[0].mxu0
      %v1804 = vpop.f32.mrb[0].mxu0
      %v1805 = vadd.f32 0.0, %v1804
      %v1806 = vpop.f32.mrb[0].mxu0
      %1807 = vmatprep.mubr.bf16.mxu0 0
      %1808 = vmatmul.mubr.bf16.gmra.mrb[0].mxu0 %v1658
      %v1809 = vpop.f32.mrb[0].mxu0
      %v1810 = vadd.f32 0.0, %v1809
      %v1811 = vpop.f32.mrb[0].mxu0
      %v1812 = vpop.f32.mrb[0].mxu0
      %v1813 = vadd.f32 0.0, %v1812
      %v1814 = vpop.f32.mrb[0].mxu0
      %1815 = vmatprep.mubr.bf16.mxu0 0
      %1816 = vmatmul.mubr.bf16.gmra.mrb[0].mxu0 %v1661
      %v1817 = vpop.f32.mrb[0].mxu0
      %v1818 = vadd.f32 0.0, %v1817
      %v1819 = vpop.f32.mrb[0].mxu0
      %v1820 = vpop.f32.mrb[0].mxu0
      %v1821 = vadd.f32 0.0, %v1820
      %v1822 = vpop.f32.mrb[0].mxu0
      %1823 = vmatprep.mubr.bf16.mxu0 0
      %1824 = vmatmul.mubr.bf16.gmra.mrb[0].mxu0 %v1664
      %v1825 = vpop.f32.mrb[0].mxu0
      %v1826 = vadd.f32 0.0, %v1825
      %v1827 = vpop.f32.mrb[0].mxu0
      %v1828 = vpop.f32.mrb[0].mxu0
      %v1829 = vadd.f32 0.0, %v1828
      %v1830 = vpop.f32.mrb[0].mxu0
      %1831 = vmatprep.mubr.bf16.mxu0 0
      %1832 = vmatmul.mubr.bf16.gmra.mrb[0].mxu0 %v1667
      %v1833 = vpop.f32.mrb[0].mxu0
      %v1834 = vadd.f32 0.0, %v1833
      %v1835 = vpop.f32.mrb[0].mxu0
      %v1836 = vpop.f32.mrb[0].mxu0
      %v1837 = vadd.f32 0.0, %v1836
      %v1838 = vpop.f32.mrb[0].mxu0
      %1839 = vmatprep.mubr.bf16.mxu0 0
      %1840 = vmatmul.mubr.bf16.gmra.mrb[0].mxu0 %v1670
      %v1841 = vpop.f32.mrb[0].mxu0
      %v1842 = vadd.f32 0.0, %v1841
      %v1843 = vpop.f32.mrb[0].mxu0
      %v1844 = vpop.f32.mrb[0].mxu0
      %v1845 = vadd.f32 0.0, %v1844
      %v1846 = vpop.f32.mrb[0].mxu0
      %1847 = vmatprep.mubr.bf16.mxu0 0
      %1848 = vmatmul.mubr.bf16.gmra.mrb[0].mxu0 %v1673
      %v1849 = vpop.f32.mrb[0].mxu0
      %v1850 = vadd.f32 0.0, %v1849
      %v1851 = vpop.f32.mrb[0].mxu0
      %v1852 = vpop.f32.mrb[0].mxu0
      %v1853 = vadd.f32 0.0, %v1852
      %v1854 = vpop.f32.mrb[0].mxu0
      %1855 = vmatprep.mubr.bf16.mxu0 0
      %1856 = vmatmul.mubr.bf16.gmra.mrb[0].mxu0 %v1676
      %v1857 = vpop.f32.mrb[0].mxu0
      %v1858 = vadd.f32 0.0, %v1857
      %v1859 = vpop.f32.mrb[0].mxu0
      %v1860 = vpop.f32.mrb[0].mxu0
      %v1861 = vadd.f32 0.0, %v1860
      %v1862 = vpop.f32.mrb[0].mxu0
      %1863 = vmatprep.mubr.bf16.mxu0 0
      %1864 = vmatmul.mubr.bf16.gmra.mrb[0].mxu0 %v1679
      %v1865 = vpop.f32.mrb[0].mxu0
      %v1866 = vadd.f32 0.0, %v1865
      %v1867 = vpop.f32.mrb[0].mxu0
      %v1868 = vpop.f32.mrb[0].mxu0
      %v1869 = vadd.f32 0.0, %v1868
      %v1870 = vpop.f32.mrb[0].mxu0
      %1871 = vmatprep.mubr.bf16.mxu0 0
      %1872 = vmatmul.mubr.bf16.gmra.mrb[0].mxu0 %v1682
      %v1873 = vpop.f32.mrb[0].mxu0
      %v1874 = vadd.f32 0.0, %v1873
      %v1875 = vpop.f32.mrb[0].mxu0
      %v1876 = vpop.f32.mrb[0].mxu0
      %v1877 = vadd.f32 0.0, %v1876
      %v1878 = vpop.f32.mrb[0].mxu0
      %1879 = vmatprep.mubr.bf16.mxu0 0
      %1880 = vmatmul.mubr.bf16.gmra.mrb[0].mxu0 %v1685
      %v1881 = vpop.f32.mrb[0].mxu0
      %v1882 = vadd.f32 0.0, %v1881
      %v1883 = vpop.f32.mrb[0].mxu0
      %v1884 = vpop.f32.mrb[0].mxu0
      %v1885 = vpop.f32.mrb[0].mxu0
      %1886 = vdwg.mxu0
      %v1887 = vadd.f32 %v1381, %v1722
      %v1888 = vadd.f32 %v1382, %v1725
      %v1889 = vadd.f32 %v1383, %v1730
      %v1890 = vadd.f32 %v1384, %v1733
      %v1891 = vadd.f32 %v1385, %v1738
      %v1892 = vadd.f32 %v1386, %v1741
      %v1893 = vadd.f32 %v1387, %v1746
      %v1894 = vadd.f32 %v1388, %v1749
      %v1895 = vadd.f32 %v1389, %v1754
      %v1896 = vadd.f32 %v1390, %v1757
      %v1897 = vadd.f32 %v1391, %v1762
      %v1898 = vadd.f32 %v1392, %v1765
      %v1899 = vadd.f32 %v1393, %v1770
      %v1900 = vadd.f32 %v1394, %v1773
      %v1901 = vadd.f32 %v1395, %v1778
      %v1902 = vadd.f32 %v1396, %v1781
      %v1903 = vadd.f32 %v1397, %v1786
      %v1904 = vadd.f32 %v1398, %v1789
      %v1905 = vadd.f32 %v1399, %v1794
      %v1906 = vadd.f32 %v1400, %v1797
      %v1907 = vadd.f32 %v1401, %v1802
      %v1908 = vadd.f32 %v1402, %v1805
      %v1909 = vadd.f32 %v1403, %v1810
      %v1910 = vadd.f32 %v1404, %v1813
      %v1911 = vadd.f32 %v1405, %v1818
      %v1912 = vadd.f32 %v1406, %v1821
      %v1913 = vadd.f32 %v1407, %v1826
      %v1914 = vadd.f32 %v1408, %v1829
      %v1915 = vadd.f32 %v1409, %v1834
      %v1916 = vadd.f32 %v1410, %v1837
      %v1917 = vadd.f32 %v1411, %v1842
      %v1918 = vadd.f32 %v1412, %v1845
      %v1919 = vadd.f32 %v1413, %v1850
      %v1920 = vadd.f32 %v1414, %v1853
      %v1921 = vadd.f32 %v1415, %v1858
      %v1922 = vadd.f32 %v1416, %v1861
      %v1923 = vadd.f32 %v1417, %v1866
      %v1924 = vadd.f32 %v1418, %v1869
      %v1925 = vadd.f32 %v1419, %v1874
      %v1926 = vadd.f32 %v1420, %v1877
      %v1927 = vadd.f32 %v1421, %v1882
      %v1928 = vld [vmem:[%s192 + $0xa8] sm:$0xf]
      %s1929 = scalar_lea.vmem %s1, 64
      %v1930 = vld [vmem:[%s1929] sm:$0xf]
      %v1931 = vld [vmem:[%s1929 + $0x4] sm:$0xf]
      %v1932 = vld [vmem:[%s1929 + $0x8] sm:$0xf]
      %v1933 = vld [vmem:[%s1929 + $0xc] sm:$0xf]
      %v1935 = vunpack.c.l.b16 %v1928
      %v1936 = vpack.c.b16 %v1935, %v1935
      %vm1937 = vsmask.f32 6400
      %v1939 = vshrl.u32 %v1550, 16
      %v1941 = vrot.slane %v1939, 1
      %v1942 = vshll.u32 %v1550, 16
      %v1944 = vrot.slane %v1942, 2
      %v1945 = vor.u32 %v1941, %v1944
      %v1947 = vshrl.u32 %v1551, 16
      %v1949 = vrot.slane %v1947, 1
      %v1950 = vshll.u32 %v1551, 16
      %v1952 = vrot.slane %v1950, 2
      %v1953 = vor.u32 %v1949, %v1952
      %v1954 = vsel %vm1937, %v1945, %v1953
      %v1956 = vshrl.u32 %v1552, 16
      %v1958 = vrot.slane %v1956, 1
      %v1959 = vshll.u32 %v1552, 16
      %v1961 = vrot.slane %v1959, 2
      %v1962 = vor.u32 %v1958, %v1961
      %v1963 = vsel %vm1937, %v1953, %v1962
      %v1965 = vshrl.u32 %v1553, 16
      %v1967 = vrot.slane %v1965, 1
      %v1968 = vshll.u32 %v1553, 16
      %v1970 = vrot.slane %v1968, 2
      %v1971 = vor.u32 %v1967, %v1970
      %v1972 = vsel %vm1937, %v1962, %v1971
      %v1974 = vshrl.u32 %v1554, 16
      %v1976 = vrot.slane %v1974, 1
      %v1977 = vshll.u32 %v1554, 16
      %v1979 = vrot.slane %v1977, 2
      %v1980 = vor.u32 %v1976, %v1979
      %v1981 = vsel %vm1937, %v1971, %v1980
      %v1983 = vshrl.u32 %v1555, 16
      %v1985 = vrot.slane %v1983, 1
      %v1986 = vshll.u32 %v1555, 16
      %v1988 = vrot.slane %v1986, 2
      %v1989 = vor.u32 %v1985, %v1988
      %v1990 = vsel %vm1937, %v1980, %v1989
      %v1992 = vshrl.u32 %v1556, 16
      %v1994 = vrot.slane %v1992, 1
      %v1995 = vshll.u32 %v1556, 16
      %v1997 = vrot.slane %v1995, 2
      %v1998 = vor.u32 %v1994, %v1997
      %v1999 = vsel %vm1937, %v1989, %v1998
      %v2001 = vshrl.u32 %v1557, 16
      %v2003 = vrot.slane %v2001, 1
      %v2004 = vshll.u32 %v1557, 16
      %v2006 = vrot.slane %v2004, 2
      %v2007 = vor.u32 %v2003, %v2006
      %v2008 = vsel %vm1937, %v1998, %v2007
      %v2010 = vshrl.u32 %v1558, 16
      %v2012 = vrot.slane %v2010, 1
      %v2013 = vshll.u32 %v1558, 16
      %v2015 = vrot.slane %v2013, 2
      %v2016 = vor.u32 %v2012, %v2015
      %v2017 = vsel %vm1937, %v2007, %v2016
      %v2019 = vshrl.u32 %v1559, 16
      %v2021 = vrot.slane %v2019, 1
      %v2022 = vshll.u32 %v1559, 16
      %v2024 = vrot.slane %v2022, 2
      %v2025 = vor.u32 %v2021, %v2024
      %v2026 = vsel %vm1937, %v2016, %v2025
      %v2028 = vshrl.u32 %v1560, 16
      %v2030 = vrot.slane %v2028, 1
      %v2031 = vshll.u32 %v1560, 16
      %v2033 = vrot.slane %v2031, 2
      %v2034 = vor.u32 %v2030, %v2033
      %v2035 = vsel %vm1937, %v2025, %v2034
      %v2037 = vshrl.u32 %v1561, 16
      %v2039 = vrot.slane %v2037, 1
      %v2040 = vshll.u32 %v1561, 16
      %v2042 = vrot.slane %v2040, 2
      %v2043 = vor.u32 %v2039, %v2042
      %v2044 = vsel %vm1937, %v2034, %v2043
      %v2046 = vshrl.u32 %v1562, 16
      %v2048 = vrot.slane %v2046, 1
      %v2049 = vshll.u32 %v1562, 16
      %v2051 = vrot.slane %v2049, 2
      %v2052 = vor.u32 %v2048, %v2051
      %v2053 = vsel %vm1937, %v2043, %v2052
      %v2055 = vshrl.u32 %v1563, 16
      %v2057 = vrot.slane %v2055, 1
      %v2058 = vshll.u32 %v1563, 16
      %v2060 = vrot.slane %v2058, 2
      %v2061 = vor.u32 %v2057, %v2060
      %v2062 = vsel %vm1937, %v2052, %v2061
      %v2064 = vshrl.u32 %v1564, 16
      %v2066 = vrot.slane %v2064, 1
      %v2067 = vshll.u32 %v1564, 16
      %v2069 = vrot.slane %v2067, 2
      %v2070 = vor.u32 %v2066, %v2069
      %v2071 = vsel %vm1937, %v2061, %v2070
      %v2073 = vshrl.u32 %v1565, 16
      %v2075 = vrot.slane %v2073, 1
      %v2076 = vshll.u32 %v1565, 16
      %v2078 = vrot.slane %v2076, 2
      %v2079 = vor.u32 %v2075, %v2078
      %v2080 = vsel %vm1937, %v2070, %v2079
      %v2082 = vshrl.u32 %v1566, 16
      %v2084 = vrot.slane %v2082, 1
      %v2085 = vshll.u32 %v1566, 16
      %v2087 = vrot.slane %v2085, 2
      %v2088 = vor.u32 %v2084, %v2087
      %v2089 = vsel %vm1937, %v2079, %v2088
      %v2091 = vshrl.u32 %v1567, 16
      %v2093 = vrot.slane %v2091, 1
      %v2094 = vshll.u32 %v1567, 16
      %v2096 = vrot.slane %v2094, 2
      %v2097 = vor.u32 %v2093, %v2096
      %v2098 = vsel %vm1937, %v2088, %v2097
      %v2100 = vshrl.u32 %v1568, 16
      %v2102 = vrot.slane %v2100, 1
      %v2103 = vshll.u32 %v1568, 16
      %v2105 = vrot.slane %v2103, 2
      %v2106 = vor.u32 %v2102, %v2105
      %v2107 = vsel %vm1937, %v2097, %v2106
      %v2109 = vshrl.u32 %v1569, 16
      %v2111 = vrot.slane %v2109, 1
      %v2112 = vshll.u32 %v1569, 16
      %v2114 = vrot.slane %v2112, 2
      %v2115 = vor.u32 %v2111, %v2114
      %v2116 = vsel %vm1937, %v2106, %v2115
      %v2118 = vshrl.u32 %v1936, 16
      %v2120 = vrot.slane %v2118, 1
      %v2121 = vshll.u32 %v1936, 16
      %v2123 = vrot.slane %v2121, 2
      %v2124 = vor.u32 %v2120, %v2123
      %v2125 = vsel %vm1937, %v2115, %v2124
      %v2130 = vunpack.c.l.b16 %v1930
      %v2131 = vunpack.c.l.b16 %v1931
      %v2132 = vunpack.c.l.b16 %v1932
      %v2133 = vunpack.c.l.b16 %v1933
      %v2134 = vpack.c.b16 %v2131, %v2130
      %v2135 = vpack.c.b16 %v2133, %v2132
      %v2139 = vsel %vm533, %v1954, 0
      %v2142 = vsel %vm533, %v1963, 0
      %v2145 = vsel %vm533, %v1972, 0
      %v2148 = vsel %vm533, %v1981, 0
      %v2151 = vsel %vm533, %v1990, 0
      %v2154 = vsel %vm533, %v1999, 0
      %v2157 = vsel %vm533, %v2008, 0
      %v2160 = vsel %vm533, %v2017, 0
      %v2163 = vsel %vm533, %v2026, 0
      %v2166 = vsel %vm533, %v2035, 0
      %v2169 = vsel %vm533, %v2044, 0
      %v2172 = vsel %vm533, %v2053, 0
      %v2175 = vsel %vm533, %v2062, 0
      %v2178 = vsel %vm533, %v2071, 0
      %v2181 = vsel %vm533, %v2080, 0
      %v2184 = vsel %vm533, %v2089, 0
      %v2187 = vsel %vm533, %v2098, 0
      %v2190 = vsel %vm533, %v2107, 0
      %v2193 = vsel %vm533, %v2116, 0
      %v2196 = vsel %vm533, %v2125, 0
      %v2199 = vsel %vm533, %v2124, 0
      %2201 = vmatprep.subr.bf16.mxu0 0
      %2202 = vmatpush1.bf16.msra.mxu0 %v2134
      %2203 = vmatprep.subr.bf16.mxu0 0
      %2204 = vmatpush1.bf16.msra.mxu0 %v2135
      %2205 = vmatprep.subr.bf16.mxu0 0
      %2206 = vmatpush1.bf16.msra.mxu0 0
      %2207 = vmatprep.subr.bf16.mxu0 0
      %2208 = vmatpush1.bf16.msra.mxu0 0
      %2209 = vmatprep.subr.bf16.mxu0 0
      %2210 = vmatpush1.bf16.msra.mxu0 0
      %2211 = vmatprep.subr.bf16.mxu0 0
      %2212 = vmatpush1.bf16.msra.mxu0 0
      %2213 = vmatprep.subr.bf16.mxu0 0
      %2214 = vmatpush1.bf16.msra.mxu0 0
      %2215 = vmatprep.subr.bf16.mxu0 0
      %2216 = vmatpush1.bf16.msra.mxu0 0
      %2217 = vmatprep.subr.bf16.mxu0 0
      %2218 = vmatpush1.bf16.msra.mxu0 0
      %2219 = vmatprep.subr.bf16.mxu0 0
      %2220 = vmatpush1.bf16.msra.mxu0 0
      %2221 = vmatprep.subr.bf16.mxu0 0
      %2222 = vmatpush1.bf16.msra.mxu0 0
      %2223 = vmatprep.subr.bf16.mxu0 0
      %2224 = vmatpush1.bf16.msra.mxu0 0
      %2225 = vmatprep.subr.bf16.mxu0 0
      %2226 = vmatpush1.bf16.msra.mxu0 0
      %2227 = vmatprep.subr.bf16.mxu0 0
      %2228 = vmatpush1.bf16.msra.mxu0 0
      %2229 = vmatprep.subr.bf16.mxu0 0
      %2230 = vmatpush1.bf16.msra.mxu0 0
      %2231 = vmatprep.subr.bf16.mxu0 0
      %2232 = vmatpush1.bf16.msra.mxu0 0
      %2233 = vmatprep.mubr.bf16.mxu0 0
      %2234 = vmatmul.mubr.bf16.gmra.mrb[0].mxu0 %v2139
      %v2235 = vpop.f32.mrb[0].mxu0
      %v2236 = vadd.f32 0.0, %v2235
      %v2237 = vpop.f32.mrb[0].mxu0
      %v2238 = vpop.f32.mrb[0].mxu0
      %v2239 = vadd.f32 0.0, %v2238
      %v2240 = vpop.f32.mrb[0].mxu0
      %2241 = vmatprep.mubr.bf16.mxu0 0
      %2242 = vmatmul.mubr.bf16.gmra.mrb[0].mxu0 %v2142
      %v2243 = vpop.f32.mrb[0].mxu0
      %v2244 = vadd.f32 0.0, %v2243
      %v2245 = vpop.f32.mrb[0].mxu0
      %v2246 = vpop.f32.mrb[0].mxu0
      %v2247 = vadd.f32 0.0, %v2246
      %v2248 = vpop.f32.mrb[0].mxu0
      %2249 = vmatprep.mubr.bf16.mxu0 0
      %2250 = vmatmul.mubr.bf16.gmra.mrb[0].mxu0 %v2145
      %v2251 = vpop.f32.mrb[0].mxu0
      %v2252 = vadd.f32 0.0, %v2251
      %v2253 = vpop.f32.mrb[0].mxu0
      %v2254 = vpop.f32.mrb[0].mxu0
      %v2255 = vadd.f32 0.0, %v2254
      %v2256 = vpop.f32.mrb[0].mxu0
      %2257 = vmatprep.mubr.bf16.mxu0 0
      %2258 = vmatmul.mubr.bf16.gmra.mrb[0].mxu0 %v2148
      %v2259 = vpop.f32.mrb[0].mxu0
      %v2260 = vadd.f32 0.0, %v2259
      %v2261 = vpop.f32.mrb[0].mxu0
      %v2262 = vpop.f32.mrb[0].mxu0
      %v2263 = vadd.f32 0.0, %v2262
      %v2264 = vpop.f32.mrb[0].mxu0
      %2265 = vmatprep.mubr.bf16.mxu0 0
      %2266 = vmatmul.mubr.bf16.gmra.mrb[0].mxu0 %v2151
      %v2267 = vpop.f32.mrb[0].mxu0
      %v2268 = vadd.f32 0.0, %v2267
      %v2269 = vpop.f32.mrb[0].mxu0
      %v2270 = vpop.f32.mrb[0].mxu0
      %v2271 = vadd.f32 0.0, %v2270
      %v2272 = vpop.f32.mrb[0].mxu0
      %2273 = vmatprep.mubr.bf16.mxu0 0
      %2274 = vmatmul.mubr.bf16.gmra.mrb[0].mxu0 %v2154
      %v2275 = vpop.f32.mrb[0].mxu0
      %v2276 = vadd.f32 0.0, %v2275
      %v2277 = vpop.f32.mrb[0].mxu0
      %v2278 = vpop.f32.mrb[0].mxu0
      %v2279 = vadd.f32 0.0, %v2278
      %v2280 = vpop.f32.mrb[0].mxu0
      %2281 = vmatprep.mubr.bf16.mxu0 0
      %2282 = vmatmul.mubr.bf16.gmra.mrb[0].mxu0 %v2157
      %v2283 = vpop.f32.mrb[0].mxu0
      %v2284 = vadd.f32 0.0, %v2283
      %v2285 = vpop.f32.mrb[0].mxu0
      %v2286 = vpop.f32.mrb[0].mxu0
      %v2287 = vadd.f32 0.0, %v2286
      %v2288 = vpop.f32.mrb[0].mxu0
      %2289 = vmatprep.mubr.bf16.mxu0 0
      %2290 = vmatmul.mubr.bf16.gmra.mrb[0].mxu0 %v2160
      %v2291 = vpop.f32.mrb[0].mxu0
      %v2292 = vadd.f32 0.0, %v2291
      %v2293 = vpop.f32.mrb[0].mxu0
      %v2294 = vpop.f32.mrb[0].mxu0
      %v2295 = vadd.f32 0.0, %v2294
      %v2296 = vpop.f32.mrb[0].mxu0
      %2297 = vmatprep.mubr.bf16.mxu0 0
      %2298 = vmatmul.mubr.bf16.gmra.mrb[0].mxu0 %v2163
      %v2299 = vpop.f32.mrb[0].mxu0
      %v2300 = vadd.f32 0.0, %v2299
      %v2301 = vpop.f32.mrb[0].mxu0
      %v2302 = vpop.f32.mrb[0].mxu0
      %v2303 = vadd.f32 0.0, %v2302
      %v2304 = vpop.f32.mrb[0].mxu0
      %2305 = vmatprep.mubr.bf16.mxu0 0
      %2306 = vmatmul.mubr.bf16.gmra.mrb[0].mxu0 %v2166
      %v2307 = vpop.f32.mrb[0].mxu0
      %v2308 = vadd.f32 0.0, %v2307
      %v2309 = vpop.f32.mrb[0].mxu0
      %v2310 = vpop.f32.mrb[0].mxu0
      %v2311 = vadd.f32 0.0, %v2310
      %v2312 = vpop.f32.mrb[0].mxu0
      %2313 = vmatprep.mubr.bf16.mxu0 0
      %2314 = vmatmul.mubr.bf16.gmra.mrb[0].mxu0 %v2169
      %v2315 = vpop.f32.mrb[0].mxu0
      %v2316 = vadd.f32 0.0, %v2315
      %v2317 = vpop.f32.mrb[0].mxu0
      %v2318 = vpop.f32.mrb[0].mxu0
      %v2319 = vadd.f32 0.0, %v2318
      %v2320 = vpop.f32.mrb[0].mxu0
      %2321 = vmatprep.mubr.bf16.mxu0 0
      %2322 = vmatmul.mubr.bf16.gmra.mrb[0].mxu0 %v2172
      %v2323 = vpop.f32.mrb[0].mxu0
      %v2324 = vadd.f32 0.0, %v2323
      %v2325 = vpop.f32.mrb[0].mxu0
      %v2326 = vpop.f32.mrb[0].mxu0
      %v2327 = vadd.f32 0.0, %v2326
      %v2328 = vpop.f32.mrb[0].mxu0
      %2329 = vmatprep.mubr.bf16.mxu0 0
      %2330 = vmatmul.mubr.bf16.gmra.mrb[0].mxu0 %v2175
      %v2331 = vpop.f32.mrb[0].mxu0
      %v2332 = vadd.f32 0.0, %v2331
      %v2333 = vpop.f32.mrb[0].mxu0
      %v2334 = vpop.f32.mrb[0].mxu0
      %v2335 = vadd.f32 0.0, %v2334
      %v2336 = vpop.f32.mrb[0].mxu0
      %2337 = vmatprep.mubr.bf16.mxu0 0
      %2338 = vmatmul.mubr.bf16.gmra.mrb[0].mxu0 %v2178
      %v2339 = vpop.f32.mrb[0].mxu0
      %v2340 = vadd.f32 0.0, %v2339
      %v2341 = vpop.f32.mrb[0].mxu0
      %v2342 = vpop.f32.mrb[0].mxu0
      %v2343 = vadd.f32 0.0, %v2342
      %v2344 = vpop.f32.mrb[0].mxu0
      %2345 = vmatprep.mubr.bf16.mxu0 0
      %2346 = vmatmul.mubr.bf16.gmra.mrb[0].mxu0 %v2181
      %v2347 = vpop.f32.mrb[0].mxu0
      %v2348 = vadd.f32 0.0, %v2347
      %v2349 = vpop.f32.mrb[0].mxu0
      %v2350 = vpop.f32.mrb[0].mxu0
      %v2351 = vadd.f32 0.0, %v2350
      %v2352 = vpop.f32.mrb[0].mxu0
      %2353 = vmatprep.mubr.bf16.mxu0 0
      %2354 = vmatmul.mubr.bf16.gmra.mrb[0].mxu0 %v2184
      %v2355 = vpop.f32.mrb[0].mxu0
      %v2356 = vadd.f32 0.0, %v2355
      %v2357 = vpop.f32.mrb[0].mxu0
      %v2358 = vpop.f32.mrb[0].mxu0
      %v2359 = vadd.f32 0.0, %v2358
      %v2360 = vpop.f32.mrb[0].mxu0
      %2361 = vmatprep.mubr.bf16.mxu0 0
      %2362 = vmatmul.mubr.bf16.gmra.mrb[0].mxu0 %v2187
      %v2363 = vpop.f32.mrb[0].mxu0
      %v2364 = vadd.f32 0.0, %v2363
      %v2365 = vpop.f32.mrb[0].mxu0
      %v2366 = vpop.f32.mrb[0].mxu0
      %v2367 = vadd.f32 0.0, %v2366
      %v2368 = vpop.f32.mrb[0].mxu0
      %2369 = vmatprep.mubr.bf16.mxu0 0
      %2370 = vmatmul.mubr.bf16.gmra.mrb[0].mxu0 %v2190
      %v2371 = vpop.f32.mrb[0].mxu0
      %v2372 = vadd.f32 0.0, %v2371
      %v2373 = vpop.f32.mrb[0].mxu0
      %v2374 = vpop.f32.mrb[0].mxu0
      %v2375 = vadd.f32 0.0, %v2374
      %v2376 = vpop.f32.mrb[0].mxu0
      %2377 = vmatprep.mubr.bf16.mxu0 0
      %2378 = vmatmul.mubr.bf16.gmra.mrb[0].mxu0 %v2193
      %v2379 = vpop.f32.mrb[0].mxu0
      %v2380 = vadd.f32 0.0, %v2379
      %v2381 = vpop.f32.mrb[0].mxu0
      %v2382 = vpop.f32.mrb[0].mxu0
      %v2383 = vadd.f32 0.0, %v2382
      %v2384 = vpop.f32.mrb[0].mxu0
      %2385 = vmatprep.mubr.bf16.mxu0 0
      %2386 = vmatmul.mubr.bf16.gmra.mrb[0].mxu0 %v2196
      %v2387 = vpop.f32.mrb[0].mxu0
      %v2388 = vadd.f32 0.0, %v2387
      %v2389 = vpop.f32.mrb[0].mxu0
      %v2390 = vpop.f32.mrb[0].mxu0
      %v2391 = vadd.f32 0.0, %v2390
      %v2392 = vpop.f32.mrb[0].mxu0
      %2393 = vmatprep.mubr.bf16.mxu0 0
      %2394 = vmatmul.mubr.bf16.gmra.mrb[0].mxu0 %v2199
      %v2395 = vpop.f32.mrb[0].mxu0
      %v2396 = vadd.f32 0.0, %v2395
      %v2397 = vpop.f32.mrb[0].mxu0
      %v2398 = vpop.f32.mrb[0].mxu0
      %v2399 = vpop.f32.mrb[0].mxu0
      %2400 = vdwg.mxu0
      %v2401 = vadd.f32 %v1887, %v2236
      %v2402 = vadd.f32 %v1888, %v2239
      %v2403 = vadd.f32 %v1889, %v2244
      %v2404 = vadd.f32 %v1890, %v2247
      %v2405 = vadd.f32 %v1891, %v2252
      %v2406 = vadd.f32 %v1892, %v2255
      %v2407 = vadd.f32 %v1893, %v2260
      %v2408 = vadd.f32 %v1894, %v2263
      %v2409 = vadd.f32 %v1895, %v2268
      %v2410 = vadd.f32 %v1896, %v2271
      %v2411 = vadd.f32 %v1897, %v2276
      %v2412 = vadd.f32 %v1898, %v2279
      %v2413 = vadd.f32 %v1899, %v2284
      %v2414 = vadd.f32 %v1900, %v2287
      %v2415 = vadd.f32 %v1901, %v2292
      %v2416 = vadd.f32 %v1902, %v2295
      %v2417 = vadd.f32 %v1903, %v2300
      %v2418 = vadd.f32 %v1904, %v2303
      %v2419 = vadd.f32 %v1905, %v2308
      %v2420 = vadd.f32 %v1906, %v2311
      %v2421 = vadd.f32 %v1907, %v2316
      %v2422 = vadd.f32 %v1908, %v2319
      %v2423 = vadd.f32 %v1909, %v2324
      %v2424 = vadd.f32 %v1910, %v2327
      %v2425 = vadd.f32 %v1911, %v2332
      %v2426 = vadd.f32 %v1912, %v2335
      %v2427 = vadd.f32 %v1913, %v2340
      %v2428 = vadd.f32 %v1914, %v2343
      %v2429 = vadd.f32 %v1915, %v2348
      %v2430 = vadd.f32 %v1916, %v2351
      %v2431 = vadd.f32 %v1917, %v2356
      %v2432 = vadd.f32 %v1918, %v2359
      %v2433 = vadd.f32 %v1919, %v2364
      %v2434 = vadd.f32 %v1920, %v2367
      %v2435 = vadd.f32 %v1921, %v2372
      %v2436 = vadd.f32 %v1922, %v2375
      %v2437 = vadd.f32 %v1923, %v2380
      %v2438 = vadd.f32 %v1924, %v2383
      %v2439 = vadd.f32 %v1925, %v2388
      %v2440 = vadd.f32 %v1926, %v2391
      %v2441 = vadd.f32 %v1927, %v2396
      %v2442 = vld [vmem:[%s192 + $0x8] sm:$0xc]
      %s2443 = scalar_lea.vmem %s1, 80
      %v2444 = vld [vmem:[%s2443] sm:$0xf]
      %v2445 = vld [vmem:[%s2443 + $0x4] sm:$0xf]
      %v2446 = vld [vmem:[%s2443 + $0x8] sm:$0xf]
      %v2447 = vld [vmem:[%s2443 + $0xc] sm:$0xf]
      %v2449 = vunpack.c.l.b16 %v2442
      %v2450 = vpack.c.b16 %v1510, %v2449
      %vm2451 = vcmask 1045504
      %v2452 = vrot.slane %v2450, 2
      %v2453 = vrot.slane %v1551, 2
      %v2454 = vsel %vm2451, %v2452, %v2453
      %v2455 = vrot.slane %v1552, 2
      %v2456 = vsel %vm2451, %v2453, %v2455
      %v2457 = vrot.slane %v1553, 2
      %v2458 = vsel %vm2451, %v2455, %v2457
      %v2459 = vrot.slane %v1554, 2
      %v2460 = vsel %vm2451, %v2457, %v2459
      %v2461 = vrot.slane %v1555, 2
      %v2462 = vsel %vm2451, %v2459, %v2461
      %v2463 = vrot.slane %v1556, 2
      %v2464 = vsel %vm2451, %v2461, %v2463
      %v2465 = vrot.slane %v1557, 2
      %v2466 = vsel %vm2451, %v2463, %v2465
      %v2467 = vrot.slane %v1558, 2
      %v2468 = vsel %vm2451, %v2465, %v2467
      %v2469 = vrot.slane %v1559, 2
      %v2470 = vsel %vm2451, %v2467, %v2469
      %v2471 = vrot.slane %v1560, 2
      %v2472 = vsel %vm2451, %v2469, %v2471
      %v2473 = vrot.slane %v1561, 2
      %v2474 = vsel %vm2451, %v2471, %v2473
      %v2475 = vrot.slane %v1562, 2
      %v2476 = vsel %vm2451, %v2473, %v2475
      %v2477 = vrot.slane %v1563, 2
      %v2478 = vsel %vm2451, %v2475, %v2477
      %v2479 = vrot.slane %v1564, 2
      %v2480 = vsel %vm2451, %v2477, %v2479
      %v2481 = vrot.slane %v1565, 2
      %v2482 = vsel %vm2451, %v2479, %v2481
      %v2483 = vrot.slane %v1566, 2
      %v2484 = vsel %vm2451, %v2481, %v2483
      %v2485 = vrot.slane %v1567, 2
      %v2486 = vsel %vm2451, %v2483, %v2485
      %v2487 = vrot.slane %v1568, 2
      %v2488 = vsel %vm2451, %v2485, %v2487
      %v2489 = vrot.slane %v1569, 2
      %v2490 = vsel %vm2451, %v2487, %v2489
      %v2491 = vrot.slane %v1936, 2
      %v2492 = vsel %vm2451, %v2489, %v2491
      %v2497 = vunpack.c.l.b16 %v2444
      %v2498 = vunpack.c.l.b16 %v2445
      %v2499 = vunpack.c.l.b16 %v2446
      %v2500 = vunpack.c.l.b16 %v2447
      %v2501 = vpack.c.b16 %v2498, %v2497
      %v2502 = vpack.c.b16 %v2500, %v2499
      %v2506 = vsel %vm533, %v2454, 0
      %v2509 = vsel %vm533, %v2456, 0
      %v2512 = vsel %vm533, %v2458, 0
      %v2515 = vsel %vm533, %v2460, 0
      %v2518 = vsel %vm533, %v2462, 0
      %v2521 = vsel %vm533, %v2464, 0
      %v2524 = vsel %vm533, %v2466, 0
      %v2527 = vsel %vm533, %v2468, 0
      %v2530 = vsel %vm533, %v2470, 0
      %v2533 = vsel %vm533, %v2472, 0
      %v2536 = vsel %vm533, %v2474, 0
      %v2539 = vsel %vm533, %v2476, 0
      %v2542 = vsel %vm533, %v2478, 0
      %v2545 = vsel %vm533, %v2480, 0
      %v2548 = vsel %vm533, %v2482, 0
      %v2551 = vsel %vm533, %v2484, 0
      %v2554 = vsel %vm533, %v2486, 0
      %v2557 = vsel %vm533, %v2488, 0
      %v2560 = vsel %vm533, %v2490, 0
      %v2563 = vsel %vm533, %v2492, 0
      %v2566 = vsel %vm533, %v2491, 0
      %2568 = vmatprep.subr.bf16.mxu0 0
      %2569 = vmatpush1.bf16.msra.mxu0 %v2501
      %2570 = vmatprep.subr.bf16.mxu0 0
      %2571 = vmatpush1.bf16.msra.mxu0 %v2502
      %2572 = vmatprep.subr.bf16.mxu0 0
      %2573 = vmatpush1.bf16.msra.mxu0 0
      %2574 = vmatprep.subr.bf16.mxu0 0
      %2575 = vmatpush1.bf16.msra.mxu0 0
      %2576 = vmatprep.subr.bf16.mxu0 0
      %2577 = vmatpush1.bf16.msra.mxu0 0
      %2578 = vmatprep.subr.bf16.mxu0 0
      %2579 = vmatpush1.bf16.msra.mxu0 0
      %2580 = vmatprep.subr.bf16.mxu0 0
      %2581 = vmatpush1.bf16.msra.mxu0 0
      %2582 = vmatprep.subr.bf16.mxu0 0
      %2583 = vmatpush1.bf16.msra.mxu0 0
      %2584 = vmatprep.subr.bf16.mxu0 0
      %2585 = vmatpush1.bf16.msra.mxu0 0
      %2586 = vmatprep.subr.bf16.mxu0 0
      %2587 = vmatpush1.bf16.msra.mxu0 0
      %2588 = vmatprep.subr.bf16.mxu0 0
      %2589 = vmatpush1.bf16.msra.mxu0 0
      %2590 = vmatprep.subr.bf16.mxu0 0
      %2591 = vmatpush1.bf16.msra.mxu0 0
      %2592 = vmatprep.subr.bf16.mxu0 0
      %2593 = vmatpush1.bf16.msra.mxu0 0
      %2594 = vmatprep.subr.bf16.mxu0 0
      %2595 = vmatpush1.bf16.msra.mxu0 0
      %2596 = vmatprep.subr.bf16.mxu0 0
      %2597 = vmatpush1.bf16.msra.mxu0 0
      %2598 = vmatprep.subr.bf16.mxu0 0
      %2599 = vmatpush1.bf16.msra.mxu0 0
      %2600 = vmatprep.mubr.bf16.mxu0 0
      %2601 = vmatmul.mubr.bf16.gmra.mrb[0].mxu0 %v2506
      %v2602 = vpop.f32.mrb[0].mxu0
      %v2603 = vadd.f32 0.0, %v2602
      %v2604 = vpop.f32.mrb[0].mxu0
      %v2605 = vpop.f32.mrb[0].mxu0
      %v2606 = vadd.f32 0.0, %v2605
      %v2607 = vpop.f32.mrb[0].mxu0
      %2608 = vmatprep.mubr.bf16.mxu0 0
      %2609 = vmatmul.mubr.bf16.gmra.mrb[0].mxu0 %v2509
      %v2610 = vpop.f32.mrb[0].mxu0
      %v2611 = vadd.f32 0.0, %v2610
      %v2612 = vpop.f32.mrb[0].mxu0
      %v2613 = vpop.f32.mrb[0].mxu0
      %v2614 = vadd.f32 0.0, %v2613
      %v2615 = vpop.f32.mrb[0].mxu0
      %2616 = vmatprep.mubr.bf16.mxu0 0
      %2617 = vmatmul.mubr.bf16.gmra.mrb[0].mxu0 %v2512
      %v2618 = vpop.f32.mrb[0].mxu0
      %v2619 = vadd.f32 0.0, %v2618
      %v2620 = vpop.f32.mrb[0].mxu0
      %v2621 = vpop.f32.mrb[0].mxu0
      %v2622 = vadd.f32 0.0, %v2621
      %v2623 = vpop.f32.mrb[0].mxu0
      %2624 = vmatprep.mubr.bf16.mxu0 0
      %2625 = vmatmul.mubr.bf16.gmra.mrb[0].mxu0 %v2515
      %v2626 = vpop.f32.mrb[0].mxu0
      %v2627 = vadd.f32 0.0, %v2626
      %v2628 = vpop.f32.mrb[0].mxu0
      %v2629 = vpop.f32.mrb[0].mxu0
      %v2630 = vadd.f32 0.0, %v2629
      %v2631 = vpop.f32.mrb[0].mxu0
      %2632 = vmatprep.mubr.bf16.mxu0 0
      %2633 = vmatmul.mubr.bf16.gmra.mrb[0].mxu0 %v2518
      %v2634 = vpop.f32.mrb[0].mxu0
      %v2635 = vadd.f32 0.0, %v2634
      %v2636 = vpop.f32.mrb[0].mxu0
      %v2637 = vpop.f32.mrb[0].mxu0
      %v2638 = vadd.f32 0.0, %v2637
      %v2639 = vpop.f32.mrb[0].mxu0
      %2640 = vmatprep.mubr.bf16.mxu0 0
      %2641 = vmatmul.mubr.bf16.gmra.mrb[0].mxu0 %v2521
      %v2642 = vpop.f32.mrb[0].mxu0
      %v2643 = vadd.f32 0.0, %v2642
      %v2644 = vpop.f32.mrb[0].mxu0
      %v2645 = vpop.f32.mrb[0].mxu0
      %v2646 = vadd.f32 0.0, %v2645
      %v2647 = vpop.f32.mrb[0].mxu0
      %2648 = vmatprep.mubr.bf16.mxu0 0
      %2649 = vmatmul.mubr.bf16.gmra.mrb[0].mxu0 %v2524
      %v2650 = vpop.f32.mrb[0].mxu0
      %v2651 = vadd.f32 0.0, %v2650
      %v2652 = vpop.f32.mrb[0].mxu0
      %v2653 = vpop.f32.mrb[0].mxu0
      %v2654 = vadd.f32 0.0, %v2653
      %v2655 = vpop.f32.mrb[0].mxu0
      %2656 = vmatprep.mubr.bf16.mxu0 0
      %2657 = vmatmul.mubr.bf16.gmra.mrb[0].mxu0 %v2527
      %v2658 = vpop.f32.mrb[0].mxu0
      %v2659 = vadd.f32 0.0, %v2658
      %v2660 = vpop.f32.mrb[0].mxu0
      %v2661 = vpop.f32.mrb[0].mxu0
      %v2662 = vadd.f32 0.0, %v2661
      %v2663 = vpop.f32.mrb[0].mxu0
      %2664 = vmatprep.mubr.bf16.mxu0 0
      %2665 = vmatmul.mubr.bf16.gmra.mrb[0].mxu0 %v2530
      %v2666 = vpop.f32.mrb[0].mxu0
      %v2667 = vadd.f32 0.0, %v2666
      %v2668 = vpop.f32.mrb[0].mxu0
      %v2669 = vpop.f32.mrb[0].mxu0
      %v2670 = vadd.f32 0.0, %v2669
      %v2671 = vpop.f32.mrb[0].mxu0
      %2672 = vmatprep.mubr.bf16.mxu0 0
      %2673 = vmatmul.mubr.bf16.gmra.mrb[0].mxu0 %v2533
      %v2674 = vpop.f32.mrb[0].mxu0
      %v2675 = vadd.f32 0.0, %v2674
      %v2676 = vpop.f32.mrb[0].mxu0
      %v2677 = vpop.f32.mrb[0].mxu0
      %v2678 = vadd.f32 0.0, %v2677
      %v2679 = vpop.f32.mrb[0].mxu0
      %2680 = vmatprep.mubr.bf16.mxu0 0
      %2681 = vmatmul.mubr.bf16.gmra.mrb[0].mxu0 %v2536
      %v2682 = vpop.f32.mrb[0].mxu0
      %v2683 = vadd.f32 0.0, %v2682
      %v2684 = vpop.f32.mrb[0].mxu0
      %v2685 = vpop.f32.mrb[0].mxu0
      %v2686 = vadd.f32 0.0, %v2685
      %v2687 = vpop.f32.mrb[0].mxu0
      %2688 = vmatprep.mubr.bf16.mxu0 0
      %2689 = vmatmul.mubr.bf16.gmra.mrb[0].mxu0 %v2539
      %v2690 = vpop.f32.mrb[0].mxu0
      %v2691 = vadd.f32 0.0, %v2690
      %v2692 = vpop.f32.mrb[0].mxu0
      %v2693 = vpop.f32.mrb[0].mxu0
      %v2694 = vadd.f32 0.0, %v2693
      %v2695 = vpop.f32.mrb[0].mxu0
      %2696 = vmatprep.mubr.bf16.mxu0 0
      %2697 = vmatmul.mubr.bf16.gmra.mrb[0].mxu0 %v2542
      %v2698 = vpop.f32.mrb[0].mxu0
      %v2699 = vadd.f32 0.0, %v2698
      %v2700 = vpop.f32.mrb[0].mxu0
      %v2701 = vpop.f32.mrb[0].mxu0
      %v2702 = vadd.f32 0.0, %v2701
      %v2703 = vpop.f32.mrb[0].mxu0
      %2704 = vmatprep.mubr.bf16.mxu0 0
      %2705 = vmatmul.mubr.bf16.gmra.mrb[0].mxu0 %v2545
      %v2706 = vpop.f32.mrb[0].mxu0
      %v2707 = vadd.f32 0.0, %v2706
      %v2708 = vpop.f32.mrb[0].mxu0
      %v2709 = vpop.f32.mrb[0].mxu0
      %v2710 = vadd.f32 0.0, %v2709
      %v2711 = vpop.f32.mrb[0].mxu0
      %2712 = vmatprep.mubr.bf16.mxu0 0
      %2713 = vmatmul.mubr.bf16.gmra.mrb[0].mxu0 %v2548
      %v2714 = vpop.f32.mrb[0].mxu0
      %v2715 = vadd.f32 0.0, %v2714
      %v2716 = vpop.f32.mrb[0].mxu0
      %v2717 = vpop.f32.mrb[0].mxu0
      %v2718 = vadd.f32 0.0, %v2717
      %v2719 = vpop.f32.mrb[0].mxu0
      %2720 = vmatprep.mubr.bf16.mxu0 0
      %2721 = vmatmul.mubr.bf16.gmra.mrb[0].mxu0 %v2551
      %v2722 = vpop.f32.mrb[0].mxu0
      %v2723 = vadd.f32 0.0, %v2722
      %v2724 = vpop.f32.mrb[0].mxu0
      %v2725 = vpop.f32.mrb[0].mxu0
      %v2726 = vadd.f32 0.0, %v2725
      %v2727 = vpop.f32.mrb[0].mxu0
      %2728 = vmatprep.mubr.bf16.mxu0 0
      %2729 = vmatmul.mubr.bf16.gmra.mrb[0].mxu0 %v2554
      %v2730 = vpop.f32.mrb[0].mxu0
      %v2731 = vadd.f32 0.0, %v2730
      %v2732 = vpop.f32.mrb[0].mxu0
      %v2733 = vpop.f32.mrb[0].mxu0
      %v2734 = vadd.f32 0.0, %v2733
      %v2735 = vpop.f32.mrb[0].mxu0
      %2736 = vmatprep.mubr.bf16.mxu0 0
      %2737 = vmatmul.mubr.bf16.gmra.mrb[0].mxu0 %v2557
      %v2738 = vpop.f32.mrb[0].mxu0
      %v2739 = vadd.f32 0.0, %v2738
      %v2740 = vpop.f32.mrb[0].mxu0
      %v2741 = vpop.f32.mrb[0].mxu0
      %v2742 = vadd.f32 0.0, %v2741
      %v2743 = vpop.f32.mrb[0].mxu0
      %2744 = vmatprep.mubr.bf16.mxu0 0
      %2745 = vmatmul.mubr.bf16.gmra.mrb[0].mxu0 %v2560
      %v2746 = vpop.f32.mrb[0].mxu0
      %v2747 = vadd.f32 0.0, %v2746
      %v2748 = vpop.f32.mrb[0].mxu0
      %v2749 = vpop.f32.mrb[0].mxu0
      %v2750 = vadd.f32 0.0, %v2749
      %v2751 = vpop.f32.mrb[0].mxu0
      %2752 = vmatprep.mubr.bf16.mxu0 0
      %2753 = vmatmul.mubr.bf16.gmra.mrb[0].mxu0 %v2563
      %v2754 = vpop.f32.mrb[0].mxu0
      %v2755 = vadd.f32 0.0, %v2754
      %v2756 = vpop.f32.mrb[0].mxu0
      %v2757 = vpop.f32.mrb[0].mxu0
      %v2758 = vadd.f32 0.0, %v2757
      %v2759 = vpop.f32.mrb[0].mxu0
      %2760 = vmatprep.mubr.bf16.mxu0 0
      %2761 = vmatmul.mubr.bf16.gmra.mrb[0].mxu0 %v2566
      %v2762 = vpop.f32.mrb[0].mxu0
      %v2763 = vadd.f32 0.0, %v2762
      %v2764 = vpop.f32.mrb[0].mxu0
      %v2765 = vpop.f32.mrb[0].mxu0
      %v2766 = vpop.f32.mrb[0].mxu0
      %2767 = vdwg.mxu0
      %v2768 = vadd.f32 %v2401, %v2603
      %v2769 = vadd.f32 %v2402, %v2606
      %v2770 = vadd.f32 %v2403, %v2611
      %v2771 = vadd.f32 %v2404, %v2614
      %v2772 = vadd.f32 %v2405, %v2619
      %v2773 = vadd.f32 %v2406, %v2622
      %v2774 = vadd.f32 %v2407, %v2627
      %v2775 = vadd.f32 %v2408, %v2630
      %v2776 = vadd.f32 %v2409, %v2635
      %v2777 = vadd.f32 %v2410, %v2638
      %v2778 = vadd.f32 %v2411, %v2643
      %v2779 = vadd.f32 %v2412, %v2646
      %v2780 = vadd.f32 %v2413, %v2651
      %v2781 = vadd.f32 %v2414, %v2654
      %v2782 = vadd.f32 %v2415, %v2659
      %v2783 = vadd.f32 %v2416, %v2662
      %v2784 = vadd.f32 %v2417, %v2667
      %v2785 = vadd.f32 %v2418, %v2670
      %v2786 = vadd.f32 %v2419, %v2675
      %v2787 = vadd.f32 %v2420, %v2678
      %v2788 = vadd.f32 %v2421, %v2683
      %v2789 = vadd.f32 %v2422, %v2686
      %v2790 = vadd.f32 %v2423, %v2691
      %v2791 = vadd.f32 %v2424, %v2694
      %v2792 = vadd.f32 %v2425, %v2699
      %v2793 = vadd.f32 %v2426, %v2702
      %v2794 = vadd.f32 %v2427, %v2707
      %v2795 = vadd.f32 %v2428, %v2710
      %v2796 = vadd.f32 %v2429, %v2715
      %v2797 = vadd.f32 %v2430, %v2718
      %v2798 = vadd.f32 %v2431, %v2723
      %v2799 = vadd.f32 %v2432, %v2726
      %v2800 = vadd.f32 %v2433, %v2731
      %v2801 = vadd.f32 %v2434, %v2734
      %v2802 = vadd.f32 %v2435, %v2739
      %v2803 = vadd.f32 %v2436, %v2742
      %v2804 = vadd.f32 %v2437, %v2747
      %v2805 = vadd.f32 %v2438, %v2750
      %v2806 = vadd.f32 %v2439, %v2755
      %v2807 = vadd.f32 %v2440, %v2758
      %v2808 = vadd.f32 %v2441, %v2763
      %v2809 = vld [vmem:[%s192 + $0x10] sm:$0xc]
      %v2810 = vld [vmem:[%s192 + $0x14] sm:$0xf]
      %v2811 = vld [vmem:[%s192 + $0x18] sm:$0xf]
      %v2812 = vld [vmem:[%s192 + $0x1c] sm:$0xf]
      %v2813 = vld [vmem:[%s192 + $0x20] sm:$0xf]
      %v2814 = vld [vmem:[%s192 + $0x24] sm:$0xf]
      %v2815 = vld [vmem:[%s192 + $0x28] sm:$0xf]
      %v2816 = vld [vmem:[%s192 + $0x2c] sm:$0xf]
      %v2817 = vld [vmem:[%s192 + $0x30] sm:$0xf]
      %v2818 = vld [vmem:[%s192 + $0x34] sm:$0xf]
      %v2819 = vld [vmem:[%s192 + $0x38] sm:$0xf]
      %v2820 = vld [vmem:[%s192 + $0x3c] sm:$0xf]
      %v2821 = vld [vmem:[%s192 + $0x40] sm:$0xf]
      %v2822 = vld [vmem:[%s192 + $0x44] sm:$0xf]
      %v2823 = vld [vmem:[%s192 + $0x48] sm:$0xf]
      %v2824 = vld [vmem:[%s192 + $0x4c] sm:$0xf]
      %v2825 = vld [vmem:[%s192 + $0x50] sm:$0xf]
      %v2826 = vld [vmem:[%s192 + $0x54] sm:$0xf]
      %v2827 = vld [vmem:[%s192 + $0x58] sm:$0xf]
      %v2828 = vld [vmem:[%s192 + $0x5c] sm:$0xf]
      %v2829 = vld [vmem:[%s192 + $0x60] sm:$0xf]
      %v2830 = vld [vmem:[%s192 + $0x64] sm:$0xf]
      %v2831 = vld [vmem:[%s192 + $0x68] sm:$0xf]
      %v2832 = vld [vmem:[%s192 + $0x6c] sm:$0xf]
      %v2833 = vld [vmem:[%s192 + $0x70] sm:$0xf]
      %v2834 = vld [vmem:[%s192 + $0x74] sm:$0xf]
      %v2835 = vld [vmem:[%s192 + $0x78] sm:$0xf]
      %v2836 = vld [vmem:[%s192 + $0x7c] sm:$0xf]
      %v2837 = vld [vmem:[%s192 + $0x80] sm:$0xf]
      %v2838 = vld [vmem:[%s192 + $0x84] sm:$0xf]
      %v2839 = vld [vmem:[%s192 + $0x88] sm:$0xf]
      %v2840 = vld [vmem:[%s192 + $0x8c] sm:$0xf]
      %v2841 = vld [vmem:[%s192 + $0x90] sm:$0xf]
      %v2842 = vld [vmem:[%s192 + $0x94] sm:$0xf]
      %v2843 = vld [vmem:[%s192 + $0x98] sm:$0xf]
      %v2844 = vld [vmem:[%s192 + $0x9c] sm:$0xf]
      %v2845 = vld [vmem:[%s192 + $0xa0] sm:$0xf]
      %v2846 = vld [vmem:[%s192 + $0xa4] sm:$0xf]
      %v2847 = vld [vmem:[%s192 + $0xa8] sm:$0xf]
      %v2848 = vld [vmem:[%s192 + $0xac] sm:$0xf]
      %v2849 = vld [vmem:[%s192 + $0xb0] sm:$0xf]
      %s2850 = scalar_lea.vmem %s1, 96
      %v2851 = vld [vmem:[%s2850] sm:$0xf]
      %v2852 = vld [vmem:[%s2850 + $0x4] sm:$0xf]
      %v2853 = vld [vmem:[%s2850 + $0x8] sm:$0xf]
      %v2854 = vld [vmem:[%s2850 + $0xc] sm:$0xf]
      %v2896 = vunpack.c.l.b16 %v2809
      %v2897 = vunpack.c.l.b16 %v2810
      %v2898 = vunpack.c.l.b16 %v2811
      %v2899 = vunpack.c.l.b16 %v2812
      %v2900 = vunpack.c.l.b16 %v2813
      %v2901 = vunpack.c.l.b16 %v2814
      %v2902 = vunpack.c.l.b16 %v2815
      %v2903 = vunpack.c.l.b16 %v2816
      %v2904 = vunpack.c.l.b16 %v2817
      %v2905 = vunpack.c.l.b16 %v2818
      %v2906 = vunpack.c.l.b16 %v2819
      %v2907 = vunpack.c.l.b16 %v2820
      %v2908 = vunpack.c.l.b16 %v2821
      %v2909 = vunpack.c.l.b16 %v2822
      %v2910 = vunpack.c.l.b16 %v2823
      %v2911 = vunpack.c.l.b16 %v2824
      %v2912 = vunpack.c.l.b16 %v2825
      %v2913 = vunpack.c.l.b16 %v2826
      %v2914 = vunpack.c.l.b16 %v2827
      %v2915 = vunpack.c.l.b16 %v2828
      %v2916 = vunpack.c.l.b16 %v2829
      %v2917 = vunpack.c.l.b16 %v2830
      %v2918 = vunpack.c.l.b16 %v2831
      %v2919 = vunpack.c.l.b16 %v2832
      %v2920 = vunpack.c.l.b16 %v2833
      %v2921 = vunpack.c.l.b16 %v2834
      %v2922 = vunpack.c.l.b16 %v2835
      %v2923 = vunpack.c.l.b16 %v2836
      %v2924 = vunpack.c.l.b16 %v2837
      %v2925 = vunpack.c.l.b16 %v2838
      %v2926 = vunpack.c.l.b16 %v2839
      %v2927 = vunpack.c.l.b16 %v2840
      %v2928 = vunpack.c.l.b16 %v2841
      %v2929 = vunpack.c.l.b16 %v2842
      %v2930 = vunpack.c.l.b16 %v2843
      %v2931 = vunpack.c.l.b16 %v2844
      %v2932 = vunpack.c.l.b16 %v2845
      %v2933 = vunpack.c.l.b16 %v2846
      %v2934 = vunpack.c.l.b16 %v2847
      %v2935 = vunpack.c.l.b16 %v2848
      %v2936 = vunpack.c.l.b16 %v2849
      %v2937 = vpack.c.b16 %v2897, %v2896
      %v2938 = vpack.c.b16 %v2899, %v2898
      %v2939 = vpack.c.b16 %v2901, %v2900
      %v2940 = vpack.c.b16 %v2903, %v2902
      %v2941 = vpack.c.b16 %v2905, %v2904
      %v2942 = vpack.c.b16 %v2907, %v2906
      %v2943 = vpack.c.b16 %v2909, %v2908
      %v2944 = vpack.c.b16 %v2911, %v2910
      %v2945 = vpack.c.b16 %v2913, %v2912
      %v2946 = vpack.c.b16 %v2915, %v2914
      %v2947 = vpack.c.b16 %v2917, %v2916
      %v2948 = vpack.c.b16 %v2919, %v2918
      %v2949 = vpack.c.b16 %v2921, %v2920
      %v2950 = vpack.c.b16 %v2923, %v2922
      %v2951 = vpack.c.b16 %v2925, %v2924
      %v2952 = vpack.c.b16 %v2927, %v2926
      %v2953 = vpack.c.b16 %v2929, %v2928
      %v2954 = vpack.c.b16 %v2931, %v2930
      %v2955 = vpack.c.b16 %v2933, %v2932
      %v2956 = vpack.c.b16 %v2935, %v2934
      %v2957 = vpack.c.b16 %v2936, %v2936
      %v2958 = vrot.slane %v2937, 2
      %v2959 = vrot.slane %v2938, 2
      %v2960 = vsel %vm2451, %v2958, %v2959
      %v2961 = vrot.slane %v2939, 2
      %v2962 = vsel %vm2451, %v2959, %v2961
      %v2963 = vrot.slane %v2940, 2
      %v2964 = vsel %vm2451, %v2961, %v2963
      %v2965 = vrot.slane %v2941, 2
      %v2966 = vsel %vm2451, %v2963, %v2965
      %v2967 = vrot.slane %v2942, 2
      %v2968 = vsel %vm2451, %v2965, %v2967
      %v2969 = vrot.slane %v2943, 2
      %v2970 = vsel %vm2451, %v2967, %v2969
      %v2971 = vrot.slane %v2944, 2
      %v2972 = vsel %vm2451, %v2969, %v2971
      %v2973 = vrot.slane %v2945, 2
      %v2974 = vsel %vm2451, %v2971, %v2973
      %v2975 = vrot.slane %v2946, 2
      %v2976 = vsel %vm2451, %v2973, %v2975
      %v2977 = vrot.slane %v2947, 2
      %v2978 = vsel %vm2451, %v2975, %v2977
      %v2979 = vrot.slane %v2948, 2
      %v2980 = vsel %vm2451, %v2977, %v2979
      %v2981 = vrot.slane %v2949, 2
      %v2982 = vsel %vm2451, %v2979, %v2981
      %v2983 = vrot.slane %v2950, 2
      %v2984 = vsel %vm2451, %v2981, %v2983
      %v2985 = vrot.slane %v2951, 2
      %v2986 = vsel %vm2451, %v2983, %v2985
      %v2987 = vrot.slane %v2952, 2
      %v2988 = vsel %vm2451, %v2985, %v2987
      %v2989 = vrot.slane %v2953, 2
      %v2990 = vsel %vm2451, %v2987, %v2989
      %v2991 = vrot.slane %v2954, 2
      %v2992 = vsel %vm2451, %v2989, %v2991
      %v2993 = vrot.slane %v2955, 2
      %v2994 = vsel %vm2451, %v2991, %v2993
      %v2995 = vrot.slane %v2956, 2
      %v2996 = vsel %vm2451, %v2993, %v2995
      %v2997 = vrot.slane %v2957, 2
      %v2998 = vsel %vm2451, %v2995, %v2997
      %v3003 = vunpack.c.l.b16 %v2851
      %v3004 = vunpack.c.l.b16 %v2852
      %v3005 = vunpack.c.l.b16 %v2853
      %v3006 = vunpack.c.l.b16 %v2854
      %v3007 = vpack.c.b16 %v3004, %v3003
      %v3008 = vpack.c.b16 %v3006, %v3005
      %v3012 = vsel %vm533, %v2960, 0
      %v3015 = vsel %vm533, %v2962, 0
      %v3018 = vsel %vm533, %v2964, 0
      %v3021 = vsel %vm533, %v2966, 0
      %v3024 = vsel %vm533, %v2968, 0
      %v3027 = vsel %vm533, %v2970, 0
      %v3030 = vsel %vm533, %v2972, 0
      %v3033 = vsel %vm533, %v2974, 0
      %v3036 = vsel %vm533, %v2976, 0
      %v3039 = vsel %vm533, %v2978, 0
      %v3042 = vsel %vm533, %v2980, 0
      %v3045 = vsel %vm533, %v2982, 0
      %v3048 = vsel %vm533, %v2984, 0
      %v3051 = vsel %vm533, %v2986, 0
      %v3054 = vsel %vm533, %v2988, 0
      %v3057 = vsel %vm533, %v2990, 0
      %v3060 = vsel %vm533, %v2992, 0
      %v3063 = vsel %vm533, %v2994, 0
      %v3066 = vsel %vm533, %v2996, 0
      %v3069 = vsel %vm533, %v2998, 0
      %v3072 = vsel %vm533, %v2997, 0
      %3074 = vmatprep.subr.bf16.mxu0 0
      %3075 = vmatpush1.bf16.msra.mxu0 %v3007
      %3076 = vmatprep.subr.bf16.mxu0 0
      %3077 = vmatpush1.bf16.msra.mxu0 %v3008
      %3078 = vmatprep.subr.bf16.mxu0 0
      %3079 = vmatpush1.bf16.msra.mxu0 0
      %3080 = vmatprep.subr.bf16.mxu0 0
      %3081 = vmatpush1.bf16.msra.mxu0 0
      %3082 = vmatprep.subr.bf16.mxu0 0
      %3083 = vmatpush1.bf16.msra.mxu0 0
      %3084 = vmatprep.subr.bf16.mxu0 0
      %3085 = vmatpush1.bf16.msra.mxu0 0
      %3086 = vmatprep.subr.bf16.mxu0 0
      %3087 = vmatpush1.bf16.msra.mxu0 0
      %3088 = vmatprep.subr.bf16.mxu0 0
      %3089 = vmatpush1.bf16.msra.mxu0 0
      %3090 = vmatprep.subr.bf16.mxu0 0
      %3091 = vmatpush1.bf16.msra.mxu0 0
      %3092 = vmatprep.subr.bf16.mxu0 0
      %3093 = vmatpush1.bf16.msra.mxu0 0
      %3094 = vmatprep.subr.bf16.mxu0 0
      %3095 = vmatpush1.bf16.msra.mxu0 0
      %3096 = vmatprep.subr.bf16.mxu0 0
      %3097 = vmatpush1.bf16.msra.mxu0 0
      %3098 = vmatprep.subr.bf16.mxu0 0
      %3099 = vmatpush1.bf16.msra.mxu0 0
      %3100 = vmatprep.subr.bf16.mxu0 0
      %3101 = vmatpush1.bf16.msra.mxu0 0
      %3102 = vmatprep.subr.bf16.mxu0 0
      %3103 = vmatpush1.bf16.msra.mxu0 0
      %3104 = vmatprep.subr.bf16.mxu0 0
      %3105 = vmatpush1.bf16.msra.mxu0 0
      %3106 = vmatprep.mubr.bf16.mxu0 0
      %3107 = vmatmul.mubr.bf16.gmra.mrb[0].mxu0 %v3012
      %v3108 = vpop.f32.mrb[0].mxu0
      %v3109 = vadd.f32 0.0, %v3108
      %v3110 = vpop.f32.mrb[0].mxu0
      %v3111 = vpop.f32.mrb[0].mxu0
      %v3112 = vadd.f32 0.0, %v3111
      %v3113 = vpop.f32.mrb[0].mxu0
      %3114 = vmatprep.mubr.bf16.mxu0 0
      %3115 = vmatmul.mubr.bf16.gmra.mrb[0].mxu0 %v3015
      %v3116 = vpop.f32.mrb[0].mxu0
      %v3117 = vadd.f32 0.0, %v3116
      %v3118 = vpop.f32.mrb[0].mxu0
      %v3119 = vpop.f32.mrb[0].mxu0
      %v3120 = vadd.f32 0.0, %v3119
      %v3121 = vpop.f32.mrb[0].mxu0
      %3122 = vmatprep.mubr.bf16.mxu0 0
      %3123 = vmatmul.mubr.bf16.gmra.mrb[0].mxu0 %v3018
      %v3124 = vpop.f32.mrb[0].mxu0
      %v3125 = vadd.f32 0.0, %v3124
      %v3126 = vpop.f32.mrb[0].mxu0
      %v3127 = vpop.f32.mrb[0].mxu0
      %v3128 = vadd.f32 0.0, %v3127
      %v3129 = vpop.f32.mrb[0].mxu0
      %3130 = vmatprep.mubr.bf16.mxu0 0
      %3131 = vmatmul.mubr.bf16.gmra.mrb[0].mxu0 %v3021
      %v3132 = vpop.f32.mrb[0].mxu0
      %v3133 = vadd.f32 0.0, %v3132
      %v3134 = vpop.f32.mrb[0].mxu0
      %v3135 = vpop.f32.mrb[0].mxu0
      %v3136 = vadd.f32 0.0, %v3135
      %v3137 = vpop.f32.mrb[0].mxu0
      %3138 = vmatprep.mubr.bf16.mxu0 0
      %3139 = vmatmul.mubr.bf16.gmra.mrb[0].mxu0 %v3024
      %v3140 = vpop.f32.mrb[0].mxu0
      %v3141 = vadd.f32 0.0, %v3140
      %v3142 = vpop.f32.mrb[0].mxu0
      %v3143 = vpop.f32.mrb[0].mxu0
      %v3144 = vadd.f32 0.0, %v3143
      %v3145 = vpop.f32.mrb[0].mxu0
      %3146 = vmatprep.mubr.bf16.mxu0 0
      %3147 = vmatmul.mubr.bf16.gmra.mrb[0].mxu0 %v3027
      %v3148 = vpop.f32.mrb[0].mxu0
      %v3149 = vadd.f32 0.0, %v3148
      %v3150 = vpop.f32.mrb[0].mxu0
      %v3151 = vpop.f32.mrb[0].mxu0
      %v3152 = vadd.f32 0.0, %v3151
      %v3153 = vpop.f32.mrb[0].mxu0
      %3154 = vmatprep.mubr.bf16.mxu0 0
      %3155 = vmatmul.mubr.bf16.gmra.mrb[0].mxu0 %v3030
      %v3156 = vpop.f32.mrb[0].mxu0
      %v3157 = vadd.f32 0.0, %v3156
      %v3158 = vpop.f32.mrb[0].mxu0
      %v3159 = vpop.f32.mrb[0].mxu0
      %v3160 = vadd.f32 0.0, %v3159
      %v3161 = vpop.f32.mrb[0].mxu0
      %3162 = vmatprep.mubr.bf16.mxu0 0
      %3163 = vmatmul.mubr.bf16.gmra.mrb[0].mxu0 %v3033
      %v3164 = vpop.f32.mrb[0].mxu0
      %v3165 = vadd.f32 0.0, %v3164
      %v3166 = vpop.f32.mrb[0].mxu0
      %v3167 = vpop.f32.mrb[0].mxu0
      %v3168 = vadd.f32 0.0, %v3167
      %v3169 = vpop.f32.mrb[0].mxu0
      %3170 = vmatprep.mubr.bf16.mxu0 0
      %3171 = vmatmul.mubr.bf16.gmra.mrb[0].mxu0 %v3036
      %v3172 = vpop.f32.mrb[0].mxu0
      %v3173 = vadd.f32 0.0, %v3172
      %v3174 = vpop.f32.mrb[0].mxu0
      %v3175 = vpop.f32.mrb[0].mxu0
      %v3176 = vadd.f32 0.0, %v3175
      %v3177 = vpop.f32.mrb[0].mxu0
      %3178 = vmatprep.mubr.bf16.mxu0 0
      %3179 = vmatmul.mubr.bf16.gmra.mrb[0].mxu0 %v3039
      %v3180 = vpop.f32.mrb[0].mxu0
      %v3181 = vadd.f32 0.0, %v3180
      %v3182 = vpop.f32.mrb[0].mxu0
      %v3183 = vpop.f32.mrb[0].mxu0
      %v3184 = vadd.f32 0.0, %v3183
      %v3185 = vpop.f32.mrb[0].mxu0
      %3186 = vmatprep.mubr.bf16.mxu0 0
      %3187 = vmatmul.mubr.bf16.gmra.mrb[0].mxu0 %v3042
      %v3188 = vpop.f32.mrb[0].mxu0
      %v3189 = vadd.f32 0.0, %v3188
      %v3190 = vpop.f32.mrb[0].mxu0
      %v3191 = vpop.f32.mrb[0].mxu0
      %v3192 = vadd.f32 0.0, %v3191
      %v3193 = vpop.f32.mrb[0].mxu0
      %3194 = vmatprep.mubr.bf16.mxu0 0
      %3195 = vmatmul.mubr.bf16.gmra.mrb[0].mxu0 %v3045
      %v3196 = vpop.f32.mrb[0].mxu0
      %v3197 = vadd.f32 0.0, %v3196
      %v3198 = vpop.f32.mrb[0].mxu0
      %v3199 = vpop.f32.mrb[0].mxu0
      %v3200 = vadd.f32 0.0, %v3199
      %v3201 = vpop.f32.mrb[0].mxu0
      %3202 = vmatprep.mubr.bf16.mxu0 0
      %3203 = vmatmul.mubr.bf16.gmra.mrb[0].mxu0 %v3048
      %v3204 = vpop.f32.mrb[0].mxu0
      %v3205 = vadd.f32 0.0, %v3204
      %v3206 = vpop.f32.mrb[0].mxu0
      %v3207 = vpop.f32.mrb[0].mxu0
      %v3208 = vadd.f32 0.0, %v3207
      %v3209 = vpop.f32.mrb[0].mxu0
      %3210 = vmatprep.mubr.bf16.mxu0 0
      %3211 = vmatmul.mubr.bf16.gmra.mrb[0].mxu0 %v3051
      %v3212 = vpop.f32.mrb[0].mxu0
      %v3213 = vadd.f32 0.0, %v3212
      %v3214 = vpop.f32.mrb[0].mxu0
      %v3215 = vpop.f32.mrb[0].mxu0
      %v3216 = vadd.f32 0.0, %v3215
      %v3217 = vpop.f32.mrb[0].mxu0
      %3218 = vmatprep.mubr.bf16.mxu0 0
      %3219 = vmatmul.mubr.bf16.gmra.mrb[0].mxu0 %v3054
      %v3220 = vpop.f32.mrb[0].mxu0
      %v3221 = vadd.f32 0.0, %v3220
      %v3222 = vpop.f32.mrb[0].mxu0
      %v3223 = vpop.f32.mrb[0].mxu0
      %v3224 = vadd.f32 0.0, %v3223
      %v3225 = vpop.f32.mrb[0].mxu0
      %3226 = vmatprep.mubr.bf16.mxu0 0
      %3227 = vmatmul.mubr.bf16.gmra.mrb[0].mxu0 %v3057
      %v3228 = vpop.f32.mrb[0].mxu0
      %v3229 = vadd.f32 0.0, %v3228
      %v3230 = vpop.f32.mrb[0].mxu0
      %v3231 = vpop.f32.mrb[0].mxu0
      %v3232 = vadd.f32 0.0, %v3231
      %v3233 = vpop.f32.mrb[0].mxu0
      %3234 = vmatprep.mubr.bf16.mxu0 0
      %3235 = vmatmul.mubr.bf16.gmra.mrb[0].mxu0 %v3060
      %v3236 = vpop.f32.mrb[0].mxu0
      %v3237 = vadd.f32 0.0, %v3236
      %v3238 = vpop.f32.mrb[0].mxu0
      %v3239 = vpop.f32.mrb[0].mxu0
      %v3240 = vadd.f32 0.0, %v3239
      %v3241 = vpop.f32.mrb[0].mxu0
      %3242 = vmatprep.mubr.bf16.mxu0 0
      %3243 = vmatmul.mubr.bf16.gmra.mrb[0].mxu0 %v3063
      %v3244 = vpop.f32.mrb[0].mxu0
      %v3245 = vadd.f32 0.0, %v3244
      %v3246 = vpop.f32.mrb[0].mxu0
      %v3247 = vpop.f32.mrb[0].mxu0
      %v3248 = vadd.f32 0.0, %v3247
      %v3249 = vpop.f32.mrb[0].mxu0
      %3250 = vmatprep.mubr.bf16.mxu0 0
      %3251 = vmatmul.mubr.bf16.gmra.mrb[0].mxu0 %v3066
      %v3252 = vpop.f32.mrb[0].mxu0
      %v3253 = vadd.f32 0.0, %v3252
      %v3254 = vpop.f32.mrb[0].mxu0
      %v3255 = vpop.f32.mrb[0].mxu0
      %v3256 = vadd.f32 0.0, %v3255
      %v3257 = vpop.f32.mrb[0].mxu0
      %3258 = vmatprep.mubr.bf16.mxu0 0
      %3259 = vmatmul.mubr.bf16.gmra.mrb[0].mxu0 %v3069
      %v3260 = vpop.f32.mrb[0].mxu0
      %v3261 = vadd.f32 0.0, %v3260
      %v3262 = vpop.f32.mrb[0].mxu0
      %v3263 = vpop.f32.mrb[0].mxu0
      %v3264 = vadd.f32 0.0, %v3263
      %v3265 = vpop.f32.mrb[0].mxu0
      %3266 = vmatprep.mubr.bf16.mxu0 0
      %3267 = vmatmul.mubr.bf16.gmra.mrb[0].mxu0 %v3072
      %v3268 = vpop.f32.mrb[0].mxu0
      %v3269 = vadd.f32 0.0, %v3268
      %v3270 = vpop.f32.mrb[0].mxu0
      %v3271 = vpop.f32.mrb[0].mxu0
      %v3272 = vpop.f32.mrb[0].mxu0
      %3273 = vdwg.mxu0
      %v3274 = vadd.f32 %v2768, %v3109
      %v3275 = vadd.f32 %v2769, %v3112
      %v3276 = vadd.f32 %v2770, %v3117
      %v3277 = vadd.f32 %v2771, %v3120
      %v3278 = vadd.f32 %v2772, %v3125
      %v3279 = vadd.f32 %v2773, %v3128
      %v3280 = vadd.f32 %v2774, %v3133
      %v3281 = vadd.f32 %v2775, %v3136
      %v3282 = vadd.f32 %v2776, %v3141
      %v3283 = vadd.f32 %v2777, %v3144
      %v3284 = vadd.f32 %v2778, %v3149
      %v3285 = vadd.f32 %v2779, %v3152
      %v3286 = vadd.f32 %v2780, %v3157
      %v3287 = vadd.f32 %v2781, %v3160
      %v3288 = vadd.f32 %v2782, %v3165
      %v3289 = vadd.f32 %v2783, %v3168
      %v3290 = vadd.f32 %v2784, %v3173
      %v3291 = vadd.f32 %v2785, %v3176
      %v3292 = vadd.f32 %v2786, %v3181
      %v3293 = vadd.f32 %v2787, %v3184
      %v3294 = vadd.f32 %v2788, %v3189
      %v3295 = vadd.f32 %v2789, %v3192
      %v3296 = vadd.f32 %v2790, %v3197
      %v3297 = vadd.f32 %v2791, %v3200
      %v3298 = vadd.f32 %v2792, %v3205
      %v3299 = vadd.f32 %v2793, %v3208
      %v3300 = vadd.f32 %v2794, %v3213
      %v3301 = vadd.f32 %v2795, %v3216
      %v3302 = vadd.f32 %v2796, %v3221
      %v3303 = vadd.f32 %v2797, %v3224
      %v3304 = vadd.f32 %v2798, %v3229
      %v3305 = vadd.f32 %v2799, %v3232
      %v3306 = vadd.f32 %v2800, %v3237
      %v3307 = vadd.f32 %v2801, %v3240
      %v3308 = vadd.f32 %v2802, %v3245
      %v3309 = vadd.f32 %v2803, %v3248
      %v3310 = vadd.f32 %v2804, %v3253
      %v3311 = vadd.f32 %v2805, %v3256
      %v3312 = vadd.f32 %v2806, %v3261
      %v3313 = vadd.f32 %v2807, %v3264
      %v3314 = vadd.f32 %v2808, %v3269
      %v3315 = vld [vmem:[%s192 + $0x10] sm:$0xc]
      %v3316 = vld [vmem:[%s192 + $0x14] sm:$0xf]
      %v3317 = vld [vmem:[%s192 + $0x18] sm:$0xf]
      %v3318 = vld [vmem:[%s192 + $0x1c] sm:$0xf]
      %v3319 = vld [vmem:[%s192 + $0x20] sm:$0xf]
      %v3320 = vld [vmem:[%s192 + $0x24] sm:$0xf]
      %v3321 = vld [vmem:[%s192 + $0x28] sm:$0xf]
      %v3322 = vld [vmem:[%s192 + $0x2c] sm:$0xf]
      %v3323 = vld [vmem:[%s192 + $0x30] sm:$0xf]
      %v3324 = vld [vmem:[%s192 + $0x34] sm:$0xf]
      %v3325 = vld [vmem:[%s192 + $0x38] sm:$0xf]
      %v3326 = vld [vmem:[%s192 + $0x3c] sm:$0xf]
      %v3327 = vld [vmem:[%s192 + $0x40] sm:$0xf]
      %v3328 = vld [vmem:[%s192 + $0x44] sm:$0xf]
      %v3329 = vld [vmem:[%s192 + $0x48] sm:$0xf]
      %v3330 = vld [vmem:[%s192 + $0x4c] sm:$0xf]
      %v3331 = vld [vmem:[%s192 + $0x50] sm:$0xf]
      %v3332 = vld [vmem:[%s192 + $0x54] sm:$0xf]
      %v3333 = vld [vmem:[%s192 + $0x58] sm:$0xf]
      %v3334 = vld [vmem:[%s192 + $0x5c] sm:$0xf]
      %v3335 = vld [vmem:[%s192 + $0x60] sm:$0xf]
      %v3336 = vld [vmem:[%s192 + $0x64] sm:$0xf]
      %v3337 = vld [vmem:[%s192 + $0x68] sm:$0xf]
      %v3338 = vld [vmem:[%s192 + $0x6c] sm:$0xf]
      %v3339 = vld [vmem:[%s192 + $0x70] sm:$0xf]
      %v3340 = vld [vmem:[%s192 + $0x74] sm:$0xf]
      %v3341 = vld [vmem:[%s192 + $0x78] sm:$0xf]
      %v3342 = vld [vmem:[%s192 + $0x7c] sm:$0xf]
      %v3343 = vld [vmem:[%s192 + $0x80] sm:$0xf]
      %v3344 = vld [vmem:[%s192 + $0x84] sm:$0xf]
      %v3345 = vld [vmem:[%s192 + $0x88] sm:$0xf]
      %v3346 = vld [vmem:[%s192 + $0x8c] sm:$0xf]
      %v3347 = vld [vmem:[%s192 + $0x90] sm:$0xf]
      %v3348 = vld [vmem:[%s192 + $0x94] sm:$0xf]
      %v3349 = vld [vmem:[%s192 + $0x98] sm:$0xf]
      %v3350 = vld [vmem:[%s192 + $0x9c] sm:$0xf]
      %v3351 = vld [vmem:[%s192 + $0xa0] sm:$0xf]
      %v3352 = vld [vmem:[%s192 + $0xa4] sm:$0xf]
      %v3353 = vld [vmem:[%s192 + $0xa8] sm:$0xf]
      %v3354 = vld [vmem:[%s192 + $0xac] sm:$0xf]
      %v3355 = vld [vmem:[%s192 + $0xb0] sm:$0xf]
      %v3356 = vld [vmem:[%s192 + $0xb4] sm:$0x1]
      %s3357 = scalar_lea.vmem %s1, 112
      %v3358 = vld [vmem:[%s3357] sm:$0xf]
      %v3359 = vld [vmem:[%s3357 + $0x4] sm:$0xf]
      %v3360 = vld [vmem:[%s3357 + $0x8] sm:$0xf]
      %v3361 = vld [vmem:[%s3357 + $0xc] sm:$0xf]
      %v3404 = vunpack.c.l.b16 %v3315
      %v3405 = vunpack.c.l.b16 %v3316
      %v3406 = vunpack.c.l.b16 %v3317
      %v3407 = vunpack.c.l.b16 %v3318
      %v3408 = vunpack.c.l.b16 %v3319
      %v3409 = vunpack.c.l.b16 %v3320
      %v3410 = vunpack.c.l.b16 %v3321
      %v3411 = vunpack.c.l.b16 %v3322
      %v3412 = vunpack.c.l.b16 %v3323
      %v3413 = vunpack.c.l.b16 %v3324
      %v3414 = vunpack.c.l.b16 %v3325
      %v3415 = vunpack.c.l.b16 %v3326
      %v3416 = vunpack.c.l.b16 %v3327
      %v3417 = vunpack.c.l.b16 %v3328
      %v3418 = vunpack.c.l.b16 %v3329
      %v3419 = vunpack.c.l.b16 %v3330
      %v3420 = vunpack.c.l.b16 %v3331
      %v3421 = vunpack.c.l.b16 %v3332
      %v3422 = vunpack.c.l.b16 %v3333
      %v3423 = vunpack.c.l.b16 %v3334
      %v3424 = vunpack.c.l.b16 %v3335
      %v3425 = vunpack.c.l.b16 %v3336
      %v3426 = vunpack.c.l.b16 %v3337
      %v3427 = vunpack.c.l.b16 %v3338
      %v3428 = vunpack.c.l.b16 %v3339
      %v3429 = vunpack.c.l.b16 %v3340
      %v3430 = vunpack.c.l.b16 %v3341
      %v3431 = vunpack.c.l.b16 %v3342
      %v3432 = vunpack.c.l.b16 %v3343
      %v3433 = vunpack.c.l.b16 %v3344
      %v3434 = vunpack.c.l.b16 %v3345
      %v3435 = vunpack.c.l.b16 %v3346
      %v3436 = vunpack.c.l.b16 %v3347
      %v3437 = vunpack.c.l.b16 %v3348
      %v3438 = vunpack.c.l.b16 %v3349
      %v3439 = vunpack.c.l.b16 %v3350
      %v3440 = vunpack.c.l.b16 %v3351
      %v3441 = vunpack.c.l.b16 %v3352
      %v3442 = vunpack.c.l.b16 %v3353
      %v3443 = vunpack.c.l.b16 %v3354
      %v3444 = vunpack.c.l.b16 %v3355
      %v3445 = vunpack.c.l.b16 %v3356
      %v3446 = vpack.c.b16 %v3405, %v3404
      %v3447 = vpack.c.b16 %v3407, %v3406
      %v3448 = vpack.c.b16 %v3409, %v3408
      %v3449 = vpack.c.b16 %v3411, %v3410
      %v3450 = vpack.c.b16 %v3413, %v3412
      %v3451 = vpack.c.b16 %v3415, %v3414
      %v3452 = vpack.c.b16 %v3417, %v3416
      %v3453 = vpack.c.b16 %v3419, %v3418
      %v3454 = vpack.c.b16 %v3421, %v3420
      %v3455 = vpack.c.b16 %v3423, %v3422
      %v3456 = vpack.c.b16 %v3425, %v3424
      %v3457 = vpack.c.b16 %v3427, %v3426
      %v3458 = vpack.c.b16 %v3429, %v3428
      %v3459 = vpack.c.b16 %v3431, %v3430
      %v3460 = vpack.c.b16 %v3433, %v3432
      %v3461 = vpack.c.b16 %v3435, %v3434
      %v3462 = vpack.c.b16 %v3437, %v3436
      %v3463 = vpack.c.b16 %v3439, %v3438
      %v3464 = vpack.c.b16 %v3441, %v3440
      %v3465 = vpack.c.b16 %v3443, %v3442
      %v3466 = vpack.c.b16 %v3445, %v3444
      %vm3467 = vsmask.f32 5376
      %v3469 = vshrl.u32 %v3446, 16
      %v3471 = vrot.slane %v3469, 2
      %v3472 = vshll.u32 %v3446, 16
      %v3474 = vrot.slane %v3472, 3
      %v3475 = vor.u32 %v3471, %v3474
      %v3477 = vshrl.u32 %v3447, 16
      %v3479 = vrot.slane %v3477, 2
      %v3480 = vshll.u32 %v3447, 16
      %v3482 = vrot.slane %v3480, 3
      %v3483 = vor.u32 %v3479, %v3482
      %v3484 = vsel %vm3467, %v3475, %v3483
      %v3486 = vshrl.u32 %v3448, 16
      %v3488 = vrot.slane %v3486, 2
      %v3489 = vshll.u32 %v3448, 16
      %v3491 = vrot.slane %v3489, 3
      %v3492 = vor.u32 %v3488, %v3491
      %v3493 = vsel %vm3467, %v3483, %v3492
      %v3495 = vshrl.u32 %v3449, 16
      %v3497 = vrot.slane %v3495, 2
      %v3498 = vshll.u32 %v3449, 16
      %v3500 = vrot.slane %v3498, 3
      %v3501 = vor.u32 %v3497, %v3500
      %v3502 = vsel %vm3467, %v3492, %v3501
      %v3504 = vshrl.u32 %v3450, 16
      %v3506 = vrot.slane %v3504, 2
      %v3507 = vshll.u32 %v3450, 16
      %v3509 = vrot.slane %v3507, 3
      %v3510 = vor.u32 %v3506, %v3509
      %v3511 = vsel %vm3467, %v3501, %v3510
      %v3513 = vshrl.u32 %v3451, 16
      %v3515 = vrot.slane %v3513, 2
      %v3516 = vshll.u32 %v3451, 16
      %v3518 = vrot.slane %v3516, 3
      %v3519 = vor.u32 %v3515, %v3518
      %v3520 = vsel %vm3467, %v3510, %v3519
      %v3522 = vshrl.u32 %v3452, 16
      %v3524 = vrot.slane %v3522, 2
      %v3525 = vshll.u32 %v3452, 16
      %v3527 = vrot.slane %v3525, 3
      %v3528 = vor.u32 %v3524, %v3527
      %v3529 = vsel %vm3467, %v3519, %v3528
      %v3531 = vshrl.u32 %v3453, 16
      %v3533 = vrot.slane %v3531, 2
      %v3534 = vshll.u32 %v3453, 16
      %v3536 = vrot.slane %v3534, 3
      %v3537 = vor.u32 %v3533, %v3536
      %v3538 = vsel %vm3467, %v3528, %v3537
      %v3540 = vshrl.u32 %v3454, 16
      %v3542 = vrot.slane %v3540, 2
      %v3543 = vshll.u32 %v3454, 16
      %v3545 = vrot.slane %v3543, 3
      %v3546 = vor.u32 %v3542, %v3545
      %v3547 = vsel %vm3467, %v3537, %v3546
      %v3549 = vshrl.u32 %v3455, 16
      %v3551 = vrot.slane %v3549, 2
      %v3552 = vshll.u32 %v3455, 16
      %v3554 = vrot.slane %v3552, 3
      %v3555 = vor.u32 %v3551, %v3554
      %v3556 = vsel %vm3467, %v3546, %v3555
      %v3558 = vshrl.u32 %v3456, 16
      %v3560 = vrot.slane %v3558, 2
      %v3561 = vshll.u32 %v3456, 16
      %v3563 = vrot.slane %v3561, 3
      %v3564 = vor.u32 %v3560, %v3563
      %v3565 = vsel %vm3467, %v3555, %v3564
      %v3567 = vshrl.u32 %v3457, 16
      %v3569 = vrot.slane %v3567, 2
      %v3570 = vshll.u32 %v3457, 16
      %v3572 = vrot.slane %v3570, 3
      %v3573 = vor.u32 %v3569, %v3572
      %v3574 = vsel %vm3467, %v3564, %v3573
      %v3576 = vshrl.u32 %v3458, 16
      %v3578 = vrot.slane %v3576, 2
      %v3579 = vshll.u32 %v3458, 16
      %v3581 = vrot.slane %v3579, 3
      %v3582 = vor.u32 %v3578, %v3581
      %v3583 = vsel %vm3467, %v3573, %v3582
      %v3585 = vshrl.u32 %v3459, 16
      %v3587 = vrot.slane %v3585, 2
      %v3588 = vshll.u32 %v3459, 16
      %v3590 = vrot.slane %v3588, 3
      %v3591 = vor.u32 %v3587, %v3590
      %v3592 = vsel %vm3467, %v3582, %v3591
      %v3594 = vshrl.u32 %v3460, 16
      %v3596 = vrot.slane %v3594, 2
      %v3597 = vshll.u32 %v3460, 16
      %v3599 = vrot.slane %v3597, 3
      %v3600 = vor.u32 %v3596, %v3599
      %v3601 = vsel %vm3467, %v3591, %v3600
      %v3603 = vshrl.u32 %v3461, 16
      %v3605 = vrot.slane %v3603, 2
      %v3606 = vshll.u32 %v3461, 16
      %v3608 = vrot.slane %v3606, 3
      %v3609 = vor.u32 %v3605, %v3608
      %v3610 = vsel %vm3467, %v3600, %v3609
      %v3612 = vshrl.u32 %v3462, 16
      %v3614 = vrot.slane %v3612, 2
      %v3615 = vshll.u32 %v3462, 16
      %v3617 = vrot.slane %v3615, 3
      %v3618 = vor.u32 %v3614, %v3617
      %v3619 = vsel %vm3467, %v3609, %v3618
      %v3621 = vshrl.u32 %v3463, 16
      %v3623 = vrot.slane %v3621, 2
      %v3624 = vshll.u32 %v3463, 16
      %v3626 = vrot.slane %v3624, 3
      %v3627 = vor.u32 %v3623, %v3626
      %v3628 = vsel %vm3467, %v3618, %v3627
      %v3630 = vshrl.u32 %v3464, 16
      %v3632 = vrot.slane %v3630, 2
      %v3633 = vshll.u32 %v3464, 16
      %v3635 = vrot.slane %v3633, 3
      %v3636 = vor.u32 %v3632, %v3635
      %v3637 = vsel %vm3467, %v3627, %v3636
      %v3639 = vshrl.u32 %v3465, 16
      %v3641 = vrot.slane %v3639, 2
      %v3642 = vshll.u32 %v3465, 16
      %v3644 = vrot.slane %v3642, 3
      %v3645 = vor.u32 %v3641, %v3644
      %v3646 = vsel %vm3467, %v3636, %v3645
      %v3648 = vshrl.u32 %v3466, 16
      %v3650 = vrot.slane %v3648, 2
      %v3651 = vshll.u32 %v3466, 16
      %v3653 = vrot.slane %v3651, 3
      %v3654 = vor.u32 %v3650, %v3653
      %v3655 = vsel %vm3467, %v3645, %v3654
      %v3660 = vunpack.c.l.b16 %v3358
      %v3661 = vunpack.c.l.b16 %v3359
      %v3662 = vunpack.c.l.b16 %v3360
      %v3663 = vunpack.c.l.b16 %v3361
      %v3664 = vpack.c.b16 %v3661, %v3660
      %v3665 = vpack.c.b16 %v3663, %v3662
      %v3669 = vsel %vm533, %v3484, 0
      %v3672 = vsel %vm533, %v3493, 0
      %v3675 = vsel %vm533, %v3502, 0
      %v3678 = vsel %vm533, %v3511, 0
      %v3681 = vsel %vm533, %v3520, 0
      %v3684 = vsel %vm533, %v3529, 0
      %v3687 = vsel %vm533, %v3538, 0
      %v3690 = vsel %vm533, %v3547, 0
      %v3693 = vsel %vm533, %v3556, 0
      %v3696 = vsel %vm533, %v3565, 0
      %v3699 = vsel %vm533, %v3574, 0
      %v3702 = vsel %vm533, %v3583, 0
      %v3705 = vsel %vm533, %v3592, 0
      %v3708 = vsel %vm533, %v3601, 0
      %v3711 = vsel %vm533, %v3610, 0
      %v3714 = vsel %vm533, %v3619, 0
      %v3717 = vsel %vm533, %v3628, 0
      %v3720 = vsel %vm533, %v3637, 0
      %v3723 = vsel %vm533, %v3646, 0
      %v3726 = vsel %vm533, %v3655, 0
      %v3729 = vsel %vm533, %v3654, 0
      %3731 = vmatprep.subr.bf16.mxu0 0
      %3732 = vmatpush1.bf16.msra.mxu0 %v3664
      %3733 = vmatprep.subr.bf16.mxu0 0
      %3734 = vmatpush1.bf16.msra.mxu0 %v3665
      %3735 = vmatprep.subr.bf16.mxu0 0
      %3736 = vmatpush1.bf16.msra.mxu0 0
      %3737 = vmatprep.subr.bf16.mxu0 0
      %3738 = vmatpush1.bf16.msra.mxu0 0
      %3739 = vmatprep.subr.bf16.mxu0 0
      %3740 = vmatpush1.bf16.msra.mxu0 0
      %3741 = vmatprep.subr.bf16.mxu0 0
      %3742 = vmatpush1.bf16.msra.mxu0 0
      %3743 = vmatprep.subr.bf16.mxu0 0
      %3744 = vmatpush1.bf16.msra.mxu0 0
      %3745 = vmatprep.subr.bf16.mxu0 0
      %3746 = vmatpush1.bf16.msra.mxu0 0
      %3747 = vmatprep.subr.bf16.mxu0 0
      %3748 = vmatpush1.bf16.msra.mxu0 0
      %3749 = vmatprep.subr.bf16.mxu0 0
      %3750 = vmatpush1.bf16.msra.mxu0 0
      %3751 = vmatprep.subr.bf16.mxu0 0
      %3752 = vmatpush1.bf16.msra.mxu0 0
      %3753 = vmatprep.subr.bf16.mxu0 0
      %3754 = vmatpush1.bf16.msra.mxu0 0
      %3755 = vmatprep.subr.bf16.mxu0 0
      %3756 = vmatpush1.bf16.msra.mxu0 0
      %3757 = vmatprep.subr.bf16.mxu0 0
      %3758 = vmatpush1.bf16.msra.mxu0 0
      %3759 = vmatprep.subr.bf16.mxu0 0
      %3760 = vmatpush1.bf16.msra.mxu0 0
      %3761 = vmatprep.subr.bf16.mxu0 0
      %3762 = vmatpush1.bf16.msra.mxu0 0
      %3763 = vmatprep.mubr.bf16.mxu0 0
      %3764 = vmatmul.mubr.bf16.gmra.mrb[0].mxu0 %v3669
      %v3765 = vpop.f32.mrb[0].mxu0
      %v3766 = vadd.f32 0.0, %v3765
      %v3767 = vpop.f32.mrb[0].mxu0
      %v3768 = vpop.f32.mrb[0].mxu0
      %v3769 = vadd.f32 0.0, %v3768
      %v3770 = vpop.f32.mrb[0].mxu0
      %3771 = vmatprep.mubr.bf16.mxu0 0
      %3772 = vmatmul.mubr.bf16.gmra.mrb[0].mxu0 %v3672
      %v3773 = vpop.f32.mrb[0].mxu0
      %v3774 = vadd.f32 0.0, %v3773
      %v3775 = vpop.f32.mrb[0].mxu0
      %v3776 = vpop.f32.mrb[0].mxu0
      %v3777 = vadd.f32 0.0, %v3776
      %v3778 = vpop.f32.mrb[0].mxu0
      %3779 = vmatprep.mubr.bf16.mxu0 0
      %3780 = vmatmul.mubr.bf16.gmra.mrb[0].mxu0 %v3675
      %v3781 = vpop.f32.mrb[0].mxu0
      %v3782 = vadd.f32 0.0, %v3781
      %v3783 = vpop.f32.mrb[0].mxu0
      %v3784 = vpop.f32.mrb[0].mxu0
      %v3785 = vadd.f32 0.0, %v3784
      %v3786 = vpop.f32.mrb[0].mxu0
      %3787 = vmatprep.mubr.bf16.mxu0 0
      %3788 = vmatmul.mubr.bf16.gmra.mrb[0].mxu0 %v3678
      %v3789 = vpop.f32.mrb[0].mxu0
      %v3790 = vadd.f32 0.0, %v3789
      %v3791 = vpop.f32.mrb[0].mxu0
      %v3792 = vpop.f32.mrb[0].mxu0
      %v3793 = vadd.f32 0.0, %v3792
      %v3794 = vpop.f32.mrb[0].mxu0
      %3795 = vmatprep.mubr.bf16.mxu0 0
      %3796 = vmatmul.mubr.bf16.gmra.mrb[0].mxu0 %v3681
      %v3797 = vpop.f32.mrb[0].mxu0
      %v3798 = vadd.f32 0.0, %v3797
      %v3799 = vpop.f32.mrb[0].mxu0
      %v3800 = vpop.f32.mrb[0].mxu0
      %v3801 = vadd.f32 0.0, %v3800
      %v3802 = vpop.f32.mrb[0].mxu0
      %3803 = vmatprep.mubr.bf16.mxu0 0
      %3804 = vmatmul.mubr.bf16.gmra.mrb[0].mxu0 %v3684
      %v3805 = vpop.f32.mrb[0].mxu0
      %v3806 = vadd.f32 0.0, %v3805
      %v3807 = vpop.f32.mrb[0].mxu0
      %v3808 = vpop.f32.mrb[0].mxu0
      %v3809 = vadd.f32 0.0, %v3808
      %v3810 = vpop.f32.mrb[0].mxu0
      %3811 = vmatprep.mubr.bf16.mxu0 0
      %3812 = vmatmul.mubr.bf16.gmra.mrb[0].mxu0 %v3687
      %v3813 = vpop.f32.mrb[0].mxu0
      %v3814 = vadd.f32 0.0, %v3813
      %v3815 = vpop.f32.mrb[0].mxu0
      %v3816 = vpop.f32.mrb[0].mxu0
      %v3817 = vadd.f32 0.0, %v3816
      %v3818 = vpop.f32.mrb[0].mxu0
      %3819 = vmatprep.mubr.bf16.mxu0 0
      %3820 = vmatmul.mubr.bf16.gmra.mrb[0].mxu0 %v3690
      %v3821 = vpop.f32.mrb[0].mxu0
      %v3822 = vadd.f32 0.0, %v3821
      %v3823 = vpop.f32.mrb[0].mxu0
      %v3824 = vpop.f32.mrb[0].mxu0
      %v3825 = vadd.f32 0.0, %v3824
      %v3826 = vpop.f32.mrb[0].mxu0
      %3827 = vmatprep.mubr.bf16.mxu0 0
      %3828 = vmatmul.mubr.bf16.gmra.mrb[0].mxu0 %v3693
      %v3829 = vpop.f32.mrb[0].mxu0
      %v3830 = vadd.f32 0.0, %v3829
      %v3831 = vpop.f32.mrb[0].mxu0
      %v3832 = vpop.f32.mrb[0].mxu0
      %v3833 = vadd.f32 0.0, %v3832
      %v3834 = vpop.f32.mrb[0].mxu0
      %3835 = vmatprep.mubr.bf16.mxu0 0
      %3836 = vmatmul.mubr.bf16.gmra.mrb[0].mxu0 %v3696
      %v3837 = vpop.f32.mrb[0].mxu0
      %v3838 = vadd.f32 0.0, %v3837
      %v3839 = vpop.f32.mrb[0].mxu0
      %v3840 = vpop.f32.mrb[0].mxu0
      %v3841 = vadd.f32 0.0, %v3840
      %v3842 = vpop.f32.mrb[0].mxu0
      %3843 = vmatprep.mubr.bf16.mxu0 0
      %3844 = vmatmul.mubr.bf16.gmra.mrb[0].mxu0 %v3699
      %v3845 = vpop.f32.mrb[0].mxu0
      %v3846 = vadd.f32 0.0, %v3845
      %v3847 = vpop.f32.mrb[0].mxu0
      %v3848 = vpop.f32.mrb[0].mxu0
      %v3849 = vadd.f32 0.0, %v3848
      %v3850 = vpop.f32.mrb[0].mxu0
      %3851 = vmatprep.mubr.bf16.mxu0 0
      %3852 = vmatmul.mubr.bf16.gmra.mrb[0].mxu0 %v3702
      %v3853 = vpop.f32.mrb[0].mxu0
      %v3854 = vadd.f32 0.0, %v3853
      %v3855 = vpop.f32.mrb[0].mxu0
      %v3856 = vpop.f32.mrb[0].mxu0
      %v3857 = vadd.f32 0.0, %v3856
      %v3858 = vpop.f32.mrb[0].mxu0
      %3859 = vmatprep.mubr.bf16.mxu0 0
      %3860 = vmatmul.mubr.bf16.gmra.mrb[0].mxu0 %v3705
      %v3861 = vpop.f32.mrb[0].mxu0
      %v3862 = vadd.f32 0.0, %v3861
      %v3863 = vpop.f32.mrb[0].mxu0
      %v3864 = vpop.f32.mrb[0].mxu0
      %v3865 = vadd.f32 0.0, %v3864
      %v3866 = vpop.f32.mrb[0].mxu0
      %3867 = vmatprep.mubr.bf16.mxu0 0
      %3868 = vmatmul.mubr.bf16.gmra.mrb[0].mxu0 %v3708
      %v3869 = vpop.f32.mrb[0].mxu0
      %v3870 = vadd.f32 0.0, %v3869
      %v3871 = vpop.f32.mrb[0].mxu0
      %v3872 = vpop.f32.mrb[0].mxu0
      %v3873 = vadd.f32 0.0, %v3872
      %v3874 = vpop.f32.mrb[0].mxu0
      %3875 = vmatprep.mubr.bf16.mxu0 0
      %3876 = vmatmul.mubr.bf16.gmra.mrb[0].mxu0 %v3711
      %v3877 = vpop.f32.mrb[0].mxu0
      %v3878 = vadd.f32 0.0, %v3877
      %v3879 = vpop.f32.mrb[0].mxu0
      %v3880 = vpop.f32.mrb[0].mxu0
      %v3881 = vadd.f32 0.0, %v3880
      %v3882 = vpop.f32.mrb[0].mxu0
      %3883 = vmatprep.mubr.bf16.mxu0 0
      %3884 = vmatmul.mubr.bf16.gmra.mrb[0].mxu0 %v3714
      %v3885 = vpop.f32.mrb[0].mxu0
      %v3886 = vadd.f32 0.0, %v3885
      %v3887 = vpop.f32.mrb[0].mxu0
      %v3888 = vpop.f32.mrb[0].mxu0
      %v3889 = vadd.f32 0.0, %v3888
      %v3890 = vpop.f32.mrb[0].mxu0
      %3891 = vmatprep.mubr.bf16.mxu0 0
      %3892 = vmatmul.mubr.bf16.gmra.mrb[0].mxu0 %v3717
      %v3893 = vpop.f32.mrb[0].mxu0
      %v3894 = vadd.f32 0.0, %v3893
      %v3895 = vpop.f32.mrb[0].mxu0
      %v3896 = vpop.f32.mrb[0].mxu0
      %v3897 = vadd.f32 0.0, %v3896
      %v3898 = vpop.f32.mrb[0].mxu0
      %3899 = vmatprep.mubr.bf16.mxu0 0
      %3900 = vmatmul.mubr.bf16.gmra.mrb[0].mxu0 %v3720
      %v3901 = vpop.f32.mrb[0].mxu0
      %v3902 = vadd.f32 0.0, %v3901
      %v3903 = vpop.f32.mrb[0].mxu0
      %v3904 = vpop.f32.mrb[0].mxu0
      %v3905 = vadd.f32 0.0, %v3904
      %v3906 = vpop.f32.mrb[0].mxu0
      %3907 = vmatprep.mubr.bf16.mxu0 0
      %3908 = vmatmul.mubr.bf16.gmra.mrb[0].mxu0 %v3723
      %v3909 = vpop.f32.mrb[0].mxu0
      %v3910 = vadd.f32 0.0, %v3909
      %v3911 = vpop.f32.mrb[0].mxu0
      %v3912 = vpop.f32.mrb[0].mxu0
      %v3913 = vadd.f32 0.0, %v3912
      %v3914 = vpop.f32.mrb[0].mxu0
      %3915 = vmatprep.mubr.bf16.mxu0 0
      %3916 = vmatmul.mubr.bf16.gmra.mrb[0].mxu0 %v3726
      %v3917 = vpop.f32.mrb[0].mxu0
      %v3918 = vadd.f32 0.0, %v3917
      %v3919 = vpop.f32.mrb[0].mxu0
      %v3920 = vpop.f32.mrb[0].mxu0
      %v3921 = vadd.f32 0.0, %v3920
      %v3922 = vpop.f32.mrb[0].mxu0
      %3923 = vmatprep.mubr.bf16.mxu0 0
      %3924 = vmatmul.mubr.bf16.gmra.mrb[0].mxu0 %v3729
      %v3925 = vpop.f32.mrb[0].mxu0
      %v3926 = vadd.f32 0.0, %v3925
      %v3927 = vpop.f32.mrb[0].mxu0
      %v3928 = vpop.f32.mrb[0].mxu0
      %v3929 = vpop.f32.mrb[0].mxu0
      %3930 = vdwg.mxu0
      %v3931 = vadd.f32 %v3274, %v3766
      %v3932 = vadd.f32 %v3275, %v3769
      %v3933 = vadd.f32 %v3276, %v3774
      %v3934 = vadd.f32 %v3277, %v3777
      %v3935 = vadd.f32 %v3278, %v3782
      %v3936 = vadd.f32 %v3279, %v3785
      %v3937 = vadd.f32 %v3280, %v3790
      %v3938 = vadd.f32 %v3281, %v3793
      %v3939 = vadd.f32 %v3282, %v3798
      %v3940 = vadd.f32 %v3283, %v3801
      %v3941 = vadd.f32 %v3284, %v3806
      %v3942 = vadd.f32 %v3285, %v3809
      %v3943 = vadd.f32 %v3286, %v3814
      %v3944 = vadd.f32 %v3287, %v3817
      %v3945 = vadd.f32 %v3288, %v3822
      %v3946 = vadd.f32 %v3289, %v3825
      %v3947 = vadd.f32 %v3290, %v3830
      %v3948 = vadd.f32 %v3291, %v3833
      %v3949 = vadd.f32 %v3292, %v3838
      %v3950 = vadd.f32 %v3293, %v3841
      %v3951 = vadd.f32 %v3294, %v3846
      %v3952 = vadd.f32 %v3295, %v3849
      %v3953 = vadd.f32 %v3296, %v3854
      %v3954 = vadd.f32 %v3297, %v3857
      %v3955 = vadd.f32 %v3298, %v3862
      %v3956 = vadd.f32 %v3299, %v3865
      %v3957 = vadd.f32 %v3300, %v3870
      %v3958 = vadd.f32 %v3301, %v3873
      %v3959 = vadd.f32 %v3302, %v3878
      %v3960 = vadd.f32 %v3303, %v3881
      %v3961 = vadd.f32 %v3304, %v3886
      %v3962 = vadd.f32 %v3305, %v3889
      %v3963 = vadd.f32 %v3306, %v3894
      %v3964 = vadd.f32 %v3307, %v3897
      %v3965 = vadd.f32 %v3308, %v3902
      %v3966 = vadd.f32 %v3309, %v3905
      %v3967 = vadd.f32 %v3310, %v3910
      %v3968 = vadd.f32 %v3311, %v3913
      %v3969 = vadd.f32 %v3312, %v3918
      %v3970 = vadd.f32 %v3313, %v3921
      %v3971 = vadd.f32 %v3314, %v3926
      %v3972 = vld [vmem:[%s192 + $0x10] sm:$0x8]
      %s3973 = scalar_lea.vmem %s1, 128
      %v3974 = vld [vmem:[%s3973] sm:$0xf]
      %v3975 = vld [vmem:[%s3973 + $0x4] sm:$0xf]
      %v3976 = vld [vmem:[%s3973 + $0x8] sm:$0xf]
      %v3977 = vld [vmem:[%s3973 + $0xc] sm:$0xf]
      %v3979 = vunpack.c.l.b16 %v3972
      %v3980 = vpack.c.b16 %v3405, %v3979
      %vm3981 = vcmask 1044480
      %v3982 = vrot.slane %v3980, 3
      %v3983 = vrot.slane %v3447, 3
      %v3984 = vsel %vm3981, %v3982, %v3983
      %v3985 = vrot.slane %v3448, 3
      %v3986 = vsel %vm3981, %v3983, %v3985
      %v3987 = vrot.slane %v3449, 3
      %v3988 = vsel %vm3981, %v3985, %v3987
      %v3989 = vrot.slane %v3450, 3
      %v3990 = vsel %vm3981, %v3987, %v3989
      %v3991 = vrot.slane %v3451, 3
      %v3992 = vsel %vm3981, %v3989, %v3991
      %v3993 = vrot.slane %v3452, 3
      %v3994 = vsel %vm3981, %v3991, %v3993
      %v3995 = vrot.slane %v3453, 3
      %v3996 = vsel %vm3981, %v3993, %v3995
      %v3997 = vrot.slane %v3454, 3
      %v3998 = vsel %vm3981, %v3995, %v3997
      %v3999 = vrot.slane %v3455, 3
      %v4000 = vsel %vm3981, %v3997, %v3999
      %v4001 = vrot.slane %v3456, 3
      %v4002 = vsel %vm3981, %v3999, %v4001
      %v4003 = vrot.slane %v3457, 3
      %v4004 = vsel %vm3981, %v4001, %v4003
      %v4005 = vrot.slane %v3458, 3
      %v4006 = vsel %vm3981, %v4003, %v4005
      %v4007 = vrot.slane %v3459, 3
      %v4008 = vsel %vm3981, %v4005, %v4007
      %v4009 = vrot.slane %v3460, 3
      %v4010 = vsel %vm3981, %v4007, %v4009
      %v4011 = vrot.slane %v3461, 3
      %v4012 = vsel %vm3981, %v4009, %v4011
      %v4013 = vrot.slane %v3462, 3
      %v4014 = vsel %vm3981, %v4011, %v4013
      %v4015 = vrot.slane %v3463, 3
      %v4016 = vsel %vm3981, %v4013, %v4015
      %v4017 = vrot.slane %v3464, 3
      %v4018 = vsel %vm3981, %v4015, %v4017
      %v4019 = vrot.slane %v3465, 3
      %v4020 = vsel %vm3981, %v4017, %v4019
      %v4021 = vrot.slane %v3466, 3
      %v4022 = vsel %vm3981, %v4019, %v4021
      %v4027 = vunpack.c.l.b16 %v3974
      %v4028 = vunpack.c.l.b16 %v3975
      %v4029 = vunpack.c.l.b16 %v3976
      %v4030 = vunpack.c.l.b16 %v3977
      %v4031 = vpack.c.b16 %v4028, %v4027
      %v4032 = vpack.c.b16 %v4030, %v4029
      %v4036 = vsel %vm533, %v3984, 0
      %v4039 = vsel %vm533, %v3986, 0
      %v4042 = vsel %vm533, %v3988, 0
      %v4045 = vsel %vm533, %v3990, 0
      %v4048 = vsel %vm533, %v3992, 0
      %v4051 = vsel %vm533, %v3994, 0
      %v4054 = vsel %vm533, %v3996, 0
      %v4057 = vsel %vm533, %v3998, 0
      %v4060 = vsel %vm533, %v4000, 0
      %v4063 = vsel %vm533, %v4002, 0
      %v4066 = vsel %vm533, %v4004, 0
      %v4069 = vsel %vm533, %v4006, 0
      %v4072 = vsel %vm533, %v4008, 0
      %v4075 = vsel %vm533, %v4010, 0
      %v4078 = vsel %vm533, %v4012, 0
      %v4081 = vsel %vm533, %v4014, 0
      %v4084 = vsel %vm533, %v4016, 0
      %v4087 = vsel %vm533, %v4018, 0
      %v4090 = vsel %vm533, %v4020, 0
      %v4093 = vsel %vm533, %v4022, 0
      %v4096 = vsel %vm533, %v4021, 0
      %4098 = vmatprep.subr.bf16.mxu0 0
      %4099 = vmatpush1.bf16.msra.mxu0 %v4031
      %4100 = vmatprep.subr.bf16.mxu0 0
      %4101 = vmatpush1.bf16.msra.mxu0 %v4032
      %4102 = vmatprep.subr.bf16.mxu0 0
      %4103 = vmatpush1.bf16.msra.mxu0 0
      %4104 = vmatprep.subr.bf16.mxu0 0
      %4105 = vmatpush1.bf16.msra.mxu0 0
      %4106 = vmatprep.subr.bf16.mxu0 0
      %4107 = vmatpush1.bf16.msra.mxu0 0
      %4108 = vmatprep.subr.bf16.mxu0 0
      %4109 = vmatpush1.bf16.msra.mxu0 0
      %4110 = vmatprep.subr.bf16.mxu0 0
      %4111 = vmatpush1.bf16.msra.mxu0 0
      %4112 = vmatprep.subr.bf16.mxu0 0
      %4113 = vmatpush1.bf16.msra.mxu0 0
      %4114 = vmatprep.subr.bf16.mxu0 0
      %4115 = vmatpush1.bf16.msra.mxu0 0
      %4116 = vmatprep.subr.bf16.mxu0 0
      %4117 = vmatpush1.bf16.msra.mxu0 0
      %4118 = vmatprep.subr.bf16.mxu0 0
      %4119 = vmatpush1.bf16.msra.mxu0 0
      %4120 = vmatprep.subr.bf16.mxu0 0
      %4121 = vmatpush1.bf16.msra.mxu0 0
      %4122 = vmatprep.subr.bf16.mxu0 0
      %4123 = vmatpush1.bf16.msra.mxu0 0
      %4124 = vmatprep.subr.bf16.mxu0 0
      %4125 = vmatpush1.bf16.msra.mxu0 0
      %4126 = vmatprep.subr.bf16.mxu0 0
      %4127 = vmatpush1.bf16.msra.mxu0 0
      %4128 = vmatprep.subr.bf16.mxu0 0
      %4129 = vmatpush1.bf16.msra.mxu0 0
      %4130 = vmatprep.mubr.bf16.mxu0 0
      %4131 = vmatmul.mubr.bf16.gmra.mrb[0].mxu0 %v4036
      %v4132 = vpop.f32.mrb[0].mxu0
      %v4133 = vadd.f32 0.0, %v4132
      %v4134 = vpop.f32.mrb[0].mxu0
      %v4135 = vpop.f32.mrb[0].mxu0
      %v4136 = vadd.f32 0.0, %v4135
      %v4137 = vpop.f32.mrb[0].mxu0
      %4138 = vmatprep.mubr.bf16.mxu0 0
      %4139 = vmatmul.mubr.bf16.gmra.mrb[0].mxu0 %v4039
      %v4140 = vpop.f32.mrb[0].mxu0
      %v4141 = vadd.f32 0.0, %v4140
      %v4142 = vpop.f32.mrb[0].mxu0
      %v4143 = vpop.f32.mrb[0].mxu0
      %v4144 = vadd.f32 0.0, %v4143
      %v4145 = vpop.f32.mrb[0].mxu0
      %4146 = vmatprep.mubr.bf16.mxu0 0
      %4147 = vmatmul.mubr.bf16.gmra.mrb[0].mxu0 %v4042
      %v4148 = vpop.f32.mrb[0].mxu0
      %v4149 = vadd.f32 0.0, %v4148
      %v4150 = vpop.f32.mrb[0].mxu0
      %v4151 = vpop.f32.mrb[0].mxu0
      %v4152 = vadd.f32 0.0, %v4151
      %v4153 = vpop.f32.mrb[0].mxu0
      %4154 = vmatprep.mubr.bf16.mxu0 0
      %4155 = vmatmul.mubr.bf16.gmra.mrb[0].mxu0 %v4045
      %v4156 = vpop.f32.mrb[0].mxu0
      %v4157 = vadd.f32 0.0, %v4156
      %v4158 = vpop.f32.mrb[0].mxu0
      %v4159 = vpop.f32.mrb[0].mxu0
      %v4160 = vadd.f32 0.0, %v4159
      %v4161 = vpop.f32.mrb[0].mxu0
      %4162 = vmatprep.mubr.bf16.mxu0 0
      %4163 = vmatmul.mubr.bf16.gmra.mrb[0].mxu0 %v4048
      %v4164 = vpop.f32.mrb[0].mxu0
      %v4165 = vadd.f32 0.0, %v4164
      %v4166 = vpop.f32.mrb[0].mxu0
      %v4167 = vpop.f32.mrb[0].mxu0
      %v4168 = vadd.f32 0.0, %v4167
      %v4169 = vpop.f32.mrb[0].mxu0
      %4170 = vmatprep.mubr.bf16.mxu0 0
      %4171 = vmatmul.mubr.bf16.gmra.mrb[0].mxu0 %v4051
      %v4172 = vpop.f32.mrb[0].mxu0
      %v4173 = vadd.f32 0.0, %v4172
      %v4174 = vpop.f32.mrb[0].mxu0
      %v4175 = vpop.f32.mrb[0].mxu0
      %v4176 = vadd.f32 0.0, %v4175
      %v4177 = vpop.f32.mrb[0].mxu0
      %4178 = vmatprep.mubr.bf16.mxu0 0
      %4179 = vmatmul.mubr.bf16.gmra.mrb[0].mxu0 %v4054
      %v4180 = vpop.f32.mrb[0].mxu0
      %v4181 = vadd.f32 0.0, %v4180
      %v4182 = vpop.f32.mrb[0].mxu0
      %v4183 = vpop.f32.mrb[0].mxu0
      %v4184 = vadd.f32 0.0, %v4183
      %v4185 = vpop.f32.mrb[0].mxu0
      %4186 = vmatprep.mubr.bf16.mxu0 0
      %4187 = vmatmul.mubr.bf16.gmra.mrb[0].mxu0 %v4057
      %v4188 = vpop.f32.mrb[0].mxu0
      %v4189 = vadd.f32 0.0, %v4188
      %v4190 = vpop.f32.mrb[0].mxu0
      %v4191 = vpop.f32.mrb[0].mxu0
      %v4192 = vadd.f32 0.0, %v4191
      %v4193 = vpop.f32.mrb[0].mxu0
      %4194 = vmatprep.mubr.bf16.mxu0 0
      %4195 = vmatmul.mubr.bf16.gmra.mrb[0].mxu0 %v4060
      %v4196 = vpop.f32.mrb[0].mxu0
      %v4197 = vadd.f32 0.0, %v4196
      %v4198 = vpop.f32.mrb[0].mxu0
      %v4199 = vpop.f32.mrb[0].mxu0
      %v4200 = vadd.f32 0.0, %v4199
      %v4201 = vpop.f32.mrb[0].mxu0
      %4202 = vmatprep.mubr.bf16.mxu0 0
      %4203 = vmatmul.mubr.bf16.gmra.mrb[0].mxu0 %v4063
      %v4204 = vpop.f32.mrb[0].mxu0
      %v4205 = vadd.f32 0.0, %v4204
      %v4206 = vpop.f32.mrb[0].mxu0
      %v4207 = vpop.f32.mrb[0].mxu0
      %v4208 = vadd.f32 0.0, %v4207
      %v4209 = vpop.f32.mrb[0].mxu0
      %4210 = vmatprep.mubr.bf16.mxu0 0
      %4211 = vmatmul.mubr.bf16.gmra.mrb[0].mxu0 %v4066
      %v4212 = vpop.f32.mrb[0].mxu0
      %v4213 = vadd.f32 0.0, %v4212
      %v4214 = vpop.f32.mrb[0].mxu0
      %v4215 = vpop.f32.mrb[0].mxu0
      %v4216 = vadd.f32 0.0, %v4215
      %v4217 = vpop.f32.mrb[0].mxu0
      %4218 = vmatprep.mubr.bf16.mxu0 0
      %4219 = vmatmul.mubr.bf16.gmra.mrb[0].mxu0 %v4069
      %v4220 = vpop.f32.mrb[0].mxu0
      %v4221 = vadd.f32 0.0, %v4220
      %v4222 = vpop.f32.mrb[0].mxu0
      %v4223 = vpop.f32.mrb[0].mxu0
      %v4224 = vadd.f32 0.0, %v4223
      %v4225 = vpop.f32.mrb[0].mxu0
      %4226 = vmatprep.mubr.bf16.mxu0 0
      %4227 = vmatmul.mubr.bf16.gmra.mrb[0].mxu0 %v4072
      %v4228 = vpop.f32.mrb[0].mxu0
      %v4229 = vadd.f32 0.0, %v4228
      %v4230 = vpop.f32.mrb[0].mxu0
      %v4231 = vpop.f32.mrb[0].mxu0
      %v4232 = vadd.f32 0.0, %v4231
      %v4233 = vpop.f32.mrb[0].mxu0
      %4234 = vmatprep.mubr.bf16.mxu0 0
      %4235 = vmatmul.mubr.bf16.gmra.mrb[0].mxu0 %v4075
      %v4236 = vpop.f32.mrb[0].mxu0
      %v4237 = vadd.f32 0.0, %v4236
      %v4238 = vpop.f32.mrb[0].mxu0
      %v4239 = vpop.f32.mrb[0].mxu0
      %v4240 = vadd.f32 0.0, %v4239
      %v4241 = vpop.f32.mrb[0].mxu0
      %4242 = vmatprep.mubr.bf16.mxu0 0
      %4243 = vmatmul.mubr.bf16.gmra.mrb[0].mxu0 %v4078
      %v4244 = vpop.f32.mrb[0].mxu0
      %v4245 = vadd.f32 0.0, %v4244
      %v4246 = vpop.f32.mrb[0].mxu0
      %v4247 = vpop.f32.mrb[0].mxu0
      %v4248 = vadd.f32 0.0, %v4247
      %v4249 = vpop.f32.mrb[0].mxu0
      %4250 = vmatprep.mubr.bf16.mxu0 0
      %4251 = vmatmul.mubr.bf16.gmra.mrb[0].mxu0 %v4081
      %v4252 = vpop.f32.mrb[0].mxu0
      %v4253 = vadd.f32 0.0, %v4252
      %v4254 = vpop.f32.mrb[0].mxu0
      %v4255 = vpop.f32.mrb[0].mxu0
      %v4256 = vadd.f32 0.0, %v4255
      %v4257 = vpop.f32.mrb[0].mxu0
      %4258 = vmatprep.mubr.bf16.mxu0 0
      %4259 = vmatmul.mubr.bf16.gmra.mrb[0].mxu0 %v4084
      %v4260 = vpop.f32.mrb[0].mxu0
      %v4261 = vadd.f32 0.0, %v4260
      %v4262 = vpop.f32.mrb[0].mxu0
      %v4263 = vpop.f32.mrb[0].mxu0
      %v4264 = vadd.f32 0.0, %v4263
      %v4265 = vpop.f32.mrb[0].mxu0
      %4266 = vmatprep.mubr.bf16.mxu0 0
      %4267 = vmatmul.mubr.bf16.gmra.mrb[0].mxu0 %v4087
      %v4268 = vpop.f32.mrb[0].mxu0
      %v4269 = vadd.f32 0.0, %v4268
      %v4270 = vpop.f32.mrb[0].mxu0
      %v4271 = vpop.f32.mrb[0].mxu0
      %v4272 = vadd.f32 0.0, %v4271
      %v4273 = vpop.f32.mrb[0].mxu0
      %4274 = vmatprep.mubr.bf16.mxu0 0
      %4275 = vmatmul.mubr.bf16.gmra.mrb[0].mxu0 %v4090
      %v4276 = vpop.f32.mrb[0].mxu0
      %v4277 = vadd.f32 0.0, %v4276
      %v4278 = vpop.f32.mrb[0].mxu0
      %v4279 = vpop.f32.mrb[0].mxu0
      %v4280 = vadd.f32 0.0, %v4279
      %v4281 = vpop.f32.mrb[0].mxu0
      %4282 = vmatprep.mubr.bf16.mxu0 0
      %4283 = vmatmul.mubr.bf16.gmra.mrb[0].mxu0 %v4093
      %v4284 = vpop.f32.mrb[0].mxu0
      %v4285 = vadd.f32 0.0, %v4284
      %v4286 = vpop.f32.mrb[0].mxu0
      %v4287 = vpop.f32.mrb[0].mxu0
      %v4288 = vadd.f32 0.0, %v4287
      %v4289 = vpop.f32.mrb[0].mxu0
      %4290 = vmatprep.mubr.bf16.mxu0 0
      %4291 = vmatmul.mubr.bf16.gmra.mrb[0].mxu0 %v4096
      %v4292 = vpop.f32.mrb[0].mxu0
      %v4293 = vadd.f32 0.0, %v4292
      %v4294 = vpop.f32.mrb[0].mxu0
      %v4295 = vpop.f32.mrb[0].mxu0
      %v4296 = vpop.f32.mrb[0].mxu0
      %4297 = vdwg.mxu0
      %v4298 = vadd.f32 %v3931, %v4133
      %v4299 = vadd.f32 %v3932, %v4136
      %v4300 = vadd.f32 %v3933, %v4141
      %v4301 = vadd.f32 %v3934, %v4144
      %v4302 = vadd.f32 %v3935, %v4149
      %v4303 = vadd.f32 %v3936, %v4152
      %v4304 = vadd.f32 %v3937, %v4157
      %v4305 = vadd.f32 %v3938, %v4160
      %v4306 = vadd.f32 %v3939, %v4165
      %v4307 = vadd.f32 %v3940, %v4168
      %v4308 = vadd.f32 %v3941, %v4173
      %v4309 = vadd.f32 %v3942, %v4176
      %v4310 = vadd.f32 %v3943, %v4181
      %v4311 = vadd.f32 %v3944, %v4184
      %v4312 = vadd.f32 %v3945, %v4189
      %v4313 = vadd.f32 %v3946, %v4192
      %v4314 = vadd.f32 %v3947, %v4197
      %v4315 = vadd.f32 %v3948, %v4200
      %v4316 = vadd.f32 %v3949, %v4205
      %v4317 = vadd.f32 %v3950, %v4208
      %v4318 = vadd.f32 %v3951, %v4213
      %v4319 = vadd.f32 %v3952, %v4216
      %v4320 = vadd.f32 %v3953, %v4221
      %v4321 = vadd.f32 %v3954, %v4224
      %v4322 = vadd.f32 %v3955, %v4229
      %v4323 = vadd.f32 %v3956, %v4232
      %v4324 = vadd.f32 %v3957, %v4237
      %v4325 = vadd.f32 %v3958, %v4240
      %v4326 = vadd.f32 %v3959, %v4245
      %v4327 = vadd.f32 %v3960, %v4248
      %v4328 = vadd.f32 %v3961, %v4253
      %v4329 = vadd.f32 %v3962, %v4256
      %v4330 = vadd.f32 %v3963, %v4261
      %v4331 = vadd.f32 %v3964, %v4264
      %v4332 = vadd.f32 %v3965, %v4269
      %v4333 = vadd.f32 %v3966, %v4272
      %v4334 = vadd.f32 %v3967, %v4277
      %v4335 = vadd.f32 %v3968, %v4280
      %v4336 = vadd.f32 %v3969, %v4285
      %v4337 = vadd.f32 %v3970, %v4288
      %v4338 = vadd.f32 %v3971, %v4293
      %v4339 = vld [vmem:[%s2] sm:$0x1]
      %v4341 = vlaneseq
      %v4342 = vshrl.u32 %v4341, 7
      %v4343 = vsub.s32 0, %v4342
      %v4344 = vrot.slane %v4339, %v4343
      %v4346 = vadd.f32 %v4298, %v4344
      %v4347 = vadd.f32 %v4299, %v4344
      %v4348 = vadd.f32 %v4300, %v4344
      %v4349 = vadd.f32 %v4301, %v4344
      %v4350 = vadd.f32 %v4302, %v4344
      %v4351 = vadd.f32 %v4303, %v4344
      %v4352 = vadd.f32 %v4304, %v4344
      %v4353 = vadd.f32 %v4305, %v4344
      %v4354 = vadd.f32 %v4306, %v4344
      %v4355 = vadd.f32 %v4307, %v4344
      %v4356 = vadd.f32 %v4308, %v4344
      %v4357 = vadd.f32 %v4309, %v4344
      %v4358 = vadd.f32 %v4310, %v4344
      %v4359 = vadd.f32 %v4311, %v4344
      %v4360 = vadd.f32 %v4312, %v4344
      %v4361 = vadd.f32 %v4313, %v4344
      %v4362 = vadd.f32 %v4314, %v4344
      %v4363 = vadd.f32 %v4315, %v4344
      %v4364 = vadd.f32 %v4316, %v4344
      %v4365 = vadd.f32 %v4317, %v4344
      %v4366 = vadd.f32 %v4318, %v4344
      %v4367 = vadd.f32 %v4319, %v4344
      %v4368 = vadd.f32 %v4320, %v4344
      %v4369 = vadd.f32 %v4321, %v4344
      %v4370 = vadd.f32 %v4322, %v4344
      %v4371 = vadd.f32 %v4323, %v4344
      %v4372 = vadd.f32 %v4324, %v4344
      %v4373 = vadd.f32 %v4325, %v4344
      %v4374 = vadd.f32 %v4326, %v4344
      %v4375 = vadd.f32 %v4327, %v4344
      %v4376 = vadd.f32 %v4328, %v4344
      %v4377 = vadd.f32 %v4329, %v4344
      %v4378 = vadd.f32 %v4330, %v4344
      %v4379 = vadd.f32 %v4331, %v4344
      %v4380 = vadd.f32 %v4332, %v4344
      %v4381 = vadd.f32 %v4333, %v4344
      %v4382 = vadd.f32 %v4334, %v4344
      %v4383 = vadd.f32 %v4335, %v4344
      %v4384 = vadd.f32 %v4336, %v4344
      %v4385 = vadd.f32 %v4337, %v4344
      %v4386 = vadd.f32 %v4338, %v4344
      %vm4387 = vcmp.gt.f32.partialorder %v4346, 0.0
      %vm4388 = vcmp.gt.f32.partialorder %v4347, 0.0
      %vm4389 = vcmp.gt.f32.partialorder %v4348, 0.0
      %vm4390 = vcmp.gt.f32.partialorder %v4349, 0.0
      %vm4391 = vcmp.gt.f32.partialorder %v4350, 0.0
      %vm4392 = vcmp.gt.f32.partialorder %v4351, 0.0
      %vm4393 = vcmp.gt.f32.partialorder %v4352, 0.0
      %vm4394 = vcmp.gt.f32.partialorder %v4353, 0.0
      %vm4395 = vcmp.gt.f32.partialorder %v4354, 0.0
      %vm4396 = vcmp.gt.f32.partialorder %v4355, 0.0
      %vm4397 = vcmp.gt.f32.partialorder %v4356, 0.0
      %vm4398 = vcmp.gt.f32.partialorder %v4357, 0.0
      %vm4399 = vcmp.gt.f32.partialorder %v4358, 0.0
      %vm4400 = vcmp.gt.f32.partialorder %v4359, 0.0
      %vm4401 = vcmp.gt.f32.partialorder %v4360, 0.0
      %vm4402 = vcmp.gt.f32.partialorder %v4361, 0.0
      %vm4403 = vcmp.gt.f32.partialorder %v4362, 0.0
      %vm4404 = vcmp.gt.f32.partialorder %v4363, 0.0
      %vm4405 = vcmp.gt.f32.partialorder %v4364, 0.0
      %vm4406 = vcmp.gt.f32.partialorder %v4365, 0.0
      %vm4407 = vcmp.gt.f32.partialorder %v4366, 0.0
      %vm4408 = vcmp.gt.f32.partialorder %v4367, 0.0
      %vm4409 = vcmp.gt.f32.partialorder %v4368, 0.0
      %vm4410 = vcmp.gt.f32.partialorder %v4369, 0.0
      %vm4411 = vcmp.gt.f32.partialorder %v4370, 0.0
      %vm4412 = vcmp.gt.f32.partialorder %v4371, 0.0
      %vm4413 = vcmp.gt.f32.partialorder %v4372, 0.0
      %vm4414 = vcmp.gt.f32.partialorder %v4373, 0.0
      %vm4415 = vcmp.gt.f32.partialorder %v4374, 0.0
      %vm4416 = vcmp.gt.f32.partialorder %v4375, 0.0
      %vm4417 = vcmp.gt.f32.partialorder %v4376, 0.0
      %vm4418 = vcmp.gt.f32.partialorder %v4377, 0.0
      %vm4419 = vcmp.gt.f32.partialorder %v4378, 0.0
      %vm4420 = vcmp.gt.f32.partialorder %v4379, 0.0
      %vm4421 = vcmp.gt.f32.partialorder %v4380, 0.0
      %vm4422 = vcmp.gt.f32.partialorder %v4381, 0.0
      %vm4423 = vcmp.gt.f32.partialorder %v4382, 0.0
      %vm4424 = vcmp.gt.f32.partialorder %v4383, 0.0
      %vm4425 = vcmp.gt.f32.partialorder %v4384, 0.0
      %vm4426 = vcmp.gt.f32.partialorder %v4385, 0.0
      %vm4427 = vcmp.gt.f32.partialorder %v4386, 0.0
      %v4428 = vmul.f32 %v4346, 0.2
      %v4429 = vmul.f32 %v4347, 0.2
      %v4430 = vmul.f32 %v4348, 0.2
      %v4431 = vmul.f32 %v4349, 0.2
      %v4432 = vmul.f32 %v4350, 0.2
      %v4433 = vmul.f32 %v4351, 0.2
      %v4434 = vmul.f32 %v4352, 0.2
      %v4435 = vmul.f32 %v4353, 0.2
      %v4436 = vmul.f32 %v4354, 0.2
      %v4437 = vmul.f32 %v4355, 0.2
      %v4438 = vmul.f32 %v4356, 0.2
      %v4439 = vmul.f32 %v4357, 0.2
      %v4440 = vmul.f32 %v4358, 0.2
      %v4441 = vmul.f32 %v4359, 0.2
      %v4442 = vmul.f32 %v4360, 0.2
      %v4443 = vmul.f32 %v4361, 0.2
      %v4444 = vmul.f32 %v4362, 0.2
      %v4445 = vmul.f32 %v4363, 0.2
      %v4446 = vmul.f32 %v4364, 0.2
      %v4447 = vmul.f32 %v4365, 0.2
      %v4448 = vmul.f32 %v4366, 0.2
      %v4449 = vmul.f32 %v4367, 0.2
      %v4450 = vmul.f32 %v4368, 0.2
      %v4451 = vmul.f32 %v4369, 0.2
      %v4452 = vmul.f32 %v4370, 0.2
      %v4453 = vmul.f32 %v4371, 0.2
      %v4454 = vmul.f32 %v4372, 0.2
      %v4455 = vmul.f32 %v4373, 0.2
      %v4456 = vmul.f32 %v4374, 0.2
      %v4457 = vmul.f32 %v4375, 0.2
      %v4458 = vmul.f32 %v4376, 0.2
      %v4459 = vmul.f32 %v4377, 0.2
      %v4460 = vmul.f32 %v4378, 0.2
      %v4461 = vmul.f32 %v4379, 0.2
      %v4462 = vmul.f32 %v4380, 0.2
      %v4463 = vmul.f32 %v4381, 0.2
      %v4464 = vmul.f32 %v4382, 0.2
      %v4465 = vmul.f32 %v4383, 0.2
      %v4466 = vmul.f32 %v4384, 0.2
      %v4467 = vmul.f32 %v4385, 0.2
      %v4468 = vmul.f32 %v4386, 0.2
      %v4469 = vsel %vm4387, %v4346, %v4428
      %v4470 = vsel %vm4388, %v4347, %v4429
      %v4471 = vsel %vm4389, %v4348, %v4430
      %v4472 = vsel %vm4390, %v4349, %v4431
      %v4473 = vsel %vm4391, %v4350, %v4432
      %v4474 = vsel %vm4392, %v4351, %v4433
      %v4475 = vsel %vm4393, %v4352, %v4434
      %v4476 = vsel %vm4394, %v4353, %v4435
      %v4477 = vsel %vm4395, %v4354, %v4436
      %v4478 = vsel %vm4396, %v4355, %v4437
      %v4479 = vsel %vm4397, %v4356, %v4438
      %v4480 = vsel %vm4398, %v4357, %v4439
      %v4481 = vsel %vm4399, %v4358, %v4440
      %v4482 = vsel %vm4400, %v4359, %v4441
      %v4483 = vsel %vm4401, %v4360, %v4442
      %v4484 = vsel %vm4402, %v4361, %v4443
      %v4485 = vsel %vm4403, %v4362, %v4444
      %v4486 = vsel %vm4404, %v4363, %v4445
      %v4487 = vsel %vm4405, %v4364, %v4446
      %v4488 = vsel %vm4406, %v4365, %v4447
      %v4489 = vsel %vm4407, %v4366, %v4448
      %v4490 = vsel %vm4408, %v4367, %v4449
      %v4491 = vsel %vm4409, %v4368, %v4450
      %v4492 = vsel %vm4410, %v4369, %v4451
      %v4493 = vsel %vm4411, %v4370, %v4452
      %v4494 = vsel %vm4412, %v4371, %v4453
      %v4495 = vsel %vm4413, %v4372, %v4454
      %v4496 = vsel %vm4414, %v4373, %v4455
      %v4497 = vsel %vm4415, %v4374, %v4456
      %v4498 = vsel %vm4416, %v4375, %v4457
      %v4499 = vsel %vm4417, %v4376, %v4458
      %v4500 = vsel %vm4418, %v4377, %v4459
      %v4501 = vsel %vm4419, %v4378, %v4460
      %v4502 = vsel %vm4420, %v4379, %v4461
      %v4503 = vsel %vm4421, %v4380, %v4462
      %v4504 = vsel %vm4422, %v4381, %v4463
      %v4505 = vsel %vm4423, %v4382, %v4464
      %v4506 = vsel %vm4424, %v4383, %v4465
      %v4507 = vsel %vm4425, %v4384, %v4466
      %v4508 = vsel %vm4426, %v4385, %v4467
      %v4509 = vsel %vm4427, %v4386, %v4468
      %v4510 = vmul.f32 %v4469, %v4469
      %v4511 = vmul.f32 %v4470, %v4470
      %v4512 = vmul.f32 %v4471, %v4471
      %v4513 = vmul.f32 %v4472, %v4472
      %v4514 = vmul.f32 %v4473, %v4473
      %v4515 = vmul.f32 %v4474, %v4474
      %v4516 = vmul.f32 %v4475, %v4475
      %v4517 = vmul.f32 %v4476, %v4476
      %v4518 = vmul.f32 %v4477, %v4477
      %v4519 = vmul.f32 %v4478, %v4478
      %v4520 = vmul.f32 %v4479, %v4479
      %v4521 = vmul.f32 %v4480, %v4480
      %v4522 = vmul.f32 %v4481, %v4481
      %v4523 = vmul.f32 %v4482, %v4482
      %v4524 = vmul.f32 %v4483, %v4483
      %v4525 = vmul.f32 %v4484, %v4484
      %v4526 = vmul.f32 %v4485, %v4485
      %v4527 = vmul.f32 %v4486, %v4486
      %v4528 = vmul.f32 %v4487, %v4487
      %v4529 = vmul.f32 %v4488, %v4488
      %v4530 = vmul.f32 %v4489, %v4489
      %v4531 = vmul.f32 %v4490, %v4490
      %v4532 = vmul.f32 %v4491, %v4491
      %v4533 = vmul.f32 %v4492, %v4492
      %v4534 = vmul.f32 %v4493, %v4493
      %v4535 = vmul.f32 %v4494, %v4494
      %v4536 = vmul.f32 %v4495, %v4495
      %v4537 = vmul.f32 %v4496, %v4496
      %v4538 = vmul.f32 %v4497, %v4497
      %v4539 = vmul.f32 %v4498, %v4498
      %v4540 = vmul.f32 %v4499, %v4499
      %v4541 = vmul.f32 %v4500, %v4500
      %v4542 = vmul.f32 %v4501, %v4501
      %v4543 = vmul.f32 %v4502, %v4502
      %v4544 = vmul.f32 %v4503, %v4503
      %v4545 = vmul.f32 %v4504, %v4504
      %v4546 = vmul.f32 %v4505, %v4505
      %v4547 = vmul.f32 %v4506, %v4506
      %v4548 = vmul.f32 %v4507, %v4507
      %v4549 = vmul.f32 %v4508, %v4508
      %v4550 = vmul.f32 %v4509, %v4509
      %v4551 = vsel %vm533, %v4510, 0.0
      %4552 = vadd.xlane.f32.xlu0 %v4551
      %v4553 = vpop.xlane.xlu0 %4552
      %v4554 = vsel %vm533, %v4511, 0.0
      %4555 = vadd.xlane.f32.xlu0 %v4554
      %v4556 = vpop.xlane.xlu0 %4555
      %v4557 = vsel %vm533, %v4512, 0.0
      %4558 = vadd.xlane.f32.xlu0 %v4557
      %v4559 = vpop.xlane.xlu0 %4558
      %v4560 = vsel %vm533, %v4513, 0.0
      %4561 = vadd.xlane.f32.xlu0 %v4560
      %v4562 = vpop.xlane.xlu0 %4561
      %v4563 = vsel %vm533, %v4514, 0.0
      %4564 = vadd.xlane.f32.xlu0 %v4563
      %v4565 = vpop.xlane.xlu0 %4564
      %v4566 = vsel %vm533, %v4515, 0.0
      %4567 = vadd.xlane.f32.xlu0 %v4566
      %v4568 = vpop.xlane.xlu0 %4567
      %v4569 = vsel %vm533, %v4516, 0.0
      %4570 = vadd.xlane.f32.xlu0 %v4569
      %v4571 = vpop.xlane.xlu0 %4570
      %v4572 = vsel %vm533, %v4517, 0.0
      %4573 = vadd.xlane.f32.xlu0 %v4572
      %v4574 = vpop.xlane.xlu0 %4573
      %v4575 = vsel %vm533, %v4518, 0.0
      %4576 = vadd.xlane.f32.xlu0 %v4575
      %v4577 = vpop.xlane.xlu0 %4576
      %v4578 = vsel %vm533, %v4519, 0.0
      %4579 = vadd.xlane.f32.xlu0 %v4578
      %v4580 = vpop.xlane.xlu0 %4579
      %v4581 = vsel %vm533, %v4520, 0.0
      %4582 = vadd.xlane.f32.xlu0 %v4581
      %v4583 = vpop.xlane.xlu0 %4582
      %v4584 = vsel %vm533, %v4521, 0.0
      %4585 = vadd.xlane.f32.xlu0 %v4584
      %v4586 = vpop.xlane.xlu0 %4585
      %v4587 = vsel %vm533, %v4522, 0.0
      %4588 = vadd.xlane.f32.xlu0 %v4587
      %v4589 = vpop.xlane.xlu0 %4588
      %v4590 = vsel %vm533, %v4523, 0.0
      %4591 = vadd.xlane.f32.xlu0 %v4590
      %v4592 = vpop.xlane.xlu0 %4591
      %v4593 = vsel %vm533, %v4524, 0.0
      %4594 = vadd.xlane.f32.xlu0 %v4593
      %v4595 = vpop.xlane.xlu0 %4594
      %v4596 = vsel %vm533, %v4525, 0.0
      %4597 = vadd.xlane.f32.xlu0 %v4596
      %v4598 = vpop.xlane.xlu0 %4597
      %v4599 = vsel %vm533, %v4526, 0.0
      %4600 = vadd.xlane.f32.xlu0 %v4599
      %v4601 = vpop.xlane.xlu0 %4600
      %v4602 = vsel %vm533, %v4527, 0.0
      %4603 = vadd.xlane.f32.xlu0 %v4602
      %v4604 = vpop.xlane.xlu0 %4603
      %v4605 = vsel %vm533, %v4528, 0.0
      %4606 = vadd.xlane.f32.xlu0 %v4605
      %v4607 = vpop.xlane.xlu0 %4606
      %v4608 = vsel %vm533, %v4529, 0.0
      %4609 = vadd.xlane.f32.xlu0 %v4608
      %v4610 = vpop.xlane.xlu0 %4609
      %v4611 = vsel %vm533, %v4530, 0.0
      %4612 = vadd.xlane.f32.xlu0 %v4611
      %v4613 = vpop.xlane.xlu0 %4612
      %v4614 = vsel %vm533, %v4531, 0.0
      %4615 = vadd.xlane.f32.xlu0 %v4614
      %v4616 = vpop.xlane.xlu0 %4615
      %v4617 = vsel %vm533, %v4532, 0.0
      %4618 = vadd.xlane.f32.xlu0 %v4617
      %v4619 = vpop.xlane.xlu0 %4618
      %v4620 = vsel %vm533, %v4533, 0.0
      %4621 = vadd.xlane.f32.xlu0 %v4620
      %v4622 = vpop.xlane.xlu0 %4621
      %v4623 = vsel %vm533, %v4534, 0.0
      %4624 = vadd.xlane.f32.xlu0 %v4623
      %v4625 = vpop.xlane.xlu0 %4624
      %v4626 = vsel %vm533, %v4535, 0.0
      %4627 = vadd.xlane.f32.xlu0 %v4626
      %v4628 = vpop.xlane.xlu0 %4627
      %v4629 = vsel %vm533, %v4536, 0.0
      %4630 = vadd.xlane.f32.xlu0 %v4629
      %v4631 = vpop.xlane.xlu0 %4630
      %v4632 = vsel %vm533, %v4537, 0.0
      %4633 = vadd.xlane.f32.xlu0 %v4632
      %v4634 = vpop.xlane.xlu0 %4633
      %v4635 = vsel %vm533, %v4538, 0.0
      %4636 = vadd.xlane.f32.xlu0 %v4635
      %v4637 = vpop.xlane.xlu0 %4636
      %v4638 = vsel %vm533, %v4539, 0.0
      %4639 = vadd.xlane.f32.xlu0 %v4638
      %v4640 = vpop.xlane.xlu0 %4639
      %v4641 = vsel %vm533, %v4540, 0.0
      %4642 = vadd.xlane.f32.xlu0 %v4641
      %v4643 = vpop.xlane.xlu0 %4642
      %v4644 = vsel %vm533, %v4541, 0.0
      %4645 = vadd.xlane.f32.xlu0 %v4644
      %v4646 = vpop.xlane.xlu0 %4645
      %v4647 = vsel %vm533, %v4542, 0.0
      %4648 = vadd.xlane.f32.xlu0 %v4647
      %v4649 = vpop.xlane.xlu0 %4648
      %v4650 = vsel %vm533, %v4543, 0.0
      %4651 = vadd.xlane.f32.xlu0 %v4650
      %v4652 = vpop.xlane.xlu0 %4651
      %v4653 = vsel %vm533, %v4544, 0.0
      %4654 = vadd.xlane.f32.xlu0 %v4653
      %v4655 = vpop.xlane.xlu0 %4654
      %v4656 = vsel %vm533, %v4545, 0.0
      %4657 = vadd.xlane.f32.xlu0 %v4656
      %v4658 = vpop.xlane.xlu0 %4657
      %v4659 = vsel %vm533, %v4546, 0.0
      %4660 = vadd.xlane.f32.xlu0 %v4659
      %v4661 = vpop.xlane.xlu0 %4660
      %v4662 = vsel %vm533, %v4547, 0.0
      %4663 = vadd.xlane.f32.xlu0 %v4662
      %v4664 = vpop.xlane.xlu0 %4663
      %v4665 = vsel %vm533, %v4548, 0.0
      %4666 = vadd.xlane.f32.xlu0 %v4665
      %v4667 = vpop.xlane.xlu0 %4666
      %v4668 = vsel %vm533, %v4549, 0.0
      %4669 = vadd.xlane.f32.xlu0 %v4668
      %v4670 = vpop.xlane.xlu0 %4669
      %vm4671 = vcmask 257024
      %v4672 = vsel %vm4671, %v4550, 0.0
      %4673 = vadd.xlane.f32.xlu0 %v4672
      %v4674 = vpop.xlane.xlu0 %4673
      %v4675 = vrcp.pop 32.0
      %v4676 = vmul.f32 %v4553, %v4675
      %v4677 = vmul.f32 %v4556, %v4675
      %v4678 = vmul.f32 %v4559, %v4675
      %v4679 = vmul.f32 %v4562, %v4675
      %v4680 = vmul.f32 %v4565, %v4675
      %v4681 = vmul.f32 %v4568, %v4675
      %v4682 = vmul.f32 %v4571, %v4675
      %v4683 = vmul.f32 %v4574, %v4675
      %v4684 = vmul.f32 %v4577, %v4675
      %v4685 = vmul.f32 %v4580, %v4675
      %v4686 = vmul.f32 %v4583, %v4675
      %v4687 = vmul.f32 %v4586, %v4675
      %v4688 = vmul.f32 %v4589, %v4675
      %v4689 = vmul.f32 %v4592, %v4675
      %v4690 = vmul.f32 %v4595, %v4675
      %v4691 = vmul.f32 %v4598, %v4675
      %v4692 = vmul.f32 %v4601, %v4675
      %v4693 = vmul.f32 %v4604, %v4675
      %v4694 = vmul.f32 %v4607, %v4675
      %v4695 = vmul.f32 %v4610, %v4675
      %v4696 = vmul.f32 %v4613, %v4675
      %v4697 = vmul.f32 %v4616, %v4675
      %v4698 = vmul.f32 %v4619, %v4675
      %v4699 = vmul.f32 %v4622, %v4675
      %v4700 = vmul.f32 %v4625, %v4675
      %v4701 = vmul.f32 %v4628, %v4675
      %v4702 = vmul.f32 %v4631, %v4675
      %v4703 = vmul.f32 %v4634, %v4675
      %v4704 = vmul.f32 %v4637, %v4675
      %v4705 = vmul.f32 %v4640, %v4675
      %v4706 = vmul.f32 %v4643, %v4675
      %v4707 = vmul.f32 %v4646, %v4675
      %v4708 = vmul.f32 %v4649, %v4675
      %v4709 = vmul.f32 %v4652, %v4675
      %v4710 = vmul.f32 %v4655, %v4675
      %v4711 = vmul.f32 %v4658, %v4675
      %v4712 = vmul.f32 %v4661, %v4675
      %v4713 = vmul.f32 %v4664, %v4675
      %v4714 = vmul.f32 %v4667, %v4675
      %v4715 = vmul.f32 %v4670, %v4675
      %v4716 = vmul.f32 %v4674, %v4675
      %v4717 = vadd.f32 %v4676, 1e-08
      %v4718 = vadd.f32 %v4677, 1e-08
      %v4719 = vadd.f32 %v4678, 1e-08
      %v4720 = vadd.f32 %v4679, 1e-08
      %v4721 = vadd.f32 %v4680, 1e-08
      %v4722 = vadd.f32 %v4681, 1e-08
      %v4723 = vadd.f32 %v4682, 1e-08
      %v4724 = vadd.f32 %v4683, 1e-08
      %v4725 = vadd.f32 %v4684, 1e-08
      %v4726 = vadd.f32 %v4685, 1e-08
      %v4727 = vadd.f32 %v4686, 1e-08
      %v4728 = vadd.f32 %v4687, 1e-08
      %v4729 = vadd.f32 %v4688, 1e-08
      %v4730 = vadd.f32 %v4689, 1e-08
      %v4731 = vadd.f32 %v4690, 1e-08
      %v4732 = vadd.f32 %v4691, 1e-08
      %v4733 = vadd.f32 %v4692, 1e-08
      %v4734 = vadd.f32 %v4693, 1e-08
      %v4735 = vadd.f32 %v4694, 1e-08
      %v4736 = vadd.f32 %v4695, 1e-08
      %v4737 = vadd.f32 %v4696, 1e-08
      %v4738 = vadd.f32 %v4697, 1e-08
      %v4739 = vadd.f32 %v4698, 1e-08
      %v4740 = vadd.f32 %v4699, 1e-08
      %v4741 = vadd.f32 %v4700, 1e-08
      %v4742 = vadd.f32 %v4701, 1e-08
      %v4743 = vadd.f32 %v4702, 1e-08
      %v4744 = vadd.f32 %v4703, 1e-08
      %v4745 = vadd.f32 %v4704, 1e-08
      %v4746 = vadd.f32 %v4705, 1e-08
      %v4747 = vadd.f32 %v4706, 1e-08
      %v4748 = vadd.f32 %v4707, 1e-08
      %v4749 = vadd.f32 %v4708, 1e-08
      %v4750 = vadd.f32 %v4709, 1e-08
      %v4751 = vadd.f32 %v4710, 1e-08
      %v4752 = vadd.f32 %v4711, 1e-08
      %v4753 = vadd.f32 %v4712, 1e-08
      %v4754 = vadd.f32 %v4713, 1e-08
      %v4755 = vadd.f32 %v4714, 1e-08
      %v4756 = vadd.f32 %v4715, 1e-08
      %v4757 = vadd.f32 %v4716, 1e-08
      %v4758 = vrsqrt.pop %v4717
      %v4759 = vrsqrt.pop %v4718
      %v4760 = vrsqrt.pop %v4719
      %v4761 = vrsqrt.pop %v4720
      %v4762 = vrsqrt.pop %v4721
      %v4763 = vrsqrt.pop %v4722
      %v4764 = vrsqrt.pop %v4723
      %v4765 = vrsqrt.pop %v4724
      %v4766 = vrsqrt.pop %v4725
      %v4767 = vrsqrt.pop %v4726
      %v4768 = vrsqrt.pop %v4727
      %v4769 = vrsqrt.pop %v4728
      %v4770 = vrsqrt.pop %v4729
      %v4771 = vrsqrt.pop %v4730
      %v4772 = vrsqrt.pop %v4731
      %v4773 = vrsqrt.pop %v4732
      %v4774 = vrsqrt.pop %v4733
      %v4775 = vrsqrt.pop %v4734
      %v4776 = vrsqrt.pop %v4735
      %v4777 = vrsqrt.pop %v4736
      %v4778 = vrsqrt.pop %v4737
      %v4779 = vrsqrt.pop %v4738
      %v4780 = vrsqrt.pop %v4739
      %v4781 = vrsqrt.pop %v4740
      %v4782 = vrsqrt.pop %v4741
      %v4783 = vrsqrt.pop %v4742
      %v4784 = vrsqrt.pop %v4743
      %v4785 = vrsqrt.pop %v4744
      %v4786 = vrsqrt.pop %v4745
      %v4787 = vrsqrt.pop %v4746
      %v4788 = vrsqrt.pop %v4747
      %v4789 = vrsqrt.pop %v4748
      %v4790 = vrsqrt.pop %v4749
      %v4791 = vrsqrt.pop %v4750
      %v4792 = vrsqrt.pop %v4751
      %v4793 = vrsqrt.pop %v4752
      %v4794 = vrsqrt.pop %v4753
      %v4795 = vrsqrt.pop %v4754
      %v4796 = vrsqrt.pop %v4755
      %v4797 = vrsqrt.pop %v4756
      %v4798 = vrsqrt.pop %v4757
      %v4799 = vmul.f32 %v4469, %v4758
      %v4800 = vmul.f32 %v4470, %v4759
      %v4801 = vmul.f32 %v4471, %v4760
      %v4802 = vmul.f32 %v4472, %v4761
      %v4803 = vmul.f32 %v4473, %v4762
      %v4804 = vmul.f32 %v4474, %v4763
      %v4805 = vmul.f32 %v4475, %v4764
      %v4806 = vmul.f32 %v4476, %v4765
      %v4807 = vmul.f32 %v4477, %v4766
      %v4808 = vmul.f32 %v4478, %v4767
      %v4809 = vmul.f32 %v4479, %v4768
      %v4810 = vmul.f32 %v4480, %v4769
      %v4811 = vmul.f32 %v4481, %v4770
      %v4812 = vmul.f32 %v4482, %v4771
      %v4813 = vmul.f32 %v4483, %v4772
      %v4814 = vmul.f32 %v4484, %v4773
      %v4815 = vmul.f32 %v4485, %v4774
      %v4816 = vmul.f32 %v4486, %v4775
      %v4817 = vmul.f32 %v4487, %v4776
      %v4818 = vmul.f32 %v4488, %v4777
      %v4819 = vmul.f32 %v4489, %v4778
      %v4820 = vmul.f32 %v4490, %v4779
      %v4821 = vmul.f32 %v4491, %v4780
      %v4822 = vmul.f32 %v4492, %v4781
      %v4823 = vmul.f32 %v4493, %v4782
      %v4824 = vmul.f32 %v4494, %v4783
      %v4825 = vmul.f32 %v4495, %v4784
      %v4826 = vmul.f32 %v4496, %v4785
      %v4827 = vmul.f32 %v4497, %v4786
      %v4828 = vmul.f32 %v4498, %v4787
      %v4829 = vmul.f32 %v4499, %v4788
      %v4830 = vmul.f32 %v4500, %v4789
      %v4831 = vmul.f32 %v4501, %v4790
      %v4832 = vmul.f32 %v4502, %v4791
      %v4833 = vmul.f32 %v4503, %v4792
      %v4834 = vmul.f32 %v4504, %v4793
      %v4835 = vmul.f32 %v4505, %v4794
      %v4836 = vmul.f32 %v4506, %v4795
      %v4837 = vmul.f32 %v4507, %v4796
      %v4838 = vmul.f32 %v4508, %v4797
      %v4839 = vmul.f32 %v4509, %v4798
      %v4840 = vld [vmem:[%s3] sm:$0xff]
      %v4841 = vld [vmem:[%s3 + $0x8] sm:$0xff]
      %v4842 = vld [vmem:[%s3 + $0x10] sm:$0xff]
      %v4843 = vld [vmem:[%s3 + $0x18] sm:$0xff]
      %v4844 = vld [vmem:[%s3 + $0x20] sm:$0xff]
      %v4845 = vld [vmem:[%s3 + $0x28] sm:$0xff]
      %v4846 = vld [vmem:[%s3 + $0x30] sm:$0xff]
      %v4847 = vld [vmem:[%s3 + $0x38] sm:$0xff]
      %v4848 = vld [vmem:[%s3 + $0x40] sm:$0xff]
      %v4849 = vld [vmem:[%s3 + $0x48] sm:$0xff]
      %v4850 = vld [vmem:[%s3 + $0x50] sm:$0xff]
      %v4851 = vld [vmem:[%s3 + $0x58] sm:$0xff]
      %v4852 = vld [vmem:[%s3 + $0x60] sm:$0xff]
      %v4853 = vld [vmem:[%s3 + $0x68] sm:$0xff]
      %v4854 = vld [vmem:[%s3 + $0x70] sm:$0xff]
      %v4855 = vld [vmem:[%s3 + $0x78] sm:$0xff]
      %v4856 = vld [vmem:[%s3 + $0x80] sm:$0xff]
      %v4857 = vld [vmem:[%s3 + $0x88] sm:$0xff]
      %v4858 = vld [vmem:[%s3 + $0x90] sm:$0xff]
      %v4859 = vld [vmem:[%s3 + $0x98] sm:$0xff]
      %v4860 = vld [vmem:[%s3 + $0xa0] sm:$0xff]
      %v4861 = vld [vmem:[%s3 + $0xa8] sm:$0xff]
      %v4862 = vld [vmem:[%s3 + $0xb0] sm:$0xff]
      %v4863 = vld [vmem:[%s3 + $0xb8] sm:$0xff]
      %v4864 = vld [vmem:[%s3 + $0xc0] sm:$0xff]
      %v4865 = vld [vmem:[%s3 + $0xc8] sm:$0xff]
      %v4866 = vld [vmem:[%s3 + $0xd0] sm:$0xff]
      %v4867 = vld [vmem:[%s3 + $0xd8] sm:$0xff]
      %v4868 = vld [vmem:[%s3 + $0xe0] sm:$0xff]
      %v4869 = vld [vmem:[%s3 + $0xe8] sm:$0xff]
      %v4870 = vld [vmem:[%s3 + $0xf0] sm:$0xff]
      %v4871 = vld [vmem:[%s3 + $0xf8] sm:$0xff]
      %v4872 = vld [vmem:[%s3 + $0x100] sm:$0xff]
      %v4873 = vld [vmem:[%s3 + $0x108] sm:$0xff]
      %v4874 = vld [vmem:[%s3 + $0x110] sm:$0xff]
      %v4875 = vld [vmem:[%s3 + $0x118] sm:$0xff]
      %v4876 = vld [vmem:[%s3 + $0x120] sm:$0xff]
      %v4877 = vld [vmem:[%s3 + $0x128] sm:$0xff]
      %v4878 = vld [vmem:[%s3 + $0x130] sm:$0xff]
      %v4879 = vld [vmem:[%s3 + $0x138] sm:$0xff]
      %v4880 = vld [vmem:[%s3 + $0x140] sm:$0xf]
      %4882 = vset.pattern.permute.xlu0 0
      %4883 = vperm.xlu0 %4882, %v4840
      %v4884 = vpop.permute.xlu0 %4883
      %4887 = vset.pattern.permute.xlu0 0
      %4888 = vperm.xlu0 %4887, %v4841
      %v4889 = vpop.permute.xlu0 %4888
      %4892 = vset.pattern.permute.xlu0 0
      %4893 = vperm.xlu0 %4892, %v4842
      %v4894 = vpop.permute.xlu0 %4893
      %4897 = vset.pattern.permute.xlu0 0
      %4898 = vperm.xlu0 %4897, %v4843
      %v4899 = vpop.permute.xlu0 %4898
      %4902 = vset.pattern.permute.xlu0 0
      %4903 = vperm.xlu0 %4902, %v4844
      %v4904 = vpop.permute.xlu0 %4903
      %4907 = vset.pattern.permute.xlu0 0
      %4908 = vperm.xlu0 %4907, %v4845
      %v4909 = vpop.permute.xlu0 %4908
      %4912 = vset.pattern.permute.xlu0 0
      %4913 = vperm.xlu0 %4912, %v4846
      %v4914 = vpop.permute.xlu0 %4913
      %4917 = vset.pattern.permute.xlu0 0
      %4918 = vperm.xlu0 %4917, %v4847
      %v4919 = vpop.permute.xlu0 %4918
      %4922 = vset.pattern.permute.xlu0 0
      %4923 = vperm.xlu0 %4922, %v4848
      %v4924 = vpop.permute.xlu0 %4923
      %4927 = vset.pattern.permute.xlu0 0
      %4928 = vperm.xlu0 %4927, %v4849
      %v4929 = vpop.permute.xlu0 %4928
      %4932 = vset.pattern.permute.xlu0 0
      %4933 = vperm.xlu0 %4932, %v4850
      %v4934 = vpop.permute.xlu0 %4933
      %4937 = vset.pattern.permute.xlu0 0
      %4938 = vperm.xlu0 %4937, %v4851
      %v4939 = vpop.permute.xlu0 %4938
      %4942 = vset.pattern.permute.xlu0 0
      %4943 = vperm.xlu0 %4942, %v4852
      %v4944 = vpop.permute.xlu0 %4943
      %4947 = vset.pattern.permute.xlu0 0
      %4948 = vperm.xlu0 %4947, %v4853
      %v4949 = vpop.permute.xlu0 %4948
      %4952 = vset.pattern.permute.xlu0 0
      %4953 = vperm.xlu0 %4952, %v4854
      %v4954 = vpop.permute.xlu0 %4953
      %4957 = vset.pattern.permute.xlu0 0
      %4958 = vperm.xlu0 %4957, %v4855
      %v4959 = vpop.permute.xlu0 %4958
      %4962 = vset.pattern.permute.xlu0 0
      %4963 = vperm.xlu0 %4962, %v4856
      %v4964 = vpop.permute.xlu0 %4963
      %4967 = vset.pattern.permute.xlu0 0
      %4968 = vperm.xlu0 %4967, %v4857
      %v4969 = vpop.permute.xlu0 %4968
      %4972 = vset.pattern.permute.xlu0 0
      %4973 = vperm.xlu0 %4972, %v4858
      %v4974 = vpop.permute.xlu0 %4973
      %4977 = vset.pattern.permute.xlu0 0
      %4978 = vperm.xlu0 %4977, %v4859
      %v4979 = vpop.permute.xlu0 %4978
      %4982 = vset.pattern.permute.xlu0 0
      %4983 = vperm.xlu0 %4982, %v4860
      %v4984 = vpop.permute.xlu0 %4983
      %4987 = vset.pattern.permute.xlu0 0
      %4988 = vperm.xlu0 %4987, %v4861
      %v4989 = vpop.permute.xlu0 %4988
      %4992 = vset.pattern.permute.xlu0 0
      %4993 = vperm.xlu0 %4992, %v4862
      %v4994 = vpop.permute.xlu0 %4993
      %4997 = vset.pattern.permute.xlu0 0
      %4998 = vperm.xlu0 %4997, %v4863
      %v4999 = vpop.permute.xlu0 %4998
      %5002 = vset.pattern.permute.xlu0 0
      %5003 = vperm.xlu0 %5002, %v4864
      %v5004 = vpop.permute.xlu0 %5003
      %5007 = vset.pattern.permute.xlu0 0
      %5008 = vperm.xlu0 %5007, %v4865
      %v5009 = vpop.permute.xlu0 %5008
      %5012 = vset.pattern.permute.xlu0 0
      %5013 = vperm.xlu0 %5012, %v4866
      %v5014 = vpop.permute.xlu0 %5013
      %5017 = vset.pattern.permute.xlu0 0
      %5018 = vperm.xlu0 %5017, %v4867
      %v5019 = vpop.permute.xlu0 %5018
      %5022 = vset.pattern.permute.xlu0 0
      %5023 = vperm.xlu0 %5022, %v4868
      %v5024 = vpop.permute.xlu0 %5023
      %5027 = vset.pattern.permute.xlu0 0
      %5028 = vperm.xlu0 %5027, %v4869
      %v5029 = vpop.permute.xlu0 %5028
      %5032 = vset.pattern.permute.xlu0 0
      %5033 = vperm.xlu0 %5032, %v4870
      %v5034 = vpop.permute.xlu0 %5033
      %5037 = vset.pattern.permute.xlu0 0
      %5038 = vperm.xlu0 %5037, %v4871
      %v5039 = vpop.permute.xlu0 %5038
      %5042 = vset.pattern.permute.xlu0 0
      %5043 = vperm.xlu0 %5042, %v4872
      %v5044 = vpop.permute.xlu0 %5043
      %5047 = vset.pattern.permute.xlu0 0
      %5048 = vperm.xlu0 %5047, %v4873
      %v5049 = vpop.permute.xlu0 %5048
      %5052 = vset.pattern.permute.xlu0 0
      %5053 = vperm.xlu0 %5052, %v4874
      %v5054 = vpop.permute.xlu0 %5053
      %5057 = vset.pattern.permute.xlu0 0
      %5058 = vperm.xlu0 %5057, %v4875
      %v5059 = vpop.permute.xlu0 %5058
      %5062 = vset.pattern.permute.xlu0 0
      %5063 = vperm.xlu0 %5062, %v4876
      %v5064 = vpop.permute.xlu0 %5063
      %5067 = vset.pattern.permute.xlu0 0
      %5068 = vperm.xlu0 %5067, %v4877
      %v5069 = vpop.permute.xlu0 %5068
      %5072 = vset.pattern.permute.xlu0 0
      %5073 = vperm.xlu0 %5072, %v4878
      %v5074 = vpop.permute.xlu0 %5073
      %5077 = vset.pattern.permute.xlu0 0
      %5078 = vperm.xlu0 %5077, %v4879
      %v5079 = vpop.permute.xlu0 %5078
      %5082 = vset.pattern.permute.xlu0 0
      %5083 = vperm.xlu0 %5082, %v4880
      %v5084 = vpop.permute.xlu0 %5083
      %v5086 = vmul.f32 %v4799, %v4884
      %v5087 = vmul.f32 %v4800, %v4889
      %v5088 = vmul.f32 %v4801, %v4894
      %v5089 = vmul.f32 %v4802, %v4899
      %v5090 = vmul.f32 %v4803, %v4904
      %v5091 = vmul.f32 %v4804, %v4909
      %v5092 = vmul.f32 %v4805, %v4914
      %v5093 = vmul.f32 %v4806, %v4919
      %v5094 = vmul.f32 %v4807, %v4924
      %v5095 = vmul.f32 %v4808, %v4929
      %v5096 = vmul.f32 %v4809, %v4934
      %v5097 = vmul.f32 %v4810, %v4939
      %v5098 = vmul.f32 %v4811, %v4944
      %v5099 = vmul.f32 %v4812, %v4949
      %v5100 = vmul.f32 %v4813, %v4954
      %v5101 = vmul.f32 %v4814, %v4959
      %v5102 = vmul.f32 %v4815, %v4964
      %v5103 = vmul.f32 %v4816, %v4969
      %v5104 = vmul.f32 %v4817, %v4974
      %v5105 = vmul.f32 %v4818, %v4979
      %v5106 = vmul.f32 %v4819, %v4984
      %v5107 = vmul.f32 %v4820, %v4989
      %v5108 = vmul.f32 %v4821, %v4994
      %v5109 = vmul.f32 %v4822, %v4999
      %v5110 = vmul.f32 %v4823, %v5004
      %v5111 = vmul.f32 %v4824, %v5009
      %v5112 = vmul.f32 %v4825, %v5014
      %v5113 = vmul.f32 %v4826, %v5019
      %v5114 = vmul.f32 %v4827, %v5024
      %v5115 = vmul.f32 %v4828, %v5029
      %v5116 = vmul.f32 %v4829, %v5034
      %v5117 = vmul.f32 %v4830, %v5039
      %v5118 = vmul.f32 %v4831, %v5044
      %v5119 = vmul.f32 %v4832, %v5049
      %v5120 = vmul.f32 %v4833, %v5054
      %v5121 = vmul.f32 %v4834, %v5059
      %v5122 = vmul.f32 %v4835, %v5064
      %v5123 = vmul.f32 %v4836, %v5069
      %v5124 = vmul.f32 %v4837, %v5074
      %v5125 = vmul.f32 %v4838, %v5079
      %v5126 = vmul.f32 %v4839, %v5084
      %5127 = vst.msk [vmem:[%s197] sm:$0xf] %vm4671, 0
      %5128 = vst.msk [vmem:[%s197 + $0x4] sm:$0xf] %vm4671, 0
      %vm5129 = vcmask 254976
      %vm5130 = vsmask.f32 1280
      %vm5131 = vmand %vm5129, %vm5130
      %v5132 = vld [vmem:[%s197 + $0x8] sm:$0x3]
      %v5133 = vsel %vm5131, 0, %v5132
      %5134 = vst [vmem:[%s197 + $0x8] sm:$0x3] %v5133
      %vm5135 = vcmask 257027
      %vm5136 = vsmask.f32 7950
      %vm5137 = vmand %vm5135, %vm5136
      %v5138 = vld [vmem:[%s197 + $0xa8] sm:$0x8]
      %v5139 = vsel %vm5137, 0, %v5138
      %5140 = vst [vmem:[%s197 + $0xa8] sm:$0x8] %v5139
      %5141 = vst.msk [vmem:[%s197 + $0xac] sm:$0xf] %vm4671, 0
      %5142 = vst.msk [vmem:[%s197 + $0xb0] sm:$0xf] %vm4671, 0
      %vm5143 = vcmask 253952
      %5144 = vst.msk [vmem:[%s197 + $0xb4] sm:$0x1] %vm5143, 0
      %v5145 = vpack.c.bf16 %v5087, %v5086
      %v5146 = vpack.c.bf16 %v5089, %v5088
      %v5147 = vpack.c.bf16 %v5091, %v5090
      %v5148 = vpack.c.bf16 %v5093, %v5092
      %v5149 = vpack.c.bf16 %v5095, %v5094
      %v5150 = vpack.c.bf16 %v5097, %v5096
      %v5151 = vpack.c.bf16 %v5099, %v5098
      %v5152 = vpack.c.bf16 %v5101, %v5100
      %v5153 = vpack.c.bf16 %v5103, %v5102
      %v5154 = vpack.c.bf16 %v5105, %v5104
      %v5155 = vpack.c.bf16 %v5107, %v5106
      %v5156 = vpack.c.bf16 %v5109, %v5108
      %v5157 = vpack.c.bf16 %v5111, %v5110
      %v5158 = vpack.c.bf16 %v5113, %v5112
      %v5159 = vpack.c.bf16 %v5115, %v5114
      %v5160 = vpack.c.bf16 %v5117, %v5116
      %v5161 = vpack.c.bf16 %v5119, %v5118
      %v5162 = vpack.c.bf16 %v5121, %v5120
      %v5163 = vpack.c.bf16 %v5123, %v5122
      %v5164 = vpack.c.bf16 %v5125, %v5124
      %v5165 = vpack.c.bf16 %v5126, %v5126
      %v5187 = vunpack.c.l.b16 %v5145
      %v5188 = vunpack.c.h.b16 %v5145
      %v5189 = vunpack.c.l.b16 %v5146
      %v5190 = vunpack.c.h.b16 %v5146
      %v5191 = vunpack.c.l.b16 %v5147
      %v5192 = vunpack.c.h.b16 %v5147
      %v5193 = vunpack.c.l.b16 %v5148
      %v5194 = vunpack.c.h.b16 %v5148
      %v5195 = vunpack.c.l.b16 %v5149
      %v5196 = vunpack.c.h.b16 %v5149
      %v5197 = vunpack.c.l.b16 %v5150
      %v5198 = vunpack.c.h.b16 %v5150
      %v5199 = vunpack.c.l.b16 %v5151
      %v5200 = vunpack.c.h.b16 %v5151
      %v5201 = vunpack.c.l.b16 %v5152
      %v5202 = vunpack.c.h.b16 %v5152
      %v5203 = vunpack.c.l.b16 %v5153
      %v5204 = vunpack.c.h.b16 %v5153
      %v5205 = vunpack.c.l.b16 %v5154
      %v5206 = vunpack.c.h.b16 %v5154
      %v5207 = vunpack.c.l.b16 %v5155
      %v5208 = vunpack.c.h.b16 %v5155
      %v5209 = vunpack.c.l.b16 %v5156
      %v5210 = vunpack.c.h.b16 %v5156
      %v5211 = vunpack.c.l.b16 %v5157
      %v5212 = vunpack.c.h.b16 %v5157
      %v5213 = vunpack.c.l.b16 %v5158
      %v5214 = vunpack.c.h.b16 %v5158
      %v5215 = vunpack.c.l.b16 %v5159
      %v5216 = vunpack.c.h.b16 %v5159
      %v5217 = vunpack.c.l.b16 %v5160
      %v5218 = vunpack.c.h.b16 %v5160
      %v5219 = vunpack.c.l.b16 %v5161
      %v5220 = vunpack.c.h.b16 %v5161
      %v5221 = vunpack.c.l.b16 %v5162
      %v5222 = vunpack.c.h.b16 %v5162
      %v5223 = vunpack.c.l.b16 %v5163
      %v5224 = vunpack.c.h.b16 %v5163
      %v5225 = vunpack.c.l.b16 %v5164
      %v5226 = vunpack.c.h.b16 %v5164
      %v5227 = vunpack.c.l.b16 %v5165
      %v5228 = vpack.c.b16 %v5187, %v5187
      %v5229 = vpack.c.b16 %v5188, %v5188
      %v5230 = vpack.c.b16 %v5189, %v5189
      %v5231 = vpack.c.b16 %v5190, %v5190
      %v5232 = vpack.c.b16 %v5191, %v5191
      %v5233 = vpack.c.b16 %v5192, %v5192
      %v5234 = vpack.c.b16 %v5193, %v5193
      %v5235 = vpack.c.b16 %v5194, %v5194
      %v5236 = vpack.c.b16 %v5195, %v5195
      %v5237 = vpack.c.b16 %v5196, %v5196
      %v5238 = vpack.c.b16 %v5197, %v5197
      %v5239 = vpack.c.b16 %v5198, %v5198
      %v5240 = vpack.c.b16 %v5199, %v5199
      %v5241 = vpack.c.b16 %v5200, %v5200
      %v5242 = vpack.c.b16 %v5201, %v5201
      %v5243 = vpack.c.b16 %v5202, %v5202
      %v5244 = vpack.c.b16 %v5203, %v5203
      %v5245 = vpack.c.b16 %v5204, %v5204
      %v5246 = vpack.c.b16 %v5205, %v5205
      %v5247 = vpack.c.b16 %v5206, %v5206
      %v5248 = vpack.c.b16 %v5207, %v5207
      %v5249 = vpack.c.b16 %v5208, %v5208
      %v5250 = vpack.c.b16 %v5209, %v5209
      %v5251 = vpack.c.b16 %v5210, %v5210
      %v5252 = vpack.c.b16 %v5211, %v5211
      %v5253 = vpack.c.b16 %v5212, %v5212
      %v5254 = vpack.c.b16 %v5213, %v5213
      %v5255 = vpack.c.b16 %v5214, %v5214
      %v5256 = vpack.c.b16 %v5215, %v5215
      %v5257 = vpack.c.b16 %v5216, %v5216
      %v5258 = vpack.c.b16 %v5217, %v5217
      %v5259 = vpack.c.b16 %v5218, %v5218
      %v5260 = vpack.c.b16 %v5219, %v5219
      %v5261 = vpack.c.b16 %v5220, %v5220
      %v5262 = vpack.c.b16 %v5221, %v5221
      %v5263 = vpack.c.b16 %v5222, %v5222
      %v5264 = vpack.c.b16 %v5223, %v5223
      %v5265 = vpack.c.b16 %v5224, %v5224
      %v5266 = vpack.c.b16 %v5225, %v5225
      %v5267 = vpack.c.b16 %v5226, %v5226
      %v5268 = vpack.c.b16 %v5227, %v5227
      %vm5269 = vsmask.f32 5392
      %vm5270 = vmor %vm5130, %vm5269
      %v5272 = vshrl.u32 %v5228, 16
      %v5274 = vrot.slane %v5272, 6
      %v5275 = vshll.u32 %v5228, 16
      %v5277 = vrot.slane %v5275, 7
      %v5278 = vor.u32 %v5274, %v5277
      %v5279 = vrot.slane %v5278, 4
      %v5281 = vshrl.u32 %v5229, 16
      %v5283 = vrot.slane %v5281, 6
      %v5284 = vshll.u32 %v5229, 16
      %v5286 = vrot.slane %v5284, 7
      %v5287 = vor.u32 %v5283, %v5286
      %v5288 = vsel %vm5270, %v5279, %v5287
      %v5289 = vrot.slane %v5287, 4
      %v5291 = vshrl.u32 %v5230, 16
      %v5293 = vrot.slane %v5291, 6
      %v5294 = vshll.u32 %v5230, 16
      %v5296 = vrot.slane %v5294, 7
      %v5297 = vor.u32 %v5293, %v5296
      %v5298 = vsel %vm5270, %v5289, %v5297
      %v5299 = vrot.slane %v5297, 4
      %v5301 = vshrl.u32 %v5231, 16
      %v5303 = vrot.slane %v5301, 6
      %v5304 = vshll.u32 %v5231, 16
      %v5306 = vrot.slane %v5304, 7
      %v5307 = vor.u32 %v5303, %v5306
      %v5308 = vsel %vm5270, %v5299, %v5307
      %v5309 = vrot.slane %v5307, 4
      %v5311 = vshrl.u32 %v5232, 16
      %v5313 = vrot.slane %v5311, 6
      %v5314 = vshll.u32 %v5232, 16
      %v5316 = vrot.slane %v5314, 7
      %v5317 = vor.u32 %v5313, %v5316
      %v5318 = vsel %vm5270, %v5309, %v5317
      %v5319 = vrot.slane %v5317, 4
      %v5321 = vshrl.u32 %v5233, 16
      %v5323 = vrot.slane %v5321, 6
      %v5324 = vshll.u32 %v5233, 16
      %v5326 = vrot.slane %v5324, 7
      %v5327 = vor.u32 %v5323, %v5326
      %v5328 = vsel %vm5270, %v5319, %v5327
      %v5329 = vrot.slane %v5327, 4
      %v5331 = vshrl.u32 %v5234, 16
      %v5333 = vrot.slane %v5331, 6
      %v5334 = vshll.u32 %v5234, 16
      %v5336 = vrot.slane %v5334, 7
      %v5337 = vor.u32 %v5333, %v5336
      %v5338 = vsel %vm5270, %v5329, %v5337
      %v5339 = vrot.slane %v5337, 4
      %v5341 = vshrl.u32 %v5235, 16
      %v5343 = vrot.slane %v5341, 6
      %v5344 = vshll.u32 %v5235, 16
      %v5346 = vrot.slane %v5344, 7
      %v5347 = vor.u32 %v5343, %v5346
      %v5348 = vsel %vm5270, %v5339, %v5347
      %v5349 = vrot.slane %v5347, 4
      %v5351 = vshrl.u32 %v5236, 16
      %v5353 = vrot.slane %v5351, 6
      %v5354 = vshll.u32 %v5236, 16
      %v5356 = vrot.slane %v5354, 7
      %v5357 = vor.u32 %v5353, %v5356
      %v5358 = vsel %vm5270, %v5349, %v5357
      %v5359 = vrot.slane %v5357, 4
      %v5361 = vshrl.u32 %v5237, 16
      %v5363 = vrot.slane %v5361, 6
      %v5364 = vshll.u32 %v5237, 16
      %v5366 = vrot.slane %v5364, 7
      %v5367 = vor.u32 %v5363, %v5366
      %v5368 = vsel %vm5270, %v5359, %v5367
      %v5369 = vrot.slane %v5367, 4
      %v5371 = vshrl.u32 %v5238, 16
      %v5373 = vrot.slane %v5371, 6
      %v5374 = vshll.u32 %v5238, 16
      %v5376 = vrot.slane %v5374, 7
      %v5377 = vor.u32 %v5373, %v5376
      %v5378 = vsel %vm5270, %v5369, %v5377
      %v5379 = vrot.slane %v5377, 4
      %v5381 = vshrl.u32 %v5239, 16
      %v5383 = vrot.slane %v5381, 6
      %v5384 = vshll.u32 %v5239, 16
      %v5386 = vrot.slane %v5384, 7
      %v5387 = vor.u32 %v5383, %v5386
      %v5388 = vsel %vm5270, %v5379, %v5387
      %v5389 = vrot.slane %v5387, 4
      %v5391 = vshrl.u32 %v5240, 16
      %v5393 = vrot.slane %v5391, 6
      %v5394 = vshll.u32 %v5240, 16
      %v5396 = vrot.slane %v5394, 7
      %v5397 = vor.u32 %v5393, %v5396
      %v5398 = vsel %vm5270, %v5389, %v5397
      %v5399 = vrot.slane %v5397, 4
      %v5401 = vshrl.u32 %v5241, 16
      %v5403 = vrot.slane %v5401, 6
      %v5404 = vshll.u32 %v5241, 16
      %v5406 = vrot.slane %v5404, 7
      %v5407 = vor.u32 %v5403, %v5406
      %v5408 = vsel %vm5270, %v5399, %v5407
      %v5409 = vrot.slane %v5407, 4
      %v5411 = vshrl.u32 %v5242, 16
      %v5413 = vrot.slane %v5411, 6
      %v5414 = vshll.u32 %v5242, 16
      %v5416 = vrot.slane %v5414, 7
      %v5417 = vor.u32 %v5413, %v5416
      %v5418 = vsel %vm5270, %v5409, %v5417
      %v5419 = vrot.slane %v5417, 4
      %v5421 = vshrl.u32 %v5243, 16
      %v5423 = vrot.slane %v5421, 6
      %v5424 = vshll.u32 %v5243, 16
      %v5426 = vrot.slane %v5424, 7
      %v5427 = vor.u32 %v5423, %v5426
      %v5428 = vsel %vm5270, %v5419, %v5427
      %v5429 = vrot.slane %v5427, 4
      %v5431 = vshrl.u32 %v5244, 16
      %v5433 = vrot.slane %v5431, 6
      %v5434 = vshll.u32 %v5244, 16
      %v5436 = vrot.slane %v5434, 7
      %v5437 = vor.u32 %v5433, %v5436
      %v5438 = vsel %vm5270, %v5429, %v5437
      %v5439 = vrot.slane %v5437, 4
      %v5441 = vshrl.u32 %v5245, 16
      %v5443 = vrot.slane %v5441, 6
      %v5444 = vshll.u32 %v5245, 16
      %v5446 = vrot.slane %v5444, 7
      %v5447 = vor.u32 %v5443, %v5446
      %v5448 = vsel %vm5270, %v5439, %v5447
      %v5449 = vrot.slane %v5447, 4
      %v5451 = vshrl.u32 %v5246, 16
      %v5453 = vrot.slane %v5451, 6
      %v5454 = vshll.u32 %v5246, 16
      %v5456 = vrot.slane %v5454, 7
      %v5457 = vor.u32 %v5453, %v5456
      %v5458 = vsel %vm5270, %v5449, %v5457
      %v5459 = vrot.slane %v5457, 4
      %v5461 = vshrl.u32 %v5247, 16
      %v5463 = vrot.slane %v5461, 6
      %v5464 = vshll.u32 %v5247, 16
      %v5466 = vrot.slane %v5464, 7
      %v5467 = vor.u32 %v5463, %v5466
      %v5468 = vsel %vm5270, %v5459, %v5467
      %v5469 = vrot.slane %v5467, 4
      %v5471 = vshrl.u32 %v5248, 16
      %v5473 = vrot.slane %v5471, 6
      %v5474 = vshll.u32 %v5248, 16
      %v5476 = vrot.slane %v5474, 7
      %v5477 = vor.u32 %v5473, %v5476
      %v5478 = vsel %vm5270, %v5469, %v5477
      %v5479 = vrot.slane %v5477, 4
      %v5481 = vshrl.u32 %v5249, 16
      %v5483 = vrot.slane %v5481, 6
      %v5484 = vshll.u32 %v5249, 16
      %v5486 = vrot.slane %v5484, 7
      %v5487 = vor.u32 %v5483, %v5486
      %v5488 = vsel %vm5270, %v5479, %v5487
      %v5489 = vrot.slane %v5487, 4
      %v5491 = vshrl.u32 %v5250, 16
      %v5493 = vrot.slane %v5491, 6
      %v5494 = vshll.u32 %v5250, 16
      %v5496 = vrot.slane %v5494, 7
      %v5497 = vor.u32 %v5493, %v5496
      %v5498 = vsel %vm5270, %v5489, %v5497
      %v5499 = vrot.slane %v5497, 4
      %v5501 = vshrl.u32 %v5251, 16
      %v5503 = vrot.slane %v5501, 6
      %v5504 = vshll.u32 %v5251, 16
      %v5506 = vrot.slane %v5504, 7
      %v5507 = vor.u32 %v5503, %v5506
      %v5508 = vsel %vm5270, %v5499, %v5507
      %v5509 = vrot.slane %v5507, 4
      %v5511 = vshrl.u32 %v5252, 16
      %v5513 = vrot.slane %v5511, 6
      %v5514 = vshll.u32 %v5252, 16
      %v5516 = vrot.slane %v5514, 7
      %v5517 = vor.u32 %v5513, %v5516
      %v5518 = vsel %vm5270, %v5509, %v5517
      %v5519 = vrot.slane %v5517, 4
      %v5521 = vshrl.u32 %v5253, 16
      %v5523 = vrot.slane %v5521, 6
      %v5524 = vshll.u32 %v5253, 16
      %v5526 = vrot.slane %v5524, 7
      %v5527 = vor.u32 %v5523, %v5526
      %v5528 = vsel %vm5270, %v5519, %v5527
      %v5529 = vrot.slane %v5527, 4
      %v5531 = vshrl.u32 %v5254, 16
      %v5533 = vrot.slane %v5531, 6
      %v5534 = vshll.u32 %v5254, 16
      %v5536 = vrot.slane %v5534, 7
      %v5537 = vor.u32 %v5533, %v5536
      %v5538 = vsel %vm5270, %v5529, %v5537
      %v5539 = vrot.slane %v5537, 4
      %v5541 = vshrl.u32 %v5255, 16
      %v5543 = vrot.slane %v5541, 6
      %v5544 = vshll.u32 %v5255, 16
      %v5546 = vrot.slane %v5544, 7
      %v5547 = vor.u32 %v5543, %v5546
      %v5548 = vsel %vm5270, %v5539, %v5547
      %v5549 = vrot.slane %v5547, 4
      %v5551 = vshrl.u32 %v5256, 16
      %v5553 = vrot.slane %v5551, 6
      %v5554 = vshll.u32 %v5256, 16
      %v5556 = vrot.slane %v5554, 7
      %v5557 = vor.u32 %v5553, %v5556
      %v5558 = vsel %vm5270, %v5549, %v5557
      %v5559 = vrot.slane %v5557, 4
      %v5561 = vshrl.u32 %v5257, 16
      %v5563 = vrot.slane %v5561, 6
      %v5564 = vshll.u32 %v5257, 16
      %v5566 = vrot.slane %v5564, 7
      %v5567 = vor.u32 %v5563, %v5566
      %v5568 = vsel %vm5270, %v5559, %v5567
      %v5569 = vrot.slane %v5567, 4
      %v5571 = vshrl.u32 %v5258, 16
      %v5573 = vrot.slane %v5571, 6
      %v5574 = vshll.u32 %v5258, 16
      %v5576 = vrot.slane %v5574, 7
      %v5577 = vor.u32 %v5573, %v5576
      %v5578 = vsel %vm5270, %v5569, %v5577
      %v5579 = vrot.slane %v5577, 4
      %v5581 = vshrl.u32 %v5259, 16
      %v5583 = vrot.slane %v5581, 6
      %v5584 = vshll.u32 %v5259, 16
      %v5586 = vrot.slane %v5584, 7
      %v5587 = vor.u32 %v5583, %v5586
      %v5588 = vsel %vm5270, %v5579, %v5587
      %v5589 = vrot.slane %v5587, 4
      %v5591 = vshrl.u32 %v5260, 16
      %v5593 = vrot.slane %v5591, 6
      %v5594 = vshll.u32 %v5260, 16
      %v5596 = vrot.slane %v5594, 7
      %v5597 = vor.u32 %v5593, %v5596
      %v5598 = vsel %vm5270, %v5589, %v5597
      %v5599 = vrot.slane %v5597, 4
      %v5601 = vshrl.u32 %v5261, 16
      %v5603 = vrot.slane %v5601, 6
      %v5604 = vshll.u32 %v5261, 16
      %v5606 = vrot.slane %v5604, 7
      %v5607 = vor.u32 %v5603, %v5606
      %v5608 = vsel %vm5270, %v5599, %v5607
      %v5609 = vrot.slane %v5607, 4
      %v5611 = vshrl.u32 %v5262, 16
      %v5613 = vrot.slane %v5611, 6
      %v5614 = vshll.u32 %v5262, 16
      %v5616 = vrot.slane %v5614, 7
      %v5617 = vor.u32 %v5613, %v5616
      %v5618 = vsel %vm5270, %v5609, %v5617
      %v5619 = vrot.slane %v5617, 4
      %v5621 = vshrl.u32 %v5263, 16
      %v5623 = vrot.slane %v5621, 6
      %v5624 = vshll.u32 %v5263, 16
      %v5626 = vrot.slane %v5624, 7
      %v5627 = vor.u32 %v5623, %v5626
      %v5628 = vsel %vm5270, %v5619, %v5627
      %v5629 = vrot.slane %v5627, 4
      %v5631 = vshrl.u32 %v5264, 16
      %v5633 = vrot.slane %v5631, 6
      %v5634 = vshll.u32 %v5264, 16
      %v5636 = vrot.slane %v5634, 7
      %v5637 = vor.u32 %v5633, %v5636
      %v5638 = vsel %vm5270, %v5629, %v5637
      %v5639 = vrot.slane %v5637, 4
      %v5641 = vshrl.u32 %v5265, 16
      %v5643 = vrot.slane %v5641, 6
      %v5644 = vshll.u32 %v5265, 16
      %v5646 = vrot.slane %v5644, 7
      %v5647 = vor.u32 %v5643, %v5646
      %v5648 = vsel %vm5270, %v5639, %v5647
      %v5649 = vrot.slane %v5647, 4
      %v5651 = vshrl.u32 %v5266, 16
      %v5653 = vrot.slane %v5651, 6
      %v5654 = vshll.u32 %v5266, 16
      %v5656 = vrot.slane %v5654, 7
      %v5657 = vor.u32 %v5653, %v5656
      %v5658 = vsel %vm5270, %v5649, %v5657
      %v5659 = vrot.slane %v5657, 4
      %v5661 = vshrl.u32 %v5267, 16
      %v5663 = vrot.slane %v5661, 6
      %v5664 = vshll.u32 %v5267, 16
      %v5666 = vrot.slane %v5664, 7
      %v5667 = vor.u32 %v5663, %v5666
      %v5668 = vsel %vm5270, %v5659, %v5667
      %v5669 = vrot.slane %v5667, 4
      %v5671 = vshrl.u32 %v5268, 16
      %v5673 = vrot.slane %v5671, 6
      %v5674 = vshll.u32 %v5268, 16
      %v5676 = vrot.slane %v5674, 7
      %v5677 = vor.u32 %v5673, %v5676
      %v5678 = vsel %vm5270, %v5669, %v5677
      %vm5720 = vcmask 257025
      %vm5721 = vsmask.f32 7942
      %vm5722 = vmand %vm5720, %vm5721
      %v5723 = vld [vmem:[%s197 + $0x8] sm:$0xe]
      %v5724 = vsel %vm5722, %v5278, %v5723
      %5725 = vst [vmem:[%s197 + $0x8] sm:$0xe] %v5724
      %5726 = vst.msk [vmem:[%s197 + $0xc] sm:$0xf] %vm4671, %v5288
      %5727 = vst.msk [vmem:[%s197 + $0x10] sm:$0xf] %vm4671, %v5298
      %5728 = vst.msk [vmem:[%s197 + $0x14] sm:$0xf] %vm4671, %v5308
      %5729 = vst.msk [vmem:[%s197 + $0x18] sm:$0xf] %vm4671, %v5318
      %5730 = vst.msk [vmem:[%s197 + $0x1c] sm:$0xf] %vm4671, %v5328
      %5731 = vst.msk [vmem:[%s197 + $0x20] sm:$0xf] %vm4671, %v5338
      %5732 = vst.msk [vmem:[%s197 + $0x24] sm:$0xf] %vm4671, %v5348
      %5733 = vst.msk [vmem:[%s197 + $0x28] sm:$0xf] %vm4671, %v5358
      %5734 = vst.msk [vmem:[%s197 + $0x2c] sm:$0xf] %vm4671, %v5368
      %5735 = vst.msk [vmem:[%s197 + $0x30] sm:$0xf] %vm4671, %v5378
      %5736 = vst.msk [vmem:[%s197 + $0x34] sm:$0xf] %vm4671, %v5388
      %5737 = vst.msk [vmem:[%s197 + $0x38] sm:$0xf] %vm4671, %v5398
      %5738 = vst.msk [vmem:[%s197 + $0x3c] sm:$0xf] %vm4671, %v5408
      %5739 = vst.msk [vmem:[%s197 + $0x40] sm:$0xf] %vm4671, %v5418
      %5740 = vst.msk [vmem:[%s197 + $0x44] sm:$0xf] %vm4671, %v5428
      %5741 = vst.msk [vmem:[%s197 + $0x48] sm:$0xf] %vm4671, %v5438
      %5742 = vst.msk [vmem:[%s197 + $0x4c] sm:$0xf] %vm4671, %v5448
      %5743 = vst.msk [vmem:[%s197 + $0x50] sm:$0xf] %vm4671, %v5458
      %5744 = vst.msk [vmem:[%s197 + $0x54] sm:$0xf] %vm4671, %v5468
      %5745 = vst.msk [vmem:[%s197 + $0x58] sm:$0xf] %vm4671, %v5478
      %5746 = vst.msk [vmem:[%s197 + $0x5c] sm:$0xf] %vm4671, %v5488
      %5747 = vst.msk [vmem:[%s197 + $0x60] sm:$0xf] %vm4671, %v5498
      %5748 = vst.msk [vmem:[%s197 + $0x64] sm:$0xf] %vm4671, %v5508
      %5749 = vst.msk [vmem:[%s197 + $0x68] sm:$0xf] %vm4671, %v5518
      %5750 = vst.msk [vmem:[%s197 + $0x6c] sm:$0xf] %vm4671, %v5528
      %5751 = vst.msk [vmem:[%s197 + $0x70] sm:$0xf] %vm4671, %v5538
      %5752 = vst.msk [vmem:[%s197 + $0x74] sm:$0xf] %vm4671, %v5548
      %5753 = vst.msk [vmem:[%s197 + $0x78] sm:$0xf] %vm4671, %v5558
      %5754 = vst.msk [vmem:[%s197 + $0x7c] sm:$0xf] %vm4671, %v5568
      %5755 = vst.msk [vmem:[%s197 + $0x80] sm:$0xf] %vm4671, %v5578
      %5756 = vst.msk [vmem:[%s197 + $0x84] sm:$0xf] %vm4671, %v5588
      %5757 = vst.msk [vmem:[%s197 + $0x88] sm:$0xf] %vm4671, %v5598
      %5758 = vst.msk [vmem:[%s197 + $0x8c] sm:$0xf] %vm4671, %v5608
      %5759 = vst.msk [vmem:[%s197 + $0x90] sm:$0xf] %vm4671, %v5618
      %5760 = vst.msk [vmem:[%s197 + $0x94] sm:$0xf] %vm4671, %v5628
      %5761 = vst.msk [vmem:[%s197 + $0x98] sm:$0xf] %vm4671, %v5638
      %5762 = vst.msk [vmem:[%s197 + $0x9c] sm:$0xf] %vm4671, %v5648
      %5763 = vst.msk [vmem:[%s197 + $0xa0] sm:$0xf] %vm4671, %v5658
      %5764 = vst.msk [vmem:[%s197 + $0xa4] sm:$0xf] %vm4671, %v5668
      %vm5765 = vcmask 257024
      %vm5766 = vsmask.f32 3328
      %vm5767 = vmand %vm5765, %vm5766
      %v5768 = vld [vmem:[%s197 + $0xa8] sm:$0xf]
      %v5769 = vsel %vm5767, %v5678, %v5768
      %5770 = vst [vmem:[%s197 + $0xa8] sm:$0xf] %v5769
      %p5771 = scmp.lt.s32.totalorder %s15, 1
      %s5772 = scalar_select %p5771, %s15, 1
      %s5773 = smul.addr %s5772, 46
      %s5774 = smul.addr %s5773, 4
      %s5775 = scalar_lea.vmem %s4, %s5774
      // Predicated region
      $region37: #{generator_forward.11} parent=35 // pred_check
        %p5776 = pneg %p122
      $region38: #{generator_forward.11} parent=35 // pred_check_branch
        %5778 = sbr.rel (%p5776) target = $region40
      $region39: #{generator_forward.11} parent=35 // pred_region
        _
      $region40: #{generator_forward.11} parent=35 // pred_fallthru
        _
    $region36: #{generator_forward.11} parent=5 // pred_fallthru
      _
    %p5779 = scmp.le.s32.totalorder 2, %s10
    // Predicated region
    $region41: #{generator_forward.11} parent=5 // pred_check
      %p5780 = pneg %p5779
    $region42: #{generator_forward.11} parent=5 // pred_check_branch
      %5782 = sbr.rel (%p5780) target = $region44
    $region43: #{generator_forward.11} parent=5 // pred_region
      %s5783 = ssub.s32 %s10, 2
      // Predicated region
      $region45: #{generator_forward.11} parent=43 // pred_check
        %p5784 = pneg %p128
      $region46: #{generator_forward.11} parent=43 // pred_check_branch
        %5786 = sbr.rel (%p5784) target = $region48
      $region47: #{generator_forward.11} parent=43 // pred_region
        %p5787 = scmp.lt.s32.totalorder %s16, 1
        %s5788 = scalar_select %p5787, %s16, 1
        %s5789 = smul.addr %s5788, 46
        %s5790 = smul.addr %s5789, 4
        %s5791 = scalar_lea.vmem %s4, %s5790
      $region48: #{generator_forward.11} parent=43 // pred_fallthru
        _
    $region44: #{generator_forward.11} parent=5 // pred_fallthru
      _
  $region6: #{generator_forward.11} parent=0 // loop_footer
    %s14 = sadd.s32 1, %s10
  $region7: #{generator_forward.11} parent=0 // loop_footer_branch
    %9 = sbr.rel target = $region3
  $region8: #{generator_forward.11} parent=0 // loop_exit
    _

</llo_original>
